<compile_context>
chip_gen: v5e
topology: v5e:2x2
jax: 0.10.0
libtpu: 0.0.40
codegen_flags: <defaults>
</compile_context>

<pallas_src>
import functools

import jax
import jax.numpy as jnp
from jax.experimental import pallas as pl
from jax.experimental.pallas import tpu as pltpu


def _round_up(x, m):
    return ((x + m - 1) // m) * m


# ----------------------------- Pallas kernels -----------------------------

def _gemm_bias_lrelu_kernel(a_ref, w_ref, b_ref, o_ref, *, slope):
    y = jnp.dot(a_ref[...], w_ref[...], preferred_element_type=jnp.float32)
    y = y + b_ref[...]
    o_ref[...] = jnp.where(y >= 0, y, slope * y)


def gemm_bias_lrelu(a, w, b, slope=0.2, tm_cap=4096):
    """(M,K) @ (K,N) + b with fused LeakyReLU.  One M block unless M is huge."""
    M, K = a.shape
    N = w.shape[1]
    m8 = _round_up(M, 8)
    tm = m8 if m8 <= tm_cap else tm_cap
    m_pad = _round_up(m8, tm)
    a_p = a if m_pad == M else jnp.pad(a, ((0, m_pad - M), (0, 0)))
    out = pl.pallas_call(
        functools.partial(_gemm_bias_lrelu_kernel, slope=slope),
        out_shape=jax.ShapeDtypeStruct((m_pad, N), jnp.float32),
        grid=(m_pad // tm,),
        in_specs=[
            pl.BlockSpec((tm, K), lambda i: (i, 0)),
            pl.BlockSpec((K, N), lambda i: (0, 0)),
            pl.BlockSpec((1, N), lambda i: (0, 0)),
        ],
        out_specs=pl.BlockSpec((tm, N), lambda i: (i, 0)),
        compiler_params=pltpu.CompilerParams(
            dimension_semantics=("parallel",)),
    )(a_p, w, b.reshape(1, N))
    return out if m_pad == M else out[:M]


def _gemm_bn_lrelu_kernel(a_ref, w_ref, b_ref, g_ref, be_ref, o_ref,
                          *, eps, slope):
    y = jnp.dot(a_ref[...], w_ref[...], preferred_element_type=jnp.float32)
    y = y + b_ref[...]                                   # conv bias
    mean = jnp.mean(y, axis=0, keepdims=True)            # batch stats over
    var = jnp.mean(jnp.square(y - mean), axis=0, keepdims=True)  # (N,H,W) rows
    z = (y - mean) * jax.lax.rsqrt(var + eps) * g_ref[...] + be_ref[...]
    o_ref[...] = jnp.where(z >= 0, z, slope * z)


def gemm_bn_lrelu(a, w, b, gamma, beta, eps=1e-5, slope=0.2):
    """Fused conv-GEMM + bias + BatchNorm2d(train-mode stats) + LeakyReLU.

    Single VMEM block over all M rows so the batch statistics are exact and no
    padded rows pollute them (M <= 512 at B=2; total VMEM < 2 MiB per layer).
    """
    # TODO(synk): for large batch, tile M and accumulate sum/sum-sq partials in
    # VMEM scratch (finalize under pl.when) instead of one full-M block.
    M, K = a.shape
    N = w.shape[1]
    return pl.pallas_call(
        functools.partial(_gemm_bn_lrelu_kernel, eps=eps, slope=slope),
        out_shape=jax.ShapeDtypeStruct((M, N), jnp.float32),
        grid=(1,),
        in_specs=[
            pl.BlockSpec((M, K), lambda i: (0, 0)),
            pl.BlockSpec((K, N), lambda i: (0, 0)),
            pl.BlockSpec((1, N), lambda i: (0, 0)),
            pl.BlockSpec((1, N), lambda i: (0, 0)),
            pl.BlockSpec((1, N), lambda i: (0, 0)),
        ],
        out_specs=pl.BlockSpec((M, N), lambda i: (0, 0)),
    )(a, w, b.reshape(1, N), gamma.reshape(1, N), beta.reshape(1, N))


def _conv_avgpool_kernel(p_ref, a_ref, w_ref, b_ref, o_ref):
    pooled = jnp.dot(p_ref[...], a_ref[...],
                     preferred_element_type=jnp.float32)         # (B, K)
    o_ref[...] = jnp.dot(pooled, w_ref[...],
                         preferred_element_type=jnp.float32) + b_ref[...]


def conv_avgpool(a, w, b, batch, spatial):
    """Fused final conv (no activation) + global average pool.

    Since there is no nonlinearity after the last conv:
        avgpool(A @ w + b) == (P @ A) @ w + b,
    with P the (B, B*S) block-diagonal per-batch averaging matrix.
    """
    M, K = a.shape                       # M = batch * spatial
    N = w.shape[1]                       # 1
    pool = jnp.kron(jnp.eye(batch, dtype=jnp.float32),
                    jnp.full((1, spatial), 1.0 / spatial, jnp.float32))
    return pl.pallas_call(
        _conv_avgpool_kernel,
        out_shape=jax.ShapeDtypeStruct((batch, N), jnp.float32),
        grid=(1,),
        in_specs=[
            pl.BlockSpec((batch, M), lambda i: (0, 0)),
            pl.BlockSpec((M, K), lambda i: (0, 0)),
            pl.BlockSpec((K, N), lambda i: (0, 0)),
            pl.BlockSpec((1, N), lambda i: (0, 0)),
        ],
        out_specs=pl.BlockSpec((batch, N), lambda i: (0, 0)),
    )(pool, a, w, b.reshape(1, N))


# ------------------------------- JAX glue ---------------------------------

def im2col_nhwc(x, kh, kw, stride, pad):
    """x:(N,H,W,C) -> (N*OH*OW, kh*kw*C); cols ordered (kh, kw, c).

    Strided slices + one concat only (no 6-axis transpose); the GEMM output
    rows come back already in NHWC order, so the next layer needs just a free
    reshape.
    """
    N, H, W, C = x.shape
    if pad:
        x = jnp.pad(x, ((0, 0), (pad, pad), (pad, pad), (0, 0)))
    OH = (H + 2 * pad - kh) // stride + 1
    OW = (W + 2 * pad - kw) // stride + 1
    cols = []
    for i in range(kh):
        for j in range(kw):
            cols.append(x[:, i:i + stride * OH:stride,
                          j:j + stride * OW:stride, :])
    a = jnp.concatenate(cols, axis=-1)               # (N, OH, OW, kh*kw*C)
    return a.reshape(N * OH * OW, kh * kw * C), OH, OW


def torch_weight_to_mat(w):
    """torch Conv2d weight (OC, IC, KH, KW) -> GEMM matrix (KH*KW*IC, OC)."""
    OC, IC, KH, KW = w.shape
    return jnp.transpose(w, (2, 3, 1, 0)).reshape(KH * KW * IC, OC)


def d_forward(x, p):
    """x: (B, 1, H, W) in NCHW (PyTorch convention) -> (B, 1)."""
    B = x.shape[0]
    x = jnp.transpose(x, (0, 2, 3, 1))               # NCHW -> NHWC, once
    # Conv(1->d, 4, 2, 1) + LeakyReLU(0.2)
    a, oh, ow = im2col_nhwc(x, 4, 4, 2, 1)
    y = gemm_bias_lrelu(a, p["w1"], p["b1"])
    x = y.reshape(B, oh, ow, -1)
    # Conv(d->2d, 4, 2, 1) + BatchNorm2d + LeakyReLU   (one fused kernel)
    a, oh, ow = im2col_nhwc(x, 4, 4, 2, 1)
    y = gemm_bn_lrelu(a, p["w2"], p["b2"], p["g2"], p["be2"])
    x = y.reshape(B, oh, ow, -1)
    # Conv(2d->4d, 4, 2, 1) + BatchNorm2d + LeakyReLU
    a, oh, ow = im2col_nhwc(x, 4, 4, 2, 1)
    y = gemm_bn_lrelu(a, p["w3"], p["b3"], p["g3"], p["be3"])
    x = y.reshape(B, oh, ow, -1)
    # Conv(4d->8d, 4, 1, 0) + BatchNorm2d + LeakyReLU
    a, oh, ow = im2col_nhwc(x, 4, 4, 1, 0)
    y = gemm_bn_lrelu(a, p["w4"], p["b4"], p["g4"], p["be4"])
    x = y.reshape(B, oh, ow, -1)
    # Conv(8d->1, 4, 1, 0) + F.avg_pool2d(full spatial).view(B, -1)  (fused)
    a, oh, ow = im2col_nhwc(x, 4, 4, 1, 0)
    return conv_avgpool(a, p["w5"], p["b5"], B, oh * ow)


def init_params(key, d=32):
    ks = jax.random.split(key, 5)

    def conv(k, oc, ic, kh=4, kw=4):
        kw_, kb = jax.random.split(k)
        w = 0.05 * jax.random.normal(kw_, (oc, ic, kh, kw), jnp.float32)
        b = 0.01 * jax.random.normal(kb, (oc,), jnp.float32)
        # Convert to GEMM layout once, outside the forward pass.
        return torch_weight_to_mat(w), b

    p = {}
    p["w1"], p["b1"] = conv(ks[0], d, 1)
    p["w2"], p["b2"] = conv(ks[1], d * 2, d)
    p["w3"], p["b3"] = conv(ks[2], d * 4, d * 2)
    p["w4"], p["b4"] = conv(ks[3], d * 8, d * 4)
    p["w5"], p["b5"] = conv(ks[4], 1, d * 8)
    for i, c in zip((2, 3, 4), (d * 2, d * 4, d * 8)):
        p[f"g{i}"] = jnp.ones((c,), jnp.float32)     # BN gamma (torch init)
        p[f"be{i}"] = jnp.zeros((c,), jnp.float32)   # BN beta  (torch init)
    return p


if __name__ == "__main__":
    key = jax.random.PRNGKey(0)
    pk, xk = jax.random.split(key)
    params = init_params(pk, d=32)
    # Minimum input spatial size for this architecture is 56; use 64x64.
    x = jax.random.normal(xk, (2, 1, 64, 64), jnp.float32)
    out = jax.jit(d_forward)(x, params)
    out = jax.block_until_ready(out)
    assert out.shape == (2, 1)
    assert bool(jnp.all(jnp.isfinite(out)))
    print("KERNEL_OK")
</pallas_src>

<mosaic_0001>
module attributes {stable_mosaic.version = 11 : i64} {
  func.func @_gemm_bias_lrelu_kernel(%arg0: i32, %arg1: memref<2048x16xf32, #tpu.memory_space<vmem>>, %arg2: memref<16x32xf32, #tpu.memory_space<vmem>>, %arg3: memref<1x32xf32, #tpu.memory_space<vmem>>, %arg4: memref<2048x32xf32, #tpu.memory_space<vmem>>) attributes {dimension_semantics = [#tpu.dimension_semantics<parallel>], iteration_bounds = array<i64: 1>, scalar_prefetch = 0 : i64, scratch_operands = 0 : i64, tpu.core_type = #tpu.core_type<tc>, window_params = [{transform_indices = @transform_0, window_bounds = array<i64: 2048, 16>}, {pipeline_mode = #tpu.pipeline_mode<synchronous>, transform_indices = @transform_1, window_bounds = array<i64: 16, 32>}, {pipeline_mode = #tpu.pipeline_mode<synchronous>, transform_indices = @transform_2, window_bounds = array<i64: 1, 32>}, {transform_indices = @transform_3, window_bounds = array<i64: 2048, 32>}]} {
    %c0 = arith.constant 0 : index
    %c0_0 = arith.constant 0 : index
    %0 = vector.load %arg1[%c0, %c0_0] : memref<2048x16xf32, #tpu.memory_space<vmem>>, vector<2048x16xf32>
    %c0_1 = arith.constant 0 : index
    %c0_2 = arith.constant 0 : index
    %1 = vector.load %arg2[%c0_1, %c0_2] : memref<16x32xf32, #tpu.memory_space<vmem>>, vector<16x32xf32>
    %cst = arith.constant dense<0.000000e+00> : vector<2048x32xf32>
    %2 = tpu.matmul %0, %1, %cst {dimension_numbers = #tpu.dot_dimension_numbers<[1], [0], [0], [1], [0, 0, 1, 1], [], []>} : vector<2048x16xf32>, vector<16x32xf32>, vector<2048x32xf32> -> vector<2048x32xf32>
    %c0_3 = arith.constant 0 : index
    %c0_4 = arith.constant 0 : index
    %3 = vector.load %arg3[%c0_3, %c0_4] : memref<1x32xf32, #tpu.memory_space<vmem>>, vector<1x32xf32>
    %4 = vector.broadcast %3 : vector<1x32xf32> to vector<2048x32xf32>
    %5 = arith.addf %2, %4 : vector<2048x32xf32>
    %cst_5 = arith.constant 0.000000e+00 : f32
    %6 = vector.broadcast %cst_5 : f32 to vector<2048x32xf32>
    %7 = arith.cmpf oge, %5, %6 : vector<2048x32xf32>
    %cst_6 = arith.constant 2.000000e-01 : f32
    %8 = vector.broadcast %cst_6 : f32 to vector<2048x32xf32>
    %9 = arith.mulf %8, %5 : vector<2048x32xf32>
    %10 = arith.select %7, %5, %9 : vector<2048x32xi1>, vector<2048x32xf32>
    %c0_7 = arith.constant 0 : index
    %c0_8 = arith.constant 0 : index
    %11 = vector.load %arg4[%c0_7, %c0_8] : memref<2048x32xf32, #tpu.memory_space<vmem>>, vector<2048x32xf32>
    tpu.vector_store %arg4[%c0_7, %c0_8], %10 {strides = array<i32>} : memref<2048x32xf32, #tpu.memory_space<vmem>>, vector<2048x32xf32>,
    return
  }
  func.func @transform_0(%arg0: i32) -> (i32, i32) {
    %c0_i32 = arith.constant 0 : i32
    %c0_i32_0 = arith.constant 0 : i32
    return %arg0, %c0_i32 : i32, i32
  }
  func.func @transform_1(%arg0: i32) -> (i32, i32) {
    %c0_i32 = arith.constant 0 : i32
    %c0_i32_0 = arith.constant 0 : i32
    %c0_i32_1 = arith.constant 0 : i32
    return %c0_i32, %c0_i32_0 : i32, i32
  }
  func.func @transform_2(%arg0: i32) -> (i32, i32) {
    %c0_i32 = arith.constant 0 : i32
    %c0_i32_0 = arith.constant 0 : i32
    %c0_i32_1 = arith.constant 0 : i32
    return %c0_i32, %c0_i32_0 : i32, i32
  }
  func.func @transform_3(%arg0: i32) -> (i32, i32) {
    %c0_i32 = arith.constant 0 : i32
    %c0_i32_0 = arith.constant 0 : i32
    return %arg0, %c0_i32 : i32, i32
  }
}

module attributes {stable_mosaic.version = 11 : i64} {
  func.func @_gemm_bn_lrelu_kernel(%arg0: i32, %arg1: memref<512x512xf32, #tpu.memory_space<vmem>>, %arg2: memref<512x64xf32, #tpu.memory_space<vmem>>, %arg3: memref<1x64xf32, #tpu.memory_space<vmem>>, %arg4: memref<1x64xf32, #tpu.memory_space<vmem>>, %arg5: memref<1x64xf32, #tpu.memory_space<vmem>>, %arg6: memref<512x64xf32, #tpu.memory_space<vmem>>) attributes {dimension_semantics = [#tpu.dimension_semantics<arbitrary>], iteration_bounds = array<i64: 1>, scalar_prefetch = 0 : i64, scratch_operands = 0 : i64, tpu.core_type = #tpu.core_type<tc>, window_params = [{pipeline_mode = #tpu.pipeline_mode<synchronous>, transform_indices = @transform_0, window_bounds = array<i64: 512, 512>}, {pipeline_mode = #tpu.pipeline_mode<synchronous>, transform_indices = @transform_1, window_bounds = array<i64: 512, 64>}, {pipeline_mode = #tpu.pipeline_mode<synchronous>, transform_indices = @transform_2, window_bounds = array<i64: 1, 64>}, {pipeline_mode = #tpu.pipeline_mode<synchronous>, transform_indices = @transform_3, window_bounds = array<i64: 1, 64>}, {pipeline_mode = #tpu.pipeline_mode<synchronous>, transform_indices = @transform_4, window_bounds = array<i64: 1, 64>}, {pipeline_mode = #tpu.pipeline_mode<synchronous>, transform_indices = @transform_5, window_bounds = array<i64: 512, 64>}]} {
    %c0 = arith.constant 0 : index
    %c0_0 = arith.constant 0 : index
    %0 = vector.load %arg1[%c0, %c0_0] : memref<512x512xf32, #tpu.memory_space<vmem>>, vector<512x512xf32>
    %c0_1 = arith.constant 0 : index
    %c0_2 = arith.constant 0 : index
    %1 = vector.load %arg2[%c0_1, %c0_2] : memref<512x64xf32, #tpu.memory_space<vmem>>, vector<512x64xf32>
    %cst = arith.constant dense<0.000000e+00> : vector<512x64xf32>
    %2 = tpu.matmul %0, %1, %cst {dimension_numbers = #tpu.dot_dimension_numbers<[1], [0], [0], [1], [0, 0, 1, 1], [], []>} : vector<512x512xf32>, vector<512x64xf32>, vector<512x64xf32> -> vector<512x64xf32>
    %c0_3 = arith.constant 0 : index
    %c0_4 = arith.constant 0 : index
    %3 = vector.load %arg3[%c0_3, %c0_4] : memref<1x64xf32, #tpu.memory_space<vmem>>, vector<1x64xf32>
    %4 = vector.broadcast %3 : vector<1x64xf32> to vector<512x64xf32>
    %5 = arith.addf %2, %4 : vector<512x64xf32>
    %cst_5 = arith.constant dense<0.000000e+00> : vector<64xf32>
    %6 = vector.multi_reduction <add>, %5, %cst_5 [0] : vector<512x64xf32> to vector<64xf32>
    %7 = vector.shape_cast %6 : vector<64xf32> to vector<1x64xf32>
    %cst_6 = arith.constant 5.120000e+02 : f32
    %8 = vector.broadcast %cst_6 : f32 to vector<1x64xf32>
    %9 = arith.divf %7, %8 : vector<1x64xf32>
    %10 = vector.broadcast %9 : vector<1x64xf32> to vector<512x64xf32>
    %11 = arith.subf %5, %10 : vector<512x64xf32>
    %12 = arith.mulf %11, %11 : vector<512x64xf32>
    %cst_7 = arith.constant dense<0.000000e+00> : vector<64xf32>
    %13 = vector.multi_reduction <add>, %12, %cst_7 [0] : vector<512x64xf32> to vector<64xf32>
    %14 = vector.shape_cast %13 : vector<64xf32> to vector<1x64xf32>
    %cst_8 = arith.constant 5.120000e+02 : f32
    %15 = vector.broadcast %cst_8 : f32 to vector<1x64xf32>
    %16 = arith.divf %14, %15 : vector<1x64xf32>
    %17 = vector.broadcast %9 : vector<1x64xf32> to vector<512x64xf32>
    %18 = arith.subf %5, %17 : vector<512x64xf32>
    %cst_9 = arith.constant 9.99999974E-6 : f32
    %19 = vector.broadcast %cst_9 : f32 to vector<1x64xf32>
    %20 = arith.addf %16, %19 : vector<1x64xf32>
    %21 = math.rsqrt %20 : vector<1x64xf32>
    %22 = vector.broadcast %21 : vector<1x64xf32> to vector<512x64xf32>
    %23 = arith.mulf %18, %22 : vector<512x64xf32>
    %c0_10 = arith.constant 0 : index
    %c0_11 = arith.constant 0 : index
    %24 = vector.load %arg4[%c0_10, %c0_11] : memref<1x64xf32, #tpu.memory_space<vmem>>, vector<1x64xf32>
    %25 = vector.broadcast %24 : vector<1x64xf32> to vector<512x64xf32>
    %26 = arith.mulf %23, %25 : vector<512x64xf32>
    %c0_12 = arith.constant 0 : index
    %c0_13 = arith.constant 0 : index
    %27 = vector.load %arg5[%c0_12, %c0_13] : memref<1x64xf32, #tpu.memory_space<vmem>>, vector<1x64xf32>
    %28 = vector.broadcast %27 : vector<1x64xf32> to vector<512x64xf32>
    %29 = arith.addf %26, %28 : vector<512x64xf32>
    %cst_14 = arith.constant 0.000000e+00 : f32
    %30 = vector.broadcast %cst_14 : f32 to vector<512x64xf32>
    %31 = arith.cmpf oge, %29, %30 : vector<512x64xf32>
    %cst_15 = arith.constant 2.000000e-01 : f32
    %32 = vector.broadcast %cst_15 : f32 to vector<512x64xf32>
    %33 = arith.mulf %32, %29 : vector<512x64xf32>
    %34 = arith.select %31, %29, %33 : vector<512x64xi1>, vector<512x64xf32>
    %c0_16 = arith.constant 0 : index
    %c0_17 = arith.constant 0 : index
    %35 = vector.load %arg6[%c0_16, %c0_17] : memref<512x64xf32, #tpu.memory_space<vmem>>, vector<512x64xf32>
    tpu.vector_store %arg6[%c0_16, %c0_17], %34 {strides = array<i32>} : memref<512x64xf32, #tpu.memory_space<vmem>>, vector<512x64xf32>,
    return
  }
  func.func @transform_0(%arg0: i32) -> (i32, i32) {
    %c0_i32 = arith.constant 0 : i32
    %c0_i32_0 = arith.constant 0 : i32
    %c0_i32_1 = arith.constant 0 : i32
    return %c0_i32, %c0_i32_0 : i32, i32
  }
  func.func @transform_1(%arg0: i32) -> (i32, i32) {
    %c0_i32 = arith.constant 0 : i32
    %c0_i32_0 = arith.constant 0 : i32
    %c0_i32_1 = arith.constant 0 : i32
    return %c0_i32, %c0_i32_0 : i32, i32
  }
  func.func @transform_2(%arg0: i32) -> (i32, i32) {
    %c0_i32 = arith.constant 0 : i32
    %c0_i32_0 = arith.constant 0 : i32
    %c0_i32_1 = arith.constant 0 : i32
    return %c0_i32, %c0_i32_0 : i32, i32
  }
  func.func @transform_3(%arg0: i32) -> (i32, i32) {
    %c0_i32 = arith.constant 0 : i32
    %c0_i32_0 = arith.constant 0 : i32
    %c0_i32_1 = arith.constant 0 : i32
    return %c0_i32, %c0_i32_0 : i32, i32
  }
  func.func @transform_4(%arg0: i32) -> (i32, i32) {
    %c0_i32 = arith.constant 0 : i32
    %c0_i32_0 = arith.constant 0 : i32
    %c0_i32_1 = arith.constant 0 : i32
    return %c0_i32, %c0_i32_0 : i32, i32
  }
  func.func @transform_5(%arg0: i32) -> (i32, i32) {
    %c0_i32 = arith.constant 0 : i32
    %c0_i32_0 = arith.constant 0 : i32
    %c0_i32_1 = arith.constant 0 : i32
    return %c0_i32, %c0_i32_0 : i32, i32
  }
}

module attributes {stable_mosaic.version = 11 : i64} {
  func.func @_gemm_bn_lrelu_kernel(%arg0: i32, %arg1: memref<128x1024xf32, #tpu.memory_space<vmem>>, %arg2: memref<1024x128xf32, #tpu.memory_space<vmem>>, %arg3: memref<1x128xf32, #tpu.memory_space<vmem>>, %arg4: memref<1x128xf32, #tpu.memory_space<vmem>>, %arg5: memref<1x128xf32, #tpu.memory_space<vmem>>, %arg6: memref<128x128xf32, #tpu.memory_space<vmem>>) attributes {dimension_semantics = [#tpu.dimension_semantics<arbitrary>], iteration_bounds = array<i64: 1>, scalar_prefetch = 0 : i64, scratch_operands = 0 : i64, tpu.core_type = #tpu.core_type<tc>, window_params = [{pipeline_mode = #tpu.pipeline_mode<synchronous>, transform_indices = @transform_0, window_bounds = array<i64: 128, 1024>}, {pipeline_mode = #tpu.pipeline_mode<synchronous>, transform_indices = @transform_1, window_bounds = array<i64: 1024, 128>}, {pipeline_mode = #tpu.pipeline_mode<synchronous>, transform_indices = @transform_2, window_bounds = array<i64: 1, 128>}, {pipeline_mode = #tpu.pipeline_mode<synchronous>, transform_indices = @transform_3, window_bounds = array<i64: 1, 128>}, {pipeline_mode = #tpu.pipeline_mode<synchronous>, transform_indices = @transform_4, window_bounds = array<i64: 1, 128>}, {pipeline_mode = #tpu.pipeline_mode<synchronous>, transform_indices = @transform_5, window_bounds = array<i64: 128, 128>}]} {
    %c0 = arith.constant 0 : index
    %c0_0 = arith.constant 0 : index
    %0 = vector.load %arg1[%c0, %c0_0] : memref<128x1024xf32, #tpu.memory_space<vmem>>, vector<128x1024xf32>
    %c0_1 = arith.constant 0 : index
    %c0_2 = arith.constant 0 : index
    %1 = vector.load %arg2[%c0_1, %c0_2] : memref<1024x128xf32, #tpu.memory_space<vmem>>, vector<1024x128xf32>
    %cst = arith.constant dense<0.000000e+00> : vector<128x128xf32>
    %2 = tpu.matmul %0, %1, %cst {dimension_numbers = #tpu.dot_dimension_numbers<[1], [0], [0], [1], [0, 0, 1, 1], [], []>} : vector<128x1024xf32>, vector<1024x128xf32>, vector<128x128xf32> -> vector<128x128xf32>
    %c0_3 = arith.constant 0 : index
    %c0_4 = arith.constant 0 : index
    %3 = vector.load %arg3[%c0_3, %c0_4] : memref<1x128xf32, #tpu.memory_space<vmem>>, vector<1x128xf32>
    %4 = vector.broadcast %3 : vector<1x128xf32> to vector<128x128xf32>
    %5 = arith.addf %2, %4 : vector<128x128xf32>
    %cst_5 = arith.constant dense<0.000000e+00> : vector<128xf32>
    %6 = vector.multi_reduction <add>, %5, %cst_5 [0] : vector<128x128xf32> to vector<128xf32>
    %7 = vector.shape_cast %6 : vector<128xf32> to vector<1x128xf32>
    %cst_6 = arith.constant 1.280000e+02 : f32
    %8 = vector.broadcast %cst_6 : f32 to vector<1x128xf32>
    %9 = arith.divf %7, %8 : vector<1x128xf32>
    %10 = vector.broadcast %9 : vector<1x128xf32> to vector<128x128xf32>
    %11 = arith.subf %5, %10 : vector<128x128xf32>
    %12 = arith.mulf %11, %11 : vector<128x128xf32>
    %cst_7 = arith.constant dense<0.000000e+00> : vector<128xf32>
    %13 = vector.multi_reduction <add>, %12, %cst_7 [0] : vector<128x128xf32> to vector<128xf32>
    %14 = vector.shape_cast %13 : vector<128xf32> to vector<1x128xf32>
    %cst_8 = arith.constant 1.280000e+02 : f32
    %15 = vector.broadcast %cst_8 : f32 to vector<1x128xf32>
    %16 = arith.divf %14, %15 : vector<1x128xf32>
    %17 = vector.broadcast %9 : vector<1x128xf32> to vector<128x128xf32>
    %18 = arith.subf %5, %17 : vector<128x128xf32>
    %cst_9 = arith.constant 9.99999974E-6 : f32
    %19 = vector.broadcast %cst_9 : f32 to vector<1x128xf32>
    %20 = arith.addf %16, %19 : vector<1x128xf32>
    %21 = math.rsqrt %20 : vector<1x128xf32>
    %22 = vector.broadcast %21 : vector<1x128xf32> to vector<128x128xf32>
    %23 = arith.mulf %18, %22 : vector<128x128xf32>
    %c0_10 = arith.constant 0 : index
    %c0_11 = arith.constant 0 : index
    %24 = vector.load %arg4[%c0_10, %c0_11] : memref<1x128xf32, #tpu.memory_space<vmem>>, vector<1x128xf32>
    %25 = vector.broadcast %24 : vector<1x128xf32> to vector<128x128xf32>
    %26 = arith.mulf %23, %25 : vector<128x128xf32>
    %c0_12 = arith.constant 0 : index
    %c0_13 = arith.constant 0 : index
    %27 = vector.load %arg5[%c0_12, %c0_13] : memref<1x128xf32, #tpu.memory_space<vmem>>, vector<1x128xf32>
    %28 = vector.broadcast %27 : vector<1x128xf32> to vector<128x128xf32>
    %29 = arith.addf %26, %28 : vector<128x128xf32>
    %cst_14 = arith.constant 0.000000e+00 : f32
    %30 = vector.broadcast %cst_14 : f32 to vector<128x128xf32>
    %31 = arith.cmpf oge, %29, %30 : vector<128x128xf32>
    %cst_15 = arith.constant 2.000000e-01 : f32
    %32 = vector.broadcast %cst_15 : f32 to vector<128x128xf32>
    %33 = arith.mulf %32, %29 : vector<128x128xf32>
    %34 = arith.select %31, %29, %33 : vector<128x128xi1>, vector<128x128xf32>
    %c0_16 = arith.constant 0 : index
    %c0_17 = arith.constant 0 : index
    %35 = vector.load %arg6[%c0_16, %c0_17] : memref<128x128xf32, #tpu.memory_space<vmem>>, vector<128x128xf32>
    tpu.vector_store %arg6[%c0_16, %c0_17], %34 {strides = array<i32>} : memref<128x128xf32, #tpu.memory_space<vmem>>, vector<128x128xf32>,
    return
  }
  func.func @transform_0(%arg0: i32) -> (i32, i32) {
    %c0_i32 = arith.constant 0 : i32
    %c0_i32_0 = arith.constant 0 : i32
    %c0_i32_1 = arith.constant 0 : i32
    return %c0_i32, %c0_i32_0 : i32, i32
  }
  func.func @transform_1(%arg0: i32) -> (i32, i32) {
    %c0_i32 = arith.constant 0 : i32
    %c0_i32_0 = arith.constant 0 : i32
    %c0_i32_1 = arith.constant 0 : i32
    return %c0_i32, %c0_i32_0 : i32, i32
  }
  func.func @transform_2(%arg0: i32) -> (i32, i32) {
    %c0_i32 = arith.constant 0 : i32
    %c0_i32_0 = arith.constant 0 : i32
    %c0_i32_1 = arith.constant 0 : i32
    return %c0_i32, %c0_i32_0 : i32, i32
  }
  func.func @transform_3(%arg0: i32) -> (i32, i32) {
    %c0_i32 = arith.constant 0 : i32
    %c0_i32_0 = arith.constant 0 : i32
    %c0_i32_1 = arith.constant 0 : i32
    return %c0_i32, %c0_i32_0 : i32, i32
  }
  func.func @transform_4(%arg0: i32) -> (i32, i32) {
    %c0_i32 = arith.constant 0 : i32
    %c0_i32_0 = arith.constant 0 : i32
    %c0_i32_1 = arith.constant 0 : i32
    return %c0_i32, %c0_i32_0 : i32, i32
  }
  func.func @transform_5(%arg0: i32) -> (i32, i32) {
    %c0_i32 = arith.constant 0 : i32
    %c0_i32_0 = arith.constant 0 : i32
    %c0_i32_1 = arith.constant 0 : i32
    return %c0_i32, %c0_i32_0 : i32, i32
  }
}

module attributes {stable_mosaic.version = 11 : i64} {
  func.func @_gemm_bn_lrelu_kernel(%arg0: i32, %arg1: memref<50x2048xf32, #tpu.memory_space<vmem>>, %arg2: memref<2048x256xf32, #tpu.memory_space<vmem>>, %arg3: memref<1x256xf32, #tpu.memory_space<vmem>>, %arg4: memref<1x256xf32, #tpu.memory_space<vmem>>, %arg5: memref<1x256xf32, #tpu.memory_space<vmem>>, %arg6: memref<50x256xf32, #tpu.memory_space<vmem>>) attributes {dimension_semantics = [#tpu.dimension_semantics<arbitrary>], iteration_bounds = array<i64: 1>, scalar_prefetch = 0 : i64, scratch_operands = 0 : i64, tpu.core_type = #tpu.core_type<tc>, window_params = [{pipeline_mode = #tpu.pipeline_mode<synchronous>, transform_indices = @transform_0, window_bounds = array<i64: 50, 2048>}, {pipeline_mode = #tpu.pipeline_mode<synchronous>, transform_indices = @transform_1, window_bounds = array<i64: 2048, 256>}, {pipeline_mode = #tpu.pipeline_mode<synchronous>, transform_indices = @transform_2, window_bounds = array<i64: 1, 256>}, {pipeline_mode = #tpu.pipeline_mode<synchronous>, transform_indices = @transform_3, window_bounds = array<i64: 1, 256>}, {pipeline_mode = #tpu.pipeline_mode<synchronous>, transform_indices = @transform_4, window_bounds = array<i64: 1, 256>}, {pipeline_mode = #tpu.pipeline_mode<synchronous>, transform_indices = @transform_5, window_bounds = array<i64: 50, 256>}]} {
    %c0 = arith.constant 0 : index
    %c0_0 = arith.constant 0 : index
    %0 = vector.load %arg1[%c0, %c0_0] : memref<50x2048xf32, #tpu.memory_space<vmem>>, vector<50x2048xf32>
    %c0_1 = arith.constant 0 : index
    %c0_2 = arith.constant 0 : index
    %1 = vector.load %arg2[%c0_1, %c0_2] : memref<2048x256xf32, #tpu.memory_space<vmem>>, vector<2048x256xf32>
    %cst = arith.constant dense<0.000000e+00> : vector<50x256xf32>
    %2 = tpu.matmul %0, %1, %cst {dimension_numbers = #tpu.dot_dimension_numbers<[1], [0], [0], [1], [0, 0, 1, 1], [], []>} : vector<50x2048xf32>, vector<2048x256xf32>, vector<50x256xf32> -> vector<50x256xf32>
    %c0_3 = arith.constant 0 : index
    %c0_4 = arith.constant 0 : index
    %3 = vector.load %arg3[%c0_3, %c0_4] : memref<1x256xf32, #tpu.memory_space<vmem>>, vector<1x256xf32>
    %4 = vector.broadcast %3 : vector<1x256xf32> to vector<50x256xf32>
    %5 = arith.addf %2, %4 : vector<50x256xf32>
    %cst_5 = arith.constant dense<0.000000e+00> : vector<256xf32>
    %6 = vector.multi_reduction <add>, %5, %cst_5 [0] : vector<50x256xf32> to vector<256xf32>
    %7 = vector.shape_cast %6 : vector<256xf32> to vector<1x256xf32>
    %cst_6 = arith.constant 5.000000e+01 : f32
    %8 = vector.broadcast %cst_6 : f32 to vector<1x256xf32>
    %9 = arith.divf %7, %8 : vector<1x256xf32>
    %10 = vector.broadcast %9 : vector<1x256xf32> to vector<50x256xf32>
    %11 = arith.subf %5, %10 : vector<50x256xf32>
    %12 = arith.mulf %11, %11 : vector<50x256xf32>
    %cst_7 = arith.constant dense<0.000000e+00> : vector<256xf32>
    %13 = vector.multi_reduction <add>, %12, %cst_7 [0] : vector<50x256xf32> to vector<256xf32>
    %14 = vector.shape_cast %13 : vector<256xf32> to vector<1x256xf32>
    %cst_8 = arith.constant 5.000000e+01 : f32
    %15 = vector.broadcast %cst_8 : f32 to vector<1x256xf32>
    %16 = arith.divf %14, %15 : vector<1x256xf32>
    %17 = vector.broadcast %9 : vector<1x256xf32> to vector<50x256xf32>
    %18 = arith.subf %5, %17 : vector<50x256xf32>
    %cst_9 = arith.constant 9.99999974E-6 : f32
    %19 = vector.broadcast %cst_9 : f32 to vector<1x256xf32>
    %20 = arith.addf %16, %19 : vector<1x256xf32>
    %21 = math.rsqrt %20 : vector<1x256xf32>
    %22 = vector.broadcast %21 : vector<1x256xf32> to vector<50x256xf32>
    %23 = arith.mulf %18, %22 : vector<50x256xf32>
    %c0_10 = arith.constant 0 : index
    %c0_11 = arith.constant 0 : index
    %24 = vector.load %arg4[%c0_10, %c0_11] : memref<1x256xf32, #tpu.memory_space<vmem>>, vector<1x256xf32>
    %25 = vector.broadcast %24 : vector<1x256xf32> to vector<50x256xf32>
    %26 = arith.mulf %23, %25 : vector<50x256xf32>
    %c0_12 = arith.constant 0 : index
    %c0_13 = arith.constant 0 : index
    %27 = vector.load %arg5[%c0_12, %c0_13] : memref<1x256xf32, #tpu.memory_space<vmem>>, vector<1x256xf32>
    %28 = vector.broadcast %27 : vector<1x256xf32> to vector<50x256xf32>
    %29 = arith.addf %26, %28 : vector<50x256xf32>
    %cst_14 = arith.constant 0.000000e+00 : f32
    %30 = vector.broadcast %cst_14 : f32 to vector<50x256xf32>
    %31 = arith.cmpf oge, %29, %30 : vector<50x256xf32>
    %cst_15 = arith.constant 2.000000e-01 : f32
    %32 = vector.broadcast %cst_15 : f32 to vector<50x256xf32>
    %33 = arith.mulf %32, %29 : vector<50x256xf32>
    %34 = arith.select %31, %29, %33 : vector<50x256xi1>, vector<50x256xf32>
    %c0_16 = arith.constant 0 : index
    %c0_17 = arith.constant 0 : index
    %35 = vector.load %arg6[%c0_16, %c0_17] : memref<50x256xf32, #tpu.memory_space<vmem>>, vector<50x256xf32>
    tpu.vector_store %arg6[%c0_16, %c0_17], %34 {strides = array<i32>} : memref<50x256xf32, #tpu.memory_space<vmem>>, vector<50x256xf32>,
    return
  }
  func.func @transform_0(%arg0: i32) -> (i32, i32) {
    %c0_i32 = arith.constant 0 : i32
    %c0_i32_0 = arith.constant 0 : i32
    %c0_i32_1 = arith.constant 0 : i32
    return %c0_i32, %c0_i32_0 : i32, i32
  }
  func.func @transform_1(%arg0: i32) -> (i32, i32) {
    %c0_i32 = arith.constant 0 : i32
    %c0_i32_0 = arith.constant 0 : i32
    %c0_i32_1 = arith.constant 0 : i32
    return %c0_i32, %c0_i32_0 : i32, i32
  }
  func.func @transform_2(%arg0: i32) -> (i32, i32) {
    %c0_i32 = arith.constant 0 : i32
    %c0_i32_0 = arith.constant 0 : i32
    %c0_i32_1 = arith.constant 0 : i32
    return %c0_i32, %c0_i32_0 : i32, i32
  }
  func.func @transform_3(%arg0: i32) -> (i32, i32) {
    %c0_i32 = arith.constant 0 : i32
    %c0_i32_0 = arith.constant 0 : i32
    %c0_i32_1 = arith.constant 0 : i32
    return %c0_i32, %c0_i32_0 : i32, i32
  }
  func.func @transform_4(%arg0: i32) -> (i32, i32) {
    %c0_i32 = arith.constant 0 : i32
    %c0_i32_0 = arith.constant 0 : i32
    %c0_i32_1 = arith.constant 0 : i32
    return %c0_i32, %c0_i32_0 : i32, i32
  }
  func.func @transform_5(%arg0: i32) -> (i32, i32) {
    %c0_i32 = arith.constant 0 : i32
    %c0_i32_0 = arith.constant 0 : i32
    %c0_i32_1 = arith.constant 0 : i32
    return %c0_i32, %c0_i32_0 : i32, i32
  }
}

module attributes {stable_mosaic.version = 11 : i64} {
  func.func @_conv_avgpool_kernel(%arg0: i32, %arg1: memref<2x8xf32, #tpu.memory_space<vmem>>, %arg2: memref<8x4096xf32, #tpu.memory_space<vmem>>, %arg3: memref<4096x1xf32, #tpu.memory_space<vmem>>, %arg4: memref<1x1xf32, #tpu.memory_space<vmem>>, %arg5: memref<2x1xf32, #tpu.memory_space<vmem>>) attributes {dimension_semantics = [#tpu.dimension_semantics<arbitrary>], iteration_bounds = array<i64: 1>, scalar_prefetch = 0 : i64, scratch_operands = 0 : i64, tpu.core_type = #tpu.core_type<tc>, window_params = [{pipeline_mode = #tpu.pipeline_mode<synchronous>, transform_indices = @transform_0, window_bounds = array<i64: 2, 8>}, {pipeline_mode = #tpu.pipeline_mode<synchronous>, transform_indices = @transform_1, window_bounds = array<i64: 8, 4096>}, {pipeline_mode = #tpu.pipeline_mode<synchronous>, transform_indices = @transform_2, window_bounds = array<i64: 4096, 1>}, {pipeline_mode = #tpu.pipeline_mode<synchronous>, transform_indices = @transform_3, window_bounds = array<i64: 1, 1>}, {pipeline_mode = #tpu.pipeline_mode<synchronous>, transform_indices = @transform_4, window_bounds = array<i64: 2, 1>}]} {
    %c0 = arith.constant 0 : index
    %c0_0 = arith.constant 0 : index
    %0 = vector.load %arg1[%c0, %c0_0] : memref<2x8xf32, #tpu.memory_space<vmem>>, vector<2x8xf32>
    %c0_1 = arith.constant 0 : index
    %c0_2 = arith.constant 0 : index
    %1 = vector.load %arg2[%c0_1, %c0_2] : memref<8x4096xf32, #tpu.memory_space<vmem>>, vector<8x4096xf32>
    %cst = arith.constant dense<0.000000e+00> : vector<2x4096xf32>
    %2 = tpu.matmul %0, %1, %cst {dimension_numbers = #tpu.dot_dimension_numbers<[1], [0], [0], [1], [0, 0, 1, 1], [], []>} : vector<2x8xf32>, vector<8x4096xf32>, vector<2x4096xf32> -> vector<2x4096xf32>
    %c0_3 = arith.constant 0 : index
    %c0_4 = arith.constant 0 : index
    %3 = vector.load %arg3[%c0_3, %c0_4] : memref<4096x1xf32, #tpu.memory_space<vmem>>, vector<4096x1xf32>
    %cst_5 = arith.constant dense<0.000000e+00> : vector<2x1xf32>
    %4 = tpu.matmul %2, %3, %cst_5 {dimension_numbers = #tpu.dot_dimension_numbers<[1], [0], [0], [1], [0, 0, 1, 1], [], []>} : vector<2x4096xf32>, vector<4096x1xf32>, vector<2x1xf32> -> vector<2x1xf32>
    %c0_6 = arith.constant 0 : index
    %c0_7 = arith.constant 0 : index
    %5 = vector.load %arg4[%c0_6, %c0_7] : memref<1x1xf32, #tpu.memory_space<vmem>>, vector<1x1xf32>
    %6 = vector.broadcast %5 : vector<1x1xf32> to vector<2x1xf32>
    %7 = arith.addf %4, %6 : vector<2x1xf32>
    %c0_8 = arith.constant 0 : index
    %c0_9 = arith.constant 0 : index
    %8 = vector.load %arg5[%c0_8, %c0_9] : memref<2x1xf32, #tpu.memory_space<vmem>>, vector<2x1xf32>
    tpu.vector_store %arg5[%c0_8, %c0_9], %7 {strides = array<i32>} : memref<2x1xf32, #tpu.memory_space<vmem>>, vector<2x1xf32>,
    return
  }
  func.func @transform_0(%arg0: i32) -> (i32, i32) {
    %c0_i32 = arith.constant 0 : i32
    %c0_i32_0 = arith.constant 0 : i32
    %c0_i32_1 = arith.constant 0 : i32
    return %c0_i32, %c0_i32_0 : i32, i32
  }
  func.func @transform_1(%arg0: i32) -> (i32, i32) {
    %c0_i32 = arith.constant 0 : i32
    %c0_i32_0 = arith.constant 0 : i32
    %c0_i32_1 = arith.constant 0 : i32
    return %c0_i32, %c0_i32_0 : i32, i32
  }
  func.func @transform_2(%arg0: i32) -> (i32, i32) {
    %c0_i32 = arith.constant 0 : i32
    %c0_i32_0 = arith.constant 0 : i32
    %c0_i32_1 = arith.constant 0 : i32
    return %c0_i32, %c0_i32_0 : i32, i32
  }
  func.func @transform_3(%arg0: i32) -> (i32, i32) {
    %c0_i32 = arith.constant 0 : i32
    %c0_i32_0 = arith.constant 0 : i32
    %c0_i32_1 = arith.constant 0 : i32
    return %c0_i32, %c0_i32_0 : i32, i32
  }
  func.func @transform_4(%arg0: i32) -> (i32, i32) {
    %c0_i32 = arith.constant 0 : i32
    %c0_i32_0 = arith.constant 0 : i32
    %c0_i32_1 = arith.constant 0 : i32
    return %c0_i32, %c0_i32_0 : i32, i32
  }
}

</mosaic_0001>

<llo_original>
// kernel: d_forward.5
$region0: #{d_forward.5}
  #allocation0 [shape = 'u32[]', space=smem, size = 0x4, offset = 0x4, fixed_abs, tag = 'smem constant byte address 0x4 - core index']
  #allocation1 [shape = 'u32[72,128]{1,0:T(1,128)}', space=vmem, size = 0x9000, scoped, tag = 'internal scratch']
  %s0 = inlined_call_operand.vmem [shape: f32[2048,16], index: 0, kind: input, shape index: {}]
  %s1 = inlined_call_operand.vmem [shape: f32[16,32], index: 1, kind: input, shape index: {}]
  %s2 = inlined_call_operand.vmem [shape: f32[1,32], index: 2, kind: input, shape index: {}]
  %s3 = inlined_call_operand.vmem [shape: f32[2048,32], index: 3, kind: output, shape index: {}]
  %s4 = sld [smem:[#allocation0]]
  $region22: #{d_forward.5} parent=0
    _
  %s6 = ssub.s32 1, %s4
  %s7 = scalar_select 0, %s6, %s4
  // Predicated region
  $region2: #{d_forward.5} parent=0 // pred_check
    _
  $region3: #{d_forward.5} parent=0 // pred_check_branch
    %9 = sbr.rel (0) target = $region5
  $region4: #{d_forward.5} parent=0 // pred_region
    _
  $region5: #{d_forward.5} parent=0 // pred_fallthru
    _
  // Predicated region
  $region6: #{d_forward.5} parent=0 // pred_check
    _
  $region7: #{d_forward.5} parent=0 // pred_check_branch
    %11 = sbr.rel (0) target = $region9
  $region8: #{d_forward.5} parent=0 // pred_region
    _
  $region9: #{d_forward.5} parent=0 // pred_fallthru
    _
  // Predicated region
  $region10: #{d_forward.5} parent=0 // pred_check
    _
  $region11: #{d_forward.5} parent=0 // pred_check_branch
    %13 = sbr.rel (0) target = $region13
  $region12: #{d_forward.5} parent=0 // pred_region
    _
  $region13: #{d_forward.5} parent=0 // pred_fallthru
    _
  %v14 = vld [vmem:[%s0] sm:$0xff]
  %v15 = vld [vmem:[%s0 + $0x8] sm:$0xff]
  %v16 = vld [vmem:[%s0 + $0x10] sm:$0xff]
  %v17 = vld [vmem:[%s0 + $0x18] sm:$0xff]
  %v18 = vld [vmem:[%s0 + $0x20] sm:$0xff]
  %v19 = vld [vmem:[%s0 + $0x28] sm:$0xff]
  %v20 = vld [vmem:[%s0 + $0x30] sm:$0xff]
  %v21 = vld [vmem:[%s0 + $0x38] sm:$0xff]
  %v22 = vld [vmem:[%s0 + $0x40] sm:$0xff]
  %v23 = vld [vmem:[%s0 + $0x48] sm:$0xff]
  %v24 = vld [vmem:[%s0 + $0x50] sm:$0xff]
  %v25 = vld [vmem:[%s0 + $0x58] sm:$0xff]
  %v26 = vld [vmem:[%s0 + $0x60] sm:$0xff]
  %v27 = vld [vmem:[%s0 + $0x68] sm:$0xff]
  %v28 = vld [vmem:[%s0 + $0x70] sm:$0xff]
  %v29 = vld [vmem:[%s0 + $0x78] sm:$0xff]
  %v30 = vld [vmem:[%s0 + $0x80] sm:$0xff]
  %v31 = vld [vmem:[%s0 + $0x88] sm:$0xff]
  %v32 = vld [vmem:[%s0 + $0x90] sm:$0xff]
  %v33 = vld [vmem:[%s0 + $0x98] sm:$0xff]
  %v34 = vld [vmem:[%s0 + $0xa0] sm:$0xff]
  %v35 = vld [vmem:[%s0 + $0xa8] sm:$0xff]
  %v36 = vld [vmem:[%s0 + $0xb0] sm:$0xff]
  %v37 = vld [vmem:[%s0 + $0xb8] sm:$0xff]
  %v38 = vld [vmem:[%s0 + $0xc0] sm:$0xff]
  %v39 = vld [vmem:[%s0 + $0xc8] sm:$0xff]
  %v40 = vld [vmem:[%s0 + $0xd0] sm:$0xff]
  %v41 = vld [vmem:[%s0 + $0xd8] sm:$0xff]
  %v42 = vld [vmem:[%s0 + $0xe0] sm:$0xff]
  %v43 = vld [vmem:[%s0 + $0xe8] sm:$0xff]
  %v44 = vld [vmem:[%s0 + $0xf0] sm:$0xff]
  %v45 = vld [vmem:[%s0 + $0xf8] sm:$0xff]
  %v46 = vld [vmem:[%s0 + $0x100] sm:$0xff]
  %v47 = vld [vmem:[%s0 + $0x108] sm:$0xff]
  %v48 = vld [vmem:[%s0 + $0x110] sm:$0xff]
  %v49 = vld [vmem:[%s0 + $0x118] sm:$0xff]
  %v50 = vld [vmem:[%s0 + $0x120] sm:$0xff]
  %v51 = vld [vmem:[%s0 + $0x128] sm:$0xff]
  %v52 = vld [vmem:[%s0 + $0x130] sm:$0xff]
  %v53 = vld [vmem:[%s0 + $0x138] sm:$0xff]
  %v54 = vld [vmem:[%s0 + $0x140] sm:$0xff]
  %v55 = vld [vmem:[%s0 + $0x148] sm:$0xff]
  %v56 = vld [vmem:[%s0 + $0x150] sm:$0xff]
  %v57 = vld [vmem:[%s0 + $0x158] sm:$0xff]
  %v58 = vld [vmem:[%s0 + $0x160] sm:$0xff]
  %v59 = vld [vmem:[%s0 + $0x168] sm:$0xff]
  %v60 = vld [vmem:[%s0 + $0x170] sm:$0xff]
  %v61 = vld [vmem:[%s0 + $0x178] sm:$0xff]
  %v62 = vld [vmem:[%s0 + $0x180] sm:$0xff]
  %v63 = vld [vmem:[%s0 + $0x188] sm:$0xff]
  %v64 = vld [vmem:[%s0 + $0x190] sm:$0xff]
  %v65 = vld [vmem:[%s0 + $0x198] sm:$0xff]
  %v66 = vld [vmem:[%s0 + $0x1a0] sm:$0xff]
  %v67 = vld [vmem:[%s0 + $0x1a8] sm:$0xff]
  %v68 = vld [vmem:[%s0 + $0x1b0] sm:$0xff]
  %v69 = vld [vmem:[%s0 + $0x1b8] sm:$0xff]
  %v70 = vld [vmem:[%s0 + $0x1c0] sm:$0xff]
  %v71 = vld [vmem:[%s0 + $0x1c8] sm:$0xff]
  %v72 = vld [vmem:[%s0 + $0x1d0] sm:$0xff]
  %v73 = vld [vmem:[%s0 + $0x1d8] sm:$0xff]
  %v74 = vld [vmem:[%s0 + $0x1e0] sm:$0xff]
  %v75 = vld [vmem:[%s0 + $0x1e8] sm:$0xff]
  %v76 = vld [vmem:[%s0 + $0x1f0] sm:$0xff]
  %v77 = vld [vmem:[%s0 + $0x1f8] sm:$0xff]
  %v78 = vld [vmem:[%s0 + $0x200] sm:$0xff]
  %v79 = vld [vmem:[%s0 + $0x208] sm:$0xff]
  %v80 = vld [vmem:[%s0 + $0x210] sm:$0xff]
  %v81 = vld [vmem:[%s0 + $0x218] sm:$0xff]
  %v82 = vld [vmem:[%s0 + $0x220] sm:$0xff]
  %v83 = vld [vmem:[%s0 + $0x228] sm:$0xff]
  %v84 = vld [vmem:[%s0 + $0x230] sm:$0xff]
  %v85 = vld [vmem:[%s0 + $0x238] sm:$0xff]
  %v86 = vld [vmem:[%s0 + $0x240] sm:$0xff]
  %v87 = vld [vmem:[%s0 + $0x248] sm:$0xff]
  %v88 = vld [vmem:[%s0 + $0x250] sm:$0xff]
  %v89 = vld [vmem:[%s0 + $0x258] sm:$0xff]
  %v90 = vld [vmem:[%s0 + $0x260] sm:$0xff]
  %v91 = vld [vmem:[%s0 + $0x268] sm:$0xff]
  %v92 = vld [vmem:[%s0 + $0x270] sm:$0xff]
  %v93 = vld [vmem:[%s0 + $0x278] sm:$0xff]
  %v94 = vld [vmem:[%s0 + $0x280] sm:$0xff]
  %v95 = vld [vmem:[%s0 + $0x288] sm:$0xff]
  %v96 = vld [vmem:[%s0 + $0x290] sm:$0xff]
  %v97 = vld [vmem:[%s0 + $0x298] sm:$0xff]
  %v98 = vld [vmem:[%s0 + $0x2a0] sm:$0xff]
  %v99 = vld [vmem:[%s0 + $0x2a8] sm:$0xff]
  %v100 = vld [vmem:[%s0 + $0x2b0] sm:$0xff]
  %v101 = vld [vmem:[%s0 + $0x2b8] sm:$0xff]
  %v102 = vld [vmem:[%s0 + $0x2c0] sm:$0xff]
  %v103 = vld [vmem:[%s0 + $0x2c8] sm:$0xff]
  %v104 = vld [vmem:[%s0 + $0x2d0] sm:$0xff]
  %v105 = vld [vmem:[%s0 + $0x2d8] sm:$0xff]
  %v106 = vld [vmem:[%s0 + $0x2e0] sm:$0xff]
  %v107 = vld [vmem:[%s0 + $0x2e8] sm:$0xff]
  %v108 = vld [vmem:[%s0 + $0x2f0] sm:$0xff]
  %v109 = vld [vmem:[%s0 + $0x2f8] sm:$0xff]
  %v110 = vld [vmem:[%s0 + $0x300] sm:$0xff]
  %v111 = vld [vmem:[%s0 + $0x308] sm:$0xff]
  %v112 = vld [vmem:[%s0 + $0x310] sm:$0xff]
  %v113 = vld [vmem:[%s0 + $0x318] sm:$0xff]
  %v114 = vld [vmem:[%s0 + $0x320] sm:$0xff]
  %v115 = vld [vmem:[%s0 + $0x328] sm:$0xff]
  %v116 = vld [vmem:[%s0 + $0x330] sm:$0xff]
  %v117 = vld [vmem:[%s0 + $0x338] sm:$0xff]
  %v118 = vld [vmem:[%s0 + $0x340] sm:$0xff]
  %v119 = vld [vmem:[%s0 + $0x348] sm:$0xff]
  %v120 = vld [vmem:[%s0 + $0x350] sm:$0xff]
  %v121 = vld [vmem:[%s0 + $0x358] sm:$0xff]
  %v122 = vld [vmem:[%s0 + $0x360] sm:$0xff]
  %v123 = vld [vmem:[%s0 + $0x368] sm:$0xff]
  %v124 = vld [vmem:[%s0 + $0x370] sm:$0xff]
  %v125 = vld [vmem:[%s0 + $0x378] sm:$0xff]
  %v126 = vld [vmem:[%s0 + $0x380] sm:$0xff]
  %v127 = vld [vmem:[%s0 + $0x388] sm:$0xff]
  %v128 = vld [vmem:[%s0 + $0x390] sm:$0xff]
  %v129 = vld [vmem:[%s0 + $0x398] sm:$0xff]
  %v130 = vld [vmem:[%s0 + $0x3a0] sm:$0xff]
  %v131 = vld [vmem:[%s0 + $0x3a8] sm:$0xff]
  %v132 = vld [vmem:[%s0 + $0x3b0] sm:$0xff]
  %v133 = vld [vmem:[%s0 + $0x3b8] sm:$0xff]
  %v134 = vld [vmem:[%s0 + $0x3c0] sm:$0xff]
  %v135 = vld [vmem:[%s0 + $0x3c8] sm:$0xff]
  %v136 = vld [vmem:[%s0 + $0x3d0] sm:$0xff]
  %v137 = vld [vmem:[%s0 + $0x3d8] sm:$0xff]
  %v138 = vld [vmem:[%s0 + $0x3e0] sm:$0xff]
  %v139 = vld [vmem:[%s0 + $0x3e8] sm:$0xff]
  %v140 = vld [vmem:[%s0 + $0x3f0] sm:$0xff]
  %v141 = vld [vmem:[%s0 + $0x3f8] sm:$0xff]
  %v142 = vld [vmem:[%s0 + $0x400] sm:$0xff]
  %v143 = vld [vmem:[%s0 + $0x408] sm:$0xff]
  %v144 = vld [vmem:[%s0 + $0x410] sm:$0xff]
  %v145 = vld [vmem:[%s0 + $0x418] sm:$0xff]
  %v146 = vld [vmem:[%s0 + $0x420] sm:$0xff]
  %v147 = vld [vmem:[%s0 + $0x428] sm:$0xff]
  %v148 = vld [vmem:[%s0 + $0x430] sm:$0xff]
  %v149 = vld [vmem:[%s0 + $0x438] sm:$0xff]
  %v150 = vld [vmem:[%s0 + $0x440] sm:$0xff]
  %v151 = vld [vmem:[%s0 + $0x448] sm:$0xff]
  %v152 = vld [vmem:[%s0 + $0x450] sm:$0xff]
  %v153 = vld [vmem:[%s0 + $0x458] sm:$0xff]
  %v154 = vld [vmem:[%s0 + $0x460] sm:$0xff]
  %v155 = vld [vmem:[%s0 + $0x468] sm:$0xff]
  %v156 = vld [vmem:[%s0 + $0x470] sm:$0xff]
  %v157 = vld [vmem:[%s0 + $0x478] sm:$0xff]
  %v158 = vld [vmem:[%s0 + $0x480] sm:$0xff]
  %v159 = vld [vmem:[%s0 + $0x488] sm:$0xff]
  %v160 = vld [vmem:[%s0 + $0x490] sm:$0xff]
  %v161 = vld [vmem:[%s0 + $0x498] sm:$0xff]
  %v162 = vld [vmem:[%s0 + $0x4a0] sm:$0xff]
  %v163 = vld [vmem:[%s0 + $0x4a8] sm:$0xff]
  %v164 = vld [vmem:[%s0 + $0x4b0] sm:$0xff]
  %v165 = vld [vmem:[%s0 + $0x4b8] sm:$0xff]
  %v166 = vld [vmem:[%s0 + $0x4c0] sm:$0xff]
  %v167 = vld [vmem:[%s0 + $0x4c8] sm:$0xff]
  %v168 = vld [vmem:[%s0 + $0x4d0] sm:$0xff]
  %v169 = vld [vmem:[%s0 + $0x4d8] sm:$0xff]
  %v170 = vld [vmem:[%s0 + $0x4e0] sm:$0xff]
  %v171 = vld [vmem:[%s0 + $0x4e8] sm:$0xff]
  %v172 = vld [vmem:[%s0 + $0x4f0] sm:$0xff]
  %v173 = vld [vmem:[%s0 + $0x4f8] sm:$0xff]
  %v174 = vld [vmem:[%s0 + $0x500] sm:$0xff]
  %v175 = vld [vmem:[%s0 + $0x508] sm:$0xff]
  %v176 = vld [vmem:[%s0 + $0x510] sm:$0xff]
  %v177 = vld [vmem:[%s0 + $0x518] sm:$0xff]
  %v178 = vld [vmem:[%s0 + $0x520] sm:$0xff]
  %v179 = vld [vmem:[%s0 + $0x528] sm:$0xff]
  %v180 = vld [vmem:[%s0 + $0x530] sm:$0xff]
  %v181 = vld [vmem:[%s0 + $0x538] sm:$0xff]
  %v182 = vld [vmem:[%s0 + $0x540] sm:$0xff]
  %v183 = vld [vmem:[%s0 + $0x548] sm:$0xff]
  %v184 = vld [vmem:[%s0 + $0x550] sm:$0xff]
  %v185 = vld [vmem:[%s0 + $0x558] sm:$0xff]
  %v186 = vld [vmem:[%s0 + $0x560] sm:$0xff]
  %v187 = vld [vmem:[%s0 + $0x568] sm:$0xff]
  %v188 = vld [vmem:[%s0 + $0x570] sm:$0xff]
  %v189 = vld [vmem:[%s0 + $0x578] sm:$0xff]
  %v190 = vld [vmem:[%s0 + $0x580] sm:$0xff]
  %v191 = vld [vmem:[%s0 + $0x588] sm:$0xff]
  %v192 = vld [vmem:[%s0 + $0x590] sm:$0xff]
  %v193 = vld [vmem:[%s0 + $0x598] sm:$0xff]
  %v194 = vld [vmem:[%s0 + $0x5a0] sm:$0xff]
  %v195 = vld [vmem:[%s0 + $0x5a8] sm:$0xff]
  %v196 = vld [vmem:[%s0 + $0x5b0] sm:$0xff]
  %v197 = vld [vmem:[%s0 + $0x5b8] sm:$0xff]
  %v198 = vld [vmem:[%s0 + $0x5c0] sm:$0xff]
  %v199 = vld [vmem:[%s0 + $0x5c8] sm:$0xff]
  %v200 = vld [vmem:[%s0 + $0x5d0] sm:$0xff]
  %v201 = vld [vmem:[%s0 + $0x5d8] sm:$0xff]
  %v202 = vld [vmem:[%s0 + $0x5e0] sm:$0xff]
  %v203 = vld [vmem:[%s0 + $0x5e8] sm:$0xff]
  %v204 = vld [vmem:[%s0 + $0x5f0] sm:$0xff]
  %v205 = vld [vmem:[%s0 + $0x5f8] sm:$0xff]
  %v206 = vld [vmem:[%s0 + $0x600] sm:$0xff]
  %v207 = vld [vmem:[%s0 + $0x608] sm:$0xff]
  %v208 = vld [vmem:[%s0 + $0x610] sm:$0xff]
  %v209 = vld [vmem:[%s0 + $0x618] sm:$0xff]
  %v210 = vld [vmem:[%s0 + $0x620] sm:$0xff]
  %v211 = vld [vmem:[%s0 + $0x628] sm:$0xff]
  %v212 = vld [vmem:[%s0 + $0x630] sm:$0xff]
  %v213 = vld [vmem:[%s0 + $0x638] sm:$0xff]
  %v214 = vld [vmem:[%s0 + $0x640] sm:$0xff]
  %v215 = vld [vmem:[%s0 + $0x648] sm:$0xff]
  %v216 = vld [vmem:[%s0 + $0x650] sm:$0xff]
  %v217 = vld [vmem:[%s0 + $0x658] sm:$0xff]
  %v218 = vld [vmem:[%s0 + $0x660] sm:$0xff]
  %v219 = vld [vmem:[%s0 + $0x668] sm:$0xff]
  %v220 = vld [vmem:[%s0 + $0x670] sm:$0xff]
  %v221 = vld [vmem:[%s0 + $0x678] sm:$0xff]
  %v222 = vld [vmem:[%s0 + $0x680] sm:$0xff]
  %v223 = vld [vmem:[%s0 + $0x688] sm:$0xff]
  %v224 = vld [vmem:[%s0 + $0x690] sm:$0xff]
  %v225 = vld [vmem:[%s0 + $0x698] sm:$0xff]
  %v226 = vld [vmem:[%s0 + $0x6a0] sm:$0xff]
  %v227 = vld [vmem:[%s0 + $0x6a8] sm:$0xff]
  %v228 = vld [vmem:[%s0 + $0x6b0] sm:$0xff]
  %v229 = vld [vmem:[%s0 + $0x6b8] sm:$0xff]
  %v230 = vld [vmem:[%s0 + $0x6c0] sm:$0xff]
  %v231 = vld [vmem:[%s0 + $0x6c8] sm:$0xff]
  %v232 = vld [vmem:[%s0 + $0x6d0] sm:$0xff]
  %v233 = vld [vmem:[%s0 + $0x6d8] sm:$0xff]
  %v234 = vld [vmem:[%s0 + $0x6e0] sm:$0xff]
  %v235 = vld [vmem:[%s0 + $0x6e8] sm:$0xff]
  %v236 = vld [vmem:[%s0 + $0x6f0] sm:$0xff]
  %v237 = vld [vmem:[%s0 + $0x6f8] sm:$0xff]
  %v238 = vld [vmem:[%s0 + $0x700] sm:$0xff]
  %v239 = vld [vmem:[%s0 + $0x708] sm:$0xff]
  %v240 = vld [vmem:[%s0 + $0x710] sm:$0xff]
  %v241 = vld [vmem:[%s0 + $0x718] sm:$0xff]
  %v242 = vld [vmem:[%s0 + $0x720] sm:$0xff]
  %v243 = vld [vmem:[%s0 + $0x728] sm:$0xff]
  %v244 = vld [vmem:[%s0 + $0x730] sm:$0xff]
  %v245 = vld [vmem:[%s0 + $0x738] sm:$0xff]
  %v246 = vld [vmem:[%s0 + $0x740] sm:$0xff]
  %v247 = vld [vmem:[%s0 + $0x748] sm:$0xff]
  %v248 = vld [vmem:[%s0 + $0x750] sm:$0xff]
  %v249 = vld [vmem:[%s0 + $0x758] sm:$0xff]
  %v250 = vld [vmem:[%s0 + $0x760] sm:$0xff]
  %v251 = vld [vmem:[%s0 + $0x768] sm:$0xff]
  %v252 = vld [vmem:[%s0 + $0x770] sm:$0xff]
  %v253 = vld [vmem:[%s0 + $0x778] sm:$0xff]
  %v254 = vld [vmem:[%s0 + $0x780] sm:$0xff]
  %v255 = vld [vmem:[%s0 + $0x788] sm:$0xff]
  %v256 = vld [vmem:[%s0 + $0x790] sm:$0xff]
  %v257 = vld [vmem:[%s0 + $0x798] sm:$0xff]
  %v258 = vld [vmem:[%s0 + $0x7a0] sm:$0xff]
  %v259 = vld [vmem:[%s0 + $0x7a8] sm:$0xff]
  %v260 = vld [vmem:[%s0 + $0x7b0] sm:$0xff]
  %v261 = vld [vmem:[%s0 + $0x7b8] sm:$0xff]
  %v262 = vld [vmem:[%s0 + $0x7c0] sm:$0xff]
  %v263 = vld [vmem:[%s0 + $0x7c8] sm:$0xff]
  %v264 = vld [vmem:[%s0 + $0x7d0] sm:$0xff]
  %v265 = vld [vmem:[%s0 + $0x7d8] sm:$0xff]
  %v266 = vld [vmem:[%s0 + $0x7e0] sm:$0xff]
  %v267 = vld [vmem:[%s0 + $0x7e8] sm:$0xff]
  %v268 = vld [vmem:[%s0 + $0x7f0] sm:$0xff]
  %v269 = vld [vmem:[%s0 + $0x7f8] sm:$0xff]
  %v270 = vld [vmem:[%s1] sm:$0xff]
  %v271 = vld [vmem:[%s1 + $0x8] sm:$0xff]
  %v272 = vld [vmem:[%s2] sm:$0x1]
  %v274 = vperm.slane %v272, 0
  %vm276 = vcmask 130048
  %v278 = vsel %vm276, %v14, 0
  %v281 = vsel %vm276, %v15, 0
  %v284 = vsel %vm276, %v16, 0
  %v287 = vsel %vm276, %v17, 0
  %v290 = vsel %vm276, %v18, 0
  %v293 = vsel %vm276, %v19, 0
  %v296 = vsel %vm276, %v20, 0
  %v299 = vsel %vm276, %v21, 0
  %v302 = vsel %vm276, %v22, 0
  %v305 = vsel %vm276, %v23, 0
  %v308 = vsel %vm276, %v24, 0
  %v311 = vsel %vm276, %v25, 0
  %v314 = vsel %vm276, %v26, 0
  %v317 = vsel %vm276, %v27, 0
  %v320 = vsel %vm276, %v28, 0
  %v323 = vsel %vm276, %v29, 0
  %v326 = vsel %vm276, %v30, 0
  %v329 = vsel %vm276, %v31, 0
  %v332 = vsel %vm276, %v32, 0
  %v335 = vsel %vm276, %v33, 0
  %v338 = vsel %vm276, %v34, 0
  %v341 = vsel %vm276, %v35, 0
  %v344 = vsel %vm276, %v36, 0
  %v347 = vsel %vm276, %v37, 0
  %v350 = vsel %vm276, %v38, 0
  %v353 = vsel %vm276, %v39, 0
  %v356 = vsel %vm276, %v40, 0
  %v359 = vsel %vm276, %v41, 0
  %v362 = vsel %vm276, %v42, 0
  %v365 = vsel %vm276, %v43, 0
  %v368 = vsel %vm276, %v44, 0
  %v371 = vsel %vm276, %v45, 0
  %v374 = vsel %vm276, %v46, 0
  %v377 = vsel %vm276, %v47, 0
  %v380 = vsel %vm276, %v48, 0
  %v383 = vsel %vm276, %v49, 0
  %v386 = vsel %vm276, %v50, 0
  %v389 = vsel %vm276, %v51, 0
  %v392 = vsel %vm276, %v52, 0
  %v395 = vsel %vm276, %v53, 0
  %v398 = vsel %vm276, %v54, 0
  %v401 = vsel %vm276, %v55, 0
  %v404 = vsel %vm276, %v56, 0
  %v407 = vsel %vm276, %v57, 0
  %v410 = vsel %vm276, %v58, 0
  %v413 = vsel %vm276, %v59, 0
  %v416 = vsel %vm276, %v60, 0
  %v419 = vsel %vm276, %v61, 0
  %v422 = vsel %vm276, %v62, 0
  %v425 = vsel %vm276, %v63, 0
  %v428 = vsel %vm276, %v64, 0
  %v431 = vsel %vm276, %v65, 0
  %v434 = vsel %vm276, %v66, 0
  %v437 = vsel %vm276, %v67, 0
  %v440 = vsel %vm276, %v68, 0
  %v443 = vsel %vm276, %v69, 0
  %v446 = vsel %vm276, %v70, 0
  %v449 = vsel %vm276, %v71, 0
  %v452 = vsel %vm276, %v72, 0
  %v455 = vsel %vm276, %v73, 0
  %v458 = vsel %vm276, %v74, 0
  %v461 = vsel %vm276, %v75, 0
  %v464 = vsel %vm276, %v76, 0
  %v467 = vsel %vm276, %v77, 0
  %v470 = vsel %vm276, %v78, 0
  %v473 = vsel %vm276, %v79, 0
  %v476 = vsel %vm276, %v80, 0
  %v479 = vsel %vm276, %v81, 0
  %v482 = vsel %vm276, %v82, 0
  %v485 = vsel %vm276, %v83, 0
  %v488 = vsel %vm276, %v84, 0
  %v491 = vsel %vm276, %v85, 0
  %v494 = vsel %vm276, %v86, 0
  %v497 = vsel %vm276, %v87, 0
  %v500 = vsel %vm276, %v88, 0
  %v503 = vsel %vm276, %v89, 0
  %v506 = vsel %vm276, %v90, 0
  %v509 = vsel %vm276, %v91, 0
  %v512 = vsel %vm276, %v92, 0
  %v515 = vsel %vm276, %v93, 0
  %v518 = vsel %vm276, %v94, 0
  %v521 = vsel %vm276, %v95, 0
  %v524 = vsel %vm276, %v96, 0
  %v527 = vsel %vm276, %v97, 0
  %v530 = vsel %vm276, %v98, 0
  %v533 = vsel %vm276, %v99, 0
  %v536 = vsel %vm276, %v100, 0
  %v539 = vsel %vm276, %v101, 0
  %v542 = vsel %vm276, %v102, 0
  %v545 = vsel %vm276, %v103, 0
  %v548 = vsel %vm276, %v104, 0
  %v551 = vsel %vm276, %v105, 0
  %v554 = vsel %vm276, %v106, 0
  %v557 = vsel %vm276, %v107, 0
  %v560 = vsel %vm276, %v108, 0
  %v563 = vsel %vm276, %v109, 0
  %v566 = vsel %vm276, %v110, 0
  %v569 = vsel %vm276, %v111, 0
  %v572 = vsel %vm276, %v112, 0
  %v575 = vsel %vm276, %v113, 0
  %v578 = vsel %vm276, %v114, 0
  %v581 = vsel %vm276, %v115, 0
  %v584 = vsel %vm276, %v116, 0
  %v587 = vsel %vm276, %v117, 0
  %v590 = vsel %vm276, %v118, 0
  %v593 = vsel %vm276, %v119, 0
  %v596 = vsel %vm276, %v120, 0
  %v599 = vsel %vm276, %v121, 0
  %v602 = vsel %vm276, %v122, 0
  %v605 = vsel %vm276, %v123, 0
  %v608 = vsel %vm276, %v124, 0
  %v611 = vsel %vm276, %v125, 0
  %v614 = vsel %vm276, %v126, 0
  %v617 = vsel %vm276, %v127, 0
  %v620 = vsel %vm276, %v128, 0
  %v623 = vsel %vm276, %v129, 0
  %v626 = vsel %vm276, %v130, 0
  %v629 = vsel %vm276, %v131, 0
  %v632 = vsel %vm276, %v132, 0
  %v635 = vsel %vm276, %v133, 0
  %v638 = vsel %vm276, %v134, 0
  %v641 = vsel %vm276, %v135, 0
  %v644 = vsel %vm276, %v136, 0
  %v647 = vsel %vm276, %v137, 0
  %v650 = vsel %vm276, %v138, 0
  %v653 = vsel %vm276, %v139, 0
  %v656 = vsel %vm276, %v140, 0
  %v659 = vsel %vm276, %v141, 0
  %v662 = vsel %vm276, %v142, 0
  %v665 = vsel %vm276, %v143, 0
  %v668 = vsel %vm276, %v144, 0
  %v671 = vsel %vm276, %v145, 0
  %v674 = vsel %vm276, %v146, 0
  %v677 = vsel %vm276, %v147, 0
  %v680 = vsel %vm276, %v148, 0
  %v683 = vsel %vm276, %v149, 0
  %v686 = vsel %vm276, %v150, 0
  %v689 = vsel %vm276, %v151, 0
  %v692 = vsel %vm276, %v152, 0
  %v695 = vsel %vm276, %v153, 0
  %v698 = vsel %vm276, %v154, 0
  %v701 = vsel %vm276, %v155, 0
  %v704 = vsel %vm276, %v156, 0
  %v707 = vsel %vm276, %v157, 0
  %v710 = vsel %vm276, %v158, 0
  %v713 = vsel %vm276, %v159, 0
  %v716 = vsel %vm276, %v160, 0
  %v719 = vsel %vm276, %v161, 0
  %v722 = vsel %vm276, %v162, 0
  %v725 = vsel %vm276, %v163, 0
  %v728 = vsel %vm276, %v164, 0
  %v731 = vsel %vm276, %v165, 0
  %v734 = vsel %vm276, %v166, 0
  %v737 = vsel %vm276, %v167, 0
  %v740 = vsel %vm276, %v168, 0
  %v743 = vsel %vm276, %v169, 0
  %v746 = vsel %vm276, %v170, 0
  %v749 = vsel %vm276, %v171, 0
  %v752 = vsel %vm276, %v172, 0
  %v755 = vsel %vm276, %v173, 0
  %v758 = vsel %vm276, %v174, 0
  %v761 = vsel %vm276, %v175, 0
  %v764 = vsel %vm276, %v176, 0
  %v767 = vsel %vm276, %v177, 0
  %v770 = vsel %vm276, %v178, 0
  %v773 = vsel %vm276, %v179, 0
  %v776 = vsel %vm276, %v180, 0
  %v779 = vsel %vm276, %v181, 0
  %v782 = vsel %vm276, %v182, 0
  %v785 = vsel %vm276, %v183, 0
  %v788 = vsel %vm276, %v184, 0
  %v791 = vsel %vm276, %v185, 0
  %v794 = vsel %vm276, %v186, 0
  %v797 = vsel %vm276, %v187, 0
  %v800 = vsel %vm276, %v188, 0
  %v803 = vsel %vm276, %v189, 0
  %v806 = vsel %vm276, %v190, 0
  %v809 = vsel %vm276, %v191, 0
  %v812 = vsel %vm276, %v192, 0
  %v815 = vsel %vm276, %v193, 0
  %v818 = vsel %vm276, %v194, 0
  %v821 = vsel %vm276, %v195, 0
  %v824 = vsel %vm276, %v196, 0
  %v827 = vsel %vm276, %v197, 0
  %v830 = vsel %vm276, %v198, 0
  %v833 = vsel %vm276, %v199, 0
  %v836 = vsel %vm276, %v200, 0
  %v839 = vsel %vm276, %v201, 0
  %v842 = vsel %vm276, %v202, 0
  %v845 = vsel %vm276, %v203, 0
  %v848 = vsel %vm276, %v204, 0
  %v851 = vsel %vm276, %v205, 0
  %v854 = vsel %vm276, %v206, 0
  %v857 = vsel %vm276, %v207, 0
  %v860 = vsel %vm276, %v208, 0
  %v863 = vsel %vm276, %v209, 0
  %v866 = vsel %vm276, %v210, 0
  %v869 = vsel %vm276, %v211, 0
  %v872 = vsel %vm276, %v212, 0
  %v875 = vsel %vm276, %v213, 0
  %v878 = vsel %vm276, %v214, 0
  %v881 = vsel %vm276, %v215, 0
  %v884 = vsel %vm276, %v216, 0
  %v887 = vsel %vm276, %v217, 0
  %v890 = vsel %vm276, %v218, 0
  %v893 = vsel %vm276, %v219, 0
  %v896 = vsel %vm276, %v220, 0
  %v899 = vsel %vm276, %v221, 0
  %v902 = vsel %vm276, %v222, 0
  %v905 = vsel %vm276, %v223, 0
  %v908 = vsel %vm276, %v224, 0
  %v911 = vsel %vm276, %v225, 0
  %v914 = vsel %vm276, %v226, 0
  %v917 = vsel %vm276, %v227, 0
  %v920 = vsel %vm276, %v228, 0
  %v923 = vsel %vm276, %v229, 0
  %v926 = vsel %vm276, %v230, 0
  %v929 = vsel %vm276, %v231, 0
  %v932 = vsel %vm276, %v232, 0
  %v935 = vsel %vm276, %v233, 0
  %v938 = vsel %vm276, %v234, 0
  %v941 = vsel %vm276, %v235, 0
  %v944 = vsel %vm276, %v236, 0
  %v947 = vsel %vm276, %v237, 0
  %v950 = vsel %vm276, %v238, 0
  %v953 = vsel %vm276, %v239, 0
  %v956 = vsel %vm276, %v240, 0
  %v959 = vsel %vm276, %v241, 0
  %v962 = vsel %vm276, %v242, 0
  %v965 = vsel %vm276, %v243, 0
  %v968 = vsel %vm276, %v244, 0
  %v971 = vsel %vm276, %v245, 0
  %v974 = vsel %vm276, %v246, 0
  %v977 = vsel %vm276, %v247, 0
  %v980 = vsel %vm276, %v248, 0
  %v983 = vsel %vm276, %v249, 0
  %v986 = vsel %vm276, %v250, 0
  %v989 = vsel %vm276, %v251, 0
  %v992 = vsel %vm276, %v252, 0
  %v995 = vsel %vm276, %v253, 0
  %v998 = vsel %vm276, %v254, 0
  %v1001 = vsel %vm276, %v255, 0
  %v1004 = vsel %vm276, %v256, 0
  %v1007 = vsel %vm276, %v257, 0
  %v1010 = vsel %vm276, %v258, 0
  %v1013 = vsel %vm276, %v259, 0
  %v1016 = vsel %vm276, %v260, 0
  %v1019 = vsel %vm276, %v261, 0
  %v1022 = vsel %vm276, %v262, 0
  %v1025 = vsel %vm276, %v263, 0
  %v1028 = vsel %vm276, %v264, 0
  %v1031 = vsel %vm276, %v265, 0
  %v1034 = vsel %vm276, %v266, 0
  %v1037 = vsel %vm276, %v267, 0
  %v1040 = vsel %vm276, %v268, 0
  %v1043 = vsel %vm276, %v269, 0
  %1045 = vmatpush.msra.mxu0 0.0
  %1046 = vmatpush.msra.mxu0 0.0
  %1047 = vmatpush.msra.mxu0 0.0
  %1048 = vmatpush.msra.mxu0 0.0
  %1049 = vmatpush.msra.mxu0 0.0
  %1050 = vmatpush.msra.mxu0 0.0
  %1051 = vmatpush.msra.mxu0 0.0
  %1052 = vmatpush.msra.mxu0 0.0
  %1053 = vmatpush.msra.mxu0 0.0
  %1054 = vmatpush.msra.mxu0 0.0
  %1055 = vmatpush.msra.mxu0 0.0
  %1056 = vmatpush.msra.mxu0 0.0
  %1057 = vmatpush.msra.mxu0 0.0
  %1058 = vmatpush.msra.mxu0 0.0
  %1059 = vmatpush.msra.mxu0 %v271
  %1060 = vmatpush.msra.mxu0 %v270
  %1061 = vmatmul.f32.gmra.mxu0 %v278
  %v1062 = vpop.f32.mrf.mxu0
  %v1063 = vadd.f32 %v274, %v1062
  %1064 = vmatmul.f32.gmra.mxu0 %v281
  %v1065 = vpop.f32.mrf.mxu0
  %v1066 = vadd.f32 %v274, %v1065
  %1067 = vmatmul.f32.gmra.mxu0 %v284
  %v1068 = vpop.f32.mrf.mxu0
  %v1069 = vadd.f32 %v274, %v1068
  %1070 = vmatmul.f32.gmra.mxu0 %v287
  %v1071 = vpop.f32.mrf.mxu0
  %v1072 = vadd.f32 %v274, %v1071
  %1073 = vmatmul.f32.gmra.mxu0 %v290
  %v1074 = vpop.f32.mrf.mxu0
  %v1075 = vadd.f32 %v274, %v1074
  %1076 = vmatmul.f32.gmra.mxu0 %v293
  %v1077 = vpop.f32.mrf.mxu0
  %v1078 = vadd.f32 %v274, %v1077
  %1079 = vmatmul.f32.gmra.mxu0 %v296
  %v1080 = vpop.f32.mrf.mxu0
  %v1081 = vadd.f32 %v274, %v1080
  %1082 = vmatmul.f32.gmra.mxu0 %v299
  %v1083 = vpop.f32.mrf.mxu0
  %v1084 = vadd.f32 %v274, %v1083
  %1085 = vmatmul.f32.gmra.mxu0 %v302
  %v1086 = vpop.f32.mrf.mxu0
  %v1087 = vadd.f32 %v274, %v1086
  %1088 = vmatmul.f32.gmra.mxu0 %v305
  %v1089 = vpop.f32.mrf.mxu0
  %v1090 = vadd.f32 %v274, %v1089
  %1091 = vmatmul.f32.gmra.mxu0 %v308
  %v1092 = vpop.f32.mrf.mxu0
  %v1093 = vadd.f32 %v274, %v1092
  %1094 = vmatmul.f32.gmra.mxu0 %v311
  %v1095 = vpop.f32.mrf.mxu0
  %v1096 = vadd.f32 %v274, %v1095
  %1097 = vmatmul.f32.gmra.mxu0 %v314
  %v1098 = vpop.f32.mrf.mxu0
  %v1099 = vadd.f32 %v274, %v1098
  %1100 = vmatmul.f32.gmra.mxu0 %v317
  %v1101 = vpop.f32.mrf.mxu0
  %v1102 = vadd.f32 %v274, %v1101
  %1103 = vmatmul.f32.gmra.mxu0 %v320
  %v1104 = vpop.f32.mrf.mxu0
  %v1105 = vadd.f32 %v274, %v1104
  %1106 = vmatmul.f32.gmra.mxu0 %v323
  %v1107 = vpop.f32.mrf.mxu0
  %v1108 = vadd.f32 %v274, %v1107
  %1109 = vmatmul.f32.gmra.mxu0 %v326
  %v1110 = vpop.f32.mrf.mxu0
  %v1111 = vadd.f32 %v274, %v1110
  %1112 = vmatmul.f32.gmra.mxu0 %v329
  %v1113 = vpop.f32.mrf.mxu0
  %v1114 = vadd.f32 %v274, %v1113
  %1115 = vmatmul.f32.gmra.mxu0 %v332
  %v1116 = vpop.f32.mrf.mxu0
  %v1117 = vadd.f32 %v274, %v1116
  %1118 = vmatmul.f32.gmra.mxu0 %v335
  %v1119 = vpop.f32.mrf.mxu0
  %v1120 = vadd.f32 %v274, %v1119
  %1121 = vmatmul.f32.gmra.mxu0 %v338
  %v1122 = vpop.f32.mrf.mxu0
  %v1123 = vadd.f32 %v274, %v1122
  %1124 = vmatmul.f32.gmra.mxu0 %v341
  %v1125 = vpop.f32.mrf.mxu0
  %v1126 = vadd.f32 %v274, %v1125
  %1127 = vmatmul.f32.gmra.mxu0 %v344
  %v1128 = vpop.f32.mrf.mxu0
  %v1129 = vadd.f32 %v274, %v1128
  %1130 = vmatmul.f32.gmra.mxu0 %v347
  %v1131 = vpop.f32.mrf.mxu0
  %v1132 = vadd.f32 %v274, %v1131
  %1133 = vmatmul.f32.gmra.mxu0 %v350
  %v1134 = vpop.f32.mrf.mxu0
  %v1135 = vadd.f32 %v274, %v1134
  %1136 = vmatmul.f32.gmra.mxu0 %v353
  %v1137 = vpop.f32.mrf.mxu0
  %v1138 = vadd.f32 %v274, %v1137
  %1139 = vmatmul.f32.gmra.mxu0 %v356
  %v1140 = vpop.f32.mrf.mxu0
  %v1141 = vadd.f32 %v274, %v1140
  %1142 = vmatmul.f32.gmra.mxu0 %v359
  %v1143 = vpop.f32.mrf.mxu0
  %v1144 = vadd.f32 %v274, %v1143
  %1145 = vmatmul.f32.gmra.mxu0 %v362
  %v1146 = vpop.f32.mrf.mxu0
  %v1147 = vadd.f32 %v274, %v1146
  %1148 = vmatmul.f32.gmra.mxu0 %v365
  %v1149 = vpop.f32.mrf.mxu0
  %v1150 = vadd.f32 %v274, %v1149
  %1151 = vmatmul.f32.gmra.mxu0 %v368
  %v1152 = vpop.f32.mrf.mxu0
  %v1153 = vadd.f32 %v274, %v1152
  %1154 = vmatmul.f32.gmra.mxu0 %v371
  %v1155 = vpop.f32.mrf.mxu0
  %v1156 = vadd.f32 %v274, %v1155
  %1157 = vmatmul.f32.gmra.mxu0 %v374
  %v1158 = vpop.f32.mrf.mxu0
  %v1159 = vadd.f32 %v274, %v1158
  %1160 = vmatmul.f32.gmra.mxu0 %v377
  %v1161 = vpop.f32.mrf.mxu0
  %v1162 = vadd.f32 %v274, %v1161
  %1163 = vmatmul.f32.gmra.mxu0 %v380
  %v1164 = vpop.f32.mrf.mxu0
  %v1165 = vadd.f32 %v274, %v1164
  %1166 = vmatmul.f32.gmra.mxu0 %v383
  %v1167 = vpop.f32.mrf.mxu0
  %v1168 = vadd.f32 %v274, %v1167
  %1169 = vmatmul.f32.gmra.mxu0 %v386
  %v1170 = vpop.f32.mrf.mxu0
  %v1171 = vadd.f32 %v274, %v1170
  %1172 = vmatmul.f32.gmra.mxu0 %v389
  %v1173 = vpop.f32.mrf.mxu0
  %v1174 = vadd.f32 %v274, %v1173
  %1175 = vmatmul.f32.gmra.mxu0 %v392
  %v1176 = vpop.f32.mrf.mxu0
  %v1177 = vadd.f32 %v274, %v1176
  %1178 = vmatmul.f32.gmra.mxu0 %v395
  %v1179 = vpop.f32.mrf.mxu0
  %v1180 = vadd.f32 %v274, %v1179
  %1181 = vmatmul.f32.gmra.mxu0 %v398
  %v1182 = vpop.f32.mrf.mxu0
  %v1183 = vadd.f32 %v274, %v1182
  %1184 = vmatmul.f32.gmra.mxu0 %v401
  %v1185 = vpop.f32.mrf.mxu0
  %v1186 = vadd.f32 %v274, %v1185
  %1187 = vmatmul.f32.gmra.mxu0 %v404
  %v1188 = vpop.f32.mrf.mxu0
  %v1189 = vadd.f32 %v274, %v1188
  %1190 = vmatmul.f32.gmra.mxu0 %v407
  %v1191 = vpop.f32.mrf.mxu0
  %v1192 = vadd.f32 %v274, %v1191
  %1193 = vmatmul.f32.gmra.mxu0 %v410
  %v1194 = vpop.f32.mrf.mxu0
  %v1195 = vadd.f32 %v274, %v1194
  %1196 = vmatmul.f32.gmra.mxu0 %v413
  %v1197 = vpop.f32.mrf.mxu0
  %v1198 = vadd.f32 %v274, %v1197
  %1199 = vmatmul.f32.gmra.mxu0 %v416
  %v1200 = vpop.f32.mrf.mxu0
  %v1201 = vadd.f32 %v274, %v1200
  %1202 = vmatmul.f32.gmra.mxu0 %v419
  %v1203 = vpop.f32.mrf.mxu0
  %v1204 = vadd.f32 %v274, %v1203
  %1205 = vmatmul.f32.gmra.mxu0 %v422
  %v1206 = vpop.f32.mrf.mxu0
  %v1207 = vadd.f32 %v274, %v1206
  %1208 = vmatmul.f32.gmra.mxu0 %v425
  %v1209 = vpop.f32.mrf.mxu0
  %v1210 = vadd.f32 %v274, %v1209
  %1211 = vmatmul.f32.gmra.mxu0 %v428
  %v1212 = vpop.f32.mrf.mxu0
  %v1213 = vadd.f32 %v274, %v1212
  %1214 = vmatmul.f32.gmra.mxu0 %v431
  %v1215 = vpop.f32.mrf.mxu0
  %v1216 = vadd.f32 %v274, %v1215
  %1217 = vmatmul.f32.gmra.mxu0 %v434
  %v1218 = vpop.f32.mrf.mxu0
  %v1219 = vadd.f32 %v274, %v1218
  %1220 = vmatmul.f32.gmra.mxu0 %v437
  %v1221 = vpop.f32.mrf.mxu0
  %v1222 = vadd.f32 %v274, %v1221
  %1223 = vmatmul.f32.gmra.mxu0 %v440
  %v1224 = vpop.f32.mrf.mxu0
  %v1225 = vadd.f32 %v274, %v1224
  %1226 = vmatmul.f32.gmra.mxu0 %v443
  %v1227 = vpop.f32.mrf.mxu0
  %v1228 = vadd.f32 %v274, %v1227
  %1229 = vmatmul.f32.gmra.mxu0 %v446
  %v1230 = vpop.f32.mrf.mxu0
  %v1231 = vadd.f32 %v274, %v1230
  %1232 = vmatmul.f32.gmra.mxu0 %v449
  %v1233 = vpop.f32.mrf.mxu0
  %v1234 = vadd.f32 %v274, %v1233
  %1235 = vmatmul.f32.gmra.mxu0 %v452
  %v1236 = vpop.f32.mrf.mxu0
  %v1237 = vadd.f32 %v274, %v1236
  %1238 = vmatmul.f32.gmra.mxu0 %v455
  %v1239 = vpop.f32.mrf.mxu0
  %v1240 = vadd.f32 %v274, %v1239
  %1241 = vmatmul.f32.gmra.mxu0 %v458
  %v1242 = vpop.f32.mrf.mxu0
  %v1243 = vadd.f32 %v274, %v1242
  %1244 = vmatmul.f32.gmra.mxu0 %v461
  %v1245 = vpop.f32.mrf.mxu0
  %v1246 = vadd.f32 %v274, %v1245
  %1247 = vmatmul.f32.gmra.mxu0 %v464
  %v1248 = vpop.f32.mrf.mxu0
  %v1249 = vadd.f32 %v274, %v1248
  %1250 = vmatmul.f32.gmra.mxu0 %v467
  %v1251 = vpop.f32.mrf.mxu0
  %v1252 = vadd.f32 %v274, %v1251
  %1253 = vmatmul.f32.gmra.mxu0 %v470
  %v1254 = vpop.f32.mrf.mxu0
  %v1255 = vadd.f32 %v274, %v1254
  %1256 = vmatmul.f32.gmra.mxu0 %v473
  %v1257 = vpop.f32.mrf.mxu0
  %v1258 = vadd.f32 %v274, %v1257
  %1259 = vmatmul.f32.gmra.mxu0 %v476
  %v1260 = vpop.f32.mrf.mxu0
  %v1261 = vadd.f32 %v274, %v1260
  %1262 = vmatmul.f32.gmra.mxu0 %v479
  %v1263 = vpop.f32.mrf.mxu0
  %v1264 = vadd.f32 %v274, %v1263
  %1265 = vmatmul.f32.gmra.mxu0 %v482
  %v1266 = vpop.f32.mrf.mxu0
  %v1267 = vadd.f32 %v274, %v1266
  %1268 = vmatmul.f32.gmra.mxu0 %v485
  %v1269 = vpop.f32.mrf.mxu0
  %v1270 = vadd.f32 %v274, %v1269
  %1271 = vmatmul.f32.gmra.mxu0 %v488
  %v1272 = vpop.f32.mrf.mxu0
  %v1273 = vadd.f32 %v274, %v1272
  %1274 = vmatmul.f32.gmra.mxu0 %v491
  %v1275 = vpop.f32.mrf.mxu0
  %v1276 = vadd.f32 %v274, %v1275
  %1277 = vmatmul.f32.gmra.mxu0 %v494
  %v1278 = vpop.f32.mrf.mxu0
  %v1279 = vadd.f32 %v274, %v1278
  %1280 = vmatmul.f32.gmra.mxu0 %v497
  %v1281 = vpop.f32.mrf.mxu0
  %v1282 = vadd.f32 %v274, %v1281
  %1283 = vmatmul.f32.gmra.mxu0 %v500
  %v1284 = vpop.f32.mrf.mxu0
  %v1285 = vadd.f32 %v274, %v1284
  %1286 = vmatmul.f32.gmra.mxu0 %v503
  %v1287 = vpop.f32.mrf.mxu0
  %v1288 = vadd.f32 %v274, %v1287
  %1289 = vmatmul.f32.gmra.mxu0 %v506
  %v1290 = vpop.f32.mrf.mxu0
  %v1291 = vadd.f32 %v274, %v1290
  %1292 = vmatmul.f32.gmra.mxu0 %v509
  %v1293 = vpop.f32.mrf.mxu0
  %v1294 = vadd.f32 %v274, %v1293
  %1295 = vmatmul.f32.gmra.mxu0 %v512
  %v1296 = vpop.f32.mrf.mxu0
  %v1297 = vadd.f32 %v274, %v1296
  %1298 = vmatmul.f32.gmra.mxu0 %v515
  %v1299 = vpop.f32.mrf.mxu0
  %v1300 = vadd.f32 %v274, %v1299
  %1301 = vmatmul.f32.gmra.mxu0 %v518
  %v1302 = vpop.f32.mrf.mxu0
  %v1303 = vadd.f32 %v274, %v1302
  %1304 = vmatmul.f32.gmra.mxu0 %v521
  %v1305 = vpop.f32.mrf.mxu0
  %v1306 = vadd.f32 %v274, %v1305
  %1307 = vmatmul.f32.gmra.mxu0 %v524
  %v1308 = vpop.f32.mrf.mxu0
  %v1309 = vadd.f32 %v274, %v1308
  %1310 = vmatmul.f32.gmra.mxu0 %v527
  %v1311 = vpop.f32.mrf.mxu0
  %v1312 = vadd.f32 %v274, %v1311
  %1313 = vmatmul.f32.gmra.mxu0 %v530
  %v1314 = vpop.f32.mrf.mxu0
  %v1315 = vadd.f32 %v274, %v1314
  %1316 = vmatmul.f32.gmra.mxu0 %v533
  %v1317 = vpop.f32.mrf.mxu0
  %v1318 = vadd.f32 %v274, %v1317
  %1319 = vmatmul.f32.gmra.mxu0 %v536
  %v1320 = vpop.f32.mrf.mxu0
  %v1321 = vadd.f32 %v274, %v1320
  %1322 = vmatmul.f32.gmra.mxu0 %v539
  %v1323 = vpop.f32.mrf.mxu0
  %v1324 = vadd.f32 %v274, %v1323
  %1325 = vmatmul.f32.gmra.mxu0 %v542
  %v1326 = vpop.f32.mrf.mxu0
  %v1327 = vadd.f32 %v274, %v1326
  %1328 = vmatmul.f32.gmra.mxu0 %v545
  %v1329 = vpop.f32.mrf.mxu0
  %v1330 = vadd.f32 %v274, %v1329
  %1331 = vmatmul.f32.gmra.mxu0 %v548
  %v1332 = vpop.f32.mrf.mxu0
  %v1333 = vadd.f32 %v274, %v1332
  %1334 = vmatmul.f32.gmra.mxu0 %v551
  %v1335 = vpop.f32.mrf.mxu0
  %v1336 = vadd.f32 %v274, %v1335
  %1337 = vmatmul.f32.gmra.mxu0 %v554
  %v1338 = vpop.f32.mrf.mxu0
  %v1339 = vadd.f32 %v274, %v1338
  %1340 = vmatmul.f32.gmra.mxu0 %v557
  %v1341 = vpop.f32.mrf.mxu0
  %v1342 = vadd.f32 %v274, %v1341
  %1343 = vmatmul.f32.gmra.mxu0 %v560
  %v1344 = vpop.f32.mrf.mxu0
  %v1345 = vadd.f32 %v274, %v1344
  %1346 = vmatmul.f32.gmra.mxu0 %v563
  %v1347 = vpop.f32.mrf.mxu0
  %v1348 = vadd.f32 %v274, %v1347
  %1349 = vmatmul.f32.gmra.mxu0 %v566
  %v1350 = vpop.f32.mrf.mxu0
  %v1351 = vadd.f32 %v274, %v1350
  %1352 = vmatmul.f32.gmra.mxu0 %v569
  %v1353 = vpop.f32.mrf.mxu0
  %v1354 = vadd.f32 %v274, %v1353
  %1355 = vmatmul.f32.gmra.mxu0 %v572
  %v1356 = vpop.f32.mrf.mxu0
  %v1357 = vadd.f32 %v274, %v1356
  %1358 = vmatmul.f32.gmra.mxu0 %v575
  %v1359 = vpop.f32.mrf.mxu0
  %v1360 = vadd.f32 %v274, %v1359
  %1361 = vmatmul.f32.gmra.mxu0 %v578
  %v1362 = vpop.f32.mrf.mxu0
  %v1363 = vadd.f32 %v274, %v1362
  %1364 = vmatmul.f32.gmra.mxu0 %v581
  %v1365 = vpop.f32.mrf.mxu0
  %v1366 = vadd.f32 %v274, %v1365
  %1367 = vmatmul.f32.gmra.mxu0 %v584
  %v1368 = vpop.f32.mrf.mxu0
  %v1369 = vadd.f32 %v274, %v1368
  %1370 = vmatmul.f32.gmra.mxu0 %v587
  %v1371 = vpop.f32.mrf.mxu0
  %v1372 = vadd.f32 %v274, %v1371
  %1373 = vmatmul.f32.gmra.mxu0 %v590
  %v1374 = vpop.f32.mrf.mxu0
  %v1375 = vadd.f32 %v274, %v1374
  %1376 = vmatmul.f32.gmra.mxu0 %v593
  %v1377 = vpop.f32.mrf.mxu0
  %v1378 = vadd.f32 %v274, %v1377
  %1379 = vmatmul.f32.gmra.mxu0 %v596
  %v1380 = vpop.f32.mrf.mxu0
  %v1381 = vadd.f32 %v274, %v1380
  %1382 = vmatmul.f32.gmra.mxu0 %v599
  %v1383 = vpop.f32.mrf.mxu0
  %v1384 = vadd.f32 %v274, %v1383
  %1385 = vmatmul.f32.gmra.mxu0 %v602
  %v1386 = vpop.f32.mrf.mxu0
  %v1387 = vadd.f32 %v274, %v1386
  %1388 = vmatmul.f32.gmra.mxu0 %v605
  %v1389 = vpop.f32.mrf.mxu0
  %v1390 = vadd.f32 %v274, %v1389
  %1391 = vmatmul.f32.gmra.mxu0 %v608
  %v1392 = vpop.f32.mrf.mxu0
  %v1393 = vadd.f32 %v274, %v1392
  %1394 = vmatmul.f32.gmra.mxu0 %v611
  %v1395 = vpop.f32.mrf.mxu0
  %v1396 = vadd.f32 %v274, %v1395
  %1397 = vmatmul.f32.gmra.mxu0 %v614
  %v1398 = vpop.f32.mrf.mxu0
  %v1399 = vadd.f32 %v274, %v1398
  %1400 = vmatmul.f32.gmra.mxu0 %v617
  %v1401 = vpop.f32.mrf.mxu0
  %v1402 = vadd.f32 %v274, %v1401
  %1403 = vmatmul.f32.gmra.mxu0 %v620
  %v1404 = vpop.f32.mrf.mxu0
  %v1405 = vadd.f32 %v274, %v1404
  %1406 = vmatmul.f32.gmra.mxu0 %v623
  %v1407 = vpop.f32.mrf.mxu0
  %v1408 = vadd.f32 %v274, %v1407
  %1409 = vmatmul.f32.gmra.mxu0 %v626
  %v1410 = vpop.f32.mrf.mxu0
  %v1411 = vadd.f32 %v274, %v1410
  %1412 = vmatmul.f32.gmra.mxu0 %v629
  %v1413 = vpop.f32.mrf.mxu0
  %v1414 = vadd.f32 %v274, %v1413
  %1415 = vmatmul.f32.gmra.mxu0 %v632
  %v1416 = vpop.f32.mrf.mxu0
  %v1417 = vadd.f32 %v274, %v1416
  %1418 = vmatmul.f32.gmra.mxu0 %v635
  %v1419 = vpop.f32.mrf.mxu0
  %v1420 = vadd.f32 %v274, %v1419
  %1421 = vmatmul.f32.gmra.mxu0 %v638
  %v1422 = vpop.f32.mrf.mxu0
  %v1423 = vadd.f32 %v274, %v1422
  %1424 = vmatmul.f32.gmra.mxu0 %v641
  %v1425 = vpop.f32.mrf.mxu0
  %v1426 = vadd.f32 %v274, %v1425
  %1427 = vmatmul.f32.gmra.mxu0 %v644
  %v1428 = vpop.f32.mrf.mxu0
  %v1429 = vadd.f32 %v274, %v1428
  %1430 = vmatmul.f32.gmra.mxu0 %v647
  %v1431 = vpop.f32.mrf.mxu0
  %v1432 = vadd.f32 %v274, %v1431
  %1433 = vmatmul.f32.gmra.mxu0 %v650
  %v1434 = vpop.f32.mrf.mxu0
  %v1435 = vadd.f32 %v274, %v1434
  %1436 = vmatmul.f32.gmra.mxu0 %v653
  %v1437 = vpop.f32.mrf.mxu0
  %v1438 = vadd.f32 %v274, %v1437
  %1439 = vmatmul.f32.gmra.mxu0 %v656
  %v1440 = vpop.f32.mrf.mxu0
  %v1441 = vadd.f32 %v274, %v1440
  %1442 = vmatmul.f32.gmra.mxu0 %v659
  %v1443 = vpop.f32.mrf.mxu0
  %v1444 = vadd.f32 %v274, %v1443
  %1445 = vmatmul.f32.gmra.mxu0 %v662
  %v1446 = vpop.f32.mrf.mxu0
  %v1447 = vadd.f32 %v274, %v1446
  %1448 = vmatmul.f32.gmra.mxu0 %v665
  %v1449 = vpop.f32.mrf.mxu0
  %v1450 = vadd.f32 %v274, %v1449
  %1451 = vmatmul.f32.gmra.mxu0 %v668
  %v1452 = vpop.f32.mrf.mxu0
  %v1453 = vadd.f32 %v274, %v1452
  %1454 = vmatmul.f32.gmra.mxu0 %v671
  %v1455 = vpop.f32.mrf.mxu0
  %v1456 = vadd.f32 %v274, %v1455
  %1457 = vmatmul.f32.gmra.mxu0 %v674
  %v1458 = vpop.f32.mrf.mxu0
  %v1459 = vadd.f32 %v274, %v1458
  %1460 = vmatmul.f32.gmra.mxu0 %v677
  %v1461 = vpop.f32.mrf.mxu0
  %v1462 = vadd.f32 %v274, %v1461
  %1463 = vmatmul.f32.gmra.mxu0 %v680
  %v1464 = vpop.f32.mrf.mxu0
  %v1465 = vadd.f32 %v274, %v1464
  %1466 = vmatmul.f32.gmra.mxu0 %v683
  %v1467 = vpop.f32.mrf.mxu0
  %v1468 = vadd.f32 %v274, %v1467
  %1469 = vmatmul.f32.gmra.mxu0 %v686
  %v1470 = vpop.f32.mrf.mxu0
  %v1471 = vadd.f32 %v274, %v1470
  %1472 = vmatmul.f32.gmra.mxu0 %v689
  %v1473 = vpop.f32.mrf.mxu0
  %v1474 = vadd.f32 %v274, %v1473
  %1475 = vmatmul.f32.gmra.mxu0 %v692
  %v1476 = vpop.f32.mrf.mxu0
  %v1477 = vadd.f32 %v274, %v1476
  %1478 = vmatmul.f32.gmra.mxu0 %v695
  %v1479 = vpop.f32.mrf.mxu0
  %v1480 = vadd.f32 %v274, %v1479
  %1481 = vmatmul.f32.gmra.mxu0 %v698
  %v1482 = vpop.f32.mrf.mxu0
  %v1483 = vadd.f32 %v274, %v1482
  %1484 = vmatmul.f32.gmra.mxu0 %v701
  %v1485 = vpop.f32.mrf.mxu0
  %v1486 = vadd.f32 %v274, %v1485
  %1487 = vmatmul.f32.gmra.mxu0 %v704
  %v1488 = vpop.f32.mrf.mxu0
  %v1489 = vadd.f32 %v274, %v1488
  %1490 = vmatmul.f32.gmra.mxu0 %v707
  %v1491 = vpop.f32.mrf.mxu0
  %v1492 = vadd.f32 %v274, %v1491
  %1493 = vmatmul.f32.gmra.mxu0 %v710
  %v1494 = vpop.f32.mrf.mxu0
  %v1495 = vadd.f32 %v274, %v1494
  %1496 = vmatmul.f32.gmra.mxu0 %v713
  %v1497 = vpop.f32.mrf.mxu0
  %v1498 = vadd.f32 %v274, %v1497
  %1499 = vmatmul.f32.gmra.mxu0 %v716
  %v1500 = vpop.f32.mrf.mxu0
  %v1501 = vadd.f32 %v274, %v1500
  %1502 = vmatmul.f32.gmra.mxu0 %v719
  %v1503 = vpop.f32.mrf.mxu0
  %v1504 = vadd.f32 %v274, %v1503
  %1505 = vmatmul.f32.gmra.mxu0 %v722
  %v1506 = vpop.f32.mrf.mxu0
  %v1507 = vadd.f32 %v274, %v1506
  %1508 = vmatmul.f32.gmra.mxu0 %v725
  %v1509 = vpop.f32.mrf.mxu0
  %v1510 = vadd.f32 %v274, %v1509
  %1511 = vmatmul.f32.gmra.mxu0 %v728
  %v1512 = vpop.f32.mrf.mxu0
  %v1513 = vadd.f32 %v274, %v1512
  %1514 = vmatmul.f32.gmra.mxu0 %v731
  %v1515 = vpop.f32.mrf.mxu0
  %v1516 = vadd.f32 %v274, %v1515
  %1517 = vmatmul.f32.gmra.mxu0 %v734
  %v1518 = vpop.f32.mrf.mxu0
  %v1519 = vadd.f32 %v274, %v1518
  %1520 = vmatmul.f32.gmra.mxu0 %v737
  %v1521 = vpop.f32.mrf.mxu0
  %v1522 = vadd.f32 %v274, %v1521
  %1523 = vmatmul.f32.gmra.mxu0 %v740
  %v1524 = vpop.f32.mrf.mxu0
  %v1525 = vadd.f32 %v274, %v1524
  %1526 = vmatmul.f32.gmra.mxu0 %v743
  %v1527 = vpop.f32.mrf.mxu0
  %v1528 = vadd.f32 %v274, %v1527
  %1529 = vmatmul.f32.gmra.mxu0 %v746
  %v1530 = vpop.f32.mrf.mxu0
  %v1531 = vadd.f32 %v274, %v1530
  %1532 = vmatmul.f32.gmra.mxu0 %v749
  %v1533 = vpop.f32.mrf.mxu0
  %v1534 = vadd.f32 %v274, %v1533
  %1535 = vmatmul.f32.gmra.mxu0 %v752
  %v1536 = vpop.f32.mrf.mxu0
  %v1537 = vadd.f32 %v274, %v1536
  %1538 = vmatmul.f32.gmra.mxu0 %v755
  %v1539 = vpop.f32.mrf.mxu0
  %v1540 = vadd.f32 %v274, %v1539
  %1541 = vmatmul.f32.gmra.mxu0 %v758
  %v1542 = vpop.f32.mrf.mxu0
  %v1543 = vadd.f32 %v274, %v1542
  %1544 = vmatmul.f32.gmra.mxu0 %v761
  %v1545 = vpop.f32.mrf.mxu0
  %v1546 = vadd.f32 %v274, %v1545
  %1547 = vmatmul.f32.gmra.mxu0 %v764
  %v1548 = vpop.f32.mrf.mxu0
  %v1549 = vadd.f32 %v274, %v1548
  %1550 = vmatmul.f32.gmra.mxu0 %v767
  %v1551 = vpop.f32.mrf.mxu0
  %v1552 = vadd.f32 %v274, %v1551
  %1553 = vmatmul.f32.gmra.mxu0 %v770
  %v1554 = vpop.f32.mrf.mxu0
  %v1555 = vadd.f32 %v274, %v1554
  %1556 = vmatmul.f32.gmra.mxu0 %v773
  %v1557 = vpop.f32.mrf.mxu0
  %v1558 = vadd.f32 %v274, %v1557
  %1559 = vmatmul.f32.gmra.mxu0 %v776
  %v1560 = vpop.f32.mrf.mxu0
  %v1561 = vadd.f32 %v274, %v1560
  %1562 = vmatmul.f32.gmra.mxu0 %v779
  %v1563 = vpop.f32.mrf.mxu0
  %v1564 = vadd.f32 %v274, %v1563
  %1565 = vmatmul.f32.gmra.mxu0 %v782
  %v1566 = vpop.f32.mrf.mxu0
  %v1567 = vadd.f32 %v274, %v1566
  %1568 = vmatmul.f32.gmra.mxu0 %v785
  %v1569 = vpop.f32.mrf.mxu0
  %v1570 = vadd.f32 %v274, %v1569
  %1571 = vmatmul.f32.gmra.mxu0 %v788
  %v1572 = vpop.f32.mrf.mxu0
  %v1573 = vadd.f32 %v274, %v1572
  %1574 = vmatmul.f32.gmra.mxu0 %v791
  %v1575 = vpop.f32.mrf.mxu0
  %v1576 = vadd.f32 %v274, %v1575
  %1577 = vmatmul.f32.gmra.mxu0 %v794
  %v1578 = vpop.f32.mrf.mxu0
  %v1579 = vadd.f32 %v274, %v1578
  %1580 = vmatmul.f32.gmra.mxu0 %v797
  %v1581 = vpop.f32.mrf.mxu0
  %v1582 = vadd.f32 %v274, %v1581
  %1583 = vmatmul.f32.gmra.mxu0 %v800
  %v1584 = vpop.f32.mrf.mxu0
  %v1585 = vadd.f32 %v274, %v1584
  %1586 = vmatmul.f32.gmra.mxu0 %v803
  %v1587 = vpop.f32.mrf.mxu0
  %v1588 = vadd.f32 %v274, %v1587
  %1589 = vmatmul.f32.gmra.mxu0 %v806
  %v1590 = vpop.f32.mrf.mxu0
  %v1591 = vadd.f32 %v274, %v1590
  %1592 = vmatmul.f32.gmra.mxu0 %v809
  %v1593 = vpop.f32.mrf.mxu0
  %v1594 = vadd.f32 %v274, %v1593
  %1595 = vmatmul.f32.gmra.mxu0 %v812
  %v1596 = vpop.f32.mrf.mxu0
  %v1597 = vadd.f32 %v274, %v1596
  %1598 = vmatmul.f32.gmra.mxu0 %v815
  %v1599 = vpop.f32.mrf.mxu0
  %v1600 = vadd.f32 %v274, %v1599
  %1601 = vmatmul.f32.gmra.mxu0 %v818
  %v1602 = vpop.f32.mrf.mxu0
  %v1603 = vadd.f32 %v274, %v1602
  %1604 = vmatmul.f32.gmra.mxu0 %v821
  %v1605 = vpop.f32.mrf.mxu0
  %v1606 = vadd.f32 %v274, %v1605
  %1607 = vmatmul.f32.gmra.mxu0 %v824
  %v1608 = vpop.f32.mrf.mxu0
  %v1609 = vadd.f32 %v274, %v1608
  %1610 = vmatmul.f32.gmra.mxu0 %v827
  %v1611 = vpop.f32.mrf.mxu0
  %v1612 = vadd.f32 %v274, %v1611
  %1613 = vmatmul.f32.gmra.mxu0 %v830
  %v1614 = vpop.f32.mrf.mxu0
  %v1615 = vadd.f32 %v274, %v1614
  %1616 = vmatmul.f32.gmra.mxu0 %v833
  %v1617 = vpop.f32.mrf.mxu0
  %v1618 = vadd.f32 %v274, %v1617
  %1619 = vmatmul.f32.gmra.mxu0 %v836
  %v1620 = vpop.f32.mrf.mxu0
  %v1621 = vadd.f32 %v274, %v1620
  %1622 = vmatmul.f32.gmra.mxu0 %v839
  %v1623 = vpop.f32.mrf.mxu0
  %v1624 = vadd.f32 %v274, %v1623
  %1625 = vmatmul.f32.gmra.mxu0 %v842
  %v1626 = vpop.f32.mrf.mxu0
  %v1627 = vadd.f32 %v274, %v1626
  %1628 = vmatmul.f32.gmra.mxu0 %v845
  %v1629 = vpop.f32.mrf.mxu0
  %v1630 = vadd.f32 %v274, %v1629
  %1631 = vmatmul.f32.gmra.mxu0 %v848
  %v1632 = vpop.f32.mrf.mxu0
  %v1633 = vadd.f32 %v274, %v1632
  %1634 = vmatmul.f32.gmra.mxu0 %v851
  %v1635 = vpop.f32.mrf.mxu0
  %v1636 = vadd.f32 %v274, %v1635
  %1637 = vmatmul.f32.gmra.mxu0 %v854
  %v1638 = vpop.f32.mrf.mxu0
  %v1639 = vadd.f32 %v274, %v1638
  %1640 = vmatmul.f32.gmra.mxu0 %v857
  %v1641 = vpop.f32.mrf.mxu0
  %v1642 = vadd.f32 %v274, %v1641
  %1643 = vmatmul.f32.gmra.mxu0 %v860
  %v1644 = vpop.f32.mrf.mxu0
  %v1645 = vadd.f32 %v274, %v1644
  %1646 = vmatmul.f32.gmra.mxu0 %v863
  %v1647 = vpop.f32.mrf.mxu0
  %v1648 = vadd.f32 %v274, %v1647
  %1649 = vmatmul.f32.gmra.mxu0 %v866
  %v1650 = vpop.f32.mrf.mxu0
  %v1651 = vadd.f32 %v274, %v1650
  %1652 = vmatmul.f32.gmra.mxu0 %v869
  %v1653 = vpop.f32.mrf.mxu0
  %v1654 = vadd.f32 %v274, %v1653
  %1655 = vmatmul.f32.gmra.mxu0 %v872
  %v1656 = vpop.f32.mrf.mxu0
  %v1657 = vadd.f32 %v274, %v1656
  %1658 = vmatmul.f32.gmra.mxu0 %v875
  %v1659 = vpop.f32.mrf.mxu0
  %v1660 = vadd.f32 %v274, %v1659
  %1661 = vmatmul.f32.gmra.mxu0 %v878
  %v1662 = vpop.f32.mrf.mxu0
  %v1663 = vadd.f32 %v274, %v1662
  %1664 = vmatmul.f32.gmra.mxu0 %v881
  %v1665 = vpop.f32.mrf.mxu0
  %v1666 = vadd.f32 %v274, %v1665
  %1667 = vmatmul.f32.gmra.mxu0 %v884
  %v1668 = vpop.f32.mrf.mxu0
  %v1669 = vadd.f32 %v274, %v1668
  %1670 = vmatmul.f32.gmra.mxu0 %v887
  %v1671 = vpop.f32.mrf.mxu0
  %v1672 = vadd.f32 %v274, %v1671
  %1673 = vmatmul.f32.gmra.mxu0 %v890
  %v1674 = vpop.f32.mrf.mxu0
  %v1675 = vadd.f32 %v274, %v1674
  %1676 = vmatmul.f32.gmra.mxu0 %v893
  %v1677 = vpop.f32.mrf.mxu0
  %v1678 = vadd.f32 %v274, %v1677
  %1679 = vmatmul.f32.gmra.mxu0 %v896
  %v1680 = vpop.f32.mrf.mxu0
  %v1681 = vadd.f32 %v274, %v1680
  %1682 = vmatmul.f32.gmra.mxu0 %v899
  %v1683 = vpop.f32.mrf.mxu0
  %v1684 = vadd.f32 %v274, %v1683
  %1685 = vmatmul.f32.gmra.mxu0 %v902
  %v1686 = vpop.f32.mrf.mxu0
  %v1687 = vadd.f32 %v274, %v1686
  %1688 = vmatmul.f32.gmra.mxu0 %v905
  %v1689 = vpop.f32.mrf.mxu0
  %v1690 = vadd.f32 %v274, %v1689
  %1691 = vmatmul.f32.gmra.mxu0 %v908
  %v1692 = vpop.f32.mrf.mxu0
  %v1693 = vadd.f32 %v274, %v1692
  %1694 = vmatmul.f32.gmra.mxu0 %v911
  %v1695 = vpop.f32.mrf.mxu0
  %v1696 = vadd.f32 %v274, %v1695
  %1697 = vmatmul.f32.gmra.mxu0 %v914
  %v1698 = vpop.f32.mrf.mxu0
  %v1699 = vadd.f32 %v274, %v1698
  %1700 = vmatmul.f32.gmra.mxu0 %v917
  %v1701 = vpop.f32.mrf.mxu0
  %v1702 = vadd.f32 %v274, %v1701
  %1703 = vmatmul.f32.gmra.mxu0 %v920
  %v1704 = vpop.f32.mrf.mxu0
  %v1705 = vadd.f32 %v274, %v1704
  %1706 = vmatmul.f32.gmra.mxu0 %v923
  %v1707 = vpop.f32.mrf.mxu0
  %v1708 = vadd.f32 %v274, %v1707
  %1709 = vmatmul.f32.gmra.mxu0 %v926
  %v1710 = vpop.f32.mrf.mxu0
  %v1711 = vadd.f32 %v274, %v1710
  %1712 = vmatmul.f32.gmra.mxu0 %v929
  %v1713 = vpop.f32.mrf.mxu0
  %v1714 = vadd.f32 %v274, %v1713
  %1715 = vmatmul.f32.gmra.mxu0 %v932
  %v1716 = vpop.f32.mrf.mxu0
  %v1717 = vadd.f32 %v274, %v1716
  %1718 = vmatmul.f32.gmra.mxu0 %v935
  %v1719 = vpop.f32.mrf.mxu0
  %v1720 = vadd.f32 %v274, %v1719
  %1721 = vmatmul.f32.gmra.mxu0 %v938
  %v1722 = vpop.f32.mrf.mxu0
  %v1723 = vadd.f32 %v274, %v1722
  %1724 = vmatmul.f32.gmra.mxu0 %v941
  %v1725 = vpop.f32.mrf.mxu0
  %v1726 = vadd.f32 %v274, %v1725
  %1727 = vmatmul.f32.gmra.mxu0 %v944
  %v1728 = vpop.f32.mrf.mxu0
  %v1729 = vadd.f32 %v274, %v1728
  %1730 = vmatmul.f32.gmra.mxu0 %v947
  %v1731 = vpop.f32.mrf.mxu0
  %v1732 = vadd.f32 %v274, %v1731
  %1733 = vmatmul.f32.gmra.mxu0 %v950
  %v1734 = vpop.f32.mrf.mxu0
  %v1735 = vadd.f32 %v274, %v1734
  %1736 = vmatmul.f32.gmra.mxu0 %v953
  %v1737 = vpop.f32.mrf.mxu0
  %v1738 = vadd.f32 %v274, %v1737
  %1739 = vmatmul.f32.gmra.mxu0 %v956
  %v1740 = vpop.f32.mrf.mxu0
  %v1741 = vadd.f32 %v274, %v1740
  %1742 = vmatmul.f32.gmra.mxu0 %v959
  %v1743 = vpop.f32.mrf.mxu0
  %v1744 = vadd.f32 %v274, %v1743
  %1745 = vmatmul.f32.gmra.mxu0 %v962
  %v1746 = vpop.f32.mrf.mxu0
  %v1747 = vadd.f32 %v274, %v1746
  %1748 = vmatmul.f32.gmra.mxu0 %v965
  %v1749 = vpop.f32.mrf.mxu0
  %v1750 = vadd.f32 %v274, %v1749
  %1751 = vmatmul.f32.gmra.mxu0 %v968
  %v1752 = vpop.f32.mrf.mxu0
  %v1753 = vadd.f32 %v274, %v1752
  %1754 = vmatmul.f32.gmra.mxu0 %v971
  %v1755 = vpop.f32.mrf.mxu0
  %v1756 = vadd.f32 %v274, %v1755
  %1757 = vmatmul.f32.gmra.mxu0 %v974
  %v1758 = vpop.f32.mrf.mxu0
  %v1759 = vadd.f32 %v274, %v1758
  %1760 = vmatmul.f32.gmra.mxu0 %v977
  %v1761 = vpop.f32.mrf.mxu0
  %v1762 = vadd.f32 %v274, %v1761
  %1763 = vmatmul.f32.gmra.mxu0 %v980
  %v1764 = vpop.f32.mrf.mxu0
  %v1765 = vadd.f32 %v274, %v1764
  %1766 = vmatmul.f32.gmra.mxu0 %v983
  %v1767 = vpop.f32.mrf.mxu0
  %v1768 = vadd.f32 %v274, %v1767
  %1769 = vmatmul.f32.gmra.mxu0 %v986
  %v1770 = vpop.f32.mrf.mxu0
  %v1771 = vadd.f32 %v274, %v1770
  %1772 = vmatmul.f32.gmra.mxu0 %v989
  %v1773 = vpop.f32.mrf.mxu0
  %v1774 = vadd.f32 %v274, %v1773
  %1775 = vmatmul.f32.gmra.mxu0 %v992
  %v1776 = vpop.f32.mrf.mxu0
  %v1777 = vadd.f32 %v274, %v1776
  %1778 = vmatmul.f32.gmra.mxu0 %v995
  %v1779 = vpop.f32.mrf.mxu0
  %v1780 = vadd.f32 %v274, %v1779
  %1781 = vmatmul.f32.gmra.mxu0 %v998
  %v1782 = vpop.f32.mrf.mxu0
  %v1783 = vadd.f32 %v274, %v1782
  %1784 = vmatmul.f32.gmra.mxu0 %v1001
  %v1785 = vpop.f32.mrf.mxu0
  %v1786 = vadd.f32 %v274, %v1785
  %1787 = vmatmul.f32.gmra.mxu0 %v1004
  %v1788 = vpop.f32.mrf.mxu0
  %v1789 = vadd.f32 %v274, %v1788
  %1790 = vmatmul.f32.gmra.mxu0 %v1007
  %v1791 = vpop.f32.mrf.mxu0
  %v1792 = vadd.f32 %v274, %v1791
  %1793 = vmatmul.f32.gmra.mxu0 %v1010
  %v1794 = vpop.f32.mrf.mxu0
  %v1795 = vadd.f32 %v274, %v1794
  %1796 = vmatmul.f32.gmra.mxu0 %v1013
  %v1797 = vpop.f32.mrf.mxu0
  %v1798 = vadd.f32 %v274, %v1797
  %1799 = vmatmul.f32.gmra.mxu0 %v1016
  %v1800 = vpop.f32.mrf.mxu0
  %v1801 = vadd.f32 %v274, %v1800
  %1802 = vmatmul.f32.gmra.mxu0 %v1019
  %v1803 = vpop.f32.mrf.mxu0
  %v1804 = vadd.f32 %v274, %v1803
  %1805 = vmatmul.f32.gmra.mxu0 %v1022
  %v1806 = vpop.f32.mrf.mxu0
  %v1807 = vadd.f32 %v274, %v1806
  %1808 = vmatmul.f32.gmra.mxu0 %v1025
  %v1809 = vpop.f32.mrf.mxu0
  %v1810 = vadd.f32 %v274, %v1809
  %1811 = vmatmul.f32.gmra.mxu0 %v1028
  %v1812 = vpop.f32.mrf.mxu0
  %v1813 = vadd.f32 %v274, %v1812
  %1814 = vmatmul.f32.gmra.mxu0 %v1031
  %v1815 = vpop.f32.mrf.mxu0
  %v1816 = vadd.f32 %v274, %v1815
  %1817 = vmatmul.f32.gmra.mxu0 %v1034
  %v1818 = vpop.f32.mrf.mxu0
  %v1819 = vadd.f32 %v274, %v1818
  %1820 = vmatmul.f32.gmra.mxu0 %v1037
  %v1821 = vpop.f32.mrf.mxu0
  %v1822 = vadd.f32 %v274, %v1821
  %1823 = vmatmul.f32.gmra.mxu0 %v1040
  %v1824 = vpop.f32.mrf.mxu0
  %v1825 = vadd.f32 %v274, %v1824
  %1826 = vmatmul.f32.gmra.mxu0 %v1043
  %v1827 = vpop.f32.mrf.mxu0
  %v1828 = vadd.f32 %v274, %v1827
  %1829 = vdwg.mxu0
  %vm1830 = vcmp.ge.f32.partialorder %v1063, 0.0
  %vm1831 = vcmp.ge.f32.partialorder %v1066, 0.0
  %vm1832 = vcmp.ge.f32.partialorder %v1069, 0.0
  %vm1833 = vcmp.ge.f32.partialorder %v1072, 0.0
  %vm1834 = vcmp.ge.f32.partialorder %v1075, 0.0
  %vm1835 = vcmp.ge.f32.partialorder %v1078, 0.0
  %vm1836 = vcmp.ge.f32.partialorder %v1081, 0.0
  %vm1837 = vcmp.ge.f32.partialorder %v1084, 0.0
  %vm1838 = vcmp.ge.f32.partialorder %v1087, 0.0
  %vm1839 = vcmp.ge.f32.partialorder %v1090, 0.0
  %vm1840 = vcmp.ge.f32.partialorder %v1093, 0.0
  %vm1841 = vcmp.ge.f32.partialorder %v1096, 0.0
  %vm1842 = vcmp.ge.f32.partialorder %v1099, 0.0
  %vm1843 = vcmp.ge.f32.partialorder %v1102, 0.0
  %vm1844 = vcmp.ge.f32.partialorder %v1105, 0.0
  %vm1845 = vcmp.ge.f32.partialorder %v1108, 0.0
  %vm1846 = vcmp.ge.f32.partialorder %v1111, 0.0
  %vm1847 = vcmp.ge.f32.partialorder %v1114, 0.0
  %vm1848 = vcmp.ge.f32.partialorder %v1117, 0.0
  %vm1849 = vcmp.ge.f32.partialorder %v1120, 0.0
  %vm1850 = vcmp.ge.f32.partialorder %v1123, 0.0
  %vm1851 = vcmp.ge.f32.partialorder %v1126, 0.0
  %vm1852 = vcmp.ge.f32.partialorder %v1129, 0.0
  %vm1853 = vcmp.ge.f32.partialorder %v1132, 0.0
  %vm1854 = vcmp.ge.f32.partialorder %v1135, 0.0
  %vm1855 = vcmp.ge.f32.partialorder %v1138, 0.0
  %vm1856 = vcmp.ge.f32.partialorder %v1141, 0.0
  %vm1857 = vcmp.ge.f32.partialorder %v1144, 0.0
  %vm1858 = vcmp.ge.f32.partialorder %v1147, 0.0
  %vm1859 = vcmp.ge.f32.partialorder %v1150, 0.0
  %vm1860 = vcmp.ge.f32.partialorder %v1153, 0.0
  %vm1861 = vcmp.ge.f32.partialorder %v1156, 0.0
  %vm1862 = vcmp.ge.f32.partialorder %v1159, 0.0
  %vm1863 = vcmp.ge.f32.partialorder %v1162, 0.0
  %vm1864 = vcmp.ge.f32.partialorder %v1165, 0.0
  %vm1865 = vcmp.ge.f32.partialorder %v1168, 0.0
  %vm1866 = vcmp.ge.f32.partialorder %v1171, 0.0
  %vm1867 = vcmp.ge.f32.partialorder %v1174, 0.0
  %vm1868 = vcmp.ge.f32.partialorder %v1177, 0.0
  %vm1869 = vcmp.ge.f32.partialorder %v1180, 0.0
  %vm1870 = vcmp.ge.f32.partialorder %v1183, 0.0
  %vm1871 = vcmp.ge.f32.partialorder %v1186, 0.0
  %vm1872 = vcmp.ge.f32.partialorder %v1189, 0.0
  %vm1873 = vcmp.ge.f32.partialorder %v1192, 0.0
  %vm1874 = vcmp.ge.f32.partialorder %v1195, 0.0
  %vm1875 = vcmp.ge.f32.partialorder %v1198, 0.0
  %vm1876 = vcmp.ge.f32.partialorder %v1201, 0.0
  %vm1877 = vcmp.ge.f32.partialorder %v1204, 0.0
  %vm1878 = vcmp.ge.f32.partialorder %v1207, 0.0
  %vm1879 = vcmp.ge.f32.partialorder %v1210, 0.0
  %vm1880 = vcmp.ge.f32.partialorder %v1213, 0.0
  %vm1881 = vcmp.ge.f32.partialorder %v1216, 0.0
  %vm1882 = vcmp.ge.f32.partialorder %v1219, 0.0
  %vm1883 = vcmp.ge.f32.partialorder %v1222, 0.0
  %vm1884 = vcmp.ge.f32.partialorder %v1225, 0.0
  %vm1885 = vcmp.ge.f32.partialorder %v1228, 0.0
  %vm1886 = vcmp.ge.f32.partialorder %v1231, 0.0
  %vm1887 = vcmp.ge.f32.partialorder %v1234, 0.0
  %vm1888 = vcmp.ge.f32.partialorder %v1237, 0.0
  %vm1889 = vcmp.ge.f32.partialorder %v1240, 0.0
  %vm1890 = vcmp.ge.f32.partialorder %v1243, 0.0
  %vm1891 = vcmp.ge.f32.partialorder %v1246, 0.0
  %vm1892 = vcmp.ge.f32.partialorder %v1249, 0.0
  %vm1893 = vcmp.ge.f32.partialorder %v1252, 0.0
  %vm1894 = vcmp.ge.f32.partialorder %v1255, 0.0
  %vm1895 = vcmp.ge.f32.partialorder %v1258, 0.0
  %vm1896 = vcmp.ge.f32.partialorder %v1261, 0.0
  %vm1897 = vcmp.ge.f32.partialorder %v1264, 0.0
  %vm1898 = vcmp.ge.f32.partialorder %v1267, 0.0
  %vm1899 = vcmp.ge.f32.partialorder %v1270, 0.0
  %vm1900 = vcmp.ge.f32.partialorder %v1273, 0.0
  %vm1901 = vcmp.ge.f32.partialorder %v1276, 0.0
  %vm1902 = vcmp.ge.f32.partialorder %v1279, 0.0
  %vm1903 = vcmp.ge.f32.partialorder %v1282, 0.0
  %vm1904 = vcmp.ge.f32.partialorder %v1285, 0.0
  %vm1905 = vcmp.ge.f32.partialorder %v1288, 0.0
  %vm1906 = vcmp.ge.f32.partialorder %v1291, 0.0
  %vm1907 = vcmp.ge.f32.partialorder %v1294, 0.0
  %vm1908 = vcmp.ge.f32.partialorder %v1297, 0.0
  %vm1909 = vcmp.ge.f32.partialorder %v1300, 0.0
  %vm1910 = vcmp.ge.f32.partialorder %v1303, 0.0
  %vm1911 = vcmp.ge.f32.partialorder %v1306, 0.0
  %vm1912 = vcmp.ge.f32.partialorder %v1309, 0.0
  %vm1913 = vcmp.ge.f32.partialorder %v1312, 0.0
  %vm1914 = vcmp.ge.f32.partialorder %v1315, 0.0
  %vm1915 = vcmp.ge.f32.partialorder %v1318, 0.0
  %vm1916 = vcmp.ge.f32.partialorder %v1321, 0.0
  %vm1917 = vcmp.ge.f32.partialorder %v1324, 0.0
  %vm1918 = vcmp.ge.f32.partialorder %v1327, 0.0
  %vm1919 = vcmp.ge.f32.partialorder %v1330, 0.0
  %vm1920 = vcmp.ge.f32.partialorder %v1333, 0.0
  %vm1921 = vcmp.ge.f32.partialorder %v1336, 0.0
  %vm1922 = vcmp.ge.f32.partialorder %v1339, 0.0
  %vm1923 = vcmp.ge.f32.partialorder %v1342, 0.0
  %vm1924 = vcmp.ge.f32.partialorder %v1345, 0.0
  %vm1925 = vcmp.ge.f32.partialorder %v1348, 0.0
  %vm1926 = vcmp.ge.f32.partialorder %v1351, 0.0
  %vm1927 = vcmp.ge.f32.partialorder %v1354, 0.0
  %vm1928 = vcmp.ge.f32.partialorder %v1357, 0.0
  %vm1929 = vcmp.ge.f32.partialorder %v1360, 0.0
  %vm1930 = vcmp.ge.f32.partialorder %v1363, 0.0
  %vm1931 = vcmp.ge.f32.partialorder %v1366, 0.0
  %vm1932 = vcmp.ge.f32.partialorder %v1369, 0.0
  %vm1933 = vcmp.ge.f32.partialorder %v1372, 0.0
  %vm1934 = vcmp.ge.f32.partialorder %v1375, 0.0
  %vm1935 = vcmp.ge.f32.partialorder %v1378, 0.0
  %vm1936 = vcmp.ge.f32.partialorder %v1381, 0.0
  %vm1937 = vcmp.ge.f32.partialorder %v1384, 0.0
  %vm1938 = vcmp.ge.f32.partialorder %v1387, 0.0
  %vm1939 = vcmp.ge.f32.partialorder %v1390, 0.0
  %vm1940 = vcmp.ge.f32.partialorder %v1393, 0.0
  %vm1941 = vcmp.ge.f32.partialorder %v1396, 0.0
  %vm1942 = vcmp.ge.f32.partialorder %v1399, 0.0
  %vm1943 = vcmp.ge.f32.partialorder %v1402, 0.0
  %vm1944 = vcmp.ge.f32.partialorder %v1405, 0.0
  %vm1945 = vcmp.ge.f32.partialorder %v1408, 0.0
  %vm1946 = vcmp.ge.f32.partialorder %v1411, 0.0
  %vm1947 = vcmp.ge.f32.partialorder %v1414, 0.0
  %vm1948 = vcmp.ge.f32.partialorder %v1417, 0.0
  %vm1949 = vcmp.ge.f32.partialorder %v1420, 0.0
  %vm1950 = vcmp.ge.f32.partialorder %v1423, 0.0
  %vm1951 = vcmp.ge.f32.partialorder %v1426, 0.0
  %vm1952 = vcmp.ge.f32.partialorder %v1429, 0.0
  %vm1953 = vcmp.ge.f32.partialorder %v1432, 0.0
  %vm1954 = vcmp.ge.f32.partialorder %v1435, 0.0
  %vm1955 = vcmp.ge.f32.partialorder %v1438, 0.0
  %vm1956 = vcmp.ge.f32.partialorder %v1441, 0.0
  %vm1957 = vcmp.ge.f32.partialorder %v1444, 0.0
  %vm1958 = vcmp.ge.f32.partialorder %v1447, 0.0
  %vm1959 = vcmp.ge.f32.partialorder %v1450, 0.0
  %vm1960 = vcmp.ge.f32.partialorder %v1453, 0.0
  %vm1961 = vcmp.ge.f32.partialorder %v1456, 0.0
  %vm1962 = vcmp.ge.f32.partialorder %v1459, 0.0
  %vm1963 = vcmp.ge.f32.partialorder %v1462, 0.0
  %vm1964 = vcmp.ge.f32.partialorder %v1465, 0.0
  %vm1965 = vcmp.ge.f32.partialorder %v1468, 0.0
  %vm1966 = vcmp.ge.f32.partialorder %v1471, 0.0
  %vm1967 = vcmp.ge.f32.partialorder %v1474, 0.0
  %vm1968 = vcmp.ge.f32.partialorder %v1477, 0.0
  %vm1969 = vcmp.ge.f32.partialorder %v1480, 0.0
  %vm1970 = vcmp.ge.f32.partialorder %v1483, 0.0
  %vm1971 = vcmp.ge.f32.partialorder %v1486, 0.0
  %vm1972 = vcmp.ge.f32.partialorder %v1489, 0.0
  %vm1973 = vcmp.ge.f32.partialorder %v1492, 0.0
  %vm1974 = vcmp.ge.f32.partialorder %v1495, 0.0
  %vm1975 = vcmp.ge.f32.partialorder %v1498, 0.0
  %vm1976 = vcmp.ge.f32.partialorder %v1501, 0.0
  %vm1977 = vcmp.ge.f32.partialorder %v1504, 0.0
  %vm1978 = vcmp.ge.f32.partialorder %v1507, 0.0
  %vm1979 = vcmp.ge.f32.partialorder %v1510, 0.0
  %vm1980 = vcmp.ge.f32.partialorder %v1513, 0.0
  %vm1981 = vcmp.ge.f32.partialorder %v1516, 0.0
  %vm1982 = vcmp.ge.f32.partialorder %v1519, 0.0
  %vm1983 = vcmp.ge.f32.partialorder %v1522, 0.0
  %vm1984 = vcmp.ge.f32.partialorder %v1525, 0.0
  %vm1985 = vcmp.ge.f32.partialorder %v1528, 0.0
  %vm1986 = vcmp.ge.f32.partialorder %v1531, 0.0
  %vm1987 = vcmp.ge.f32.partialorder %v1534, 0.0
  %vm1988 = vcmp.ge.f32.partialorder %v1537, 0.0
  %vm1989 = vcmp.ge.f32.partialorder %v1540, 0.0
  %vm1990 = vcmp.ge.f32.partialorder %v1543, 0.0
  %vm1991 = vcmp.ge.f32.partialorder %v1546, 0.0
  %vm1992 = vcmp.ge.f32.partialorder %v1549, 0.0
  %vm1993 = vcmp.ge.f32.partialorder %v1552, 0.0
  %vm1994 = vcmp.ge.f32.partialorder %v1555, 0.0
  %vm1995 = vcmp.ge.f32.partialorder %v1558, 0.0
  %vm1996 = vcmp.ge.f32.partialorder %v1561, 0.0
  %vm1997 = vcmp.ge.f32.partialorder %v1564, 0.0
  %vm1998 = vcmp.ge.f32.partialorder %v1567, 0.0
  %vm1999 = vcmp.ge.f32.partialorder %v1570, 0.0
  %vm2000 = vcmp.ge.f32.partialorder %v1573, 0.0
  %vm2001 = vcmp.ge.f32.partialorder %v1576, 0.0
  %vm2002 = vcmp.ge.f32.partialorder %v1579, 0.0
  %vm2003 = vcmp.ge.f32.partialorder %v1582, 0.0
  %vm2004 = vcmp.ge.f32.partialorder %v1585, 0.0
  %vm2005 = vcmp.ge.f32.partialorder %v1588, 0.0
  %vm2006 = vcmp.ge.f32.partialorder %v1591, 0.0
  %vm2007 = vcmp.ge.f32.partialorder %v1594, 0.0
  %vm2008 = vcmp.ge.f32.partialorder %v1597, 0.0
  %vm2009 = vcmp.ge.f32.partialorder %v1600, 0.0
  %vm2010 = vcmp.ge.f32.partialorder %v1603, 0.0
  %vm2011 = vcmp.ge.f32.partialorder %v1606, 0.0
  %vm2012 = vcmp.ge.f32.partialorder %v1609, 0.0
  %vm2013 = vcmp.ge.f32.partialorder %v1612, 0.0
  %vm2014 = vcmp.ge.f32.partialorder %v1615, 0.0
  %vm2015 = vcmp.ge.f32.partialorder %v1618, 0.0
  %vm2016 = vcmp.ge.f32.partialorder %v1621, 0.0
  %vm2017 = vcmp.ge.f32.partialorder %v1624, 0.0
  %vm2018 = vcmp.ge.f32.partialorder %v1627, 0.0
  %vm2019 = vcmp.ge.f32.partialorder %v1630, 0.0
  %vm2020 = vcmp.ge.f32.partialorder %v1633, 0.0
  %vm2021 = vcmp.ge.f32.partialorder %v1636, 0.0
  %vm2022 = vcmp.ge.f32.partialorder %v1639, 0.0
  %vm2023 = vcmp.ge.f32.partialorder %v1642, 0.0
  %vm2024 = vcmp.ge.f32.partialorder %v1645, 0.0
  %vm2025 = vcmp.ge.f32.partialorder %v1648, 0.0
  %vm2026 = vcmp.ge.f32.partialorder %v1651, 0.0
  %vm2027 = vcmp.ge.f32.partialorder %v1654, 0.0
  %vm2028 = vcmp.ge.f32.partialorder %v1657, 0.0
  %vm2029 = vcmp.ge.f32.partialorder %v1660, 0.0
  %vm2030 = vcmp.ge.f32.partialorder %v1663, 0.0
  %vm2031 = vcmp.ge.f32.partialorder %v1666, 0.0
  %vm2032 = vcmp.ge.f32.partialorder %v1669, 0.0
  %vm2033 = vcmp.ge.f32.partialorder %v1672, 0.0
  %vm2034 = vcmp.ge.f32.partialorder %v1675, 0.0
  %vm2035 = vcmp.ge.f32.partialorder %v1678, 0.0
  %vm2036 = vcmp.ge.f32.partialorder %v1681, 0.0
  %vm2037 = vcmp.ge.f32.partialorder %v1684, 0.0
  %vm2038 = vcmp.ge.f32.partialorder %v1687, 0.0
  %vm2039 = vcmp.ge.f32.partialorder %v1690, 0.0
  %vm2040 = vcmp.ge.f32.partialorder %v1693, 0.0
  %vm2041 = vcmp.ge.f32.partialorder %v1696, 0.0
  %vm2042 = vcmp.ge.f32.partialorder %v1699, 0.0
  %vm2043 = vcmp.ge.f32.partialorder %v1702, 0.0
  %vm2044 = vcmp.ge.f32.partialorder %v1705, 0.0
  %vm2045 = vcmp.ge.f32.partialorder %v1708, 0.0
  %vm2046 = vcmp.ge.f32.partialorder %v1711, 0.0
  %vm2047 = vcmp.ge.f32.partialorder %v1714, 0.0
  %vm2048 = vcmp.ge.f32.partialorder %v1717, 0.0
  %vm2049 = vcmp.ge.f32.partialorder %v1720, 0.0
  %vm2050 = vcmp.ge.f32.partialorder %v1723, 0.0
  %vm2051 = vcmp.ge.f32.partialorder %v1726, 0.0
  %vm2052 = vcmp.ge.f32.partialorder %v1729, 0.0
  %vm2053 = vcmp.ge.f32.partialorder %v1732, 0.0
  %vm2054 = vcmp.ge.f32.partialorder %v1735, 0.0
  %vm2055 = vcmp.ge.f32.partialorder %v1738, 0.0
  %vm2056 = vcmp.ge.f32.partialorder %v1741, 0.0
  %vm2057 = vcmp.ge.f32.partialorder %v1744, 0.0
  %vm2058 = vcmp.ge.f32.partialorder %v1747, 0.0
  %vm2059 = vcmp.ge.f32.partialorder %v1750, 0.0
  %vm2060 = vcmp.ge.f32.partialorder %v1753, 0.0
  %vm2061 = vcmp.ge.f32.partialorder %v1756, 0.0
  %vm2062 = vcmp.ge.f32.partialorder %v1759, 0.0
  %vm2063 = vcmp.ge.f32.partialorder %v1762, 0.0
  %vm2064 = vcmp.ge.f32.partialorder %v1765, 0.0
  %vm2065 = vcmp.ge.f32.partialorder %v1768, 0.0
  %vm2066 = vcmp.ge.f32.partialorder %v1771, 0.0
  %vm2067 = vcmp.ge.f32.partialorder %v1774, 0.0
  %vm2068 = vcmp.ge.f32.partialorder %v1777, 0.0
  %vm2069 = vcmp.ge.f32.partialorder %v1780, 0.0
  %vm2070 = vcmp.ge.f32.partialorder %v1783, 0.0
  %vm2071 = vcmp.ge.f32.partialorder %v1786, 0.0
  %vm2072 = vcmp.ge.f32.partialorder %v1789, 0.0
  %vm2073 = vcmp.ge.f32.partialorder %v1792, 0.0
  %vm2074 = vcmp.ge.f32.partialorder %v1795, 0.0
  %vm2075 = vcmp.ge.f32.partialorder %v1798, 0.0
  %vm2076 = vcmp.ge.f32.partialorder %v1801, 0.0
  %vm2077 = vcmp.ge.f32.partialorder %v1804, 0.0
  %vm2078 = vcmp.ge.f32.partialorder %v1807, 0.0
  %vm2079 = vcmp.ge.f32.partialorder %v1810, 0.0
  %vm2080 = vcmp.ge.f32.partialorder %v1813, 0.0
  %vm2081 = vcmp.ge.f32.partialorder %v1816, 0.0
  %vm2082 = vcmp.ge.f32.partialorder %v1819, 0.0
  %vm2083 = vcmp.ge.f32.partialorder %v1822, 0.0
  %vm2084 = vcmp.ge.f32.partialorder %v1825, 0.0
  %vm2085 = vcmp.ge.f32.partialorder %v1828, 0.0
  %v2086 = vmul.f32 %v1063, 0.2
  %v2087 = vmul.f32 %v1066, 0.2
  %v2088 = vmul.f32 %v1069, 0.2
  %v2089 = vmul.f32 %v1072, 0.2
  %v2090 = vmul.f32 %v1075, 0.2
  %v2091 = vmul.f32 %v1078, 0.2
  %v2092 = vmul.f32 %v1081, 0.2
  %v2093 = vmul.f32 %v1084, 0.2
  %v2094 = vmul.f32 %v1087, 0.2
  %v2095 = vmul.f32 %v1090, 0.2
  %v2096 = vmul.f32 %v1093, 0.2
  %v2097 = vmul.f32 %v1096, 0.2
  %v2098 = vmul.f32 %v1099, 0.2
  %v2099 = vmul.f32 %v1102, 0.2
  %v2100 = vmul.f32 %v1105, 0.2
  %v2101 = vmul.f32 %v1108, 0.2
  %v2102 = vmul.f32 %v1111, 0.2
  %v2103 = vmul.f32 %v1114, 0.2
  %v2104 = vmul.f32 %v1117, 0.2
  %v2105 = vmul.f32 %v1120, 0.2
  %v2106 = vmul.f32 %v1123, 0.2
  %v2107 = vmul.f32 %v1126, 0.2
  %v2108 = vmul.f32 %v1129, 0.2
  %v2109 = vmul.f32 %v1132, 0.2
  %v2110 = vmul.f32 %v1135, 0.2
  %v2111 = vmul.f32 %v1138, 0.2
  %v2112 = vmul.f32 %v1141, 0.2
  %v2113 = vmul.f32 %v1144, 0.2
  %v2114 = vmul.f32 %v1147, 0.2
  %v2115 = vmul.f32 %v1150, 0.2
  %v2116 = vmul.f32 %v1153, 0.2
  %v2117 = vmul.f32 %v1156, 0.2
  %v2118 = vmul.f32 %v1159, 0.2
  %v2119 = vmul.f32 %v1162, 0.2
  %v2120 = vmul.f32 %v1165, 0.2
  %v2121 = vmul.f32 %v1168, 0.2
  %v2122 = vmul.f32 %v1171, 0.2
  %v2123 = vmul.f32 %v1174, 0.2
  %v2124 = vmul.f32 %v1177, 0.2
  %v2125 = vmul.f32 %v1180, 0.2
  %v2126 = vmul.f32 %v1183, 0.2
  %v2127 = vmul.f32 %v1186, 0.2
  %v2128 = vmul.f32 %v1189, 0.2
  %v2129 = vmul.f32 %v1192, 0.2
  %v2130 = vmul.f32 %v1195, 0.2
  %v2131 = vmul.f32 %v1198, 0.2
  %v2132 = vmul.f32 %v1201, 0.2
  %v2133 = vmul.f32 %v1204, 0.2
  %v2134 = vmul.f32 %v1207, 0.2
  %v2135 = vmul.f32 %v1210, 0.2
  %v2136 = vmul.f32 %v1213, 0.2
  %v2137 = vmul.f32 %v1216, 0.2
  %v2138 = vmul.f32 %v1219, 0.2
  %v2139 = vmul.f32 %v1222, 0.2
  %v2140 = vmul.f32 %v1225, 0.2
  %v2141 = vmul.f32 %v1228, 0.2
  %v2142 = vmul.f32 %v1231, 0.2
  %v2143 = vmul.f32 %v1234, 0.2
  %v2144 = vmul.f32 %v1237, 0.2
  %v2145 = vmul.f32 %v1240, 0.2
  %v2146 = vmul.f32 %v1243, 0.2
  %v2147 = vmul.f32 %v1246, 0.2
  %v2148 = vmul.f32 %v1249, 0.2
  %v2149 = vmul.f32 %v1252, 0.2
  %v2150 = vmul.f32 %v1255, 0.2
  %v2151 = vmul.f32 %v1258, 0.2
  %v2152 = vmul.f32 %v1261, 0.2
  %v2153 = vmul.f32 %v1264, 0.2
  %v2154 = vmul.f32 %v1267, 0.2
  %v2155 = vmul.f32 %v1270, 0.2
  %v2156 = vmul.f32 %v1273, 0.2
  %v2157 = vmul.f32 %v1276, 0.2
  %v2158 = vmul.f32 %v1279, 0.2
  %v2159 = vmul.f32 %v1282, 0.2
  %v2160 = vmul.f32 %v1285, 0.2
  %v2161 = vmul.f32 %v1288, 0.2
  %v2162 = vmul.f32 %v1291, 0.2
  %v2163 = vmul.f32 %v1294, 0.2
  %v2164 = vmul.f32 %v1297, 0.2
  %v2165 = vmul.f32 %v1300, 0.2
  %v2166 = vmul.f32 %v1303, 0.2
  %v2167 = vmul.f32 %v1306, 0.2
  %v2168 = vmul.f32 %v1309, 0.2
  %v2169 = vmul.f32 %v1312, 0.2
  %v2170 = vmul.f32 %v1315, 0.2
  %v2171 = vmul.f32 %v1318, 0.2
  %v2172 = vmul.f32 %v1321, 0.2
  %v2173 = vmul.f32 %v1324, 0.2
  %v2174 = vmul.f32 %v1327, 0.2
  %v2175 = vmul.f32 %v1330, 0.2
  %v2176 = vmul.f32 %v1333, 0.2
  %v2177 = vmul.f32 %v1336, 0.2
  %v2178 = vmul.f32 %v1339, 0.2
  %v2179 = vmul.f32 %v1342, 0.2
  %v2180 = vmul.f32 %v1345, 0.2
  %v2181 = vmul.f32 %v1348, 0.2
  %v2182 = vmul.f32 %v1351, 0.2
  %v2183 = vmul.f32 %v1354, 0.2
  %v2184 = vmul.f32 %v1357, 0.2
  %v2185 = vmul.f32 %v1360, 0.2
  %v2186 = vmul.f32 %v1363, 0.2
  %v2187 = vmul.f32 %v1366, 0.2
  %v2188 = vmul.f32 %v1369, 0.2
  %v2189 = vmul.f32 %v1372, 0.2
  %v2190 = vmul.f32 %v1375, 0.2
  %v2191 = vmul.f32 %v1378, 0.2
  %v2192 = vmul.f32 %v1381, 0.2
  %v2193 = vmul.f32 %v1384, 0.2
  %v2194 = vmul.f32 %v1387, 0.2
  %v2195 = vmul.f32 %v1390, 0.2
  %v2196 = vmul.f32 %v1393, 0.2
  %v2197 = vmul.f32 %v1396, 0.2
  %v2198 = vmul.f32 %v1399, 0.2
  %v2199 = vmul.f32 %v1402, 0.2
  %v2200 = vmul.f32 %v1405, 0.2
  %v2201 = vmul.f32 %v1408, 0.2
  %v2202 = vmul.f32 %v1411, 0.2
  %v2203 = vmul.f32 %v1414, 0.2
  %v2204 = vmul.f32 %v1417, 0.2
  %v2205 = vmul.f32 %v1420, 0.2
  %v2206 = vmul.f32 %v1423, 0.2
  %v2207 = vmul.f32 %v1426, 0.2
  %v2208 = vmul.f32 %v1429, 0.2
  %v2209 = vmul.f32 %v1432, 0.2
  %v2210 = vmul.f32 %v1435, 0.2
  %v2211 = vmul.f32 %v1438, 0.2
  %v2212 = vmul.f32 %v1441, 0.2
  %v2213 = vmul.f32 %v1444, 0.2
  %v2214 = vmul.f32 %v1447, 0.2
  %v2215 = vmul.f32 %v1450, 0.2
  %v2216 = vmul.f32 %v1453, 0.2
  %v2217 = vmul.f32 %v1456, 0.2
  %v2218 = vmul.f32 %v1459, 0.2
  %v2219 = vmul.f32 %v1462, 0.2
  %v2220 = vmul.f32 %v1465, 0.2
  %v2221 = vmul.f32 %v1468, 0.2
  %v2222 = vmul.f32 %v1471, 0.2
  %v2223 = vmul.f32 %v1474, 0.2
  %v2224 = vmul.f32 %v1477, 0.2
  %v2225 = vmul.f32 %v1480, 0.2
  %v2226 = vmul.f32 %v1483, 0.2
  %v2227 = vmul.f32 %v1486, 0.2
  %v2228 = vmul.f32 %v1489, 0.2
  %v2229 = vmul.f32 %v1492, 0.2
  %v2230 = vmul.f32 %v1495, 0.2
  %v2231 = vmul.f32 %v1498, 0.2
  %v2232 = vmul.f32 %v1501, 0.2
  %v2233 = vmul.f32 %v1504, 0.2
  %v2234 = vmul.f32 %v1507, 0.2
  %v2235 = vmul.f32 %v1510, 0.2
  %v2236 = vmul.f32 %v1513, 0.2
  %v2237 = vmul.f32 %v1516, 0.2
  %v2238 = vmul.f32 %v1519, 0.2
  %v2239 = vmul.f32 %v1522, 0.2
  %v2240 = vmul.f32 %v1525, 0.2
  %v2241 = vmul.f32 %v1528, 0.2
  %v2242 = vmul.f32 %v1531, 0.2
  %v2243 = vmul.f32 %v1534, 0.2
  %v2244 = vmul.f32 %v1537, 0.2
  %v2245 = vmul.f32 %v1540, 0.2
  %v2246 = vmul.f32 %v1543, 0.2
  %v2247 = vmul.f32 %v1546, 0.2
  %v2248 = vmul.f32 %v1549, 0.2
  %v2249 = vmul.f32 %v1552, 0.2
  %v2250 = vmul.f32 %v1555, 0.2
  %v2251 = vmul.f32 %v1558, 0.2
  %v2252 = vmul.f32 %v1561, 0.2
  %v2253 = vmul.f32 %v1564, 0.2
  %v2254 = vmul.f32 %v1567, 0.2
  %v2255 = vmul.f32 %v1570, 0.2
  %v2256 = vmul.f32 %v1573, 0.2
  %v2257 = vmul.f32 %v1576, 0.2
  %v2258 = vmul.f32 %v1579, 0.2
  %v2259 = vmul.f32 %v1582, 0.2
  %v2260 = vmul.f32 %v1585, 0.2
  %v2261 = vmul.f32 %v1588, 0.2
  %v2262 = vmul.f32 %v1591, 0.2
  %v2263 = vmul.f32 %v1594, 0.2
  %v2264 = vmul.f32 %v1597, 0.2
  %v2265 = vmul.f32 %v1600, 0.2
  %v2266 = vmul.f32 %v1603, 0.2
  %v2267 = vmul.f32 %v1606, 0.2
  %v2268 = vmul.f32 %v1609, 0.2
  %v2269 = vmul.f32 %v1612, 0.2
  %v2270 = vmul.f32 %v1615, 0.2
  %v2271 = vmul.f32 %v1618, 0.2
  %v2272 = vmul.f32 %v1621, 0.2
  %v2273 = vmul.f32 %v1624, 0.2
  %v2274 = vmul.f32 %v1627, 0.2
  %v2275 = vmul.f32 %v1630, 0.2
  %v2276 = vmul.f32 %v1633, 0.2
  %v2277 = vmul.f32 %v1636, 0.2
  %v2278 = vmul.f32 %v1639, 0.2
  %v2279 = vmul.f32 %v1642, 0.2
  %v2280 = vmul.f32 %v1645, 0.2
  %v2281 = vmul.f32 %v1648, 0.2
  %v2282 = vmul.f32 %v1651, 0.2
  %v2283 = vmul.f32 %v1654, 0.2
  %v2284 = vmul.f32 %v1657, 0.2
  %v2285 = vmul.f32 %v1660, 0.2
  %v2286 = vmul.f32 %v1663, 0.2
  %v2287 = vmul.f32 %v1666, 0.2
  %v2288 = vmul.f32 %v1669, 0.2
  %v2289 = vmul.f32 %v1672, 0.2
  %v2290 = vmul.f32 %v1675, 0.2
  %v2291 = vmul.f32 %v1678, 0.2
  %v2292 = vmul.f32 %v1681, 0.2
  %v2293 = vmul.f32 %v1684, 0.2
  %v2294 = vmul.f32 %v1687, 0.2
  %v2295 = vmul.f32 %v1690, 0.2
  %v2296 = vmul.f32 %v1693, 0.2
  %v2297 = vmul.f32 %v1696, 0.2
  %v2298 = vmul.f32 %v1699, 0.2
  %v2299 = vmul.f32 %v1702, 0.2
  %v2300 = vmul.f32 %v1705, 0.2
  %v2301 = vmul.f32 %v1708, 0.2
  %v2302 = vmul.f32 %v1711, 0.2
  %v2303 = vmul.f32 %v1714, 0.2
  %v2304 = vmul.f32 %v1717, 0.2
  %v2305 = vmul.f32 %v1720, 0.2
  %v2306 = vmul.f32 %v1723, 0.2
  %v2307 = vmul.f32 %v1726, 0.2
  %v2308 = vmul.f32 %v1729, 0.2
  %v2309 = vmul.f32 %v1732, 0.2
  %v2310 = vmul.f32 %v1735, 0.2
  %v2311 = vmul.f32 %v1738, 0.2
  %v2312 = vmul.f32 %v1741, 0.2
  %v2313 = vmul.f32 %v1744, 0.2
  %v2314 = vmul.f32 %v1747, 0.2
  %v2315 = vmul.f32 %v1750, 0.2
  %v2316 = vmul.f32 %v1753, 0.2
  %v2317 = vmul.f32 %v1756, 0.2
  %v2318 = vmul.f32 %v1759, 0.2
  %v2319 = vmul.f32 %v1762, 0.2
  %v2320 = vmul.f32 %v1765, 0.2
  %v2321 = vmul.f32 %v1768, 0.2
  %v2322 = vmul.f32 %v1771, 0.2
  %v2323 = vmul.f32 %v1774, 0.2
  %v2324 = vmul.f32 %v1777, 0.2
  %v2325 = vmul.f32 %v1780, 0.2
  %v2326 = vmul.f32 %v1783, 0.2
  %v2327 = vmul.f32 %v1786, 0.2
  %v2328 = vmul.f32 %v1789, 0.2
  %v2329 = vmul.f32 %v1792, 0.2
  %v2330 = vmul.f32 %v1795, 0.2
  %v2331 = vmul.f32 %v1798, 0.2
  %v2332 = vmul.f32 %v1801, 0.2
  %v2333 = vmul.f32 %v1804, 0.2
  %v2334 = vmul.f32 %v1807, 0.2
  %v2335 = vmul.f32 %v1810, 0.2
  %v2336 = vmul.f32 %v1813, 0.2
  %v2337 = vmul.f32 %v1816, 0.2
  %v2338 = vmul.f32 %v1819, 0.2
  %v2339 = vmul.f32 %v1822, 0.2
  %v2340 = vmul.f32 %v1825, 0.2
  %v2341 = vmul.f32 %v1828, 0.2
  %v2342 = vsel %vm1830, %v1063, %v2086
  %v2343 = vsel %vm1831, %v1066, %v2087
  %v2344 = vsel %vm1832, %v1069, %v2088
  %v2345 = vsel %vm1833, %v1072, %v2089
  %v2346 = vsel %vm1834, %v1075, %v2090
  %v2347 = vsel %vm1835, %v1078, %v2091
  %v2348 = vsel %vm1836, %v1081, %v2092
  %v2349 = vsel %vm1837, %v1084, %v2093
  %v2350 = vsel %vm1838, %v1087, %v2094
  %v2351 = vsel %vm1839, %v1090, %v2095
  %v2352 = vsel %vm1840, %v1093, %v2096
  %v2353 = vsel %vm1841, %v1096, %v2097
  %v2354 = vsel %vm1842, %v1099, %v2098
  %v2355 = vsel %vm1843, %v1102, %v2099
  %v2356 = vsel %vm1844, %v1105, %v2100
  %v2357 = vsel %vm1845, %v1108, %v2101
  %v2358 = vsel %vm1846, %v1111, %v2102
  %v2359 = vsel %vm1847, %v1114, %v2103
  %v2360 = vsel %vm1848, %v1117, %v2104
  %v2361 = vsel %vm1849, %v1120, %v2105
  %v2362 = vsel %vm1850, %v1123, %v2106
  %v2363 = vsel %vm1851, %v1126, %v2107
  %v2364 = vsel %vm1852, %v1129, %v2108
  %v2365 = vsel %vm1853, %v1132, %v2109
  %v2366 = vsel %vm1854, %v1135, %v2110
  %v2367 = vsel %vm1855, %v1138, %v2111
  %v2368 = vsel %vm1856, %v1141, %v2112
  %v2369 = vsel %vm1857, %v1144, %v2113
  %v2370 = vsel %vm1858, %v1147, %v2114
  %v2371 = vsel %vm1859, %v1150, %v2115
  %v2372 = vsel %vm1860, %v1153, %v2116
  %v2373 = vsel %vm1861, %v1156, %v2117
  %v2374 = vsel %vm1862, %v1159, %v2118
  %v2375 = vsel %vm1863, %v1162, %v2119
  %v2376 = vsel %vm1864, %v1165, %v2120
  %v2377 = vsel %vm1865, %v1168, %v2121
  %v2378 = vsel %vm1866, %v1171, %v2122
  %v2379 = vsel %vm1867, %v1174, %v2123
  %v2380 = vsel %vm1868, %v1177, %v2124
  %v2381 = vsel %vm1869, %v1180, %v2125
  %v2382 = vsel %vm1870, %v1183, %v2126
  %v2383 = vsel %vm1871, %v1186, %v2127
  %v2384 = vsel %vm1872, %v1189, %v2128
  %v2385 = vsel %vm1873, %v1192, %v2129
  %v2386 = vsel %vm1874, %v1195, %v2130
  %v2387 = vsel %vm1875, %v1198, %v2131
  %v2388 = vsel %vm1876, %v1201, %v2132
  %v2389 = vsel %vm1877, %v1204, %v2133
  %v2390 = vsel %vm1878, %v1207, %v2134
  %v2391 = vsel %vm1879, %v1210, %v2135
  %v2392 = vsel %vm1880, %v1213, %v2136
  %v2393 = vsel %vm1881, %v1216, %v2137
  %v2394 = vsel %vm1882, %v1219, %v2138
  %v2395 = vsel %vm1883, %v1222, %v2139
  %v2396 = vsel %vm1884, %v1225, %v2140
  %v2397 = vsel %vm1885, %v1228, %v2141
  %v2398 = vsel %vm1886, %v1231, %v2142
  %v2399 = vsel %vm1887, %v1234, %v2143
  %v2400 = vsel %vm1888, %v1237, %v2144
  %v2401 = vsel %vm1889, %v1240, %v2145
  %v2402 = vsel %vm1890, %v1243, %v2146
  %v2403 = vsel %vm1891, %v1246, %v2147
  %v2404 = vsel %vm1892, %v1249, %v2148
  %v2405 = vsel %vm1893, %v1252, %v2149
  %v2406 = vsel %vm1894, %v1255, %v2150
  %v2407 = vsel %vm1895, %v1258, %v2151
  %v2408 = vsel %vm1896, %v1261, %v2152
  %v2409 = vsel %vm1897, %v1264, %v2153
  %v2410 = vsel %vm1898, %v1267, %v2154
  %v2411 = vsel %vm1899, %v1270, %v2155
  %v2412 = vsel %vm1900, %v1273, %v2156
  %v2413 = vsel %vm1901, %v1276, %v2157
  %v2414 = vsel %vm1902, %v1279, %v2158
  %v2415 = vsel %vm1903, %v1282, %v2159
  %v2416 = vsel %vm1904, %v1285, %v2160
  %v2417 = vsel %vm1905, %v1288, %v2161
  %v2418 = vsel %vm1906, %v1291, %v2162
  %v2419 = vsel %vm1907, %v1294, %v2163
  %v2420 = vsel %vm1908, %v1297, %v2164
  %v2421 = vsel %vm1909, %v1300, %v2165
  %v2422 = vsel %vm1910, %v1303, %v2166
  %v2423 = vsel %vm1911, %v1306, %v2167
  %v2424 = vsel %vm1912, %v1309, %v2168
  %v2425 = vsel %vm1913, %v1312, %v2169
  %v2426 = vsel %vm1914, %v1315, %v2170
  %v2427 = vsel %vm1915, %v1318, %v2171
  %v2428 = vsel %vm1916, %v1321, %v2172
  %v2429 = vsel %vm1917, %v1324, %v2173
  %v2430 = vsel %vm1918, %v1327, %v2174
  %v2431 = vsel %vm1919, %v1330, %v2175
  %v2432 = vsel %vm1920, %v1333, %v2176
  %v2433 = vsel %vm1921, %v1336, %v2177
  %v2434 = vsel %vm1922, %v1339, %v2178
  %v2435 = vsel %vm1923, %v1342, %v2179
  %v2436 = vsel %vm1924, %v1345, %v2180
  %v2437 = vsel %vm1925, %v1348, %v2181
  %v2438 = vsel %vm1926, %v1351, %v2182
  %v2439 = vsel %vm1927, %v1354, %v2183
  %v2440 = vsel %vm1928, %v1357, %v2184
  %v2441 = vsel %vm1929, %v1360, %v2185
  %v2442 = vsel %vm1930, %v1363, %v2186
  %v2443 = vsel %vm1931, %v1366, %v2187
  %v2444 = vsel %vm1932, %v1369, %v2188
  %v2445 = vsel %vm1933, %v1372, %v2189
  %v2446 = vsel %vm1934, %v1375, %v2190
  %v2447 = vsel %vm1935, %v1378, %v2191
  %v2448 = vsel %vm1936, %v1381, %v2192
  %v2449 = vsel %vm1937, %v1384, %v2193
  %v2450 = vsel %vm1938, %v1387, %v2194
  %v2451 = vsel %vm1939, %v1390, %v2195
  %v2452 = vsel %vm1940, %v1393, %v2196
  %v2453 = vsel %vm1941, %v1396, %v2197
  %v2454 = vsel %vm1942, %v1399, %v2198
  %v2455 = vsel %vm1943, %v1402, %v2199
  %v2456 = vsel %vm1944, %v1405, %v2200
  %v2457 = vsel %vm1945, %v1408, %v2201
  %v2458 = vsel %vm1946, %v1411, %v2202
  %v2459 = vsel %vm1947, %v1414, %v2203
  %v2460 = vsel %vm1948, %v1417, %v2204
  %v2461 = vsel %vm1949, %v1420, %v2205
  %v2462 = vsel %vm1950, %v1423, %v2206
  %v2463 = vsel %vm1951, %v1426, %v2207
  %v2464 = vsel %vm1952, %v1429, %v2208
  %v2465 = vsel %vm1953, %v1432, %v2209
  %v2466 = vsel %vm1954, %v1435, %v2210
  %v2467 = vsel %vm1955, %v1438, %v2211
  %v2468 = vsel %vm1956, %v1441, %v2212
  %v2469 = vsel %vm1957, %v1444, %v2213
  %v2470 = vsel %vm1958, %v1447, %v2214
  %v2471 = vsel %vm1959, %v1450, %v2215
  %v2472 = vsel %vm1960, %v1453, %v2216
  %v2473 = vsel %vm1961, %v1456, %v2217
  %v2474 = vsel %vm1962, %v1459, %v2218
  %v2475 = vsel %vm1963, %v1462, %v2219
  %v2476 = vsel %vm1964, %v1465, %v2220
  %v2477 = vsel %vm1965, %v1468, %v2221
  %v2478 = vsel %vm1966, %v1471, %v2222
  %v2479 = vsel %vm1967, %v1474, %v2223
  %v2480 = vsel %vm1968, %v1477, %v2224
  %v2481 = vsel %vm1969, %v1480, %v2225
  %v2482 = vsel %vm1970, %v1483, %v2226
  %v2483 = vsel %vm1971, %v1486, %v2227
  %v2484 = vsel %vm1972, %v1489, %v2228
  %v2485 = vsel %vm1973, %v1492, %v2229
  %v2486 = vsel %vm1974, %v1495, %v2230
  %v2487 = vsel %vm1975, %v1498, %v2231
  %v2488 = vsel %vm1976, %v1501, %v2232
  %v2489 = vsel %vm1977, %v1504, %v2233
  %v2490 = vsel %vm1978, %v1507, %v2234
  %v2491 = vsel %vm1979, %v1510, %v2235
  %v2492 = vsel %vm1980, %v1513, %v2236
  %v2493 = vsel %vm1981, %v1516, %v2237
  %v2494 = vsel %vm1982, %v1519, %v2238
  %v2495 = vsel %vm1983, %v1522, %v2239
  %v2496 = vsel %vm1984, %v1525, %v2240
  %v2497 = vsel %vm1985, %v1528, %v2241
  %v2498 = vsel %vm1986, %v1531, %v2242
  %v2499 = vsel %vm1987, %v1534, %v2243
  %v2500 = vsel %vm1988, %v1537, %v2244
  %v2501 = vsel %vm1989, %v1540, %v2245
  %v2502 = vsel %vm1990, %v1543, %v2246
  %v2503 = vsel %vm1991, %v1546, %v2247
  %v2504 = vsel %vm1992, %v1549, %v2248
  %v2505 = vsel %vm1993, %v1552, %v2249
  %v2506 = vsel %vm1994, %v1555, %v2250
  %v2507 = vsel %vm1995, %v1558, %v2251
  %v2508 = vsel %vm1996, %v1561, %v2252
  %v2509 = vsel %vm1997, %v1564, %v2253
  %v2510 = vsel %vm1998, %v1567, %v2254
  %v2511 = vsel %vm1999, %v1570, %v2255
  %v2512 = vsel %vm2000, %v1573, %v2256
  %v2513 = vsel %vm2001, %v1576, %v2257
  %v2514 = vsel %vm2002, %v1579, %v2258
  %v2515 = vsel %vm2003, %v1582, %v2259
  %v2516 = vsel %vm2004, %v1585, %v2260
  %v2517 = vsel %vm2005, %v1588, %v2261
  %v2518 = vsel %vm2006, %v1591, %v2262
  %v2519 = vsel %vm2007, %v1594, %v2263
  %v2520 = vsel %vm2008, %v1597, %v2264
  %v2521 = vsel %vm2009, %v1600, %v2265
  %v2522 = vsel %vm2010, %v1603, %v2266
  %v2523 = vsel %vm2011, %v1606, %v2267
  %v2524 = vsel %vm2012, %v1609, %v2268
  %v2525 = vsel %vm2013, %v1612, %v2269
  %v2526 = vsel %vm2014, %v1615, %v2270
  %v2527 = vsel %vm2015, %v1618, %v2271
  %v2528 = vsel %vm2016, %v1621, %v2272
  %v2529 = vsel %vm2017, %v1624, %v2273
  %v2530 = vsel %vm2018, %v1627, %v2274
  %v2531 = vsel %vm2019, %v1630, %v2275
  %v2532 = vsel %vm2020, %v1633, %v2276
  %v2533 = vsel %vm2021, %v1636, %v2277
  %v2534 = vsel %vm2022, %v1639, %v2278
  %v2535 = vsel %vm2023, %v1642, %v2279
  %v2536 = vsel %vm2024, %v1645, %v2280
  %v2537 = vsel %vm2025, %v1648, %v2281
  %v2538 = vsel %vm2026, %v1651, %v2282
  %v2539 = vsel %vm2027, %v1654, %v2283
  %v2540 = vsel %vm2028, %v1657, %v2284
  %v2541 = vsel %vm2029, %v1660, %v2285
  %v2542 = vsel %vm2030, %v1663, %v2286
  %v2543 = vsel %vm2031, %v1666, %v2287
  %v2544 = vsel %vm2032, %v1669, %v2288
  %v2545 = vsel %vm2033, %v1672, %v2289
  %v2546 = vsel %vm2034, %v1675, %v2290
  %v2547 = vsel %vm2035, %v1678, %v2291
  %v2548 = vsel %vm2036, %v1681, %v2292
  %v2549 = vsel %vm2037, %v1684, %v2293
  %v2550 = vsel %vm2038, %v1687, %v2294
  %v2551 = vsel %vm2039, %v1690, %v2295
  %v2552 = vsel %vm2040, %v1693, %v2296
  %v2553 = vsel %vm2041, %v1696, %v2297
  %v2554 = vsel %vm2042, %v1699, %v2298
  %v2555 = vsel %vm2043, %v1702, %v2299
  %v2556 = vsel %vm2044, %v1705, %v2300
  %v2557 = vsel %vm2045, %v1708, %v2301
  %v2558 = vsel %vm2046, %v1711, %v2302
  %v2559 = vsel %vm2047, %v1714, %v2303
  %v2560 = vsel %vm2048, %v1717, %v2304
  %v2561 = vsel %vm2049, %v1720, %v2305
  %v2562 = vsel %vm2050, %v1723, %v2306
  %v2563 = vsel %vm2051, %v1726, %v2307
  %v2564 = vsel %vm2052, %v1729, %v2308
  %v2565 = vsel %vm2053, %v1732, %v2309
  %v2566 = vsel %vm2054, %v1735, %v2310
  %v2567 = vsel %vm2055, %v1738, %v2311
  %v2568 = vsel %vm2056, %v1741, %v2312
  %v2569 = vsel %vm2057, %v1744, %v2313
  %v2570 = vsel %vm2058, %v1747, %v2314
  %v2571 = vsel %vm2059, %v1750, %v2315
  %v2572 = vsel %vm2060, %v1753, %v2316
  %v2573 = vsel %vm2061, %v1756, %v2317
  %v2574 = vsel %vm2062, %v1759, %v2318
  %v2575 = vsel %vm2063, %v1762, %v2319
  %v2576 = vsel %vm2064, %v1765, %v2320
  %v2577 = vsel %vm2065, %v1768, %v2321
  %v2578 = vsel %vm2066, %v1771, %v2322
  %v2579 = vsel %vm2067, %v1774, %v2323
  %v2580 = vsel %vm2068, %v1777, %v2324
  %v2581 = vsel %vm2069, %v1780, %v2325
  %v2582 = vsel %vm2070, %v1783, %v2326
  %v2583 = vsel %vm2071, %v1786, %v2327
  %v2584 = vsel %vm2072, %v1789, %v2328
  %v2585 = vsel %vm2073, %v1792, %v2329
  %v2586 = vsel %vm2074, %v1795, %v2330
  %v2587 = vsel %vm2075, %v1798, %v2331
  %v2588 = vsel %vm2076, %v1801, %v2332
  %v2589 = vsel %vm2077, %v1804, %v2333
  %v2590 = vsel %vm2078, %v1807, %v2334
  %v2591 = vsel %vm2079, %v1810, %v2335
  %v2592 = vsel %vm2080, %v1813, %v2336
  %v2593 = vsel %vm2081, %v1816, %v2337
  %v2594 = vsel %vm2082, %v1819, %v2338
  %v2595 = vsel %vm2083, %v1822, %v2339
  %v2596 = vsel %vm2084, %v1825, %v2340
  %v2597 = vsel %vm2085, %v1828, %v2341
  %vm2598 = vcmask 261120
  %2599 = vst.msk [vmem:[%s3] sm:$0xff] %vm2598, %v2342
  %2600 = vst.msk [vmem:[%s3 + $0x8] sm:$0xff] %vm2598, %v2343
  %2601 = vst.msk [vmem:[%s3 + $0x10] sm:$0xff] %vm2598, %v2344
  %2602 = vst.msk [vmem:[%s3 + $0x18] sm:$0xff] %vm2598, %v2345
  %2603 = vst.msk [vmem:[%s3 + $0x20] sm:$0xff] %vm2598, %v2346
  %2604 = vst.msk [vmem:[%s3 + $0x28] sm:$0xff] %vm2598, %v2347
  %2605 = vst.msk [vmem:[%s3 + $0x30] sm:$0xff] %vm2598, %v2348
  %2606 = vst.msk [vmem:[%s3 + $0x38] sm:$0xff] %vm2598, %v2349
  %2607 = vst.msk [vmem:[%s3 + $0x40] sm:$0xff] %vm2598, %v2350
  %2608 = vst.msk [vmem:[%s3 + $0x48] sm:$0xff] %vm2598, %v2351
  %2609 = vst.msk [vmem:[%s3 + $0x50] sm:$0xff] %vm2598, %v2352
  %2610 = vst.msk [vmem:[%s3 + $0x58] sm:$0xff] %vm2598, %v2353
  %2611 = vst.msk [vmem:[%s3 + $0x60] sm:$0xff] %vm2598, %v2354
  %2612 = vst.msk [vmem:[%s3 + $0x68] sm:$0xff] %vm2598, %v2355
  %2613 = vst.msk [vmem:[%s3 + $0x70] sm:$0xff] %vm2598, %v2356
  %2614 = vst.msk [vmem:[%s3 + $0x78] sm:$0xff] %vm2598, %v2357
  %2615 = vst.msk [vmem:[%s3 + $0x80] sm:$0xff] %vm2598, %v2358
  %2616 = vst.msk [vmem:[%s3 + $0x88] sm:$0xff] %vm2598, %v2359
  %2617 = vst.msk [vmem:[%s3 + $0x90] sm:$0xff] %vm2598, %v2360
  %2618 = vst.msk [vmem:[%s3 + $0x98] sm:$0xff] %vm2598, %v2361
  %2619 = vst.msk [vmem:[%s3 + $0xa0] sm:$0xff] %vm2598, %v2362
  %2620 = vst.msk [vmem:[%s3 + $0xa8] sm:$0xff] %vm2598, %v2363
  %2621 = vst.msk [vmem:[%s3 + $0xb0] sm:$0xff] %vm2598, %v2364
  %2622 = vst.msk [vmem:[%s3 + $0xb8] sm:$0xff] %vm2598, %v2365
  %2623 = vst.msk [vmem:[%s3 + $0xc0] sm:$0xff] %vm2598, %v2366
  %2624 = vst.msk [vmem:[%s3 + $0xc8] sm:$0xff] %vm2598, %v2367
  %2625 = vst.msk [vmem:[%s3 + $0xd0] sm:$0xff] %vm2598, %v2368
  %2626 = vst.msk [vmem:[%s3 + $0xd8] sm:$0xff] %vm2598, %v2369
  %2627 = vst.msk [vmem:[%s3 + $0xe0] sm:$0xff] %vm2598, %v2370
  %2628 = vst.msk [vmem:[%s3 + $0xe8] sm:$0xff] %vm2598, %v2371
  %2629 = vst.msk [vmem:[%s3 + $0xf0] sm:$0xff] %vm2598, %v2372
  %2630 = vst.msk [vmem:[%s3 + $0xf8] sm:$0xff] %vm2598, %v2373
  %2631 = vst.msk [vmem:[%s3 + $0x100] sm:$0xff] %vm2598, %v2374
  %2632 = vst.msk [vmem:[%s3 + $0x108] sm:$0xff] %vm2598, %v2375
  %2633 = vst.msk [vmem:[%s3 + $0x110] sm:$0xff] %vm2598, %v2376
  %2634 = vst.msk [vmem:[%s3 + $0x118] sm:$0xff] %vm2598, %v2377
  %2635 = vst.msk [vmem:[%s3 + $0x120] sm:$0xff] %vm2598, %v2378
  %2636 = vst.msk [vmem:[%s3 + $0x128] sm:$0xff] %vm2598, %v2379
  %2637 = vst.msk [vmem:[%s3 + $0x130] sm:$0xff] %vm2598, %v2380
  %2638 = vst.msk [vmem:[%s3 + $0x138] sm:$0xff] %vm2598, %v2381
  %2639 = vst.msk [vmem:[%s3 + $0x140] sm:$0xff] %vm2598, %v2382
  %2640 = vst.msk [vmem:[%s3 + $0x148] sm:$0xff] %vm2598, %v2383
  %2641 = vst.msk [vmem:[%s3 + $0x150] sm:$0xff] %vm2598, %v2384
  %2642 = vst.msk [vmem:[%s3 + $0x158] sm:$0xff] %vm2598, %v2385
  %2643 = vst.msk [vmem:[%s3 + $0x160] sm:$0xff] %vm2598, %v2386
  %2644 = vst.msk [vmem:[%s3 + $0x168] sm:$0xff] %vm2598, %v2387
  %2645 = vst.msk [vmem:[%s3 + $0x170] sm:$0xff] %vm2598, %v2388
  %2646 = vst.msk [vmem:[%s3 + $0x178] sm:$0xff] %vm2598, %v2389
  %2647 = vst.msk [vmem:[%s3 + $0x180] sm:$0xff] %vm2598, %v2390
  %2648 = vst.msk [vmem:[%s3 + $0x188] sm:$0xff] %vm2598, %v2391
  %2649 = vst.msk [vmem:[%s3 + $0x190] sm:$0xff] %vm2598, %v2392
  %2650 = vst.msk [vmem:[%s3 + $0x198] sm:$0xff] %vm2598, %v2393
  %2651 = vst.msk [vmem:[%s3 + $0x1a0] sm:$0xff] %vm2598, %v2394
  %2652 = vst.msk [vmem:[%s3 + $0x1a8] sm:$0xff] %vm2598, %v2395
  %2653 = vst.msk [vmem:[%s3 + $0x1b0] sm:$0xff] %vm2598, %v2396
  %2654 = vst.msk [vmem:[%s3 + $0x1b8] sm:$0xff] %vm2598, %v2397
  %2655 = vst.msk [vmem:[%s3 + $0x1c0] sm:$0xff] %vm2598, %v2398
  %2656 = vst.msk [vmem:[%s3 + $0x1c8] sm:$0xff] %vm2598, %v2399
  %2657 = vst.msk [vmem:[%s3 + $0x1d0] sm:$0xff] %vm2598, %v2400
  %2658 = vst.msk [vmem:[%s3 + $0x1d8] sm:$0xff] %vm2598, %v2401
  %2659 = vst.msk [vmem:[%s3 + $0x1e0] sm:$0xff] %vm2598, %v2402
  %2660 = vst.msk [vmem:[%s3 + $0x1e8] sm:$0xff] %vm2598, %v2403
  %2661 = vst.msk [vmem:[%s3 + $0x1f0] sm:$0xff] %vm2598, %v2404
  %2662 = vst.msk [vmem:[%s3 + $0x1f8] sm:$0xff] %vm2598, %v2405
  %2663 = vst.msk [vmem:[%s3 + $0x200] sm:$0xff] %vm2598, %v2406
  %2664 = vst.msk [vmem:[%s3 + $0x208] sm:$0xff] %vm2598, %v2407
  %2665 = vst.msk [vmem:[%s3 + $0x210] sm:$0xff] %vm2598, %v2408
  %2666 = vst.msk [vmem:[%s3 + $0x218] sm:$0xff] %vm2598, %v2409
  %2667 = vst.msk [vmem:[%s3 + $0x220] sm:$0xff] %vm2598, %v2410
  %2668 = vst.msk [vmem:[%s3 + $0x228] sm:$0xff] %vm2598, %v2411
  %2669 = vst.msk [vmem:[%s3 + $0x230] sm:$0xff] %vm2598, %v2412
  %2670 = vst.msk [vmem:[%s3 + $0x238] sm:$0xff] %vm2598, %v2413
  %2671 = vst.msk [vmem:[%s3 + $0x240] sm:$0xff] %vm2598, %v2414
  %2672 = vst.msk [vmem:[%s3 + $0x248] sm:$0xff] %vm2598, %v2415
  %2673 = vst.msk [vmem:[%s3 + $0x250] sm:$0xff] %vm2598, %v2416
  %2674 = vst.msk [vmem:[%s3 + $0x258] sm:$0xff] %vm2598, %v2417
  %2675 = vst.msk [vmem:[%s3 + $0x260] sm:$0xff] %vm2598, %v2418
  %2676 = vst.msk [vmem:[%s3 + $0x268] sm:$0xff] %vm2598, %v2419
  %2677 = vst.msk [vmem:[%s3 + $0x270] sm:$0xff] %vm2598, %v2420
  %2678 = vst.msk [vmem:[%s3 + $0x278] sm:$0xff] %vm2598, %v2421
  %2679 = vst.msk [vmem:[%s3 + $0x280] sm:$0xff] %vm2598, %v2422
  %2680 = vst.msk [vmem:[%s3 + $0x288] sm:$0xff] %vm2598, %v2423
  %2681 = vst.msk [vmem:[%s3 + $0x290] sm:$0xff] %vm2598, %v2424
  %2682 = vst.msk [vmem:[%s3 + $0x298] sm:$0xff] %vm2598, %v2425
  %2683 = vst.msk [vmem:[%s3 + $0x2a0] sm:$0xff] %vm2598, %v2426
  %2684 = vst.msk [vmem:[%s3 + $0x2a8] sm:$0xff] %vm2598, %v2427
  %2685 = vst.msk [vmem:[%s3 + $0x2b0] sm:$0xff] %vm2598, %v2428
  %2686 = vst.msk [vmem:[%s3 + $0x2b8] sm:$0xff] %vm2598, %v2429
  %2687 = vst.msk [vmem:[%s3 + $0x2c0] sm:$0xff] %vm2598, %v2430
  %2688 = vst.msk [vmem:[%s3 + $0x2c8] sm:$0xff] %vm2598, %v2431
  %2689 = vst.msk [vmem:[%s3 + $0x2d0] sm:$0xff] %vm2598, %v2432
  %2690 = vst.msk [vmem:[%s3 + $0x2d8] sm:$0xff] %vm2598, %v2433
  %2691 = vst.msk [vmem:[%s3 + $0x2e0] sm:$0xff] %vm2598, %v2434
  %2692 = vst.msk [vmem:[%s3 + $0x2e8] sm:$0xff] %vm2598, %v2435
  %2693 = vst.msk [vmem:[%s3 + $0x2f0] sm:$0xff] %vm2598, %v2436
  %2694 = vst.msk [vmem:[%s3 + $0x2f8] sm:$0xff] %vm2598, %v2437
  %2695 = vst.msk [vmem:[%s3 + $0x300] sm:$0xff] %vm2598, %v2438
  %2696 = vst.msk [vmem:[%s3 + $0x308] sm:$0xff] %vm2598, %v2439
  %2697 = vst.msk [vmem:[%s3 + $0x310] sm:$0xff] %vm2598, %v2440
  %2698 = vst.msk [vmem:[%s3 + $0x318] sm:$0xff] %vm2598, %v2441
  %2699 = vst.msk [vmem:[%s3 + $0x320] sm:$0xff] %vm2598, %v2442
  %2700 = vst.msk [vmem:[%s3 + $0x328] sm:$0xff] %vm2598, %v2443
  %2701 = vst.msk [vmem:[%s3 + $0x330] sm:$0xff] %vm2598, %v2444
  %2702 = vst.msk [vmem:[%s3 + $0x338] sm:$0xff] %vm2598, %v2445
  %2703 = vst.msk [vmem:[%s3 + $0x340] sm:$0xff] %vm2598, %v2446
  %2704 = vst.msk [vmem:[%s3 + $0x348] sm:$0xff] %vm2598, %v2447
  %2705 = vst.msk [vmem:[%s3 + $0x350] sm:$0xff] %vm2598, %v2448
  %2706 = vst.msk [vmem:[%s3 + $0x358] sm:$0xff] %vm2598, %v2449
  %2707 = vst.msk [vmem:[%s3 + $0x360] sm:$0xff] %vm2598, %v2450
  %2708 = vst.msk [vmem:[%s3 + $0x368] sm:$0xff] %vm2598, %v2451
  %2709 = vst.msk [vmem:[%s3 + $0x370] sm:$0xff] %vm2598, %v2452
  %2710 = vst.msk [vmem:[%s3 + $0x378] sm:$0xff] %vm2598, %v2453
  %2711 = vst.msk [vmem:[%s3 + $0x380] sm:$0xff] %vm2598, %v2454
  %2712 = vst.msk [vmem:[%s3 + $0x388] sm:$0xff] %vm2598, %v2455
  %2713 = vst.msk [vmem:[%s3 + $0x390] sm:$0xff] %vm2598, %v2456
  %2714 = vst.msk [vmem:[%s3 + $0x398] sm:$0xff] %vm2598, %v2457
  %2715 = vst.msk [vmem:[%s3 + $0x3a0] sm:$0xff] %vm2598, %v2458
  %2716 = vst.msk [vmem:[%s3 + $0x3a8] sm:$0xff] %vm2598, %v2459
  %2717 = vst.msk [vmem:[%s3 + $0x3b0] sm:$0xff] %vm2598, %v2460
  %2718 = vst.msk [vmem:[%s3 + $0x3b8] sm:$0xff] %vm2598, %v2461
  %2719 = vst.msk [vmem:[%s3 + $0x3c0] sm:$0xff] %vm2598, %v2462
  %2720 = vst.msk [vmem:[%s3 + $0x3c8] sm:$0xff] %vm2598, %v2463
  %2721 = vst.msk [vmem:[%s3 + $0x3d0] sm:$0xff] %vm2598, %v2464
  %2722 = vst.msk [vmem:[%s3 + $0x3d8] sm:$0xff] %vm2598, %v2465
  %2723 = vst.msk [vmem:[%s3 + $0x3e0] sm:$0xff] %vm2598, %v2466
  %2724 = vst.msk [vmem:[%s3 + $0x3e8] sm:$0xff] %vm2598, %v2467
  %2725 = vst.msk [vmem:[%s3 + $0x3f0] sm:$0xff] %vm2598, %v2468
  %2726 = vst.msk [vmem:[%s3 + $0x3f8] sm:$0xff] %vm2598, %v2469
  %2727 = vst.msk [vmem:[%s3 + $0x400] sm:$0xff] %vm2598, %v2470
  %2728 = vst.msk [vmem:[%s3 + $0x408] sm:$0xff] %vm2598, %v2471
  %2729 = vst.msk [vmem:[%s3 + $0x410] sm:$0xff] %vm2598, %v2472
  %2730 = vst.msk [vmem:[%s3 + $0x418] sm:$0xff] %vm2598, %v2473
  %2731 = vst.msk [vmem:[%s3 + $0x420] sm:$0xff] %vm2598, %v2474
  %2732 = vst.msk [vmem:[%s3 + $0x428] sm:$0xff] %vm2598, %v2475
  %2733 = vst.msk [vmem:[%s3 + $0x430] sm:$0xff] %vm2598, %v2476
  %2734 = vst.msk [vmem:[%s3 + $0x438] sm:$0xff] %vm2598, %v2477
  %2735 = vst.msk [vmem:[%s3 + $0x440] sm:$0xff] %vm2598, %v2478
  %2736 = vst.msk [vmem:[%s3 + $0x448] sm:$0xff] %vm2598, %v2479
  %2737 = vst.msk [vmem:[%s3 + $0x450] sm:$0xff] %vm2598, %v2480
  %2738 = vst.msk [vmem:[%s3 + $0x458] sm:$0xff] %vm2598, %v2481
  %2739 = vst.msk [vmem:[%s3 + $0x460] sm:$0xff] %vm2598, %v2482
  %2740 = vst.msk [vmem:[%s3 + $0x468] sm:$0xff] %vm2598, %v2483
  %2741 = vst.msk [vmem:[%s3 + $0x470] sm:$0xff] %vm2598, %v2484
  %2742 = vst.msk [vmem:[%s3 + $0x478] sm:$0xff] %vm2598, %v2485
  %2743 = vst.msk [vmem:[%s3 + $0x480] sm:$0xff] %vm2598, %v2486
  %2744 = vst.msk [vmem:[%s3 + $0x488] sm:$0xff] %vm2598, %v2487
  %2745 = vst.msk [vmem:[%s3 + $0x490] sm:$0xff] %vm2598, %v2488
  %2746 = vst.msk [vmem:[%s3 + $0x498] sm:$0xff] %vm2598, %v2489
  %2747 = vst.msk [vmem:[%s3 + $0x4a0] sm:$0xff] %vm2598, %v2490
  %2748 = vst.msk [vmem:[%s3 + $0x4a8] sm:$0xff] %vm2598, %v2491
  %2749 = vst.msk [vmem:[%s3 + $0x4b0] sm:$0xff] %vm2598, %v2492
  %2750 = vst.msk [vmem:[%s3 + $0x4b8] sm:$0xff] %vm2598, %v2493
  %2751 = vst.msk [vmem:[%s3 + $0x4c0] sm:$0xff] %vm2598, %v2494
  %2752 = vst.msk [vmem:[%s3 + $0x4c8] sm:$0xff] %vm2598, %v2495
  %2753 = vst.msk [vmem:[%s3 + $0x4d0] sm:$0xff] %vm2598, %v2496
  %2754 = vst.msk [vmem:[%s3 + $0x4d8] sm:$0xff] %vm2598, %v2497
  %2755 = vst.msk [vmem:[%s3 + $0x4e0] sm:$0xff] %vm2598, %v2498
  %2756 = vst.msk [vmem:[%s3 + $0x4e8] sm:$0xff] %vm2598, %v2499
  %2757 = vst.msk [vmem:[%s3 + $0x4f0] sm:$0xff] %vm2598, %v2500
  %2758 = vst.msk [vmem:[%s3 + $0x4f8] sm:$0xff] %vm2598, %v2501
  %2759 = vst.msk [vmem:[%s3 + $0x500] sm:$0xff] %vm2598, %v2502
  %2760 = vst.msk [vmem:[%s3 + $0x508] sm:$0xff] %vm2598, %v2503
  %2761 = vst.msk [vmem:[%s3 + $0x510] sm:$0xff] %vm2598, %v2504
  %2762 = vst.msk [vmem:[%s3 + $0x518] sm:$0xff] %vm2598, %v2505
  %2763 = vst.msk [vmem:[%s3 + $0x520] sm:$0xff] %vm2598, %v2506
  %2764 = vst.msk [vmem:[%s3 + $0x528] sm:$0xff] %vm2598, %v2507
  %2765 = vst.msk [vmem:[%s3 + $0x530] sm:$0xff] %vm2598, %v2508
  %2766 = vst.msk [vmem:[%s3 + $0x538] sm:$0xff] %vm2598, %v2509
  %2767 = vst.msk [vmem:[%s3 + $0x540] sm:$0xff] %vm2598, %v2510
  %2768 = vst.msk [vmem:[%s3 + $0x548] sm:$0xff] %vm2598, %v2511
  %2769 = vst.msk [vmem:[%s3 + $0x550] sm:$0xff] %vm2598, %v2512
  %2770 = vst.msk [vmem:[%s3 + $0x558] sm:$0xff] %vm2598, %v2513
  %2771 = vst.msk [vmem:[%s3 + $0x560] sm:$0xff] %vm2598, %v2514
  %2772 = vst.msk [vmem:[%s3 + $0x568] sm:$0xff] %vm2598, %v2515
  %2773 = vst.msk [vmem:[%s3 + $0x570] sm:$0xff] %vm2598, %v2516
  %2774 = vst.msk [vmem:[%s3 + $0x578] sm:$0xff] %vm2598, %v2517
  %2775 = vst.msk [vmem:[%s3 + $0x580] sm:$0xff] %vm2598, %v2518
  %2776 = vst.msk [vmem:[%s3 + $0x588] sm:$0xff] %vm2598, %v2519
  %2777 = vst.msk [vmem:[%s3 + $0x590] sm:$0xff] %vm2598, %v2520
  %2778 = vst.msk [vmem:[%s3 + $0x598] sm:$0xff] %vm2598, %v2521
  %2779 = vst.msk [vmem:[%s3 + $0x5a0] sm:$0xff] %vm2598, %v2522
  %2780 = vst.msk [vmem:[%s3 + $0x5a8] sm:$0xff] %vm2598, %v2523
  %2781 = vst.msk [vmem:[%s3 + $0x5b0] sm:$0xff] %vm2598, %v2524
  %2782 = vst.msk [vmem:[%s3 + $0x5b8] sm:$0xff] %vm2598, %v2525
  %2783 = vst.msk [vmem:[%s3 + $0x5c0] sm:$0xff] %vm2598, %v2526
  %2784 = vst.msk [vmem:[%s3 + $0x5c8] sm:$0xff] %vm2598, %v2527
  %2785 = vst.msk [vmem:[%s3 + $0x5d0] sm:$0xff] %vm2598, %v2528
  %2786 = vst.msk [vmem:[%s3 + $0x5d8] sm:$0xff] %vm2598, %v2529
  %2787 = vst.msk [vmem:[%s3 + $0x5e0] sm:$0xff] %vm2598, %v2530
  %2788 = vst.msk [vmem:[%s3 + $0x5e8] sm:$0xff] %vm2598, %v2531
  %2789 = vst.msk [vmem:[%s3 + $0x5f0] sm:$0xff] %vm2598, %v2532
  %2790 = vst.msk [vmem:[%s3 + $0x5f8] sm:$0xff] %vm2598, %v2533
  %2791 = vst.msk [vmem:[%s3 + $0x600] sm:$0xff] %vm2598, %v2534
  %2792 = vst.msk [vmem:[%s3 + $0x608] sm:$0xff] %vm2598, %v2535
  %2793 = vst.msk [vmem:[%s3 + $0x610] sm:$0xff] %vm2598, %v2536
  %2794 = vst.msk [vmem:[%s3 + $0x618] sm:$0xff] %vm2598, %v2537
  %2795 = vst.msk [vmem:[%s3 + $0x620] sm:$0xff] %vm2598, %v2538
  %2796 = vst.msk [vmem:[%s3 + $0x628] sm:$0xff] %vm2598, %v2539
  %2797 = vst.msk [vmem:[%s3 + $0x630] sm:$0xff] %vm2598, %v2540
  %2798 = vst.msk [vmem:[%s3 + $0x638] sm:$0xff] %vm2598, %v2541
  %2799 = vst.msk [vmem:[%s3 + $0x640] sm:$0xff] %vm2598, %v2542
  %2800 = vst.msk [vmem:[%s3 + $0x648] sm:$0xff] %vm2598, %v2543
  %2801 = vst.msk [vmem:[%s3 + $0x650] sm:$0xff] %vm2598, %v2544
  %2802 = vst.msk [vmem:[%s3 + $0x658] sm:$0xff] %vm2598, %v2545
  %2803 = vst.msk [vmem:[%s3 + $0x660] sm:$0xff] %vm2598, %v2546
  %2804 = vst.msk [vmem:[%s3 + $0x668] sm:$0xff] %vm2598, %v2547
  %2805 = vst.msk [vmem:[%s3 + $0x670] sm:$0xff] %vm2598, %v2548
  %2806 = vst.msk [vmem:[%s3 + $0x678] sm:$0xff] %vm2598, %v2549
  %2807 = vst.msk [vmem:[%s3 + $0x680] sm:$0xff] %vm2598, %v2550
  %2808 = vst.msk [vmem:[%s3 + $0x688] sm:$0xff] %vm2598, %v2551
  %2809 = vst.msk [vmem:[%s3 + $0x690] sm:$0xff] %vm2598, %v2552
  %2810 = vst.msk [vmem:[%s3 + $0x698] sm:$0xff] %vm2598, %v2553
  %2811 = vst.msk [vmem:[%s3 + $0x6a0] sm:$0xff] %vm2598, %v2554
  %2812 = vst.msk [vmem:[%s3 + $0x6a8] sm:$0xff] %vm2598, %v2555
  %2813 = vst.msk [vmem:[%s3 + $0x6b0] sm:$0xff] %vm2598, %v2556
  %2814 = vst.msk [vmem:[%s3 + $0x6b8] sm:$0xff] %vm2598, %v2557
  %2815 = vst.msk [vmem:[%s3 + $0x6c0] sm:$0xff] %vm2598, %v2558
  %2816 = vst.msk [vmem:[%s3 + $0x6c8] sm:$0xff] %vm2598, %v2559
  %2817 = vst.msk [vmem:[%s3 + $0x6d0] sm:$0xff] %vm2598, %v2560
  %2818 = vst.msk [vmem:[%s3 + $0x6d8] sm:$0xff] %vm2598, %v2561
  %2819 = vst.msk [vmem:[%s3 + $0x6e0] sm:$0xff] %vm2598, %v2562
  %2820 = vst.msk [vmem:[%s3 + $0x6e8] sm:$0xff] %vm2598, %v2563
  %2821 = vst.msk [vmem:[%s3 + $0x6f0] sm:$0xff] %vm2598, %v2564
  %2822 = vst.msk [vmem:[%s3 + $0x6f8] sm:$0xff] %vm2598, %v2565
  %2823 = vst.msk [vmem:[%s3 + $0x700] sm:$0xff] %vm2598, %v2566
  %2824 = vst.msk [vmem:[%s3 + $0x708] sm:$0xff] %vm2598, %v2567
  %2825 = vst.msk [vmem:[%s3 + $0x710] sm:$0xff] %vm2598, %v2568
  %2826 = vst.msk [vmem:[%s3 + $0x718] sm:$0xff] %vm2598, %v2569
  %2827 = vst.msk [vmem:[%s3 + $0x720] sm:$0xff] %vm2598, %v2570
  %2828 = vst.msk [vmem:[%s3 + $0x728] sm:$0xff] %vm2598, %v2571
  %2829 = vst.msk [vmem:[%s3 + $0x730] sm:$0xff] %vm2598, %v2572
  %2830 = vst.msk [vmem:[%s3 + $0x738] sm:$0xff] %vm2598, %v2573
  %2831 = vst.msk [vmem:[%s3 + $0x740] sm:$0xff] %vm2598, %v2574
  %2832 = vst.msk [vmem:[%s3 + $0x748] sm:$0xff] %vm2598, %v2575
  %2833 = vst.msk [vmem:[%s3 + $0x750] sm:$0xff] %vm2598, %v2576
  %2834 = vst.msk [vmem:[%s3 + $0x758] sm:$0xff] %vm2598, %v2577
  %2835 = vst.msk [vmem:[%s3 + $0x760] sm:$0xff] %vm2598, %v2578
  %2836 = vst.msk [vmem:[%s3 + $0x768] sm:$0xff] %vm2598, %v2579
  %2837 = vst.msk [vmem:[%s3 + $0x770] sm:$0xff] %vm2598, %v2580
  %2838 = vst.msk [vmem:[%s3 + $0x778] sm:$0xff] %vm2598, %v2581
  %2839 = vst.msk [vmem:[%s3 + $0x780] sm:$0xff] %vm2598, %v2582
  %2840 = vst.msk [vmem:[%s3 + $0x788] sm:$0xff] %vm2598, %v2583
  %2841 = vst.msk [vmem:[%s3 + $0x790] sm:$0xff] %vm2598, %v2584
  %2842 = vst.msk [vmem:[%s3 + $0x798] sm:$0xff] %vm2598, %v2585
  %2843 = vst.msk [vmem:[%s3 + $0x7a0] sm:$0xff] %vm2598, %v2586
  %2844 = vst.msk [vmem:[%s3 + $0x7a8] sm:$0xff] %vm2598, %v2587
  %2845 = vst.msk [vmem:[%s3 + $0x7b0] sm:$0xff] %vm2598, %v2588
  %2846 = vst.msk [vmem:[%s3 + $0x7b8] sm:$0xff] %vm2598, %v2589
  %2847 = vst.msk [vmem:[%s3 + $0x7c0] sm:$0xff] %vm2598, %v2590
  %2848 = vst.msk [vmem:[%s3 + $0x7c8] sm:$0xff] %vm2598, %v2591
  %2849 = vst.msk [vmem:[%s3 + $0x7d0] sm:$0xff] %vm2598, %v2592
  %2850 = vst.msk [vmem:[%s3 + $0x7d8] sm:$0xff] %vm2598, %v2593
  %2851 = vst.msk [vmem:[%s3 + $0x7e0] sm:$0xff] %vm2598, %v2594
  %2852 = vst.msk [vmem:[%s3 + $0x7e8] sm:$0xff] %vm2598, %v2595
  %2853 = vst.msk [vmem:[%s3 + $0x7f0] sm:$0xff] %vm2598, %v2596
  %2854 = vst.msk [vmem:[%s3 + $0x7f8] sm:$0xff] %vm2598, %v2597
  // Predicated region
  $region14: #{d_forward.5} parent=0 // pred_check
    _
  $region15: #{d_forward.5} parent=0 // pred_check_branch
    %2856 = sbr.rel (0) target = $region17
  $region16: #{d_forward.5} parent=0 // pred_region
    _
  $region17: #{d_forward.5} parent=0 // pred_fallthru
    _
  // Predicated region
  $region18: #{d_forward.5} parent=0 // pred_check
    _
  $region19: #{d_forward.5} parent=0 // pred_check_branch
    %2858 = sbr.rel (0) target = $region21
  $region20: #{d_forward.5} parent=0 // pred_region
    _
  $region21: #{d_forward.5} parent=0 // pred_fallthru
    _

// kernel: d_forward.6
$region0: #{d_forward.6}
  #allocation0 [shape = 'u32[]', space=smem, size = 0x4, offset = 0x4, fixed_abs, tag = 'smem constant byte address 0x4 - core index']
  #allocation1 [shape = 'u32[72,128]{1,0:T(1,128)}', space=vmem, size = 0x9000, scoped, tag = 'internal scratch']
  %s0 = inlined_call_operand.vmem [shape: f32[512,512], index: 0, kind: input, shape index: {}]
  %s1 = inlined_call_operand.vmem [shape: f32[512,64], index: 1, kind: input, shape index: {}]
  %s2 = inlined_call_operand.vmem [shape: f32[1,64], index: 2, kind: input, shape index: {}]
  %s3 = inlined_call_operand.vmem [shape: f32[1,64], index: 3, kind: input, shape index: {}]
  %s4 = inlined_call_operand.vmem [shape: f32[1,64], index: 4, kind: input, shape index: {}]
  %s5 = inlined_call_operand.vmem [shape: f32[512,64], index: 5, kind: output, shape index: {}]
  %s6 = sld [smem:[#allocation0]]
  $region30: #{d_forward.6} parent=0
    _
  %s8 = ssub.s32 1, %s6
  %s9 = scalar_select 0, %s8, %s6
  // Predicated region
  $region2: #{d_forward.6} parent=0 // pred_check
    _
  $region3: #{d_forward.6} parent=0 // pred_check_branch
    %11 = sbr.rel (0) target = $region5
  $region4: #{d_forward.6} parent=0 // pred_region
    _
  $region5: #{d_forward.6} parent=0 // pred_fallthru
    _
  // Predicated region
  $region6: #{d_forward.6} parent=0 // pred_check
    _
  $region7: #{d_forward.6} parent=0 // pred_check_branch
    %13 = sbr.rel (0) target = $region9
  $region8: #{d_forward.6} parent=0 // pred_region
    _
  $region9: #{d_forward.6} parent=0 // pred_fallthru
    _
  // Predicated region
  $region10: #{d_forward.6} parent=0 // pred_check
    _
  $region11: #{d_forward.6} parent=0 // pred_check_branch
    %15 = sbr.rel (0) target = $region13
  $region12: #{d_forward.6} parent=0 // pred_region
    _
  $region13: #{d_forward.6} parent=0 // pred_fallthru
    _
  // Predicated region
  $region14: #{d_forward.6} parent=0 // pred_check
    _
  $region15: #{d_forward.6} parent=0 // pred_check_branch
    %17 = sbr.rel (0) target = $region17
  $region16: #{d_forward.6} parent=0 // pred_region
    _
  $region17: #{d_forward.6} parent=0 // pred_fallthru
    _
  // Predicated region
  $region18: #{d_forward.6} parent=0 // pred_check
    _
  $region19: #{d_forward.6} parent=0 // pred_check_branch
    %19 = sbr.rel (0) target = $region21
  $region20: #{d_forward.6} parent=0 // pred_region
    _
  $region21: #{d_forward.6} parent=0 // pred_fallthru
    _
  %v20 = vld [vmem:[%s0] sm:$0xff]
  %v21 = vld [vmem:[%s0 + $0x8] sm:$0xff]
  %v22 = vld [vmem:[%s0 + $0x10] sm:$0xff]
  %v23 = vld [vmem:[%s0 + $0x18] sm:$0xff]
  %v24 = vld [vmem:[%s0 + $0x20] sm:$0xff]
  %v25 = vld [vmem:[%s0 + $0x28] sm:$0xff]
  %v26 = vld [vmem:[%s0 + $0x30] sm:$0xff]
  %v27 = vld [vmem:[%s0 + $0x38] sm:$0xff]
  %v28 = vld [vmem:[%s0 + $0x40] sm:$0xff]
  %v29 = vld [vmem:[%s0 + $0x48] sm:$0xff]
  %v30 = vld [vmem:[%s0 + $0x50] sm:$0xff]
  %v31 = vld [vmem:[%s0 + $0x58] sm:$0xff]
  %v32 = vld [vmem:[%s0 + $0x60] sm:$0xff]
  %v33 = vld [vmem:[%s0 + $0x68] sm:$0xff]
  %v34 = vld [vmem:[%s0 + $0x70] sm:$0xff]
  %v35 = vld [vmem:[%s0 + $0x78] sm:$0xff]
  %v36 = vld [vmem:[%s0 + $0x80] sm:$0xff]
  %v37 = vld [vmem:[%s0 + $0x88] sm:$0xff]
  %v38 = vld [vmem:[%s0 + $0x90] sm:$0xff]
  %v39 = vld [vmem:[%s0 + $0x98] sm:$0xff]
  %v40 = vld [vmem:[%s0 + $0xa0] sm:$0xff]
  %v41 = vld [vmem:[%s0 + $0xa8] sm:$0xff]
  %v42 = vld [vmem:[%s0 + $0xb0] sm:$0xff]
  %v43 = vld [vmem:[%s0 + $0xb8] sm:$0xff]
  %v44 = vld [vmem:[%s0 + $0xc0] sm:$0xff]
  %v45 = vld [vmem:[%s0 + $0xc8] sm:$0xff]
  %v46 = vld [vmem:[%s0 + $0xd0] sm:$0xff]
  %v47 = vld [vmem:[%s0 + $0xd8] sm:$0xff]
  %v48 = vld [vmem:[%s0 + $0xe0] sm:$0xff]
  %v49 = vld [vmem:[%s0 + $0xe8] sm:$0xff]
  %v50 = vld [vmem:[%s0 + $0xf0] sm:$0xff]
  %v51 = vld [vmem:[%s0 + $0xf8] sm:$0xff]
  %v52 = vld [vmem:[%s0 + $0x100] sm:$0xff]
  %v53 = vld [vmem:[%s0 + $0x108] sm:$0xff]
  %v54 = vld [vmem:[%s0 + $0x110] sm:$0xff]
  %v55 = vld [vmem:[%s0 + $0x118] sm:$0xff]
  %v56 = vld [vmem:[%s0 + $0x120] sm:$0xff]
  %v57 = vld [vmem:[%s0 + $0x128] sm:$0xff]
  %v58 = vld [vmem:[%s0 + $0x130] sm:$0xff]
  %v59 = vld [vmem:[%s0 + $0x138] sm:$0xff]
  %v60 = vld [vmem:[%s0 + $0x140] sm:$0xff]
  %v61 = vld [vmem:[%s0 + $0x148] sm:$0xff]
  %v62 = vld [vmem:[%s0 + $0x150] sm:$0xff]
  %v63 = vld [vmem:[%s0 + $0x158] sm:$0xff]
  %v64 = vld [vmem:[%s0 + $0x160] sm:$0xff]
  %v65 = vld [vmem:[%s0 + $0x168] sm:$0xff]
  %v66 = vld [vmem:[%s0 + $0x170] sm:$0xff]
  %v67 = vld [vmem:[%s0 + $0x178] sm:$0xff]
  %v68 = vld [vmem:[%s0 + $0x180] sm:$0xff]
  %v69 = vld [vmem:[%s0 + $0x188] sm:$0xff]
  %v70 = vld [vmem:[%s0 + $0x190] sm:$0xff]
  %v71 = vld [vmem:[%s0 + $0x198] sm:$0xff]
  %v72 = vld [vmem:[%s0 + $0x1a0] sm:$0xff]
  %v73 = vld [vmem:[%s0 + $0x1a8] sm:$0xff]
  %v74 = vld [vmem:[%s0 + $0x1b0] sm:$0xff]
  %v75 = vld [vmem:[%s0 + $0x1b8] sm:$0xff]
  %v76 = vld [vmem:[%s0 + $0x1c0] sm:$0xff]
  %v77 = vld [vmem:[%s0 + $0x1c8] sm:$0xff]
  %v78 = vld [vmem:[%s0 + $0x1d0] sm:$0xff]
  %v79 = vld [vmem:[%s0 + $0x1d8] sm:$0xff]
  %v80 = vld [vmem:[%s0 + $0x1e0] sm:$0xff]
  %v81 = vld [vmem:[%s0 + $0x1e8] sm:$0xff]
  %v82 = vld [vmem:[%s0 + $0x1f0] sm:$0xff]
  %v83 = vld [vmem:[%s0 + $0x1f8] sm:$0xff]
  %v84 = vld [vmem:[%s0 + $0x200] sm:$0xff]
  %v85 = vld [vmem:[%s0 + $0x208] sm:$0xff]
  %v86 = vld [vmem:[%s0 + $0x210] sm:$0xff]
  %v87 = vld [vmem:[%s0 + $0x218] sm:$0xff]
  %v88 = vld [vmem:[%s0 + $0x220] sm:$0xff]
  %v89 = vld [vmem:[%s0 + $0x228] sm:$0xff]
  %v90 = vld [vmem:[%s0 + $0x230] sm:$0xff]
  %v91 = vld [vmem:[%s0 + $0x238] sm:$0xff]
  %v92 = vld [vmem:[%s0 + $0x240] sm:$0xff]
  %v93 = vld [vmem:[%s0 + $0x248] sm:$0xff]
  %v94 = vld [vmem:[%s0 + $0x250] sm:$0xff]
  %v95 = vld [vmem:[%s0 + $0x258] sm:$0xff]
  %v96 = vld [vmem:[%s0 + $0x260] sm:$0xff]
  %v97 = vld [vmem:[%s0 + $0x268] sm:$0xff]
  %v98 = vld [vmem:[%s0 + $0x270] sm:$0xff]
  %v99 = vld [vmem:[%s0 + $0x278] sm:$0xff]
  %v100 = vld [vmem:[%s0 + $0x280] sm:$0xff]
  %v101 = vld [vmem:[%s0 + $0x288] sm:$0xff]
  %v102 = vld [vmem:[%s0 + $0x290] sm:$0xff]
  %v103 = vld [vmem:[%s0 + $0x298] sm:$0xff]
  %v104 = vld [vmem:[%s0 + $0x2a0] sm:$0xff]
  %v105 = vld [vmem:[%s0 + $0x2a8] sm:$0xff]
  %v106 = vld [vmem:[%s0 + $0x2b0] sm:$0xff]
  %v107 = vld [vmem:[%s0 + $0x2b8] sm:$0xff]
  %v108 = vld [vmem:[%s0 + $0x2c0] sm:$0xff]
  %v109 = vld [vmem:[%s0 + $0x2c8] sm:$0xff]
  %v110 = vld [vmem:[%s0 + $0x2d0] sm:$0xff]
  %v111 = vld [vmem:[%s0 + $0x2d8] sm:$0xff]
  %v112 = vld [vmem:[%s0 + $0x2e0] sm:$0xff]
  %v113 = vld [vmem:[%s0 + $0x2e8] sm:$0xff]
  %v114 = vld [vmem:[%s0 + $0x2f0] sm:$0xff]
  %v115 = vld [vmem:[%s0 + $0x2f8] sm:$0xff]
  %v116 = vld [vmem:[%s0 + $0x300] sm:$0xff]
  %v117 = vld [vmem:[%s0 + $0x308] sm:$0xff]
  %v118 = vld [vmem:[%s0 + $0x310] sm:$0xff]
  %v119 = vld [vmem:[%s0 + $0x318] sm:$0xff]
  %v120 = vld [vmem:[%s0 + $0x320] sm:$0xff]
  %v121 = vld [vmem:[%s0 + $0x328] sm:$0xff]
  %v122 = vld [vmem:[%s0 + $0x330] sm:$0xff]
  %v123 = vld [vmem:[%s0 + $0x338] sm:$0xff]
  %v124 = vld [vmem:[%s0 + $0x340] sm:$0xff]
  %v125 = vld [vmem:[%s0 + $0x348] sm:$0xff]
  %v126 = vld [vmem:[%s0 + $0x350] sm:$0xff]
  %v127 = vld [vmem:[%s0 + $0x358] sm:$0xff]
  %v128 = vld [vmem:[%s0 + $0x360] sm:$0xff]
  %v129 = vld [vmem:[%s0 + $0x368] sm:$0xff]
  %v130 = vld [vmem:[%s0 + $0x370] sm:$0xff]
  %v131 = vld [vmem:[%s0 + $0x378] sm:$0xff]
  %v132 = vld [vmem:[%s0 + $0x380] sm:$0xff]
  %v133 = vld [vmem:[%s0 + $0x388] sm:$0xff]
  %v134 = vld [vmem:[%s0 + $0x390] sm:$0xff]
  %v135 = vld [vmem:[%s0 + $0x398] sm:$0xff]
  %v136 = vld [vmem:[%s0 + $0x3a0] sm:$0xff]
  %v137 = vld [vmem:[%s0 + $0x3a8] sm:$0xff]
  %v138 = vld [vmem:[%s0 + $0x3b0] sm:$0xff]
  %v139 = vld [vmem:[%s0 + $0x3b8] sm:$0xff]
  %v140 = vld [vmem:[%s0 + $0x3c0] sm:$0xff]
  %v141 = vld [vmem:[%s0 + $0x3c8] sm:$0xff]
  %v142 = vld [vmem:[%s0 + $0x3d0] sm:$0xff]
  %v143 = vld [vmem:[%s0 + $0x3d8] sm:$0xff]
  %v144 = vld [vmem:[%s0 + $0x3e0] sm:$0xff]
  %v145 = vld [vmem:[%s0 + $0x3e8] sm:$0xff]
  %v146 = vld [vmem:[%s0 + $0x3f0] sm:$0xff]
  %v147 = vld [vmem:[%s0 + $0x3f8] sm:$0xff]
  %v148 = vld [vmem:[%s0 + $0x400] sm:$0xff]
  %v149 = vld [vmem:[%s0 + $0x408] sm:$0xff]
  %v150 = vld [vmem:[%s0 + $0x410] sm:$0xff]
  %v151 = vld [vmem:[%s0 + $0x418] sm:$0xff]
  %v152 = vld [vmem:[%s0 + $0x420] sm:$0xff]
  %v153 = vld [vmem:[%s0 + $0x428] sm:$0xff]
  %v154 = vld [vmem:[%s0 + $0x430] sm:$0xff]
  %v155 = vld [vmem:[%s0 + $0x438] sm:$0xff]
  %v156 = vld [vmem:[%s0 + $0x440] sm:$0xff]
  %v157 = vld [vmem:[%s0 + $0x448] sm:$0xff]
  %v158 = vld [vmem:[%s0 + $0x450] sm:$0xff]
  %v159 = vld [vmem:[%s0 + $0x458] sm:$0xff]
  %v160 = vld [vmem:[%s0 + $0x460] sm:$0xff]
  %v161 = vld [vmem:[%s0 + $0x468] sm:$0xff]
  %v162 = vld [vmem:[%s0 + $0x470] sm:$0xff]
  %v163 = vld [vmem:[%s0 + $0x478] sm:$0xff]
  %v164 = vld [vmem:[%s0 + $0x480] sm:$0xff]
  %v165 = vld [vmem:[%s0 + $0x488] sm:$0xff]
  %v166 = vld [vmem:[%s0 + $0x490] sm:$0xff]
  %v167 = vld [vmem:[%s0 + $0x498] sm:$0xff]
  %v168 = vld [vmem:[%s0 + $0x4a0] sm:$0xff]
  %v169 = vld [vmem:[%s0 + $0x4a8] sm:$0xff]
  %v170 = vld [vmem:[%s0 + $0x4b0] sm:$0xff]
  %v171 = vld [vmem:[%s0 + $0x4b8] sm:$0xff]
  %v172 = vld [vmem:[%s0 + $0x4c0] sm:$0xff]
  %v173 = vld [vmem:[%s0 + $0x4c8] sm:$0xff]
  %v174 = vld [vmem:[%s0 + $0x4d0] sm:$0xff]
  %v175 = vld [vmem:[%s0 + $0x4d8] sm:$0xff]
  %v176 = vld [vmem:[%s0 + $0x4e0] sm:$0xff]
  %v177 = vld [vmem:[%s0 + $0x4e8] sm:$0xff]
  %v178 = vld [vmem:[%s0 + $0x4f0] sm:$0xff]
  %v179 = vld [vmem:[%s0 + $0x4f8] sm:$0xff]
  %v180 = vld [vmem:[%s0 + $0x500] sm:$0xff]
  %v181 = vld [vmem:[%s0 + $0x508] sm:$0xff]
  %v182 = vld [vmem:[%s0 + $0x510] sm:$0xff]
  %v183 = vld [vmem:[%s0 + $0x518] sm:$0xff]
  %v184 = vld [vmem:[%s0 + $0x520] sm:$0xff]
  %v185 = vld [vmem:[%s0 + $0x528] sm:$0xff]
  %v186 = vld [vmem:[%s0 + $0x530] sm:$0xff]
  %v187 = vld [vmem:[%s0 + $0x538] sm:$0xff]
  %v188 = vld [vmem:[%s0 + $0x540] sm:$0xff]
  %v189 = vld [vmem:[%s0 + $0x548] sm:$0xff]
  %v190 = vld [vmem:[%s0 + $0x550] sm:$0xff]
  %v191 = vld [vmem:[%s0 + $0x558] sm:$0xff]
  %v192 = vld [vmem:[%s0 + $0x560] sm:$0xff]
  %v193 = vld [vmem:[%s0 + $0x568] sm:$0xff]
  %v194 = vld [vmem:[%s0 + $0x570] sm:$0xff]
  %v195 = vld [vmem:[%s0 + $0x578] sm:$0xff]
  %v196 = vld [vmem:[%s0 + $0x580] sm:$0xff]
  %v197 = vld [vmem:[%s0 + $0x588] sm:$0xff]
  %v198 = vld [vmem:[%s0 + $0x590] sm:$0xff]
  %v199 = vld [vmem:[%s0 + $0x598] sm:$0xff]
  %v200 = vld [vmem:[%s0 + $0x5a0] sm:$0xff]
  %v201 = vld [vmem:[%s0 + $0x5a8] sm:$0xff]
  %v202 = vld [vmem:[%s0 + $0x5b0] sm:$0xff]
  %v203 = vld [vmem:[%s0 + $0x5b8] sm:$0xff]
  %v204 = vld [vmem:[%s0 + $0x5c0] sm:$0xff]
  %v205 = vld [vmem:[%s0 + $0x5c8] sm:$0xff]
  %v206 = vld [vmem:[%s0 + $0x5d0] sm:$0xff]
  %v207 = vld [vmem:[%s0 + $0x5d8] sm:$0xff]
  %v208 = vld [vmem:[%s0 + $0x5e0] sm:$0xff]
  %v209 = vld [vmem:[%s0 + $0x5e8] sm:$0xff]
  %v210 = vld [vmem:[%s0 + $0x5f0] sm:$0xff]
  %v211 = vld [vmem:[%s0 + $0x5f8] sm:$0xff]
  %v212 = vld [vmem:[%s0 + $0x600] sm:$0xff]
  %v213 = vld [vmem:[%s0 + $0x608] sm:$0xff]
  %v214 = vld [vmem:[%s0 + $0x610] sm:$0xff]
  %v215 = vld [vmem:[%s0 + $0x618] sm:$0xff]
  %v216 = vld [vmem:[%s0 + $0x620] sm:$0xff]
  %v217 = vld [vmem:[%s0 + $0x628] sm:$0xff]
  %v218 = vld [vmem:[%s0 + $0x630] sm:$0xff]
  %v219 = vld [vmem:[%s0 + $0x638] sm:$0xff]
  %v220 = vld [vmem:[%s0 + $0x640] sm:$0xff]
  %v221 = vld [vmem:[%s0 + $0x648] sm:$0xff]
  %v222 = vld [vmem:[%s0 + $0x650] sm:$0xff]
  %v223 = vld [vmem:[%s0 + $0x658] sm:$0xff]
  %v224 = vld [vmem:[%s0 + $0x660] sm:$0xff]
  %v225 = vld [vmem:[%s0 + $0x668] sm:$0xff]
  %v226 = vld [vmem:[%s0 + $0x670] sm:$0xff]
  %v227 = vld [vmem:[%s0 + $0x678] sm:$0xff]
  %v228 = vld [vmem:[%s0 + $0x680] sm:$0xff]
  %v229 = vld [vmem:[%s0 + $0x688] sm:$0xff]
  %v230 = vld [vmem:[%s0 + $0x690] sm:$0xff]
  %v231 = vld [vmem:[%s0 + $0x698] sm:$0xff]
  %v232 = vld [vmem:[%s0 + $0x6a0] sm:$0xff]
  %v233 = vld [vmem:[%s0 + $0x6a8] sm:$0xff]
  %v234 = vld [vmem:[%s0 + $0x6b0] sm:$0xff]
  %v235 = vld [vmem:[%s0 + $0x6b8] sm:$0xff]
  %v236 = vld [vmem:[%s0 + $0x6c0] sm:$0xff]
  %v237 = vld [vmem:[%s0 + $0x6c8] sm:$0xff]
  %v238 = vld [vmem:[%s0 + $0x6d0] sm:$0xff]
  %v239 = vld [vmem:[%s0 + $0x6d8] sm:$0xff]
  %v240 = vld [vmem:[%s0 + $0x6e0] sm:$0xff]
  %v241 = vld [vmem:[%s0 + $0x6e8] sm:$0xff]
  %v242 = vld [vmem:[%s0 + $0x6f0] sm:$0xff]
  %v243 = vld [vmem:[%s0 + $0x6f8] sm:$0xff]
  %v244 = vld [vmem:[%s0 + $0x700] sm:$0xff]
  %v245 = vld [vmem:[%s0 + $0x708] sm:$0xff]
  %v246 = vld [vmem:[%s0 + $0x710] sm:$0xff]
  %v247 = vld [vmem:[%s0 + $0x718] sm:$0xff]
  %v248 = vld [vmem:[%s0 + $0x720] sm:$0xff]
  %v249 = vld [vmem:[%s0 + $0x728] sm:$0xff]
  %v250 = vld [vmem:[%s0 + $0x730] sm:$0xff]
  %v251 = vld [vmem:[%s0 + $0x738] sm:$0xff]
  %v252 = vld [vmem:[%s0 + $0x740] sm:$0xff]
  %v253 = vld [vmem:[%s0 + $0x748] sm:$0xff]
  %v254 = vld [vmem:[%s0 + $0x750] sm:$0xff]
  %v255 = vld [vmem:[%s0 + $0x758] sm:$0xff]
  %v256 = vld [vmem:[%s0 + $0x760] sm:$0xff]
  %v257 = vld [vmem:[%s0 + $0x768] sm:$0xff]
  %v258 = vld [vmem:[%s0 + $0x770] sm:$0xff]
  %v259 = vld [vmem:[%s0 + $0x778] sm:$0xff]
  %v260 = vld [vmem:[%s0 + $0x780] sm:$0xff]
  %v261 = vld [vmem:[%s0 + $0x788] sm:$0xff]
  %v262 = vld [vmem:[%s0 + $0x790] sm:$0xff]
  %v263 = vld [vmem:[%s0 + $0x798] sm:$0xff]
  %v264 = vld [vmem:[%s0 + $0x7a0] sm:$0xff]
  %v265 = vld [vmem:[%s0 + $0x7a8] sm:$0xff]
  %v266 = vld [vmem:[%s0 + $0x7b0] sm:$0xff]
  %v267 = vld [vmem:[%s0 + $0x7b8] sm:$0xff]
  %v268 = vld [vmem:[%s0 + $0x7c0] sm:$0xff]
  %v269 = vld [vmem:[%s0 + $0x7c8] sm:$0xff]
  %v270 = vld [vmem:[%s0 + $0x7d0] sm:$0xff]
  %v271 = vld [vmem:[%s0 + $0x7d8] sm:$0xff]
  %v272 = vld [vmem:[%s0 + $0x7e0] sm:$0xff]
  %v273 = vld [vmem:[%s0 + $0x7e8] sm:$0xff]
  %v274 = vld [vmem:[%s0 + $0x7f0] sm:$0xff]
  %v275 = vld [vmem:[%s0 + $0x7f8] sm:$0xff]
  %v276 = vld [vmem:[%s1] sm:$0xff]
  %v277 = vld [vmem:[%s1 + $0x8] sm:$0xff]
  %v278 = vld [vmem:[%s1 + $0x10] sm:$0xff]
  %v279 = vld [vmem:[%s1 + $0x18] sm:$0xff]
  %v280 = vld [vmem:[%s1 + $0x20] sm:$0xff]
  %v281 = vld [vmem:[%s1 + $0x28] sm:$0xff]
  %v282 = vld [vmem:[%s1 + $0x30] sm:$0xff]
  %v283 = vld [vmem:[%s1 + $0x38] sm:$0xff]
  %v284 = vld [vmem:[%s1 + $0x40] sm:$0xff]
  %v285 = vld [vmem:[%s1 + $0x48] sm:$0xff]
  %v286 = vld [vmem:[%s1 + $0x50] sm:$0xff]
  %v287 = vld [vmem:[%s1 + $0x58] sm:$0xff]
  %v288 = vld [vmem:[%s1 + $0x60] sm:$0xff]
  %v289 = vld [vmem:[%s1 + $0x68] sm:$0xff]
  %v290 = vld [vmem:[%s1 + $0x70] sm:$0xff]
  %v291 = vld [vmem:[%s1 + $0x78] sm:$0xff]
  %v292 = vld [vmem:[%s1 + $0x80] sm:$0xff]
  %v293 = vld [vmem:[%s1 + $0x88] sm:$0xff]
  %v294 = vld [vmem:[%s1 + $0x90] sm:$0xff]
  %v295 = vld [vmem:[%s1 + $0x98] sm:$0xff]
  %v296 = vld [vmem:[%s1 + $0xa0] sm:$0xff]
  %v297 = vld [vmem:[%s1 + $0xa8] sm:$0xff]
  %v298 = vld [vmem:[%s1 + $0xb0] sm:$0xff]
  %v299 = vld [vmem:[%s1 + $0xb8] sm:$0xff]
  %v300 = vld [vmem:[%s1 + $0xc0] sm:$0xff]
  %v301 = vld [vmem:[%s1 + $0xc8] sm:$0xff]
  %v302 = vld [vmem:[%s1 + $0xd0] sm:$0xff]
  %v303 = vld [vmem:[%s1 + $0xd8] sm:$0xff]
  %v304 = vld [vmem:[%s1 + $0xe0] sm:$0xff]
  %v305 = vld [vmem:[%s1 + $0xe8] sm:$0xff]
  %v306 = vld [vmem:[%s1 + $0xf0] sm:$0xff]
  %v307 = vld [vmem:[%s1 + $0xf8] sm:$0xff]
  %v308 = vld [vmem:[%s1 + $0x100] sm:$0xff]
  %v309 = vld [vmem:[%s1 + $0x108] sm:$0xff]
  %v310 = vld [vmem:[%s1 + $0x110] sm:$0xff]
  %v311 = vld [vmem:[%s1 + $0x118] sm:$0xff]
  %v312 = vld [vmem:[%s1 + $0x120] sm:$0xff]
  %v313 = vld [vmem:[%s1 + $0x128] sm:$0xff]
  %v314 = vld [vmem:[%s1 + $0x130] sm:$0xff]
  %v315 = vld [vmem:[%s1 + $0x138] sm:$0xff]
  %v316 = vld [vmem:[%s1 + $0x140] sm:$0xff]
  %v317 = vld [vmem:[%s1 + $0x148] sm:$0xff]
  %v318 = vld [vmem:[%s1 + $0x150] sm:$0xff]
  %v319 = vld [vmem:[%s1 + $0x158] sm:$0xff]
  %v320 = vld [vmem:[%s1 + $0x160] sm:$0xff]
  %v321 = vld [vmem:[%s1 + $0x168] sm:$0xff]
  %v322 = vld [vmem:[%s1 + $0x170] sm:$0xff]
  %v323 = vld [vmem:[%s1 + $0x178] sm:$0xff]
  %v324 = vld [vmem:[%s1 + $0x180] sm:$0xff]
  %v325 = vld [vmem:[%s1 + $0x188] sm:$0xff]
  %v326 = vld [vmem:[%s1 + $0x190] sm:$0xff]
  %v327 = vld [vmem:[%s1 + $0x198] sm:$0xff]
  %v328 = vld [vmem:[%s1 + $0x1a0] sm:$0xff]
  %v329 = vld [vmem:[%s1 + $0x1a8] sm:$0xff]
  %v330 = vld [vmem:[%s1 + $0x1b0] sm:$0xff]
  %v331 = vld [vmem:[%s1 + $0x1b8] sm:$0xff]
  %v332 = vld [vmem:[%s1 + $0x1c0] sm:$0xff]
  %v333 = vld [vmem:[%s1 + $0x1c8] sm:$0xff]
  %v334 = vld [vmem:[%s1 + $0x1d0] sm:$0xff]
  %v335 = vld [vmem:[%s1 + $0x1d8] sm:$0xff]
  %v336 = vld [vmem:[%s1 + $0x1e0] sm:$0xff]
  %v337 = vld [vmem:[%s1 + $0x1e8] sm:$0xff]
  %v338 = vld [vmem:[%s1 + $0x1f0] sm:$0xff]
  %v339 = vld [vmem:[%s1 + $0x1f8] sm:$0xff]
  %v340 = vld [vmem:[%s2] sm:$0x1]
  %v342 = vperm.slane %v340, 0
  %344 = vmatpush.msra.mxu0 %v291
  %345 = vmatpush.msra.mxu0 %v290
  %346 = vmatpush.msra.mxu0 %v289
  %347 = vmatpush.msra.mxu0 %v288
  %348 = vmatpush.msra.mxu0 %v287
  %349 = vmatpush.msra.mxu0 %v286
  %350 = vmatpush.msra.mxu0 %v285
  %351 = vmatpush.msra.mxu0 %v284
  %352 = vmatpush.msra.mxu0 %v283
  %353 = vmatpush.msra.mxu0 %v282
  %354 = vmatpush.msra.mxu0 %v281
  %355 = vmatpush.msra.mxu0 %v280
  %356 = vmatpush.msra.mxu0 %v279
  %357 = vmatpush.msra.mxu0 %v278
  %358 = vmatpush.msra.mxu0 %v277
  %359 = vmatpush.msra.mxu0 %v276
  %360 = vmatmul.f32.gmra.mxu0 %v20
  %v361 = vpop.f32.mrf.mxu0
  %v362 = vadd.f32 %v342, %v361
  %363 = vmatmul.f32.gmra.mxu0 %v24
  %v364 = vpop.f32.mrf.mxu0
  %v365 = vadd.f32 %v342, %v364
  %366 = vmatmul.f32.gmra.mxu0 %v28
  %v367 = vpop.f32.mrf.mxu0
  %v368 = vadd.f32 %v342, %v367
  %369 = vmatmul.f32.gmra.mxu0 %v32
  %v370 = vpop.f32.mrf.mxu0
  %v371 = vadd.f32 %v342, %v370
  %372 = vmatmul.f32.gmra.mxu0 %v36
  %v373 = vpop.f32.mrf.mxu0
  %v374 = vadd.f32 %v342, %v373
  %375 = vmatmul.f32.gmra.mxu0 %v40
  %v376 = vpop.f32.mrf.mxu0
  %v377 = vadd.f32 %v342, %v376
  %378 = vmatmul.f32.gmra.mxu0 %v44
  %v379 = vpop.f32.mrf.mxu0
  %v380 = vadd.f32 %v342, %v379
  %381 = vmatmul.f32.gmra.mxu0 %v48
  %v382 = vpop.f32.mrf.mxu0
  %v383 = vadd.f32 %v342, %v382
  %384 = vmatmul.f32.gmra.mxu0 %v52
  %v385 = vpop.f32.mrf.mxu0
  %v386 = vadd.f32 %v342, %v385
  %387 = vmatmul.f32.gmra.mxu0 %v56
  %v388 = vpop.f32.mrf.mxu0
  %v389 = vadd.f32 %v342, %v388
  %390 = vmatmul.f32.gmra.mxu0 %v60
  %v391 = vpop.f32.mrf.mxu0
  %v392 = vadd.f32 %v342, %v391
  %393 = vmatmul.f32.gmra.mxu0 %v64
  %v394 = vpop.f32.mrf.mxu0
  %v395 = vadd.f32 %v342, %v394
  %396 = vmatmul.f32.gmra.mxu0 %v68
  %v397 = vpop.f32.mrf.mxu0
  %v398 = vadd.f32 %v342, %v397
  %399 = vmatmul.f32.gmra.mxu0 %v72
  %v400 = vpop.f32.mrf.mxu0
  %v401 = vadd.f32 %v342, %v400
  %402 = vmatmul.f32.gmra.mxu0 %v76
  %v403 = vpop.f32.mrf.mxu0
  %v404 = vadd.f32 %v342, %v403
  %405 = vmatmul.f32.gmra.mxu0 %v80
  %v406 = vpop.f32.mrf.mxu0
  %v407 = vadd.f32 %v342, %v406
  %408 = vmatmul.f32.gmra.mxu0 %v84
  %v409 = vpop.f32.mrf.mxu0
  %v410 = vadd.f32 %v342, %v409
  %411 = vmatmul.f32.gmra.mxu0 %v88
  %v412 = vpop.f32.mrf.mxu0
  %v413 = vadd.f32 %v342, %v412
  %414 = vmatmul.f32.gmra.mxu0 %v92
  %v415 = vpop.f32.mrf.mxu0
  %v416 = vadd.f32 %v342, %v415
  %417 = vmatmul.f32.gmra.mxu0 %v96
  %v418 = vpop.f32.mrf.mxu0
  %v419 = vadd.f32 %v342, %v418
  %420 = vmatmul.f32.gmra.mxu0 %v100
  %v421 = vpop.f32.mrf.mxu0
  %v422 = vadd.f32 %v342, %v421
  %423 = vmatmul.f32.gmra.mxu0 %v104
  %v424 = vpop.f32.mrf.mxu0
  %v425 = vadd.f32 %v342, %v424
  %426 = vmatmul.f32.gmra.mxu0 %v108
  %v427 = vpop.f32.mrf.mxu0
  %v428 = vadd.f32 %v342, %v427
  %429 = vmatmul.f32.gmra.mxu0 %v112
  %v430 = vpop.f32.mrf.mxu0
  %v431 = vadd.f32 %v342, %v430
  %432 = vmatmul.f32.gmra.mxu0 %v116
  %v433 = vpop.f32.mrf.mxu0
  %v434 = vadd.f32 %v342, %v433
  %435 = vmatmul.f32.gmra.mxu0 %v120
  %v436 = vpop.f32.mrf.mxu0
  %v437 = vadd.f32 %v342, %v436
  %438 = vmatmul.f32.gmra.mxu0 %v124
  %v439 = vpop.f32.mrf.mxu0
  %v440 = vadd.f32 %v342, %v439
  %441 = vmatmul.f32.gmra.mxu0 %v128
  %v442 = vpop.f32.mrf.mxu0
  %v443 = vadd.f32 %v342, %v442
  %444 = vmatmul.f32.gmra.mxu0 %v132
  %v445 = vpop.f32.mrf.mxu0
  %v446 = vadd.f32 %v342, %v445
  %447 = vmatmul.f32.gmra.mxu0 %v136
  %v448 = vpop.f32.mrf.mxu0
  %v449 = vadd.f32 %v342, %v448
  %450 = vmatmul.f32.gmra.mxu0 %v140
  %v451 = vpop.f32.mrf.mxu0
  %v452 = vadd.f32 %v342, %v451
  %453 = vmatmul.f32.gmra.mxu0 %v144
  %v454 = vpop.f32.mrf.mxu0
  %v455 = vadd.f32 %v342, %v454
  %456 = vmatmul.f32.gmra.mxu0 %v148
  %v457 = vpop.f32.mrf.mxu0
  %v458 = vadd.f32 %v342, %v457
  %459 = vmatmul.f32.gmra.mxu0 %v152
  %v460 = vpop.f32.mrf.mxu0
  %v461 = vadd.f32 %v342, %v460
  %462 = vmatmul.f32.gmra.mxu0 %v156
  %v463 = vpop.f32.mrf.mxu0
  %v464 = vadd.f32 %v342, %v463
  %465 = vmatmul.f32.gmra.mxu0 %v160
  %v466 = vpop.f32.mrf.mxu0
  %v467 = vadd.f32 %v342, %v466
  %468 = vmatmul.f32.gmra.mxu0 %v164
  %v469 = vpop.f32.mrf.mxu0
  %v470 = vadd.f32 %v342, %v469
  %471 = vmatmul.f32.gmra.mxu0 %v168
  %v472 = vpop.f32.mrf.mxu0
  %v473 = vadd.f32 %v342, %v472
  %474 = vmatmul.f32.gmra.mxu0 %v172
  %v475 = vpop.f32.mrf.mxu0
  %v476 = vadd.f32 %v342, %v475
  %477 = vmatmul.f32.gmra.mxu0 %v176
  %v478 = vpop.f32.mrf.mxu0
  %v479 = vadd.f32 %v342, %v478
  %480 = vmatmul.f32.gmra.mxu0 %v180
  %v481 = vpop.f32.mrf.mxu0
  %v482 = vadd.f32 %v342, %v481
  %483 = vmatmul.f32.gmra.mxu0 %v184
  %v484 = vpop.f32.mrf.mxu0
  %v485 = vadd.f32 %v342, %v484
  %486 = vmatmul.f32.gmra.mxu0 %v188
  %v487 = vpop.f32.mrf.mxu0
  %v488 = vadd.f32 %v342, %v487
  %489 = vmatmul.f32.gmra.mxu0 %v192
  %v490 = vpop.f32.mrf.mxu0
  %v491 = vadd.f32 %v342, %v490
  %492 = vmatmul.f32.gmra.mxu0 %v196
  %v493 = vpop.f32.mrf.mxu0
  %v494 = vadd.f32 %v342, %v493
  %495 = vmatmul.f32.gmra.mxu0 %v200
  %v496 = vpop.f32.mrf.mxu0
  %v497 = vadd.f32 %v342, %v496
  %498 = vmatmul.f32.gmra.mxu0 %v204
  %v499 = vpop.f32.mrf.mxu0
  %v500 = vadd.f32 %v342, %v499
  %501 = vmatmul.f32.gmra.mxu0 %v208
  %v502 = vpop.f32.mrf.mxu0
  %v503 = vadd.f32 %v342, %v502
  %504 = vmatmul.f32.gmra.mxu0 %v212
  %v505 = vpop.f32.mrf.mxu0
  %v506 = vadd.f32 %v342, %v505
  %507 = vmatmul.f32.gmra.mxu0 %v216
  %v508 = vpop.f32.mrf.mxu0
  %v509 = vadd.f32 %v342, %v508
  %510 = vmatmul.f32.gmra.mxu0 %v220
  %v511 = vpop.f32.mrf.mxu0
  %v512 = vadd.f32 %v342, %v511
  %513 = vmatmul.f32.gmra.mxu0 %v224
  %v514 = vpop.f32.mrf.mxu0
  %v515 = vadd.f32 %v342, %v514
  %516 = vmatmul.f32.gmra.mxu0 %v228
  %v517 = vpop.f32.mrf.mxu0
  %v518 = vadd.f32 %v342, %v517
  %519 = vmatmul.f32.gmra.mxu0 %v232
  %v520 = vpop.f32.mrf.mxu0
  %v521 = vadd.f32 %v342, %v520
  %522 = vmatmul.f32.gmra.mxu0 %v236
  %v523 = vpop.f32.mrf.mxu0
  %v524 = vadd.f32 %v342, %v523
  %525 = vmatmul.f32.gmra.mxu0 %v240
  %v526 = vpop.f32.mrf.mxu0
  %v527 = vadd.f32 %v342, %v526
  %528 = vmatmul.f32.gmra.mxu0 %v244
  %v529 = vpop.f32.mrf.mxu0
  %v530 = vadd.f32 %v342, %v529
  %531 = vmatmul.f32.gmra.mxu0 %v248
  %v532 = vpop.f32.mrf.mxu0
  %v533 = vadd.f32 %v342, %v532
  %534 = vmatmul.f32.gmra.mxu0 %v252
  %v535 = vpop.f32.mrf.mxu0
  %v536 = vadd.f32 %v342, %v535
  %537 = vmatmul.f32.gmra.mxu0 %v256
  %v538 = vpop.f32.mrf.mxu0
  %v539 = vadd.f32 %v342, %v538
  %540 = vmatmul.f32.gmra.mxu0 %v260
  %v541 = vpop.f32.mrf.mxu0
  %v542 = vadd.f32 %v342, %v541
  %543 = vmatmul.f32.gmra.mxu0 %v264
  %v544 = vpop.f32.mrf.mxu0
  %v545 = vadd.f32 %v342, %v544
  %546 = vmatmul.f32.gmra.mxu0 %v268
  %v547 = vpop.f32.mrf.mxu0
  %v548 = vadd.f32 %v342, %v547
  %549 = vmatmul.f32.gmra.mxu0 %v272
  %v550 = vpop.f32.mrf.mxu0
  %v551 = vadd.f32 %v342, %v550
  %552 = vdwg.mxu0
  %553 = vmatpush.msra.mxu0 %v307
  %554 = vmatpush.msra.mxu0 %v306
  %555 = vmatpush.msra.mxu0 %v305
  %556 = vmatpush.msra.mxu0 %v304
  %557 = vmatpush.msra.mxu0 %v303
  %558 = vmatpush.msra.mxu0 %v302
  %559 = vmatpush.msra.mxu0 %v301
  %560 = vmatpush.msra.mxu0 %v300
  %561 = vmatpush.msra.mxu0 %v299
  %562 = vmatpush.msra.mxu0 %v298
  %563 = vmatpush.msra.mxu0 %v297
  %564 = vmatpush.msra.mxu0 %v296
  %565 = vmatpush.msra.mxu0 %v295
  %566 = vmatpush.msra.mxu0 %v294
  %567 = vmatpush.msra.mxu0 %v293
  %568 = vmatpush.msra.mxu0 %v292
  %569 = vmatmul.f32.gmra.mxu0 %v21
  %v570 = vpop.f32.mrf.mxu0
  %v571 = vadd.f32 %v362, %v570
  %572 = vmatmul.f32.gmra.mxu0 %v25
  %v573 = vpop.f32.mrf.mxu0
  %v574 = vadd.f32 %v365, %v573
  %575 = vmatmul.f32.gmra.mxu0 %v29
  %v576 = vpop.f32.mrf.mxu0
  %v577 = vadd.f32 %v368, %v576
  %578 = vmatmul.f32.gmra.mxu0 %v33
  %v579 = vpop.f32.mrf.mxu0
  %v580 = vadd.f32 %v371, %v579
  %581 = vmatmul.f32.gmra.mxu0 %v37
  %v582 = vpop.f32.mrf.mxu0
  %v583 = vadd.f32 %v374, %v582
  %584 = vmatmul.f32.gmra.mxu0 %v41
  %v585 = vpop.f32.mrf.mxu0
  %v586 = vadd.f32 %v377, %v585
  %587 = vmatmul.f32.gmra.mxu0 %v45
  %v588 = vpop.f32.mrf.mxu0
  %v589 = vadd.f32 %v380, %v588
  %590 = vmatmul.f32.gmra.mxu0 %v49
  %v591 = vpop.f32.mrf.mxu0
  %v592 = vadd.f32 %v383, %v591
  %593 = vmatmul.f32.gmra.mxu0 %v53
  %v594 = vpop.f32.mrf.mxu0
  %v595 = vadd.f32 %v386, %v594
  %596 = vmatmul.f32.gmra.mxu0 %v57
  %v597 = vpop.f32.mrf.mxu0
  %v598 = vadd.f32 %v389, %v597
  %599 = vmatmul.f32.gmra.mxu0 %v61
  %v600 = vpop.f32.mrf.mxu0
  %v601 = vadd.f32 %v392, %v600
  %602 = vmatmul.f32.gmra.mxu0 %v65
  %v603 = vpop.f32.mrf.mxu0
  %v604 = vadd.f32 %v395, %v603
  %605 = vmatmul.f32.gmra.mxu0 %v69
  %v606 = vpop.f32.mrf.mxu0
  %v607 = vadd.f32 %v398, %v606
  %608 = vmatmul.f32.gmra.mxu0 %v73
  %v609 = vpop.f32.mrf.mxu0
  %v610 = vadd.f32 %v401, %v609
  %611 = vmatmul.f32.gmra.mxu0 %v77
  %v612 = vpop.f32.mrf.mxu0
  %v613 = vadd.f32 %v404, %v612
  %614 = vmatmul.f32.gmra.mxu0 %v81
  %v615 = vpop.f32.mrf.mxu0
  %v616 = vadd.f32 %v407, %v615
  %617 = vmatmul.f32.gmra.mxu0 %v85
  %v618 = vpop.f32.mrf.mxu0
  %v619 = vadd.f32 %v410, %v618
  %620 = vmatmul.f32.gmra.mxu0 %v89
  %v621 = vpop.f32.mrf.mxu0
  %v622 = vadd.f32 %v413, %v621
  %623 = vmatmul.f32.gmra.mxu0 %v93
  %v624 = vpop.f32.mrf.mxu0
  %v625 = vadd.f32 %v416, %v624
  %626 = vmatmul.f32.gmra.mxu0 %v97
  %v627 = vpop.f32.mrf.mxu0
  %v628 = vadd.f32 %v419, %v627
  %629 = vmatmul.f32.gmra.mxu0 %v101
  %v630 = vpop.f32.mrf.mxu0
  %v631 = vadd.f32 %v422, %v630
  %632 = vmatmul.f32.gmra.mxu0 %v105
  %v633 = vpop.f32.mrf.mxu0
  %v634 = vadd.f32 %v425, %v633
  %635 = vmatmul.f32.gmra.mxu0 %v109
  %v636 = vpop.f32.mrf.mxu0
  %v637 = vadd.f32 %v428, %v636
  %638 = vmatmul.f32.gmra.mxu0 %v113
  %v639 = vpop.f32.mrf.mxu0
  %v640 = vadd.f32 %v431, %v639
  %641 = vmatmul.f32.gmra.mxu0 %v117
  %v642 = vpop.f32.mrf.mxu0
  %v643 = vadd.f32 %v434, %v642
  %644 = vmatmul.f32.gmra.mxu0 %v121
  %v645 = vpop.f32.mrf.mxu0
  %v646 = vadd.f32 %v437, %v645
  %647 = vmatmul.f32.gmra.mxu0 %v125
  %v648 = vpop.f32.mrf.mxu0
  %v649 = vadd.f32 %v440, %v648
  %650 = vmatmul.f32.gmra.mxu0 %v129
  %v651 = vpop.f32.mrf.mxu0
  %v652 = vadd.f32 %v443, %v651
  %653 = vmatmul.f32.gmra.mxu0 %v133
  %v654 = vpop.f32.mrf.mxu0
  %v655 = vadd.f32 %v446, %v654
  %656 = vmatmul.f32.gmra.mxu0 %v137
  %v657 = vpop.f32.mrf.mxu0
  %v658 = vadd.f32 %v449, %v657
  %659 = vmatmul.f32.gmra.mxu0 %v141
  %v660 = vpop.f32.mrf.mxu0
  %v661 = vadd.f32 %v452, %v660
  %662 = vmatmul.f32.gmra.mxu0 %v145
  %v663 = vpop.f32.mrf.mxu0
  %v664 = vadd.f32 %v455, %v663
  %665 = vmatmul.f32.gmra.mxu0 %v149
  %v666 = vpop.f32.mrf.mxu0
  %v667 = vadd.f32 %v458, %v666
  %668 = vmatmul.f32.gmra.mxu0 %v153
  %v669 = vpop.f32.mrf.mxu0
  %v670 = vadd.f32 %v461, %v669
  %671 = vmatmul.f32.gmra.mxu0 %v157
  %v672 = vpop.f32.mrf.mxu0
  %v673 = vadd.f32 %v464, %v672
  %674 = vmatmul.f32.gmra.mxu0 %v161
  %v675 = vpop.f32.mrf.mxu0
  %v676 = vadd.f32 %v467, %v675
  %677 = vmatmul.f32.gmra.mxu0 %v165
  %v678 = vpop.f32.mrf.mxu0
  %v679 = vadd.f32 %v470, %v678
  %680 = vmatmul.f32.gmra.mxu0 %v169
  %v681 = vpop.f32.mrf.mxu0
  %v682 = vadd.f32 %v473, %v681
  %683 = vmatmul.f32.gmra.mxu0 %v173
  %v684 = vpop.f32.mrf.mxu0
  %v685 = vadd.f32 %v476, %v684
  %686 = vmatmul.f32.gmra.mxu0 %v177
  %v687 = vpop.f32.mrf.mxu0
  %v688 = vadd.f32 %v479, %v687
  %689 = vmatmul.f32.gmra.mxu0 %v181
  %v690 = vpop.f32.mrf.mxu0
  %v691 = vadd.f32 %v482, %v690
  %692 = vmatmul.f32.gmra.mxu0 %v185
  %v693 = vpop.f32.mrf.mxu0
  %v694 = vadd.f32 %v485, %v693
  %695 = vmatmul.f32.gmra.mxu0 %v189
  %v696 = vpop.f32.mrf.mxu0
  %v697 = vadd.f32 %v488, %v696
  %698 = vmatmul.f32.gmra.mxu0 %v193
  %v699 = vpop.f32.mrf.mxu0
  %v700 = vadd.f32 %v491, %v699
  %701 = vmatmul.f32.gmra.mxu0 %v197
  %v702 = vpop.f32.mrf.mxu0
  %v703 = vadd.f32 %v494, %v702
  %704 = vmatmul.f32.gmra.mxu0 %v201
  %v705 = vpop.f32.mrf.mxu0
  %v706 = vadd.f32 %v497, %v705
  %707 = vmatmul.f32.gmra.mxu0 %v205
  %v708 = vpop.f32.mrf.mxu0
  %v709 = vadd.f32 %v500, %v708
  %710 = vmatmul.f32.gmra.mxu0 %v209
  %v711 = vpop.f32.mrf.mxu0
  %v712 = vadd.f32 %v503, %v711
  %713 = vmatmul.f32.gmra.mxu0 %v213
  %v714 = vpop.f32.mrf.mxu0
  %v715 = vadd.f32 %v506, %v714
  %716 = vmatmul.f32.gmra.mxu0 %v217
  %v717 = vpop.f32.mrf.mxu0
  %v718 = vadd.f32 %v509, %v717
  %719 = vmatmul.f32.gmra.mxu0 %v221
  %v720 = vpop.f32.mrf.mxu0
  %v721 = vadd.f32 %v512, %v720
  %722 = vmatmul.f32.gmra.mxu0 %v225
  %v723 = vpop.f32.mrf.mxu0
  %v724 = vadd.f32 %v515, %v723
  %725 = vmatmul.f32.gmra.mxu0 %v229
  %v726 = vpop.f32.mrf.mxu0
  %v727 = vadd.f32 %v518, %v726
  %728 = vmatmul.f32.gmra.mxu0 %v233
  %v729 = vpop.f32.mrf.mxu0
  %v730 = vadd.f32 %v521, %v729
  %731 = vmatmul.f32.gmra.mxu0 %v237
  %v732 = vpop.f32.mrf.mxu0
  %v733 = vadd.f32 %v524, %v732
  %734 = vmatmul.f32.gmra.mxu0 %v241
  %v735 = vpop.f32.mrf.mxu0
  %v736 = vadd.f32 %v527, %v735
  %737 = vmatmul.f32.gmra.mxu0 %v245
  %v738 = vpop.f32.mrf.mxu0
  %v739 = vadd.f32 %v530, %v738
  %740 = vmatmul.f32.gmra.mxu0 %v249
  %v741 = vpop.f32.mrf.mxu0
  %v742 = vadd.f32 %v533, %v741
  %743 = vmatmul.f32.gmra.mxu0 %v253
  %v744 = vpop.f32.mrf.mxu0
  %v745 = vadd.f32 %v536, %v744
  %746 = vmatmul.f32.gmra.mxu0 %v257
  %v747 = vpop.f32.mrf.mxu0
  %v748 = vadd.f32 %v539, %v747
  %749 = vmatmul.f32.gmra.mxu0 %v261
  %v750 = vpop.f32.mrf.mxu0
  %v751 = vadd.f32 %v542, %v750
  %752 = vmatmul.f32.gmra.mxu0 %v265
  %v753 = vpop.f32.mrf.mxu0
  %v754 = vadd.f32 %v545, %v753
  %755 = vmatmul.f32.gmra.mxu0 %v269
  %v756 = vpop.f32.mrf.mxu0
  %v757 = vadd.f32 %v548, %v756
  %758 = vmatmul.f32.gmra.mxu0 %v273
  %v759 = vpop.f32.mrf.mxu0
  %v760 = vadd.f32 %v551, %v759
  %761 = vdwg.mxu0
  %762 = vmatpush.msra.mxu0 %v323
  %763 = vmatpush.msra.mxu0 %v322
  %764 = vmatpush.msra.mxu0 %v321
  %765 = vmatpush.msra.mxu0 %v320
  %766 = vmatpush.msra.mxu0 %v319
  %767 = vmatpush.msra.mxu0 %v318
  %768 = vmatpush.msra.mxu0 %v317
  %769 = vmatpush.msra.mxu0 %v316
  %770 = vmatpush.msra.mxu0 %v315
  %771 = vmatpush.msra.mxu0 %v314
  %772 = vmatpush.msra.mxu0 %v313
  %773 = vmatpush.msra.mxu0 %v312
  %774 = vmatpush.msra.mxu0 %v311
  %775 = vmatpush.msra.mxu0 %v310
  %776 = vmatpush.msra.mxu0 %v309
  %777 = vmatpush.msra.mxu0 %v308
  %778 = vmatmul.f32.gmra.mxu0 %v22
  %v779 = vpop.f32.mrf.mxu0
  %v780 = vadd.f32 %v571, %v779
  %781 = vmatmul.f32.gmra.mxu0 %v26
  %v782 = vpop.f32.mrf.mxu0
  %v783 = vadd.f32 %v574, %v782
  %784 = vmatmul.f32.gmra.mxu0 %v30
  %v785 = vpop.f32.mrf.mxu0
  %v786 = vadd.f32 %v577, %v785
  %787 = vmatmul.f32.gmra.mxu0 %v34
  %v788 = vpop.f32.mrf.mxu0
  %v789 = vadd.f32 %v580, %v788
  %790 = vmatmul.f32.gmra.mxu0 %v38
  %v791 = vpop.f32.mrf.mxu0
  %v792 = vadd.f32 %v583, %v791
  %793 = vmatmul.f32.gmra.mxu0 %v42
  %v794 = vpop.f32.mrf.mxu0
  %v795 = vadd.f32 %v586, %v794
  %796 = vmatmul.f32.gmra.mxu0 %v46
  %v797 = vpop.f32.mrf.mxu0
  %v798 = vadd.f32 %v589, %v797
  %799 = vmatmul.f32.gmra.mxu0 %v50
  %v800 = vpop.f32.mrf.mxu0
  %v801 = vadd.f32 %v592, %v800
  %802 = vmatmul.f32.gmra.mxu0 %v54
  %v803 = vpop.f32.mrf.mxu0
  %v804 = vadd.f32 %v595, %v803
  %805 = vmatmul.f32.gmra.mxu0 %v58
  %v806 = vpop.f32.mrf.mxu0
  %v807 = vadd.f32 %v598, %v806
  %808 = vmatmul.f32.gmra.mxu0 %v62
  %v809 = vpop.f32.mrf.mxu0
  %v810 = vadd.f32 %v601, %v809
  %811 = vmatmul.f32.gmra.mxu0 %v66
  %v812 = vpop.f32.mrf.mxu0
  %v813 = vadd.f32 %v604, %v812
  %814 = vmatmul.f32.gmra.mxu0 %v70
  %v815 = vpop.f32.mrf.mxu0
  %v816 = vadd.f32 %v607, %v815
  %817 = vmatmul.f32.gmra.mxu0 %v74
  %v818 = vpop.f32.mrf.mxu0
  %v819 = vadd.f32 %v610, %v818
  %820 = vmatmul.f32.gmra.mxu0 %v78
  %v821 = vpop.f32.mrf.mxu0
  %v822 = vadd.f32 %v613, %v821
  %823 = vmatmul.f32.gmra.mxu0 %v82
  %v824 = vpop.f32.mrf.mxu0
  %v825 = vadd.f32 %v616, %v824
  %826 = vmatmul.f32.gmra.mxu0 %v86
  %v827 = vpop.f32.mrf.mxu0
  %v828 = vadd.f32 %v619, %v827
  %829 = vmatmul.f32.gmra.mxu0 %v90
  %v830 = vpop.f32.mrf.mxu0
  %v831 = vadd.f32 %v622, %v830
  %832 = vmatmul.f32.gmra.mxu0 %v94
  %v833 = vpop.f32.mrf.mxu0
  %v834 = vadd.f32 %v625, %v833
  %835 = vmatmul.f32.gmra.mxu0 %v98
  %v836 = vpop.f32.mrf.mxu0
  %v837 = vadd.f32 %v628, %v836
  %838 = vmatmul.f32.gmra.mxu0 %v102
  %v839 = vpop.f32.mrf.mxu0
  %v840 = vadd.f32 %v631, %v839
  %841 = vmatmul.f32.gmra.mxu0 %v106
  %v842 = vpop.f32.mrf.mxu0
  %v843 = vadd.f32 %v634, %v842
  %844 = vmatmul.f32.gmra.mxu0 %v110
  %v845 = vpop.f32.mrf.mxu0
  %v846 = vadd.f32 %v637, %v845
  %847 = vmatmul.f32.gmra.mxu0 %v114
  %v848 = vpop.f32.mrf.mxu0
  %v849 = vadd.f32 %v640, %v848
  %850 = vmatmul.f32.gmra.mxu0 %v118
  %v851 = vpop.f32.mrf.mxu0
  %v852 = vadd.f32 %v643, %v851
  %853 = vmatmul.f32.gmra.mxu0 %v122
  %v854 = vpop.f32.mrf.mxu0
  %v855 = vadd.f32 %v646, %v854
  %856 = vmatmul.f32.gmra.mxu0 %v126
  %v857 = vpop.f32.mrf.mxu0
  %v858 = vadd.f32 %v649, %v857
  %859 = vmatmul.f32.gmra.mxu0 %v130
  %v860 = vpop.f32.mrf.mxu0
  %v861 = vadd.f32 %v652, %v860
  %862 = vmatmul.f32.gmra.mxu0 %v134
  %v863 = vpop.f32.mrf.mxu0
  %v864 = vadd.f32 %v655, %v863
  %865 = vmatmul.f32.gmra.mxu0 %v138
  %v866 = vpop.f32.mrf.mxu0
  %v867 = vadd.f32 %v658, %v866
  %868 = vmatmul.f32.gmra.mxu0 %v142
  %v869 = vpop.f32.mrf.mxu0
  %v870 = vadd.f32 %v661, %v869
  %871 = vmatmul.f32.gmra.mxu0 %v146
  %v872 = vpop.f32.mrf.mxu0
  %v873 = vadd.f32 %v664, %v872
  %874 = vmatmul.f32.gmra.mxu0 %v150
  %v875 = vpop.f32.mrf.mxu0
  %v876 = vadd.f32 %v667, %v875
  %877 = vmatmul.f32.gmra.mxu0 %v154
  %v878 = vpop.f32.mrf.mxu0
  %v879 = vadd.f32 %v670, %v878
  %880 = vmatmul.f32.gmra.mxu0 %v158
  %v881 = vpop.f32.mrf.mxu0
  %v882 = vadd.f32 %v673, %v881
  %883 = vmatmul.f32.gmra.mxu0 %v162
  %v884 = vpop.f32.mrf.mxu0
  %v885 = vadd.f32 %v676, %v884
  %886 = vmatmul.f32.gmra.mxu0 %v166
  %v887 = vpop.f32.mrf.mxu0
  %v888 = vadd.f32 %v679, %v887
  %889 = vmatmul.f32.gmra.mxu0 %v170
  %v890 = vpop.f32.mrf.mxu0
  %v891 = vadd.f32 %v682, %v890
  %892 = vmatmul.f32.gmra.mxu0 %v174
  %v893 = vpop.f32.mrf.mxu0
  %v894 = vadd.f32 %v685, %v893
  %895 = vmatmul.f32.gmra.mxu0 %v178
  %v896 = vpop.f32.mrf.mxu0
  %v897 = vadd.f32 %v688, %v896
  %898 = vmatmul.f32.gmra.mxu0 %v182
  %v899 = vpop.f32.mrf.mxu0
  %v900 = vadd.f32 %v691, %v899
  %901 = vmatmul.f32.gmra.mxu0 %v186
  %v902 = vpop.f32.mrf.mxu0
  %v903 = vadd.f32 %v694, %v902
  %904 = vmatmul.f32.gmra.mxu0 %v190
  %v905 = vpop.f32.mrf.mxu0
  %v906 = vadd.f32 %v697, %v905
  %907 = vmatmul.f32.gmra.mxu0 %v194
  %v908 = vpop.f32.mrf.mxu0
  %v909 = vadd.f32 %v700, %v908
  %910 = vmatmul.f32.gmra.mxu0 %v198
  %v911 = vpop.f32.mrf.mxu0
  %v912 = vadd.f32 %v703, %v911
  %913 = vmatmul.f32.gmra.mxu0 %v202
  %v914 = vpop.f32.mrf.mxu0
  %v915 = vadd.f32 %v706, %v914
  %916 = vmatmul.f32.gmra.mxu0 %v206
  %v917 = vpop.f32.mrf.mxu0
  %v918 = vadd.f32 %v709, %v917
  %919 = vmatmul.f32.gmra.mxu0 %v210
  %v920 = vpop.f32.mrf.mxu0
  %v921 = vadd.f32 %v712, %v920
  %922 = vmatmul.f32.gmra.mxu0 %v214
  %v923 = vpop.f32.mrf.mxu0
  %v924 = vadd.f32 %v715, %v923
  %925 = vmatmul.f32.gmra.mxu0 %v218
  %v926 = vpop.f32.mrf.mxu0
  %v927 = vadd.f32 %v718, %v926
  %928 = vmatmul.f32.gmra.mxu0 %v222
  %v929 = vpop.f32.mrf.mxu0
  %v930 = vadd.f32 %v721, %v929
  %931 = vmatmul.f32.gmra.mxu0 %v226
  %v932 = vpop.f32.mrf.mxu0
  %v933 = vadd.f32 %v724, %v932
  %934 = vmatmul.f32.gmra.mxu0 %v230
  %v935 = vpop.f32.mrf.mxu0
  %v936 = vadd.f32 %v727, %v935
  %937 = vmatmul.f32.gmra.mxu0 %v234
  %v938 = vpop.f32.mrf.mxu0
  %v939 = vadd.f32 %v730, %v938
  %940 = vmatmul.f32.gmra.mxu0 %v238
  %v941 = vpop.f32.mrf.mxu0
  %v942 = vadd.f32 %v733, %v941
  %943 = vmatmul.f32.gmra.mxu0 %v242
  %v944 = vpop.f32.mrf.mxu0
  %v945 = vadd.f32 %v736, %v944
  %946 = vmatmul.f32.gmra.mxu0 %v246
  %v947 = vpop.f32.mrf.mxu0
  %v948 = vadd.f32 %v739, %v947
  %949 = vmatmul.f32.gmra.mxu0 %v250
  %v950 = vpop.f32.mrf.mxu0
  %v951 = vadd.f32 %v742, %v950
  %952 = vmatmul.f32.gmra.mxu0 %v254
  %v953 = vpop.f32.mrf.mxu0
  %v954 = vadd.f32 %v745, %v953
  %955 = vmatmul.f32.gmra.mxu0 %v258
  %v956 = vpop.f32.mrf.mxu0
  %v957 = vadd.f32 %v748, %v956
  %958 = vmatmul.f32.gmra.mxu0 %v262
  %v959 = vpop.f32.mrf.mxu0
  %v960 = vadd.f32 %v751, %v959
  %961 = vmatmul.f32.gmra.mxu0 %v266
  %v962 = vpop.f32.mrf.mxu0
  %v963 = vadd.f32 %v754, %v962
  %964 = vmatmul.f32.gmra.mxu0 %v270
  %v965 = vpop.f32.mrf.mxu0
  %v966 = vadd.f32 %v757, %v965
  %967 = vmatmul.f32.gmra.mxu0 %v274
  %v968 = vpop.f32.mrf.mxu0
  %v969 = vadd.f32 %v760, %v968
  %970 = vdwg.mxu0
  %971 = vmatpush.msra.mxu0 %v339
  %972 = vmatpush.msra.mxu0 %v338
  %973 = vmatpush.msra.mxu0 %v337
  %974 = vmatpush.msra.mxu0 %v336
  %975 = vmatpush.msra.mxu0 %v335
  %976 = vmatpush.msra.mxu0 %v334
  %977 = vmatpush.msra.mxu0 %v333
  %978 = vmatpush.msra.mxu0 %v332
  %979 = vmatpush.msra.mxu0 %v331
  %980 = vmatpush.msra.mxu0 %v330
  %981 = vmatpush.msra.mxu0 %v329
  %982 = vmatpush.msra.mxu0 %v328
  %983 = vmatpush.msra.mxu0 %v327
  %984 = vmatpush.msra.mxu0 %v326
  %985 = vmatpush.msra.mxu0 %v325
  %986 = vmatpush.msra.mxu0 %v324
  %987 = vmatmul.f32.gmra.mxu0 %v23
  %v988 = vpop.f32.mrf.mxu0
  %v989 = vadd.f32 %v780, %v988
  %990 = vmatmul.f32.gmra.mxu0 %v27
  %v991 = vpop.f32.mrf.mxu0
  %v992 = vadd.f32 %v783, %v991
  %993 = vmatmul.f32.gmra.mxu0 %v31
  %v994 = vpop.f32.mrf.mxu0
  %v995 = vadd.f32 %v786, %v994
  %996 = vmatmul.f32.gmra.mxu0 %v35
  %v997 = vpop.f32.mrf.mxu0
  %v998 = vadd.f32 %v789, %v997
  %999 = vmatmul.f32.gmra.mxu0 %v39
  %v1000 = vpop.f32.mrf.mxu0
  %v1001 = vadd.f32 %v792, %v1000
  %1002 = vmatmul.f32.gmra.mxu0 %v43
  %v1003 = vpop.f32.mrf.mxu0
  %v1004 = vadd.f32 %v795, %v1003
  %1005 = vmatmul.f32.gmra.mxu0 %v47
  %v1006 = vpop.f32.mrf.mxu0
  %v1007 = vadd.f32 %v798, %v1006
  %1008 = vmatmul.f32.gmra.mxu0 %v51
  %v1009 = vpop.f32.mrf.mxu0
  %v1010 = vadd.f32 %v801, %v1009
  %1011 = vmatmul.f32.gmra.mxu0 %v55
  %v1012 = vpop.f32.mrf.mxu0
  %v1013 = vadd.f32 %v804, %v1012
  %1014 = vmatmul.f32.gmra.mxu0 %v59
  %v1015 = vpop.f32.mrf.mxu0
  %v1016 = vadd.f32 %v807, %v1015
  %1017 = vmatmul.f32.gmra.mxu0 %v63
  %v1018 = vpop.f32.mrf.mxu0
  %v1019 = vadd.f32 %v810, %v1018
  %1020 = vmatmul.f32.gmra.mxu0 %v67
  %v1021 = vpop.f32.mrf.mxu0
  %v1022 = vadd.f32 %v813, %v1021
  %1023 = vmatmul.f32.gmra.mxu0 %v71
  %v1024 = vpop.f32.mrf.mxu0
  %v1025 = vadd.f32 %v816, %v1024
  %1026 = vmatmul.f32.gmra.mxu0 %v75
  %v1027 = vpop.f32.mrf.mxu0
  %v1028 = vadd.f32 %v819, %v1027
  %1029 = vmatmul.f32.gmra.mxu0 %v79
  %v1030 = vpop.f32.mrf.mxu0
  %v1031 = vadd.f32 %v822, %v1030
  %1032 = vmatmul.f32.gmra.mxu0 %v83
  %v1033 = vpop.f32.mrf.mxu0
  %v1034 = vadd.f32 %v825, %v1033
  %1035 = vmatmul.f32.gmra.mxu0 %v87
  %v1036 = vpop.f32.mrf.mxu0
  %v1037 = vadd.f32 %v828, %v1036
  %1038 = vmatmul.f32.gmra.mxu0 %v91
  %v1039 = vpop.f32.mrf.mxu0
  %v1040 = vadd.f32 %v831, %v1039
  %1041 = vmatmul.f32.gmra.mxu0 %v95
  %v1042 = vpop.f32.mrf.mxu0
  %v1043 = vadd.f32 %v834, %v1042
  %1044 = vmatmul.f32.gmra.mxu0 %v99
  %v1045 = vpop.f32.mrf.mxu0
  %v1046 = vadd.f32 %v837, %v1045
  %1047 = vmatmul.f32.gmra.mxu0 %v103
  %v1048 = vpop.f32.mrf.mxu0
  %v1049 = vadd.f32 %v840, %v1048
  %1050 = vmatmul.f32.gmra.mxu0 %v107
  %v1051 = vpop.f32.mrf.mxu0
  %v1052 = vadd.f32 %v843, %v1051
  %1053 = vmatmul.f32.gmra.mxu0 %v111
  %v1054 = vpop.f32.mrf.mxu0
  %v1055 = vadd.f32 %v846, %v1054
  %1056 = vmatmul.f32.gmra.mxu0 %v115
  %v1057 = vpop.f32.mrf.mxu0
  %v1058 = vadd.f32 %v849, %v1057
  %1059 = vmatmul.f32.gmra.mxu0 %v119
  %v1060 = vpop.f32.mrf.mxu0
  %v1061 = vadd.f32 %v852, %v1060
  %1062 = vmatmul.f32.gmra.mxu0 %v123
  %v1063 = vpop.f32.mrf.mxu0
  %v1064 = vadd.f32 %v855, %v1063
  %1065 = vmatmul.f32.gmra.mxu0 %v127
  %v1066 = vpop.f32.mrf.mxu0
  %v1067 = vadd.f32 %v858, %v1066
  %1068 = vmatmul.f32.gmra.mxu0 %v131
  %v1069 = vpop.f32.mrf.mxu0
  %v1070 = vadd.f32 %v861, %v1069
  %1071 = vmatmul.f32.gmra.mxu0 %v135
  %v1072 = vpop.f32.mrf.mxu0
  %v1073 = vadd.f32 %v864, %v1072
  %1074 = vmatmul.f32.gmra.mxu0 %v139
  %v1075 = vpop.f32.mrf.mxu0
  %v1076 = vadd.f32 %v867, %v1075
  %1077 = vmatmul.f32.gmra.mxu0 %v143
  %v1078 = vpop.f32.mrf.mxu0
  %v1079 = vadd.f32 %v870, %v1078
  %1080 = vmatmul.f32.gmra.mxu0 %v147
  %v1081 = vpop.f32.mrf.mxu0
  %v1082 = vadd.f32 %v873, %v1081
  %1083 = vmatmul.f32.gmra.mxu0 %v151
  %v1084 = vpop.f32.mrf.mxu0
  %v1085 = vadd.f32 %v876, %v1084
  %1086 = vmatmul.f32.gmra.mxu0 %v155
  %v1087 = vpop.f32.mrf.mxu0
  %v1088 = vadd.f32 %v879, %v1087
  %1089 = vmatmul.f32.gmra.mxu0 %v159
  %v1090 = vpop.f32.mrf.mxu0
  %v1091 = vadd.f32 %v882, %v1090
  %1092 = vmatmul.f32.gmra.mxu0 %v163
  %v1093 = vpop.f32.mrf.mxu0
  %v1094 = vadd.f32 %v885, %v1093
  %1095 = vmatmul.f32.gmra.mxu0 %v167
  %v1096 = vpop.f32.mrf.mxu0
  %v1097 = vadd.f32 %v888, %v1096
  %1098 = vmatmul.f32.gmra.mxu0 %v171
  %v1099 = vpop.f32.mrf.mxu0
  %v1100 = vadd.f32 %v891, %v1099
  %1101 = vmatmul.f32.gmra.mxu0 %v175
  %v1102 = vpop.f32.mrf.mxu0
  %v1103 = vadd.f32 %v894, %v1102
  %1104 = vmatmul.f32.gmra.mxu0 %v179
  %v1105 = vpop.f32.mrf.mxu0
  %v1106 = vadd.f32 %v897, %v1105
  %1107 = vmatmul.f32.gmra.mxu0 %v183
  %v1108 = vpop.f32.mrf.mxu0
  %v1109 = vadd.f32 %v900, %v1108
  %1110 = vmatmul.f32.gmra.mxu0 %v187
  %v1111 = vpop.f32.mrf.mxu0
  %v1112 = vadd.f32 %v903, %v1111
  %1113 = vmatmul.f32.gmra.mxu0 %v191
  %v1114 = vpop.f32.mrf.mxu0
  %v1115 = vadd.f32 %v906, %v1114
  %1116 = vmatmul.f32.gmra.mxu0 %v195
  %v1117 = vpop.f32.mrf.mxu0
  %v1118 = vadd.f32 %v909, %v1117
  %1119 = vmatmul.f32.gmra.mxu0 %v199
  %v1120 = vpop.f32.mrf.mxu0
  %v1121 = vadd.f32 %v912, %v1120
  %1122 = vmatmul.f32.gmra.mxu0 %v203
  %v1123 = vpop.f32.mrf.mxu0
  %v1124 = vadd.f32 %v915, %v1123
  %1125 = vmatmul.f32.gmra.mxu0 %v207
  %v1126 = vpop.f32.mrf.mxu0
  %v1127 = vadd.f32 %v918, %v1126
  %1128 = vmatmul.f32.gmra.mxu0 %v211
  %v1129 = vpop.f32.mrf.mxu0
  %v1130 = vadd.f32 %v921, %v1129
  %1131 = vmatmul.f32.gmra.mxu0 %v215
  %v1132 = vpop.f32.mrf.mxu0
  %v1133 = vadd.f32 %v924, %v1132
  %1134 = vmatmul.f32.gmra.mxu0 %v219
  %v1135 = vpop.f32.mrf.mxu0
  %v1136 = vadd.f32 %v927, %v1135
  %1137 = vmatmul.f32.gmra.mxu0 %v223
  %v1138 = vpop.f32.mrf.mxu0
  %v1139 = vadd.f32 %v930, %v1138
  %1140 = vmatmul.f32.gmra.mxu0 %v227
  %v1141 = vpop.f32.mrf.mxu0
  %v1142 = vadd.f32 %v933, %v1141
  %1143 = vmatmul.f32.gmra.mxu0 %v231
  %v1144 = vpop.f32.mrf.mxu0
  %v1145 = vadd.f32 %v936, %v1144
  %1146 = vmatmul.f32.gmra.mxu0 %v235
  %v1147 = vpop.f32.mrf.mxu0
  %v1148 = vadd.f32 %v939, %v1147
  %1149 = vmatmul.f32.gmra.mxu0 %v239
  %v1150 = vpop.f32.mrf.mxu0
  %v1151 = vadd.f32 %v942, %v1150
  %1152 = vmatmul.f32.gmra.mxu0 %v243
  %v1153 = vpop.f32.mrf.mxu0
  %v1154 = vadd.f32 %v945, %v1153
  %1155 = vmatmul.f32.gmra.mxu0 %v247
  %v1156 = vpop.f32.mrf.mxu0
  %v1157 = vadd.f32 %v948, %v1156
  %1158 = vmatmul.f32.gmra.mxu0 %v251
  %v1159 = vpop.f32.mrf.mxu0
  %v1160 = vadd.f32 %v951, %v1159
  %1161 = vmatmul.f32.gmra.mxu0 %v255
  %v1162 = vpop.f32.mrf.mxu0
  %v1163 = vadd.f32 %v954, %v1162
  %1164 = vmatmul.f32.gmra.mxu0 %v259
  %v1165 = vpop.f32.mrf.mxu0
  %v1166 = vadd.f32 %v957, %v1165
  %1167 = vmatmul.f32.gmra.mxu0 %v263
  %v1168 = vpop.f32.mrf.mxu0
  %v1169 = vadd.f32 %v960, %v1168
  %1170 = vmatmul.f32.gmra.mxu0 %v267
  %v1171 = vpop.f32.mrf.mxu0
  %v1172 = vadd.f32 %v963, %v1171
  %1173 = vmatmul.f32.gmra.mxu0 %v271
  %v1174 = vpop.f32.mrf.mxu0
  %v1175 = vadd.f32 %v966, %v1174
  %1176 = vmatmul.f32.gmra.mxu0 %v275
  %v1177 = vpop.f32.mrf.mxu0
  %v1178 = vadd.f32 %v969, %v1177
  %1179 = vdwg.mxu0
  %vm1180 = vcmask 523264
  %v1181 = vsel %vm1180, %v989, 0.0
  %v1182 = vsel %vm1180, %v992, 0.0
  %v1183 = vadd.f32 %v1181, %v1182
  %v1184 = vsel %vm1180, %v995, 0.0
  %v1185 = vadd.f32 %v1183, %v1184
  %v1186 = vsel %vm1180, %v998, 0.0
  %v1187 = vadd.f32 %v1185, %v1186
  %v1188 = vsel %vm1180, %v1001, 0.0
  %v1189 = vadd.f32 %v1187, %v1188
  %v1190 = vsel %vm1180, %v1004, 0.0
  %v1191 = vadd.f32 %v1189, %v1190
  %v1192 = vsel %vm1180, %v1007, 0.0
  %v1193 = vadd.f32 %v1191, %v1192
  %v1194 = vsel %vm1180, %v1010, 0.0
  %v1195 = vadd.f32 %v1193, %v1194
  %v1196 = vsel %vm1180, %v1013, 0.0
  %v1197 = vadd.f32 %v1195, %v1196
  %v1198 = vsel %vm1180, %v1016, 0.0
  %v1199 = vadd.f32 %v1197, %v1198
  %v1200 = vsel %vm1180, %v1019, 0.0
  %v1201 = vadd.f32 %v1199, %v1200
  %v1202 = vsel %vm1180, %v1022, 0.0
  %v1203 = vadd.f32 %v1201, %v1202
  %v1204 = vsel %vm1180, %v1025, 0.0
  %v1205 = vadd.f32 %v1203, %v1204
  %v1206 = vsel %vm1180, %v1028, 0.0
  %v1207 = vadd.f32 %v1205, %v1206
  %v1208 = vsel %vm1180, %v1031, 0.0
  %v1209 = vadd.f32 %v1207, %v1208
  %v1210 = vsel %vm1180, %v1034, 0.0
  %v1211 = vadd.f32 %v1209, %v1210
  %v1212 = vsel %vm1180, %v1037, 0.0
  %v1213 = vadd.f32 %v1211, %v1212
  %v1214 = vsel %vm1180, %v1040, 0.0
  %v1215 = vadd.f32 %v1213, %v1214
  %v1216 = vsel %vm1180, %v1043, 0.0
  %v1217 = vadd.f32 %v1215, %v1216
  %v1218 = vsel %vm1180, %v1046, 0.0
  %v1219 = vadd.f32 %v1217, %v1218
  %v1220 = vsel %vm1180, %v1049, 0.0
  %v1221 = vadd.f32 %v1219, %v1220
  %v1222 = vsel %vm1180, %v1052, 0.0
  %v1223 = vadd.f32 %v1221, %v1222
  %v1224 = vsel %vm1180, %v1055, 0.0
  %v1225 = vadd.f32 %v1223, %v1224
  %v1226 = vsel %vm1180, %v1058, 0.0
  %v1227 = vadd.f32 %v1225, %v1226
  %v1228 = vsel %vm1180, %v1061, 0.0
  %v1229 = vadd.f32 %v1227, %v1228
  %v1230 = vsel %vm1180, %v1064, 0.0
  %v1231 = vadd.f32 %v1229, %v1230
  %v1232 = vsel %vm1180, %v1067, 0.0
  %v1233 = vadd.f32 %v1231, %v1232
  %v1234 = vsel %vm1180, %v1070, 0.0
  %v1235 = vadd.f32 %v1233, %v1234
  %v1236 = vsel %vm1180, %v1073, 0.0
  %v1237 = vadd.f32 %v1235, %v1236
  %v1238 = vsel %vm1180, %v1076, 0.0
  %v1239 = vadd.f32 %v1237, %v1238
  %v1240 = vsel %vm1180, %v1079, 0.0
  %v1241 = vadd.f32 %v1239, %v1240
  %v1242 = vsel %vm1180, %v1082, 0.0
  %v1243 = vadd.f32 %v1241, %v1242
  %v1244 = vsel %vm1180, %v1085, 0.0
  %v1245 = vadd.f32 %v1243, %v1244
  %v1246 = vsel %vm1180, %v1088, 0.0
  %v1247 = vadd.f32 %v1245, %v1246
  %v1248 = vsel %vm1180, %v1091, 0.0
  %v1249 = vadd.f32 %v1247, %v1248
  %v1250 = vsel %vm1180, %v1094, 0.0
  %v1251 = vadd.f32 %v1249, %v1250
  %v1252 = vsel %vm1180, %v1097, 0.0
  %v1253 = vadd.f32 %v1251, %v1252
  %v1254 = vsel %vm1180, %v1100, 0.0
  %v1255 = vadd.f32 %v1253, %v1254
  %v1256 = vsel %vm1180, %v1103, 0.0
  %v1257 = vadd.f32 %v1255, %v1256
  %v1258 = vsel %vm1180, %v1106, 0.0
  %v1259 = vadd.f32 %v1257, %v1258
  %v1260 = vsel %vm1180, %v1109, 0.0
  %v1261 = vadd.f32 %v1259, %v1260
  %v1262 = vsel %vm1180, %v1112, 0.0
  %v1263 = vadd.f32 %v1261, %v1262
  %v1264 = vsel %vm1180, %v1115, 0.0
  %v1265 = vadd.f32 %v1263, %v1264
  %v1266 = vsel %vm1180, %v1118, 0.0
  %v1267 = vadd.f32 %v1265, %v1266
  %v1268 = vsel %vm1180, %v1121, 0.0
  %v1269 = vadd.f32 %v1267, %v1268
  %v1270 = vsel %vm1180, %v1124, 0.0
  %v1271 = vadd.f32 %v1269, %v1270
  %v1272 = vsel %vm1180, %v1127, 0.0
  %v1273 = vadd.f32 %v1271, %v1272
  %v1274 = vsel %vm1180, %v1130, 0.0
  %v1275 = vadd.f32 %v1273, %v1274
  %v1276 = vsel %vm1180, %v1133, 0.0
  %v1277 = vadd.f32 %v1275, %v1276
  %v1278 = vsel %vm1180, %v1136, 0.0
  %v1279 = vadd.f32 %v1277, %v1278
  %v1280 = vsel %vm1180, %v1139, 0.0
  %v1281 = vadd.f32 %v1279, %v1280
  %v1282 = vsel %vm1180, %v1142, 0.0
  %v1283 = vadd.f32 %v1281, %v1282
  %v1284 = vsel %vm1180, %v1145, 0.0
  %v1285 = vadd.f32 %v1283, %v1284
  %v1286 = vsel %vm1180, %v1148, 0.0
  %v1287 = vadd.f32 %v1285, %v1286
  %v1288 = vsel %vm1180, %v1151, 0.0
  %v1289 = vadd.f32 %v1287, %v1288
  %v1290 = vsel %vm1180, %v1154, 0.0
  %v1291 = vadd.f32 %v1289, %v1290
  %v1292 = vsel %vm1180, %v1157, 0.0
  %v1293 = vadd.f32 %v1291, %v1292
  %v1294 = vsel %vm1180, %v1160, 0.0
  %v1295 = vadd.f32 %v1293, %v1294
  %v1296 = vsel %vm1180, %v1163, 0.0
  %v1297 = vadd.f32 %v1295, %v1296
  %v1298 = vsel %vm1180, %v1166, 0.0
  %v1299 = vadd.f32 %v1297, %v1298
  %v1300 = vsel %vm1180, %v1169, 0.0
  %v1301 = vadd.f32 %v1299, %v1300
  %v1302 = vsel %vm1180, %v1172, 0.0
  %v1303 = vadd.f32 %v1301, %v1302
  %v1304 = vsel %vm1180, %v1175, 0.0
  %v1305 = vadd.f32 %v1303, %v1304
  %v1306 = vsel %vm1180, %v1178, 0.0
  %v1307 = vadd.f32 %v1305, %v1306
  %v1308 = vrot.slane %v1307, 4
  %v1309 = vadd.f32 %v1307, %v1308
  %v1310 = vrot.slane %v1309, 2
  %v1311 = vadd.f32 %v1309, %v1310
  %v1312 = vrot.slane %v1311, 1
  %v1313 = vadd.f32 %v1311, %v1312
  %v1314 = vrcp.pop 512.0
  %v1315 = vmul.f32 512.0, %v1314
  %v1316 = vsub.f32 1.0, %v1315
  %v1317 = vmul.f32 %v1314, %v1316
  %v1318 = vadd.f32 %v1314, %v1317
  %vm1319 = vweird.f32 %v1314
  %v1320 = vsel %vm1319, %v1314, %v1318
  %v1321 = vmul.f32 %v1313, %v1320
  %v1322 = vsub.f32 %v989, %v1321
  %v1323 = vsub.f32 %v992, %v1321
  %v1324 = vsub.f32 %v995, %v1321
  %v1325 = vsub.f32 %v998, %v1321
  %v1326 = vsub.f32 %v1001, %v1321
  %v1327 = vsub.f32 %v1004, %v1321
  %v1328 = vsub.f32 %v1007, %v1321
  %v1329 = vsub.f32 %v1010, %v1321
  %v1330 = vsub.f32 %v1013, %v1321
  %v1331 = vsub.f32 %v1016, %v1321
  %v1332 = vsub.f32 %v1019, %v1321
  %v1333 = vsub.f32 %v1022, %v1321
  %v1334 = vsub.f32 %v1025, %v1321
  %v1335 = vsub.f32 %v1028, %v1321
  %v1336 = vsub.f32 %v1031, %v1321
  %v1337 = vsub.f32 %v1034, %v1321
  %v1338 = vsub.f32 %v1037, %v1321
  %v1339 = vsub.f32 %v1040, %v1321
  %v1340 = vsub.f32 %v1043, %v1321
  %v1341 = vsub.f32 %v1046, %v1321
  %v1342 = vsub.f32 %v1049, %v1321
  %v1343 = vsub.f32 %v1052, %v1321
  %v1344 = vsub.f32 %v1055, %v1321
  %v1345 = vsub.f32 %v1058, %v1321
  %v1346 = vsub.f32 %v1061, %v1321
  %v1347 = vsub.f32 %v1064, %v1321
  %v1348 = vsub.f32 %v1067, %v1321
  %v1349 = vsub.f32 %v1070, %v1321
  %v1350 = vsub.f32 %v1073, %v1321
  %v1351 = vsub.f32 %v1076, %v1321
  %v1352 = vsub.f32 %v1079, %v1321
  %v1353 = vsub.f32 %v1082, %v1321
  %v1354 = vsub.f32 %v1085, %v1321
  %v1355 = vsub.f32 %v1088, %v1321
  %v1356 = vsub.f32 %v1091, %v1321
  %v1357 = vsub.f32 %v1094, %v1321
  %v1358 = vsub.f32 %v1097, %v1321
  %v1359 = vsub.f32 %v1100, %v1321
  %v1360 = vsub.f32 %v1103, %v1321
  %v1361 = vsub.f32 %v1106, %v1321
  %v1362 = vsub.f32 %v1109, %v1321
  %v1363 = vsub.f32 %v1112, %v1321
  %v1364 = vsub.f32 %v1115, %v1321
  %v1365 = vsub.f32 %v1118, %v1321
  %v1366 = vsub.f32 %v1121, %v1321
  %v1367 = vsub.f32 %v1124, %v1321
  %v1368 = vsub.f32 %v1127, %v1321
  %v1369 = vsub.f32 %v1130, %v1321
  %v1370 = vsub.f32 %v1133, %v1321
  %v1371 = vsub.f32 %v1136, %v1321
  %v1372 = vsub.f32 %v1139, %v1321
  %v1373 = vsub.f32 %v1142, %v1321
  %v1374 = vsub.f32 %v1145, %v1321
  %v1375 = vsub.f32 %v1148, %v1321
  %v1376 = vsub.f32 %v1151, %v1321
  %v1377 = vsub.f32 %v1154, %v1321
  %v1378 = vsub.f32 %v1157, %v1321
  %v1379 = vsub.f32 %v1160, %v1321
  %v1380 = vsub.f32 %v1163, %v1321
  %v1381 = vsub.f32 %v1166, %v1321
  %v1382 = vsub.f32 %v1169, %v1321
  %v1383 = vsub.f32 %v1172, %v1321
  %v1384 = vsub.f32 %v1175, %v1321
  %v1385 = vsub.f32 %v1178, %v1321
  %v1386 = vmul.f32 %v1322, %v1322
  %v1387 = vmul.f32 %v1323, %v1323
  %v1388 = vmul.f32 %v1324, %v1324
  %v1389 = vmul.f32 %v1325, %v1325
  %v1390 = vmul.f32 %v1326, %v1326
  %v1391 = vmul.f32 %v1327, %v1327
  %v1392 = vmul.f32 %v1328, %v1328
  %v1393 = vmul.f32 %v1329, %v1329
  %v1394 = vmul.f32 %v1330, %v1330
  %v1395 = vmul.f32 %v1331, %v1331
  %v1396 = vmul.f32 %v1332, %v1332
  %v1397 = vmul.f32 %v1333, %v1333
  %v1398 = vmul.f32 %v1334, %v1334
  %v1399 = vmul.f32 %v1335, %v1335
  %v1400 = vmul.f32 %v1336, %v1336
  %v1401 = vmul.f32 %v1337, %v1337
  %v1402 = vmul.f32 %v1338, %v1338
  %v1403 = vmul.f32 %v1339, %v1339
  %v1404 = vmul.f32 %v1340, %v1340
  %v1405 = vmul.f32 %v1341, %v1341
  %v1406 = vmul.f32 %v1342, %v1342
  %v1407 = vmul.f32 %v1343, %v1343
  %v1408 = vmul.f32 %v1344, %v1344
  %v1409 = vmul.f32 %v1345, %v1345
  %v1410 = vmul.f32 %v1346, %v1346
  %v1411 = vmul.f32 %v1347, %v1347
  %v1412 = vmul.f32 %v1348, %v1348
  %v1413 = vmul.f32 %v1349, %v1349
  %v1414 = vmul.f32 %v1350, %v1350
  %v1415 = vmul.f32 %v1351, %v1351
  %v1416 = vmul.f32 %v1352, %v1352
  %v1417 = vmul.f32 %v1353, %v1353
  %v1418 = vmul.f32 %v1354, %v1354
  %v1419 = vmul.f32 %v1355, %v1355
  %v1420 = vmul.f32 %v1356, %v1356
  %v1421 = vmul.f32 %v1357, %v1357
  %v1422 = vmul.f32 %v1358, %v1358
  %v1423 = vmul.f32 %v1359, %v1359
  %v1424 = vmul.f32 %v1360, %v1360
  %v1425 = vmul.f32 %v1361, %v1361
  %v1426 = vmul.f32 %v1362, %v1362
  %v1427 = vmul.f32 %v1363, %v1363
  %v1428 = vmul.f32 %v1364, %v1364
  %v1429 = vmul.f32 %v1365, %v1365
  %v1430 = vmul.f32 %v1366, %v1366
  %v1431 = vmul.f32 %v1367, %v1367
  %v1432 = vmul.f32 %v1368, %v1368
  %v1433 = vmul.f32 %v1369, %v1369
  %v1434 = vmul.f32 %v1370, %v1370
  %v1435 = vmul.f32 %v1371, %v1371
  %v1436 = vmul.f32 %v1372, %v1372
  %v1437 = vmul.f32 %v1373, %v1373
  %v1438 = vmul.f32 %v1374, %v1374
  %v1439 = vmul.f32 %v1375, %v1375
  %v1440 = vmul.f32 %v1376, %v1376
  %v1441 = vmul.f32 %v1377, %v1377
  %v1442 = vmul.f32 %v1378, %v1378
  %v1443 = vmul.f32 %v1379, %v1379
  %v1444 = vmul.f32 %v1380, %v1380
  %v1445 = vmul.f32 %v1381, %v1381
  %v1446 = vmul.f32 %v1382, %v1382
  %v1447 = vmul.f32 %v1383, %v1383
  %v1448 = vmul.f32 %v1384, %v1384
  %v1449 = vmul.f32 %v1385, %v1385
  %v1450 = vsel %vm1180, %v1386, 0.0
  %v1451 = vsel %vm1180, %v1387, 0.0
  %v1452 = vadd.f32 %v1450, %v1451
  %v1453 = vsel %vm1180, %v1388, 0.0
  %v1454 = vadd.f32 %v1452, %v1453
  %v1455 = vsel %vm1180, %v1389, 0.0
  %v1456 = vadd.f32 %v1454, %v1455
  %v1457 = vsel %vm1180, %v1390, 0.0
  %v1458 = vadd.f32 %v1456, %v1457
  %v1459 = vsel %vm1180, %v1391, 0.0
  %v1460 = vadd.f32 %v1458, %v1459
  %v1461 = vsel %vm1180, %v1392, 0.0
  %v1462 = vadd.f32 %v1460, %v1461
  %v1463 = vsel %vm1180, %v1393, 0.0
  %v1464 = vadd.f32 %v1462, %v1463
  %v1465 = vsel %vm1180, %v1394, 0.0
  %v1466 = vadd.f32 %v1464, %v1465
  %v1467 = vsel %vm1180, %v1395, 0.0
  %v1468 = vadd.f32 %v1466, %v1467
  %v1469 = vsel %vm1180, %v1396, 0.0
  %v1470 = vadd.f32 %v1468, %v1469
  %v1471 = vsel %vm1180, %v1397, 0.0
  %v1472 = vadd.f32 %v1470, %v1471
  %v1473 = vsel %vm1180, %v1398, 0.0
  %v1474 = vadd.f32 %v1472, %v1473
  %v1475 = vsel %vm1180, %v1399, 0.0
  %v1476 = vadd.f32 %v1474, %v1475
  %v1477 = vsel %vm1180, %v1400, 0.0
  %v1478 = vadd.f32 %v1476, %v1477
  %v1479 = vsel %vm1180, %v1401, 0.0
  %v1480 = vadd.f32 %v1478, %v1479
  %v1481 = vsel %vm1180, %v1402, 0.0
  %v1482 = vadd.f32 %v1480, %v1481
  %v1483 = vsel %vm1180, %v1403, 0.0
  %v1484 = vadd.f32 %v1482, %v1483
  %v1485 = vsel %vm1180, %v1404, 0.0
  %v1486 = vadd.f32 %v1484, %v1485
  %v1487 = vsel %vm1180, %v1405, 0.0
  %v1488 = vadd.f32 %v1486, %v1487
  %v1489 = vsel %vm1180, %v1406, 0.0
  %v1490 = vadd.f32 %v1488, %v1489
  %v1491 = vsel %vm1180, %v1407, 0.0
  %v1492 = vadd.f32 %v1490, %v1491
  %v1493 = vsel %vm1180, %v1408, 0.0
  %v1494 = vadd.f32 %v1492, %v1493
  %v1495 = vsel %vm1180, %v1409, 0.0
  %v1496 = vadd.f32 %v1494, %v1495
  %v1497 = vsel %vm1180, %v1410, 0.0
  %v1498 = vadd.f32 %v1496, %v1497
  %v1499 = vsel %vm1180, %v1411, 0.0
  %v1500 = vadd.f32 %v1498, %v1499
  %v1501 = vsel %vm1180, %v1412, 0.0
  %v1502 = vadd.f32 %v1500, %v1501
  %v1503 = vsel %vm1180, %v1413, 0.0
  %v1504 = vadd.f32 %v1502, %v1503
  %v1505 = vsel %vm1180, %v1414, 0.0
  %v1506 = vadd.f32 %v1504, %v1505
  %v1507 = vsel %vm1180, %v1415, 0.0
  %v1508 = vadd.f32 %v1506, %v1507
  %v1509 = vsel %vm1180, %v1416, 0.0
  %v1510 = vadd.f32 %v1508, %v1509
  %v1511 = vsel %vm1180, %v1417, 0.0
  %v1512 = vadd.f32 %v1510, %v1511
  %v1513 = vsel %vm1180, %v1418, 0.0
  %v1514 = vadd.f32 %v1512, %v1513
  %v1515 = vsel %vm1180, %v1419, 0.0
  %v1516 = vadd.f32 %v1514, %v1515
  %v1517 = vsel %vm1180, %v1420, 0.0
  %v1518 = vadd.f32 %v1516, %v1517
  %v1519 = vsel %vm1180, %v1421, 0.0
  %v1520 = vadd.f32 %v1518, %v1519
  %v1521 = vsel %vm1180, %v1422, 0.0
  %v1522 = vadd.f32 %v1520, %v1521
  %v1523 = vsel %vm1180, %v1423, 0.0
  %v1524 = vadd.f32 %v1522, %v1523
  %v1525 = vsel %vm1180, %v1424, 0.0
  %v1526 = vadd.f32 %v1524, %v1525
  %v1527 = vsel %vm1180, %v1425, 0.0
  %v1528 = vadd.f32 %v1526, %v1527
  %v1529 = vsel %vm1180, %v1426, 0.0
  %v1530 = vadd.f32 %v1528, %v1529
  %v1531 = vsel %vm1180, %v1427, 0.0
  %v1532 = vadd.f32 %v1530, %v1531
  %v1533 = vsel %vm1180, %v1428, 0.0
  %v1534 = vadd.f32 %v1532, %v1533
  %v1535 = vsel %vm1180, %v1429, 0.0
  %v1536 = vadd.f32 %v1534, %v1535
  %v1537 = vsel %vm1180, %v1430, 0.0
  %v1538 = vadd.f32 %v1536, %v1537
  %v1539 = vsel %vm1180, %v1431, 0.0
  %v1540 = vadd.f32 %v1538, %v1539
  %v1541 = vsel %vm1180, %v1432, 0.0
  %v1542 = vadd.f32 %v1540, %v1541
  %v1543 = vsel %vm1180, %v1433, 0.0
  %v1544 = vadd.f32 %v1542, %v1543
  %v1545 = vsel %vm1180, %v1434, 0.0
  %v1546 = vadd.f32 %v1544, %v1545
  %v1547 = vsel %vm1180, %v1435, 0.0
  %v1548 = vadd.f32 %v1546, %v1547
  %v1549 = vsel %vm1180, %v1436, 0.0
  %v1550 = vadd.f32 %v1548, %v1549
  %v1551 = vsel %vm1180, %v1437, 0.0
  %v1552 = vadd.f32 %v1550, %v1551
  %v1553 = vsel %vm1180, %v1438, 0.0
  %v1554 = vadd.f32 %v1552, %v1553
  %v1555 = vsel %vm1180, %v1439, 0.0
  %v1556 = vadd.f32 %v1554, %v1555
  %v1557 = vsel %vm1180, %v1440, 0.0
  %v1558 = vadd.f32 %v1556, %v1557
  %v1559 = vsel %vm1180, %v1441, 0.0
  %v1560 = vadd.f32 %v1558, %v1559
  %v1561 = vsel %vm1180, %v1442, 0.0
  %v1562 = vadd.f32 %v1560, %v1561
  %v1563 = vsel %vm1180, %v1443, 0.0
  %v1564 = vadd.f32 %v1562, %v1563
  %v1565 = vsel %vm1180, %v1444, 0.0
  %v1566 = vadd.f32 %v1564, %v1565
  %v1567 = vsel %vm1180, %v1445, 0.0
  %v1568 = vadd.f32 %v1566, %v1567
  %v1569 = vsel %vm1180, %v1446, 0.0
  %v1570 = vadd.f32 %v1568, %v1569
  %v1571 = vsel %vm1180, %v1447, 0.0
  %v1572 = vadd.f32 %v1570, %v1571
  %v1573 = vsel %vm1180, %v1448, 0.0
  %v1574 = vadd.f32 %v1572, %v1573
  %v1575 = vsel %vm1180, %v1449, 0.0
  %v1576 = vadd.f32 %v1574, %v1575
  %v1577 = vrot.slane %v1576, 4
  %v1578 = vadd.f32 %v1576, %v1577
  %v1579 = vrot.slane %v1578, 2
  %v1580 = vadd.f32 %v1578, %v1579
  %v1581 = vrot.slane %v1580, 1
  %v1582 = vadd.f32 %v1580, %v1581
  %v1583 = vmul.f32 %v1582, %v1320
  %v1584 = vadd.f32 %v1583, 1e-05
  %v1585 = vrsqrt.pop %v1584
  %v1586 = vmul.f32 %v1585, %v1584
  %v1587 = vmul.f32 %v1586, %v1585
  %v1588 = vmul.f32 0.5, %v1587
  %v1589 = vsub.f32 1.5, %v1588
  %v1590 = vmul.f32 %v1585, %v1589
  %vm1591 = vweird.f32 %v1584
  %vm1592 = vweird.f32 %v1585
  %vm1593 = vmor %vm1591, %vm1592
  %v1594 = vsel %vm1593, %v1585, %v1590
  %v1595 = vmul.f32 %v1322, %v1594
  %v1596 = vmul.f32 %v1323, %v1594
  %v1597 = vmul.f32 %v1324, %v1594
  %v1598 = vmul.f32 %v1325, %v1594
  %v1599 = vmul.f32 %v1326, %v1594
  %v1600 = vmul.f32 %v1327, %v1594
  %v1601 = vmul.f32 %v1328, %v1594
  %v1602 = vmul.f32 %v1329, %v1594
  %v1603 = vmul.f32 %v1330, %v1594
  %v1604 = vmul.f32 %v1331, %v1594
  %v1605 = vmul.f32 %v1332, %v1594
  %v1606 = vmul.f32 %v1333, %v1594
  %v1607 = vmul.f32 %v1334, %v1594
  %v1608 = vmul.f32 %v1335, %v1594
  %v1609 = vmul.f32 %v1336, %v1594
  %v1610 = vmul.f32 %v1337, %v1594
  %v1611 = vmul.f32 %v1338, %v1594
  %v1612 = vmul.f32 %v1339, %v1594
  %v1613 = vmul.f32 %v1340, %v1594
  %v1614 = vmul.f32 %v1341, %v1594
  %v1615 = vmul.f32 %v1342, %v1594
  %v1616 = vmul.f32 %v1343, %v1594
  %v1617 = vmul.f32 %v1344, %v1594
  %v1618 = vmul.f32 %v1345, %v1594
  %v1619 = vmul.f32 %v1346, %v1594
  %v1620 = vmul.f32 %v1347, %v1594
  %v1621 = vmul.f32 %v1348, %v1594
  %v1622 = vmul.f32 %v1349, %v1594
  %v1623 = vmul.f32 %v1350, %v1594
  %v1624 = vmul.f32 %v1351, %v1594
  %v1625 = vmul.f32 %v1352, %v1594
  %v1626 = vmul.f32 %v1353, %v1594
  %v1627 = vmul.f32 %v1354, %v1594
  %v1628 = vmul.f32 %v1355, %v1594
  %v1629 = vmul.f32 %v1356, %v1594
  %v1630 = vmul.f32 %v1357, %v1594
  %v1631 = vmul.f32 %v1358, %v1594
  %v1632 = vmul.f32 %v1359, %v1594
  %v1633 = vmul.f32 %v1360, %v1594
  %v1634 = vmul.f32 %v1361, %v1594
  %v1635 = vmul.f32 %v1362, %v1594
  %v1636 = vmul.f32 %v1363, %v1594
  %v1637 = vmul.f32 %v1364, %v1594
  %v1638 = vmul.f32 %v1365, %v1594
  %v1639 = vmul.f32 %v1366, %v1594
  %v1640 = vmul.f32 %v1367, %v1594
  %v1641 = vmul.f32 %v1368, %v1594
  %v1642 = vmul.f32 %v1369, %v1594
  %v1643 = vmul.f32 %v1370, %v1594
  %v1644 = vmul.f32 %v1371, %v1594
  %v1645 = vmul.f32 %v1372, %v1594
  %v1646 = vmul.f32 %v1373, %v1594
  %v1647 = vmul.f32 %v1374, %v1594
  %v1648 = vmul.f32 %v1375, %v1594
  %v1649 = vmul.f32 %v1376, %v1594
  %v1650 = vmul.f32 %v1377, %v1594
  %v1651 = vmul.f32 %v1378, %v1594
  %v1652 = vmul.f32 %v1379, %v1594
  %v1653 = vmul.f32 %v1380, %v1594
  %v1654 = vmul.f32 %v1381, %v1594
  %v1655 = vmul.f32 %v1382, %v1594
  %v1656 = vmul.f32 %v1383, %v1594
  %v1657 = vmul.f32 %v1384, %v1594
  %v1658 = vmul.f32 %v1385, %v1594
  %v1659 = vld [vmem:[%s3] sm:$0x1]
  %v1661 = vperm.slane %v1659, 0
  %v1663 = vmul.f32 %v1595, %v1661
  %v1664 = vmul.f32 %v1596, %v1661
  %v1665 = vmul.f32 %v1597, %v1661
  %v1666 = vmul.f32 %v1598, %v1661
  %v1667 = vmul.f32 %v1599, %v1661
  %v1668 = vmul.f32 %v1600, %v1661
  %v1669 = vmul.f32 %v1601, %v1661
  %v1670 = vmul.f32 %v1602, %v1661
  %v1671 = vmul.f32 %v1603, %v1661
  %v1672 = vmul.f32 %v1604, %v1661
  %v1673 = vmul.f32 %v1605, %v1661
  %v1674 = vmul.f32 %v1606, %v1661
  %v1675 = vmul.f32 %v1607, %v1661
  %v1676 = vmul.f32 %v1608, %v1661
  %v1677 = vmul.f32 %v1609, %v1661
  %v1678 = vmul.f32 %v1610, %v1661
  %v1679 = vmul.f32 %v1611, %v1661
  %v1680 = vmul.f32 %v1612, %v1661
  %v1681 = vmul.f32 %v1613, %v1661
  %v1682 = vmul.f32 %v1614, %v1661
  %v1683 = vmul.f32 %v1615, %v1661
  %v1684 = vmul.f32 %v1616, %v1661
  %v1685 = vmul.f32 %v1617, %v1661
  %v1686 = vmul.f32 %v1618, %v1661
  %v1687 = vmul.f32 %v1619, %v1661
  %v1688 = vmul.f32 %v1620, %v1661
  %v1689 = vmul.f32 %v1621, %v1661
  %v1690 = vmul.f32 %v1622, %v1661
  %v1691 = vmul.f32 %v1623, %v1661
  %v1692 = vmul.f32 %v1624, %v1661
  %v1693 = vmul.f32 %v1625, %v1661
  %v1694 = vmul.f32 %v1626, %v1661
  %v1695 = vmul.f32 %v1627, %v1661
  %v1696 = vmul.f32 %v1628, %v1661
  %v1697 = vmul.f32 %v1629, %v1661
  %v1698 = vmul.f32 %v1630, %v1661
  %v1699 = vmul.f32 %v1631, %v1661
  %v1700 = vmul.f32 %v1632, %v1661
  %v1701 = vmul.f32 %v1633, %v1661
  %v1702 = vmul.f32 %v1634, %v1661
  %v1703 = vmul.f32 %v1635, %v1661
  %v1704 = vmul.f32 %v1636, %v1661
  %v1705 = vmul.f32 %v1637, %v1661
  %v1706 = vmul.f32 %v1638, %v1661
  %v1707 = vmul.f32 %v1639, %v1661
  %v1708 = vmul.f32 %v1640, %v1661
  %v1709 = vmul.f32 %v1641, %v1661
  %v1710 = vmul.f32 %v1642, %v1661
  %v1711 = vmul.f32 %v1643, %v1661
  %v1712 = vmul.f32 %v1644, %v1661
  %v1713 = vmul.f32 %v1645, %v1661
  %v1714 = vmul.f32 %v1646, %v1661
  %v1715 = vmul.f32 %v1647, %v1661
  %v1716 = vmul.f32 %v1648, %v1661
  %v1717 = vmul.f32 %v1649, %v1661
  %v1718 = vmul.f32 %v1650, %v1661
  %v1719 = vmul.f32 %v1651, %v1661
  %v1720 = vmul.f32 %v1652, %v1661
  %v1721 = vmul.f32 %v1653, %v1661
  %v1722 = vmul.f32 %v1654, %v1661
  %v1723 = vmul.f32 %v1655, %v1661
  %v1724 = vmul.f32 %v1656, %v1661
  %v1725 = vmul.f32 %v1657, %v1661
  %v1726 = vmul.f32 %v1658, %v1661
  %v1727 = vld [vmem:[%s4] sm:$0x1]
  %v1729 = vperm.slane %v1727, 0
  %v1731 = vadd.f32 %v1663, %v1729
  %v1732 = vadd.f32 %v1664, %v1729
  %v1733 = vadd.f32 %v1665, %v1729
  %v1734 = vadd.f32 %v1666, %v1729
  %v1735 = vadd.f32 %v1667, %v1729
  %v1736 = vadd.f32 %v1668, %v1729
  %v1737 = vadd.f32 %v1669, %v1729
  %v1738 = vadd.f32 %v1670, %v1729
  %v1739 = vadd.f32 %v1671, %v1729
  %v1740 = vadd.f32 %v1672, %v1729
  %v1741 = vadd.f32 %v1673, %v1729
  %v1742 = vadd.f32 %v1674, %v1729
  %v1743 = vadd.f32 %v1675, %v1729
  %v1744 = vadd.f32 %v1676, %v1729
  %v1745 = vadd.f32 %v1677, %v1729
  %v1746 = vadd.f32 %v1678, %v1729
  %v1747 = vadd.f32 %v1679, %v1729
  %v1748 = vadd.f32 %v1680, %v1729
  %v1749 = vadd.f32 %v1681, %v1729
  %v1750 = vadd.f32 %v1682, %v1729
  %v1751 = vadd.f32 %v1683, %v1729
  %v1752 = vadd.f32 %v1684, %v1729
  %v1753 = vadd.f32 %v1685, %v1729
  %v1754 = vadd.f32 %v1686, %v1729
  %v1755 = vadd.f32 %v1687, %v1729
  %v1756 = vadd.f32 %v1688, %v1729
  %v1757 = vadd.f32 %v1689, %v1729
  %v1758 = vadd.f32 %v1690, %v1729
  %v1759 = vadd.f32 %v1691, %v1729
  %v1760 = vadd.f32 %v1692, %v1729
  %v1761 = vadd.f32 %v1693, %v1729
  %v1762 = vadd.f32 %v1694, %v1729
  %v1763 = vadd.f32 %v1695, %v1729
  %v1764 = vadd.f32 %v1696, %v1729
  %v1765 = vadd.f32 %v1697, %v1729
  %v1766 = vadd.f32 %v1698, %v1729
  %v1767 = vadd.f32 %v1699, %v1729
  %v1768 = vadd.f32 %v1700, %v1729
  %v1769 = vadd.f32 %v1701, %v1729
  %v1770 = vadd.f32 %v1702, %v1729
  %v1771 = vadd.f32 %v1703, %v1729
  %v1772 = vadd.f32 %v1704, %v1729
  %v1773 = vadd.f32 %v1705, %v1729
  %v1774 = vadd.f32 %v1706, %v1729
  %v1775 = vadd.f32 %v1707, %v1729
  %v1776 = vadd.f32 %v1708, %v1729
  %v1777 = vadd.f32 %v1709, %v1729
  %v1778 = vadd.f32 %v1710, %v1729
  %v1779 = vadd.f32 %v1711, %v1729
  %v1780 = vadd.f32 %v1712, %v1729
  %v1781 = vadd.f32 %v1713, %v1729
  %v1782 = vadd.f32 %v1714, %v1729
  %v1783 = vadd.f32 %v1715, %v1729
  %v1784 = vadd.f32 %v1716, %v1729
  %v1785 = vadd.f32 %v1717, %v1729
  %v1786 = vadd.f32 %v1718, %v1729
  %v1787 = vadd.f32 %v1719, %v1729
  %v1788 = vadd.f32 %v1720, %v1729
  %v1789 = vadd.f32 %v1721, %v1729
  %v1790 = vadd.f32 %v1722, %v1729
  %v1791 = vadd.f32 %v1723, %v1729
  %v1792 = vadd.f32 %v1724, %v1729
  %v1793 = vadd.f32 %v1725, %v1729
  %v1794 = vadd.f32 %v1726, %v1729
  %vm1795 = vcmp.ge.f32.partialorder %v1731, 0.0
  %vm1796 = vcmp.ge.f32.partialorder %v1732, 0.0
  %vm1797 = vcmp.ge.f32.partialorder %v1733, 0.0
  %vm1798 = vcmp.ge.f32.partialorder %v1734, 0.0
  %vm1799 = vcmp.ge.f32.partialorder %v1735, 0.0
  %vm1800 = vcmp.ge.f32.partialorder %v1736, 0.0
  %vm1801 = vcmp.ge.f32.partialorder %v1737, 0.0
  %vm1802 = vcmp.ge.f32.partialorder %v1738, 0.0
  %vm1803 = vcmp.ge.f32.partialorder %v1739, 0.0
  %vm1804 = vcmp.ge.f32.partialorder %v1740, 0.0
  %vm1805 = vcmp.ge.f32.partialorder %v1741, 0.0
  %vm1806 = vcmp.ge.f32.partialorder %v1742, 0.0
  %vm1807 = vcmp.ge.f32.partialorder %v1743, 0.0
  %vm1808 = vcmp.ge.f32.partialorder %v1744, 0.0
  %vm1809 = vcmp.ge.f32.partialorder %v1745, 0.0
  %vm1810 = vcmp.ge.f32.partialorder %v1746, 0.0
  %vm1811 = vcmp.ge.f32.partialorder %v1747, 0.0
  %vm1812 = vcmp.ge.f32.partialorder %v1748, 0.0
  %vm1813 = vcmp.ge.f32.partialorder %v1749, 0.0
  %vm1814 = vcmp.ge.f32.partialorder %v1750, 0.0
  %vm1815 = vcmp.ge.f32.partialorder %v1751, 0.0
  %vm1816 = vcmp.ge.f32.partialorder %v1752, 0.0
  %vm1817 = vcmp.ge.f32.partialorder %v1753, 0.0
  %vm1818 = vcmp.ge.f32.partialorder %v1754, 0.0
  %vm1819 = vcmp.ge.f32.partialorder %v1755, 0.0
  %vm1820 = vcmp.ge.f32.partialorder %v1756, 0.0
  %vm1821 = vcmp.ge.f32.partialorder %v1757, 0.0
  %vm1822 = vcmp.ge.f32.partialorder %v1758, 0.0
  %vm1823 = vcmp.ge.f32.partialorder %v1759, 0.0
  %vm1824 = vcmp.ge.f32.partialorder %v1760, 0.0
  %vm1825 = vcmp.ge.f32.partialorder %v1761, 0.0
  %vm1826 = vcmp.ge.f32.partialorder %v1762, 0.0
  %vm1827 = vcmp.ge.f32.partialorder %v1763, 0.0
  %vm1828 = vcmp.ge.f32.partialorder %v1764, 0.0
  %vm1829 = vcmp.ge.f32.partialorder %v1765, 0.0
  %vm1830 = vcmp.ge.f32.partialorder %v1766, 0.0
  %vm1831 = vcmp.ge.f32.partialorder %v1767, 0.0
  %vm1832 = vcmp.ge.f32.partialorder %v1768, 0.0
  %vm1833 = vcmp.ge.f32.partialorder %v1769, 0.0
  %vm1834 = vcmp.ge.f32.partialorder %v1770, 0.0
  %vm1835 = vcmp.ge.f32.partialorder %v1771, 0.0
  %vm1836 = vcmp.ge.f32.partialorder %v1772, 0.0
  %vm1837 = vcmp.ge.f32.partialorder %v1773, 0.0
  %vm1838 = vcmp.ge.f32.partialorder %v1774, 0.0
  %vm1839 = vcmp.ge.f32.partialorder %v1775, 0.0
  %vm1840 = vcmp.ge.f32.partialorder %v1776, 0.0
  %vm1841 = vcmp.ge.f32.partialorder %v1777, 0.0
  %vm1842 = vcmp.ge.f32.partialorder %v1778, 0.0
  %vm1843 = vcmp.ge.f32.partialorder %v1779, 0.0
  %vm1844 = vcmp.ge.f32.partialorder %v1780, 0.0
  %vm1845 = vcmp.ge.f32.partialorder %v1781, 0.0
  %vm1846 = vcmp.ge.f32.partialorder %v1782, 0.0
  %vm1847 = vcmp.ge.f32.partialorder %v1783, 0.0
  %vm1848 = vcmp.ge.f32.partialorder %v1784, 0.0
  %vm1849 = vcmp.ge.f32.partialorder %v1785, 0.0
  %vm1850 = vcmp.ge.f32.partialorder %v1786, 0.0
  %vm1851 = vcmp.ge.f32.partialorder %v1787, 0.0
  %vm1852 = vcmp.ge.f32.partialorder %v1788, 0.0
  %vm1853 = vcmp.ge.f32.partialorder %v1789, 0.0
  %vm1854 = vcmp.ge.f32.partialorder %v1790, 0.0
  %vm1855 = vcmp.ge.f32.partialorder %v1791, 0.0
  %vm1856 = vcmp.ge.f32.partialorder %v1792, 0.0
  %vm1857 = vcmp.ge.f32.partialorder %v1793, 0.0
  %vm1858 = vcmp.ge.f32.partialorder %v1794, 0.0
  %v1859 = vmul.f32 %v1731, 0.2
  %v1860 = vmul.f32 %v1732, 0.2
  %v1861 = vmul.f32 %v1733, 0.2
  %v1862 = vmul.f32 %v1734, 0.2
  %v1863 = vmul.f32 %v1735, 0.2
  %v1864 = vmul.f32 %v1736, 0.2
  %v1865 = vmul.f32 %v1737, 0.2
  %v1866 = vmul.f32 %v1738, 0.2
  %v1867 = vmul.f32 %v1739, 0.2
  %v1868 = vmul.f32 %v1740, 0.2
  %v1869 = vmul.f32 %v1741, 0.2
  %v1870 = vmul.f32 %v1742, 0.2
  %v1871 = vmul.f32 %v1743, 0.2
  %v1872 = vmul.f32 %v1744, 0.2
  %v1873 = vmul.f32 %v1745, 0.2
  %v1874 = vmul.f32 %v1746, 0.2
  %v1875 = vmul.f32 %v1747, 0.2
  %v1876 = vmul.f32 %v1748, 0.2
  %v1877 = vmul.f32 %v1749, 0.2
  %v1878 = vmul.f32 %v1750, 0.2
  %v1879 = vmul.f32 %v1751, 0.2
  %v1880 = vmul.f32 %v1752, 0.2
  %v1881 = vmul.f32 %v1753, 0.2
  %v1882 = vmul.f32 %v1754, 0.2
  %v1883 = vmul.f32 %v1755, 0.2
  %v1884 = vmul.f32 %v1756, 0.2
  %v1885 = vmul.f32 %v1757, 0.2
  %v1886 = vmul.f32 %v1758, 0.2
  %v1887 = vmul.f32 %v1759, 0.2
  %v1888 = vmul.f32 %v1760, 0.2
  %v1889 = vmul.f32 %v1761, 0.2
  %v1890 = vmul.f32 %v1762, 0.2
  %v1891 = vmul.f32 %v1763, 0.2
  %v1892 = vmul.f32 %v1764, 0.2
  %v1893 = vmul.f32 %v1765, 0.2
  %v1894 = vmul.f32 %v1766, 0.2
  %v1895 = vmul.f32 %v1767, 0.2
  %v1896 = vmul.f32 %v1768, 0.2
  %v1897 = vmul.f32 %v1769, 0.2
  %v1898 = vmul.f32 %v1770, 0.2
  %v1899 = vmul.f32 %v1771, 0.2
  %v1900 = vmul.f32 %v1772, 0.2
  %v1901 = vmul.f32 %v1773, 0.2
  %v1902 = vmul.f32 %v1774, 0.2
  %v1903 = vmul.f32 %v1775, 0.2
  %v1904 = vmul.f32 %v1776, 0.2
  %v1905 = vmul.f32 %v1777, 0.2
  %v1906 = vmul.f32 %v1778, 0.2
  %v1907 = vmul.f32 %v1779, 0.2
  %v1908 = vmul.f32 %v1780, 0.2
  %v1909 = vmul.f32 %v1781, 0.2
  %v1910 = vmul.f32 %v1782, 0.2
  %v1911 = vmul.f32 %v1783, 0.2
  %v1912 = vmul.f32 %v1784, 0.2
  %v1913 = vmul.f32 %v1785, 0.2
  %v1914 = vmul.f32 %v1786, 0.2
  %v1915 = vmul.f32 %v1787, 0.2
  %v1916 = vmul.f32 %v1788, 0.2
  %v1917 = vmul.f32 %v1789, 0.2
  %v1918 = vmul.f32 %v1790, 0.2
  %v1919 = vmul.f32 %v1791, 0.2
  %v1920 = vmul.f32 %v1792, 0.2
  %v1921 = vmul.f32 %v1793, 0.2
  %v1922 = vmul.f32 %v1794, 0.2
  %v1923 = vsel %vm1795, %v1731, %v1859
  %v1924 = vsel %vm1796, %v1732, %v1860
  %v1925 = vsel %vm1797, %v1733, %v1861
  %v1926 = vsel %vm1798, %v1734, %v1862
  %v1927 = vsel %vm1799, %v1735, %v1863
  %v1928 = vsel %vm1800, %v1736, %v1864
  %v1929 = vsel %vm1801, %v1737, %v1865
  %v1930 = vsel %vm1802, %v1738, %v1866
  %v1931 = vsel %vm1803, %v1739, %v1867
  %v1932 = vsel %vm1804, %v1740, %v1868
  %v1933 = vsel %vm1805, %v1741, %v1869
  %v1934 = vsel %vm1806, %v1742, %v1870
  %v1935 = vsel %vm1807, %v1743, %v1871
  %v1936 = vsel %vm1808, %v1744, %v1872
  %v1937 = vsel %vm1809, %v1745, %v1873
  %v1938 = vsel %vm1810, %v1746, %v1874
  %v1939 = vsel %vm1811, %v1747, %v1875
  %v1940 = vsel %vm1812, %v1748, %v1876
  %v1941 = vsel %vm1813, %v1749, %v1877
  %v1942 = vsel %vm1814, %v1750, %v1878
  %v1943 = vsel %vm1815, %v1751, %v1879
  %v1944 = vsel %vm1816, %v1752, %v1880
  %v1945 = vsel %vm1817, %v1753, %v1881
  %v1946 = vsel %vm1818, %v1754, %v1882
  %v1947 = vsel %vm1819, %v1755, %v1883
  %v1948 = vsel %vm1820, %v1756, %v1884
  %v1949 = vsel %vm1821, %v1757, %v1885
  %v1950 = vsel %vm1822, %v1758, %v1886
  %v1951 = vsel %vm1823, %v1759, %v1887
  %v1952 = vsel %vm1824, %v1760, %v1888
  %v1953 = vsel %vm1825, %v1761, %v1889
  %v1954 = vsel %vm1826, %v1762, %v1890
  %v1955 = vsel %vm1827, %v1763, %v1891
  %v1956 = vsel %vm1828, %v1764, %v1892
  %v1957 = vsel %vm1829, %v1765, %v1893
  %v1958 = vsel %vm1830, %v1766, %v1894
  %v1959 = vsel %vm1831, %v1767, %v1895
  %v1960 = vsel %vm1832, %v1768, %v1896
  %v1961 = vsel %vm1833, %v1769, %v1897
  %v1962 = vsel %vm1834, %v1770, %v1898
  %v1963 = vsel %vm1835, %v1771, %v1899
  %v1964 = vsel %vm1836, %v1772, %v1900
  %v1965 = vsel %vm1837, %v1773, %v1901
  %v1966 = vsel %vm1838, %v1774, %v1902
  %v1967 = vsel %vm1839, %v1775, %v1903
  %v1968 = vsel %vm1840, %v1776, %v1904
  %v1969 = vsel %vm1841, %v1777, %v1905
  %v1970 = vsel %vm1842, %v1778, %v1906
  %v1971 = vsel %vm1843, %v1779, %v1907
  %v1972 = vsel %vm1844, %v1780, %v1908
  %v1973 = vsel %vm1845, %v1781, %v1909
  %v1974 = vsel %vm1846, %v1782, %v1910
  %v1975 = vsel %vm1847, %v1783, %v1911
  %v1976 = vsel %vm1848, %v1784, %v1912
  %v1977 = vsel %vm1849, %v1785, %v1913
  %v1978 = vsel %vm1850, %v1786, %v1914
  %v1979 = vsel %vm1851, %v1787, %v1915
  %v1980 = vsel %vm1852, %v1788, %v1916
  %v1981 = vsel %vm1853, %v1789, %v1917
  %v1982 = vsel %vm1854, %v1790, %v1918
  %v1983 = vsel %vm1855, %v1791, %v1919
  %v1984 = vsel %vm1856, %v1792, %v1920
  %v1985 = vsel %vm1857, %v1793, %v1921
  %v1986 = vsel %vm1858, %v1794, %v1922
  %1987 = vst.msk [vmem:[%s5] sm:$0xff] %vm1180, %v1923
  %1988 = vst.msk [vmem:[%s5 + $0x8] sm:$0xff] %vm1180, %v1924
  %1989 = vst.msk [vmem:[%s5 + $0x10] sm:$0xff] %vm1180, %v1925
  %1990 = vst.msk [vmem:[%s5 + $0x18] sm:$0xff] %vm1180, %v1926
  %1991 = vst.msk [vmem:[%s5 + $0x20] sm:$0xff] %vm1180, %v1927
  %1992 = vst.msk [vmem:[%s5 + $0x28] sm:$0xff] %vm1180, %v1928
  %1993 = vst.msk [vmem:[%s5 + $0x30] sm:$0xff] %vm1180, %v1929
  %1994 = vst.msk [vmem:[%s5 + $0x38] sm:$0xff] %vm1180, %v1930
  %1995 = vst.msk [vmem:[%s5 + $0x40] sm:$0xff] %vm1180, %v1931
  %1996 = vst.msk [vmem:[%s5 + $0x48] sm:$0xff] %vm1180, %v1932
  %1997 = vst.msk [vmem:[%s5 + $0x50] sm:$0xff] %vm1180, %v1933
  %1998 = vst.msk [vmem:[%s5 + $0x58] sm:$0xff] %vm1180, %v1934
  %1999 = vst.msk [vmem:[%s5 + $0x60] sm:$0xff] %vm1180, %v1935
  %2000 = vst.msk [vmem:[%s5 + $0x68] sm:$0xff] %vm1180, %v1936
  %2001 = vst.msk [vmem:[%s5 + $0x70] sm:$0xff] %vm1180, %v1937
  %2002 = vst.msk [vmem:[%s5 + $0x78] sm:$0xff] %vm1180, %v1938
  %2003 = vst.msk [vmem:[%s5 + $0x80] sm:$0xff] %vm1180, %v1939
  %2004 = vst.msk [vmem:[%s5 + $0x88] sm:$0xff] %vm1180, %v1940
  %2005 = vst.msk [vmem:[%s5 + $0x90] sm:$0xff] %vm1180, %v1941
  %2006 = vst.msk [vmem:[%s5 + $0x98] sm:$0xff] %vm1180, %v1942
  %2007 = vst.msk [vmem:[%s5 + $0xa0] sm:$0xff] %vm1180, %v1943
  %2008 = vst.msk [vmem:[%s5 + $0xa8] sm:$0xff] %vm1180, %v1944
  %2009 = vst.msk [vmem:[%s5 + $0xb0] sm:$0xff] %vm1180, %v1945
  %2010 = vst.msk [vmem:[%s5 + $0xb8] sm:$0xff] %vm1180, %v1946
  %2011 = vst.msk [vmem:[%s5 + $0xc0] sm:$0xff] %vm1180, %v1947
  %2012 = vst.msk [vmem:[%s5 + $0xc8] sm:$0xff] %vm1180, %v1948
  %2013 = vst.msk [vmem:[%s5 + $0xd0] sm:$0xff] %vm1180, %v1949
  %2014 = vst.msk [vmem:[%s5 + $0xd8] sm:$0xff] %vm1180, %v1950
  %2015 = vst.msk [vmem:[%s5 + $0xe0] sm:$0xff] %vm1180, %v1951
  %2016 = vst.msk [vmem:[%s5 + $0xe8] sm:$0xff] %vm1180, %v1952
  %2017 = vst.msk [vmem:[%s5 + $0xf0] sm:$0xff] %vm1180, %v1953
  %2018 = vst.msk [vmem:[%s5 + $0xf8] sm:$0xff] %vm1180, %v1954
  %2019 = vst.msk [vmem:[%s5 + $0x100] sm:$0xff] %vm1180, %v1955
  %2020 = vst.msk [vmem:[%s5 + $0x108] sm:$0xff] %vm1180, %v1956
  %2021 = vst.msk [vmem:[%s5 + $0x110] sm:$0xff] %vm1180, %v1957
  %2022 = vst.msk [vmem:[%s5 + $0x118] sm:$0xff] %vm1180, %v1958
  %2023 = vst.msk [vmem:[%s5 + $0x120] sm:$0xff] %vm1180, %v1959
  %2024 = vst.msk [vmem:[%s5 + $0x128] sm:$0xff] %vm1180, %v1960
  %2025 = vst.msk [vmem:[%s5 + $0x130] sm:$0xff] %vm1180, %v1961
  %2026 = vst.msk [vmem:[%s5 + $0x138] sm:$0xff] %vm1180, %v1962
  %2027 = vst.msk [vmem:[%s5 + $0x140] sm:$0xff] %vm1180, %v1963
  %2028 = vst.msk [vmem:[%s5 + $0x148] sm:$0xff] %vm1180, %v1964
  %2029 = vst.msk [vmem:[%s5 + $0x150] sm:$0xff] %vm1180, %v1965
  %2030 = vst.msk [vmem:[%s5 + $0x158] sm:$0xff] %vm1180, %v1966
  %2031 = vst.msk [vmem:[%s5 + $0x160] sm:$0xff] %vm1180, %v1967
  %2032 = vst.msk [vmem:[%s5 + $0x168] sm:$0xff] %vm1180, %v1968
  %2033 = vst.msk [vmem:[%s5 + $0x170] sm:$0xff] %vm1180, %v1969
  %2034 = vst.msk [vmem:[%s5 + $0x178] sm:$0xff] %vm1180, %v1970
  %2035 = vst.msk [vmem:[%s5 + $0x180] sm:$0xff] %vm1180, %v1971
  %2036 = vst.msk [vmem:[%s5 + $0x188] sm:$0xff] %vm1180, %v1972
  %2037 = vst.msk [vmem:[%s5 + $0x190] sm:$0xff] %vm1180, %v1973
  %2038 = vst.msk [vmem:[%s5 + $0x198] sm:$0xff] %vm1180, %v1974
  %2039 = vst.msk [vmem:[%s5 + $0x1a0] sm:$0xff] %vm1180, %v1975
  %2040 = vst.msk [vmem:[%s5 + $0x1a8] sm:$0xff] %vm1180, %v1976
  %2041 = vst.msk [vmem:[%s5 + $0x1b0] sm:$0xff] %vm1180, %v1977
  %2042 = vst.msk [vmem:[%s5 + $0x1b8] sm:$0xff] %vm1180, %v1978
  %2043 = vst.msk [vmem:[%s5 + $0x1c0] sm:$0xff] %vm1180, %v1979
  %2044 = vst.msk [vmem:[%s5 + $0x1c8] sm:$0xff] %vm1180, %v1980
  %2045 = vst.msk [vmem:[%s5 + $0x1d0] sm:$0xff] %vm1180, %v1981
  %2046 = vst.msk [vmem:[%s5 + $0x1d8] sm:$0xff] %vm1180, %v1982
  %2047 = vst.msk [vmem:[%s5 + $0x1e0] sm:$0xff] %vm1180, %v1983
  %2048 = vst.msk [vmem:[%s5 + $0x1e8] sm:$0xff] %vm1180, %v1984
  %2049 = vst.msk [vmem:[%s5 + $0x1f0] sm:$0xff] %vm1180, %v1985
  %2050 = vst.msk [vmem:[%s5 + $0x1f8] sm:$0xff] %vm1180, %v1986
  // Predicated region
  $region22: #{d_forward.6} parent=0 // pred_check
    _
  $region23: #{d_forward.6} parent=0 // pred_check_branch
    %2052 = sbr.rel (0) target = $region25
  $region24: #{d_forward.6} parent=0 // pred_region
    _
  $region25: #{d_forward.6} parent=0 // pred_fallthru
    _
  // Predicated region
  $region26: #{d_forward.6} parent=0 // pred_check
    _
  $region27: #{d_forward.6} parent=0 // pred_check_branch
    %2054 = sbr.rel (0) target = $region29
  $region28: #{d_forward.6} parent=0 // pred_region
    _
  $region29: #{d_forward.6} parent=0 // pred_fallthru
    _

// kernel: d_forward.7
$region0: #{d_forward.7}
  #allocation0 [shape = 'u32[]', space=smem, size = 0x4, offset = 0x4, fixed_abs, tag = 'smem constant byte address 0x4 - core index']
  #allocation1 [shape = 'u32[72,128]{1,0:T(1,128)}', space=vmem, size = 0x9000, scoped, tag = 'internal scratch']
  %s0 = inlined_call_operand.vmem [shape: f32[128,1024], index: 0, kind: input, shape index: {}]
  %s1 = inlined_call_operand.vmem [shape: f32[1024,128], index: 1, kind: input, shape index: {}]
  %s2 = inlined_call_operand.vmem [shape: f32[1,128], index: 2, kind: input, shape index: {}]
  %s3 = inlined_call_operand.vmem [shape: f32[1,128], index: 3, kind: input, shape index: {}]
  %s4 = inlined_call_operand.vmem [shape: f32[1,128], index: 4, kind: input, shape index: {}]
  %s5 = inlined_call_operand.vmem [shape: f32[128,128], index: 5, kind: output, shape index: {}]
  %s6 = sld [smem:[#allocation0]]
  $region30: #{d_forward.7} parent=0
    _
  %s8 = ssub.s32 1, %s6
  %s9 = scalar_select 0, %s8, %s6
  // Predicated region
  $region2: #{d_forward.7} parent=0 // pred_check
    _
  $region3: #{d_forward.7} parent=0 // pred_check_branch
    %11 = sbr.rel (0) target = $region5
  $region4: #{d_forward.7} parent=0 // pred_region
    _
  $region5: #{d_forward.7} parent=0 // pred_fallthru
    _
  // Predicated region
  $region6: #{d_forward.7} parent=0 // pred_check
    _
  $region7: #{d_forward.7} parent=0 // pred_check_branch
    %13 = sbr.rel (0) target = $region9
  $region8: #{d_forward.7} parent=0 // pred_region
    _
  $region9: #{d_forward.7} parent=0 // pred_fallthru
    _
  // Predicated region
  $region10: #{d_forward.7} parent=0 // pred_check
    _
  $region11: #{d_forward.7} parent=0 // pred_check_branch
    %15 = sbr.rel (0) target = $region13
  $region12: #{d_forward.7} parent=0 // pred_region
    _
  $region13: #{d_forward.7} parent=0 // pred_fallthru
    _
  // Predicated region
  $region14: #{d_forward.7} parent=0 // pred_check
    _
  $region15: #{d_forward.7} parent=0 // pred_check_branch
    %17 = sbr.rel (0) target = $region17
  $region16: #{d_forward.7} parent=0 // pred_region
    _
  $region17: #{d_forward.7} parent=0 // pred_fallthru
    _
  // Predicated region
  $region18: #{d_forward.7} parent=0 // pred_check
    _
  $region19: #{d_forward.7} parent=0 // pred_check_branch
    %19 = sbr.rel (0) target = $region21
  $region20: #{d_forward.7} parent=0 // pred_region
    _
  $region21: #{d_forward.7} parent=0 // pred_fallthru
    _
  %v20 = vld [vmem:[%s0] sm:$0xff]
  %v21 = vld [vmem:[%s0 + $0x8] sm:$0xff]
  %v22 = vld [vmem:[%s0 + $0x10] sm:$0xff]
  %v23 = vld [vmem:[%s0 + $0x18] sm:$0xff]
  %v24 = vld [vmem:[%s0 + $0x20] sm:$0xff]
  %v25 = vld [vmem:[%s0 + $0x28] sm:$0xff]
  %v26 = vld [vmem:[%s0 + $0x30] sm:$0xff]
  %v27 = vld [vmem:[%s0 + $0x38] sm:$0xff]
  %v28 = vld [vmem:[%s0 + $0x40] sm:$0xff]
  %v29 = vld [vmem:[%s0 + $0x48] sm:$0xff]
  %v30 = vld [vmem:[%s0 + $0x50] sm:$0xff]
  %v31 = vld [vmem:[%s0 + $0x58] sm:$0xff]
  %v32 = vld [vmem:[%s0 + $0x60] sm:$0xff]
  %v33 = vld [vmem:[%s0 + $0x68] sm:$0xff]
  %v34 = vld [vmem:[%s0 + $0x70] sm:$0xff]
  %v35 = vld [vmem:[%s0 + $0x78] sm:$0xff]
  %v36 = vld [vmem:[%s0 + $0x80] sm:$0xff]
  %v37 = vld [vmem:[%s0 + $0x88] sm:$0xff]
  %v38 = vld [vmem:[%s0 + $0x90] sm:$0xff]
  %v39 = vld [vmem:[%s0 + $0x98] sm:$0xff]
  %v40 = vld [vmem:[%s0 + $0xa0] sm:$0xff]
  %v41 = vld [vmem:[%s0 + $0xa8] sm:$0xff]
  %v42 = vld [vmem:[%s0 + $0xb0] sm:$0xff]
  %v43 = vld [vmem:[%s0 + $0xb8] sm:$0xff]
  %v44 = vld [vmem:[%s0 + $0xc0] sm:$0xff]
  %v45 = vld [vmem:[%s0 + $0xc8] sm:$0xff]
  %v46 = vld [vmem:[%s0 + $0xd0] sm:$0xff]
  %v47 = vld [vmem:[%s0 + $0xd8] sm:$0xff]
  %v48 = vld [vmem:[%s0 + $0xe0] sm:$0xff]
  %v49 = vld [vmem:[%s0 + $0xe8] sm:$0xff]
  %v50 = vld [vmem:[%s0 + $0xf0] sm:$0xff]
  %v51 = vld [vmem:[%s0 + $0xf8] sm:$0xff]
  %v52 = vld [vmem:[%s0 + $0x100] sm:$0xff]
  %v53 = vld [vmem:[%s0 + $0x108] sm:$0xff]
  %v54 = vld [vmem:[%s0 + $0x110] sm:$0xff]
  %v55 = vld [vmem:[%s0 + $0x118] sm:$0xff]
  %v56 = vld [vmem:[%s0 + $0x120] sm:$0xff]
  %v57 = vld [vmem:[%s0 + $0x128] sm:$0xff]
  %v58 = vld [vmem:[%s0 + $0x130] sm:$0xff]
  %v59 = vld [vmem:[%s0 + $0x138] sm:$0xff]
  %v60 = vld [vmem:[%s0 + $0x140] sm:$0xff]
  %v61 = vld [vmem:[%s0 + $0x148] sm:$0xff]
  %v62 = vld [vmem:[%s0 + $0x150] sm:$0xff]
  %v63 = vld [vmem:[%s0 + $0x158] sm:$0xff]
  %v64 = vld [vmem:[%s0 + $0x160] sm:$0xff]
  %v65 = vld [vmem:[%s0 + $0x168] sm:$0xff]
  %v66 = vld [vmem:[%s0 + $0x170] sm:$0xff]
  %v67 = vld [vmem:[%s0 + $0x178] sm:$0xff]
  %v68 = vld [vmem:[%s0 + $0x180] sm:$0xff]
  %v69 = vld [vmem:[%s0 + $0x188] sm:$0xff]
  %v70 = vld [vmem:[%s0 + $0x190] sm:$0xff]
  %v71 = vld [vmem:[%s0 + $0x198] sm:$0xff]
  %v72 = vld [vmem:[%s0 + $0x1a0] sm:$0xff]
  %v73 = vld [vmem:[%s0 + $0x1a8] sm:$0xff]
  %v74 = vld [vmem:[%s0 + $0x1b0] sm:$0xff]
  %v75 = vld [vmem:[%s0 + $0x1b8] sm:$0xff]
  %v76 = vld [vmem:[%s0 + $0x1c0] sm:$0xff]
  %v77 = vld [vmem:[%s0 + $0x1c8] sm:$0xff]
  %v78 = vld [vmem:[%s0 + $0x1d0] sm:$0xff]
  %v79 = vld [vmem:[%s0 + $0x1d8] sm:$0xff]
  %v80 = vld [vmem:[%s0 + $0x1e0] sm:$0xff]
  %v81 = vld [vmem:[%s0 + $0x1e8] sm:$0xff]
  %v82 = vld [vmem:[%s0 + $0x1f0] sm:$0xff]
  %v83 = vld [vmem:[%s0 + $0x1f8] sm:$0xff]
  %v84 = vld [vmem:[%s0 + $0x200] sm:$0xff]
  %v85 = vld [vmem:[%s0 + $0x208] sm:$0xff]
  %v86 = vld [vmem:[%s0 + $0x210] sm:$0xff]
  %v87 = vld [vmem:[%s0 + $0x218] sm:$0xff]
  %v88 = vld [vmem:[%s0 + $0x220] sm:$0xff]
  %v89 = vld [vmem:[%s0 + $0x228] sm:$0xff]
  %v90 = vld [vmem:[%s0 + $0x230] sm:$0xff]
  %v91 = vld [vmem:[%s0 + $0x238] sm:$0xff]
  %v92 = vld [vmem:[%s0 + $0x240] sm:$0xff]
  %v93 = vld [vmem:[%s0 + $0x248] sm:$0xff]
  %v94 = vld [vmem:[%s0 + $0x250] sm:$0xff]
  %v95 = vld [vmem:[%s0 + $0x258] sm:$0xff]
  %v96 = vld [vmem:[%s0 + $0x260] sm:$0xff]
  %v97 = vld [vmem:[%s0 + $0x268] sm:$0xff]
  %v98 = vld [vmem:[%s0 + $0x270] sm:$0xff]
  %v99 = vld [vmem:[%s0 + $0x278] sm:$0xff]
  %v100 = vld [vmem:[%s0 + $0x280] sm:$0xff]
  %v101 = vld [vmem:[%s0 + $0x288] sm:$0xff]
  %v102 = vld [vmem:[%s0 + $0x290] sm:$0xff]
  %v103 = vld [vmem:[%s0 + $0x298] sm:$0xff]
  %v104 = vld [vmem:[%s0 + $0x2a0] sm:$0xff]
  %v105 = vld [vmem:[%s0 + $0x2a8] sm:$0xff]
  %v106 = vld [vmem:[%s0 + $0x2b0] sm:$0xff]
  %v107 = vld [vmem:[%s0 + $0x2b8] sm:$0xff]
  %v108 = vld [vmem:[%s0 + $0x2c0] sm:$0xff]
  %v109 = vld [vmem:[%s0 + $0x2c8] sm:$0xff]
  %v110 = vld [vmem:[%s0 + $0x2d0] sm:$0xff]
  %v111 = vld [vmem:[%s0 + $0x2d8] sm:$0xff]
  %v112 = vld [vmem:[%s0 + $0x2e0] sm:$0xff]
  %v113 = vld [vmem:[%s0 + $0x2e8] sm:$0xff]
  %v114 = vld [vmem:[%s0 + $0x2f0] sm:$0xff]
  %v115 = vld [vmem:[%s0 + $0x2f8] sm:$0xff]
  %v116 = vld [vmem:[%s0 + $0x300] sm:$0xff]
  %v117 = vld [vmem:[%s0 + $0x308] sm:$0xff]
  %v118 = vld [vmem:[%s0 + $0x310] sm:$0xff]
  %v119 = vld [vmem:[%s0 + $0x318] sm:$0xff]
  %v120 = vld [vmem:[%s0 + $0x320] sm:$0xff]
  %v121 = vld [vmem:[%s0 + $0x328] sm:$0xff]
  %v122 = vld [vmem:[%s0 + $0x330] sm:$0xff]
  %v123 = vld [vmem:[%s0 + $0x338] sm:$0xff]
  %v124 = vld [vmem:[%s0 + $0x340] sm:$0xff]
  %v125 = vld [vmem:[%s0 + $0x348] sm:$0xff]
  %v126 = vld [vmem:[%s0 + $0x350] sm:$0xff]
  %v127 = vld [vmem:[%s0 + $0x358] sm:$0xff]
  %v128 = vld [vmem:[%s0 + $0x360] sm:$0xff]
  %v129 = vld [vmem:[%s0 + $0x368] sm:$0xff]
  %v130 = vld [vmem:[%s0 + $0x370] sm:$0xff]
  %v131 = vld [vmem:[%s0 + $0x378] sm:$0xff]
  %v132 = vld [vmem:[%s0 + $0x380] sm:$0xff]
  %v133 = vld [vmem:[%s0 + $0x388] sm:$0xff]
  %v134 = vld [vmem:[%s0 + $0x390] sm:$0xff]
  %v135 = vld [vmem:[%s0 + $0x398] sm:$0xff]
  %v136 = vld [vmem:[%s0 + $0x3a0] sm:$0xff]
  %v137 = vld [vmem:[%s0 + $0x3a8] sm:$0xff]
  %v138 = vld [vmem:[%s0 + $0x3b0] sm:$0xff]
  %v139 = vld [vmem:[%s0 + $0x3b8] sm:$0xff]
  %v140 = vld [vmem:[%s0 + $0x3c0] sm:$0xff]
  %v141 = vld [vmem:[%s0 + $0x3c8] sm:$0xff]
  %v142 = vld [vmem:[%s0 + $0x3d0] sm:$0xff]
  %v143 = vld [vmem:[%s0 + $0x3d8] sm:$0xff]
  %v144 = vld [vmem:[%s0 + $0x3e0] sm:$0xff]
  %v145 = vld [vmem:[%s0 + $0x3e8] sm:$0xff]
  %v146 = vld [vmem:[%s0 + $0x3f0] sm:$0xff]
  %v147 = vld [vmem:[%s0 + $0x3f8] sm:$0xff]
  %v148 = vld [vmem:[%s1] sm:$0xff]
  %v149 = vld [vmem:[%s1 + $0x8] sm:$0xff]
  %v150 = vld [vmem:[%s1 + $0x10] sm:$0xff]
  %v151 = vld [vmem:[%s1 + $0x18] sm:$0xff]
  %v152 = vld [vmem:[%s1 + $0x20] sm:$0xff]
  %v153 = vld [vmem:[%s1 + $0x28] sm:$0xff]
  %v154 = vld [vmem:[%s1 + $0x30] sm:$0xff]
  %v155 = vld [vmem:[%s1 + $0x38] sm:$0xff]
  %v156 = vld [vmem:[%s1 + $0x40] sm:$0xff]
  %v157 = vld [vmem:[%s1 + $0x48] sm:$0xff]
  %v158 = vld [vmem:[%s1 + $0x50] sm:$0xff]
  %v159 = vld [vmem:[%s1 + $0x58] sm:$0xff]
  %v160 = vld [vmem:[%s1 + $0x60] sm:$0xff]
  %v161 = vld [vmem:[%s1 + $0x68] sm:$0xff]
  %v162 = vld [vmem:[%s1 + $0x70] sm:$0xff]
  %v163 = vld [vmem:[%s1 + $0x78] sm:$0xff]
  %v164 = vld [vmem:[%s1 + $0x80] sm:$0xff]
  %v165 = vld [vmem:[%s1 + $0x88] sm:$0xff]
  %v166 = vld [vmem:[%s1 + $0x90] sm:$0xff]
  %v167 = vld [vmem:[%s1 + $0x98] sm:$0xff]
  %v168 = vld [vmem:[%s1 + $0xa0] sm:$0xff]
  %v169 = vld [vmem:[%s1 + $0xa8] sm:$0xff]
  %v170 = vld [vmem:[%s1 + $0xb0] sm:$0xff]
  %v171 = vld [vmem:[%s1 + $0xb8] sm:$0xff]
  %v172 = vld [vmem:[%s1 + $0xc0] sm:$0xff]
  %v173 = vld [vmem:[%s1 + $0xc8] sm:$0xff]
  %v174 = vld [vmem:[%s1 + $0xd0] sm:$0xff]
  %v175 = vld [vmem:[%s1 + $0xd8] sm:$0xff]
  %v176 = vld [vmem:[%s1 + $0xe0] sm:$0xff]
  %v177 = vld [vmem:[%s1 + $0xe8] sm:$0xff]
  %v178 = vld [vmem:[%s1 + $0xf0] sm:$0xff]
  %v179 = vld [vmem:[%s1 + $0xf8] sm:$0xff]
  %v180 = vld [vmem:[%s1 + $0x100] sm:$0xff]
  %v181 = vld [vmem:[%s1 + $0x108] sm:$0xff]
  %v182 = vld [vmem:[%s1 + $0x110] sm:$0xff]
  %v183 = vld [vmem:[%s1 + $0x118] sm:$0xff]
  %v184 = vld [vmem:[%s1 + $0x120] sm:$0xff]
  %v185 = vld [vmem:[%s1 + $0x128] sm:$0xff]
  %v186 = vld [vmem:[%s1 + $0x130] sm:$0xff]
  %v187 = vld [vmem:[%s1 + $0x138] sm:$0xff]
  %v188 = vld [vmem:[%s1 + $0x140] sm:$0xff]
  %v189 = vld [vmem:[%s1 + $0x148] sm:$0xff]
  %v190 = vld [vmem:[%s1 + $0x150] sm:$0xff]
  %v191 = vld [vmem:[%s1 + $0x158] sm:$0xff]
  %v192 = vld [vmem:[%s1 + $0x160] sm:$0xff]
  %v193 = vld [vmem:[%s1 + $0x168] sm:$0xff]
  %v194 = vld [vmem:[%s1 + $0x170] sm:$0xff]
  %v195 = vld [vmem:[%s1 + $0x178] sm:$0xff]
  %v196 = vld [vmem:[%s1 + $0x180] sm:$0xff]
  %v197 = vld [vmem:[%s1 + $0x188] sm:$0xff]
  %v198 = vld [vmem:[%s1 + $0x190] sm:$0xff]
  %v199 = vld [vmem:[%s1 + $0x198] sm:$0xff]
  %v200 = vld [vmem:[%s1 + $0x1a0] sm:$0xff]
  %v201 = vld [vmem:[%s1 + $0x1a8] sm:$0xff]
  %v202 = vld [vmem:[%s1 + $0x1b0] sm:$0xff]
  %v203 = vld [vmem:[%s1 + $0x1b8] sm:$0xff]
  %v204 = vld [vmem:[%s1 + $0x1c0] sm:$0xff]
  %v205 = vld [vmem:[%s1 + $0x1c8] sm:$0xff]
  %v206 = vld [vmem:[%s1 + $0x1d0] sm:$0xff]
  %v207 = vld [vmem:[%s1 + $0x1d8] sm:$0xff]
  %v208 = vld [vmem:[%s1 + $0x1e0] sm:$0xff]
  %v209 = vld [vmem:[%s1 + $0x1e8] sm:$0xff]
  %v210 = vld [vmem:[%s1 + $0x1f0] sm:$0xff]
  %v211 = vld [vmem:[%s1 + $0x1f8] sm:$0xff]
  %v212 = vld [vmem:[%s1 + $0x200] sm:$0xff]
  %v213 = vld [vmem:[%s1 + $0x208] sm:$0xff]
  %v214 = vld [vmem:[%s1 + $0x210] sm:$0xff]
  %v215 = vld [vmem:[%s1 + $0x218] sm:$0xff]
  %v216 = vld [vmem:[%s1 + $0x220] sm:$0xff]
  %v217 = vld [vmem:[%s1 + $0x228] sm:$0xff]
  %v218 = vld [vmem:[%s1 + $0x230] sm:$0xff]
  %v219 = vld [vmem:[%s1 + $0x238] sm:$0xff]
  %v220 = vld [vmem:[%s1 + $0x240] sm:$0xff]
  %v221 = vld [vmem:[%s1 + $0x248] sm:$0xff]
  %v222 = vld [vmem:[%s1 + $0x250] sm:$0xff]
  %v223 = vld [vmem:[%s1 + $0x258] sm:$0xff]
  %v224 = vld [vmem:[%s1 + $0x260] sm:$0xff]
  %v225 = vld [vmem:[%s1 + $0x268] sm:$0xff]
  %v226 = vld [vmem:[%s1 + $0x270] sm:$0xff]
  %v227 = vld [vmem:[%s1 + $0x278] sm:$0xff]
  %v228 = vld [vmem:[%s1 + $0x280] sm:$0xff]
  %v229 = vld [vmem:[%s1 + $0x288] sm:$0xff]
  %v230 = vld [vmem:[%s1 + $0x290] sm:$0xff]
  %v231 = vld [vmem:[%s1 + $0x298] sm:$0xff]
  %v232 = vld [vmem:[%s1 + $0x2a0] sm:$0xff]
  %v233 = vld [vmem:[%s1 + $0x2a8] sm:$0xff]
  %v234 = vld [vmem:[%s1 + $0x2b0] sm:$0xff]
  %v235 = vld [vmem:[%s1 + $0x2b8] sm:$0xff]
  %v236 = vld [vmem:[%s1 + $0x2c0] sm:$0xff]
  %v237 = vld [vmem:[%s1 + $0x2c8] sm:$0xff]
  %v238 = vld [vmem:[%s1 + $0x2d0] sm:$0xff]
  %v239 = vld [vmem:[%s1 + $0x2d8] sm:$0xff]
  %v240 = vld [vmem:[%s1 + $0x2e0] sm:$0xff]
  %v241 = vld [vmem:[%s1 + $0x2e8] sm:$0xff]
  %v242 = vld [vmem:[%s1 + $0x2f0] sm:$0xff]
  %v243 = vld [vmem:[%s1 + $0x2f8] sm:$0xff]
  %v244 = vld [vmem:[%s1 + $0x300] sm:$0xff]
  %v245 = vld [vmem:[%s1 + $0x308] sm:$0xff]
  %v246 = vld [vmem:[%s1 + $0x310] sm:$0xff]
  %v247 = vld [vmem:[%s1 + $0x318] sm:$0xff]
  %v248 = vld [vmem:[%s1 + $0x320] sm:$0xff]
  %v249 = vld [vmem:[%s1 + $0x328] sm:$0xff]
  %v250 = vld [vmem:[%s1 + $0x330] sm:$0xff]
  %v251 = vld [vmem:[%s1 + $0x338] sm:$0xff]
  %v252 = vld [vmem:[%s1 + $0x340] sm:$0xff]
  %v253 = vld [vmem:[%s1 + $0x348] sm:$0xff]
  %v254 = vld [vmem:[%s1 + $0x350] sm:$0xff]
  %v255 = vld [vmem:[%s1 + $0x358] sm:$0xff]
  %v256 = vld [vmem:[%s1 + $0x360] sm:$0xff]
  %v257 = vld [vmem:[%s1 + $0x368] sm:$0xff]
  %v258 = vld [vmem:[%s1 + $0x370] sm:$0xff]
  %v259 = vld [vmem:[%s1 + $0x378] sm:$0xff]
  %v260 = vld [vmem:[%s1 + $0x380] sm:$0xff]
  %v261 = vld [vmem:[%s1 + $0x388] sm:$0xff]
  %v262 = vld [vmem:[%s1 + $0x390] sm:$0xff]
  %v263 = vld [vmem:[%s1 + $0x398] sm:$0xff]
  %v264 = vld [vmem:[%s1 + $0x3a0] sm:$0xff]
  %v265 = vld [vmem:[%s1 + $0x3a8] sm:$0xff]
  %v266 = vld [vmem:[%s1 + $0x3b0] sm:$0xff]
  %v267 = vld [vmem:[%s1 + $0x3b8] sm:$0xff]
  %v268 = vld [vmem:[%s1 + $0x3c0] sm:$0xff]
  %v269 = vld [vmem:[%s1 + $0x3c8] sm:$0xff]
  %v270 = vld [vmem:[%s1 + $0x3d0] sm:$0xff]
  %v271 = vld [vmem:[%s1 + $0x3d8] sm:$0xff]
  %v272 = vld [vmem:[%s1 + $0x3e0] sm:$0xff]
  %v273 = vld [vmem:[%s1 + $0x3e8] sm:$0xff]
  %v274 = vld [vmem:[%s1 + $0x3f0] sm:$0xff]
  %v275 = vld [vmem:[%s1 + $0x3f8] sm:$0xff]
  %v276 = vld [vmem:[%s2] sm:$0x1]
  %v278 = vperm.slane %v276, 0
  %280 = vmatpush.msra.mxu0 %v163
  %281 = vmatpush.msra.mxu0 %v162
  %282 = vmatpush.msra.mxu0 %v161
  %283 = vmatpush.msra.mxu0 %v160
  %284 = vmatpush.msra.mxu0 %v159
  %285 = vmatpush.msra.mxu0 %v158
  %286 = vmatpush.msra.mxu0 %v157
  %287 = vmatpush.msra.mxu0 %v156
  %288 = vmatpush.msra.mxu0 %v155
  %289 = vmatpush.msra.mxu0 %v154
  %290 = vmatpush.msra.mxu0 %v153
  %291 = vmatpush.msra.mxu0 %v152
  %292 = vmatpush.msra.mxu0 %v151
  %293 = vmatpush.msra.mxu0 %v150
  %294 = vmatpush.msra.mxu0 %v149
  %295 = vmatpush.msra.mxu0 %v148
  %296 = vmatmul.f32.gmra.mxu0 %v20
  %v297 = vpop.f32.mrf.mxu0
  %v298 = vadd.f32 %v278, %v297
  %299 = vmatmul.f32.gmra.mxu0 %v28
  %v300 = vpop.f32.mrf.mxu0
  %v301 = vadd.f32 %v278, %v300
  %302 = vmatmul.f32.gmra.mxu0 %v36
  %v303 = vpop.f32.mrf.mxu0
  %v304 = vadd.f32 %v278, %v303
  %305 = vmatmul.f32.gmra.mxu0 %v44
  %v306 = vpop.f32.mrf.mxu0
  %v307 = vadd.f32 %v278, %v306
  %308 = vmatmul.f32.gmra.mxu0 %v52
  %v309 = vpop.f32.mrf.mxu0
  %v310 = vadd.f32 %v278, %v309
  %311 = vmatmul.f32.gmra.mxu0 %v60
  %v312 = vpop.f32.mrf.mxu0
  %v313 = vadd.f32 %v278, %v312
  %314 = vmatmul.f32.gmra.mxu0 %v68
  %v315 = vpop.f32.mrf.mxu0
  %v316 = vadd.f32 %v278, %v315
  %317 = vmatmul.f32.gmra.mxu0 %v76
  %v318 = vpop.f32.mrf.mxu0
  %v319 = vadd.f32 %v278, %v318
  %320 = vmatmul.f32.gmra.mxu0 %v84
  %v321 = vpop.f32.mrf.mxu0
  %v322 = vadd.f32 %v278, %v321
  %323 = vmatmul.f32.gmra.mxu0 %v92
  %v324 = vpop.f32.mrf.mxu0
  %v325 = vadd.f32 %v278, %v324
  %326 = vmatmul.f32.gmra.mxu0 %v100
  %v327 = vpop.f32.mrf.mxu0
  %v328 = vadd.f32 %v278, %v327
  %329 = vmatmul.f32.gmra.mxu0 %v108
  %v330 = vpop.f32.mrf.mxu0
  %v331 = vadd.f32 %v278, %v330
  %332 = vmatmul.f32.gmra.mxu0 %v116
  %v333 = vpop.f32.mrf.mxu0
  %v334 = vadd.f32 %v278, %v333
  %335 = vmatmul.f32.gmra.mxu0 %v124
  %v336 = vpop.f32.mrf.mxu0
  %v337 = vadd.f32 %v278, %v336
  %338 = vmatmul.f32.gmra.mxu0 %v132
  %v339 = vpop.f32.mrf.mxu0
  %v340 = vadd.f32 %v278, %v339
  %341 = vmatmul.f32.gmra.mxu0 %v140
  %v342 = vpop.f32.mrf.mxu0
  %v343 = vadd.f32 %v278, %v342
  %344 = vdwg.mxu0
  %345 = vmatpush.msra.mxu0 %v179
  %346 = vmatpush.msra.mxu0 %v178
  %347 = vmatpush.msra.mxu0 %v177
  %348 = vmatpush.msra.mxu0 %v176
  %349 = vmatpush.msra.mxu0 %v175
  %350 = vmatpush.msra.mxu0 %v174
  %351 = vmatpush.msra.mxu0 %v173
  %352 = vmatpush.msra.mxu0 %v172
  %353 = vmatpush.msra.mxu0 %v171
  %354 = vmatpush.msra.mxu0 %v170
  %355 = vmatpush.msra.mxu0 %v169
  %356 = vmatpush.msra.mxu0 %v168
  %357 = vmatpush.msra.mxu0 %v167
  %358 = vmatpush.msra.mxu0 %v166
  %359 = vmatpush.msra.mxu0 %v165
  %360 = vmatpush.msra.mxu0 %v164
  %361 = vmatmul.f32.gmra.mxu0 %v21
  %v362 = vpop.f32.mrf.mxu0
  %v363 = vadd.f32 %v298, %v362
  %364 = vmatmul.f32.gmra.mxu0 %v29
  %v365 = vpop.f32.mrf.mxu0
  %v366 = vadd.f32 %v301, %v365
  %367 = vmatmul.f32.gmra.mxu0 %v37
  %v368 = vpop.f32.mrf.mxu0
  %v369 = vadd.f32 %v304, %v368
  %370 = vmatmul.f32.gmra.mxu0 %v45
  %v371 = vpop.f32.mrf.mxu0
  %v372 = vadd.f32 %v307, %v371
  %373 = vmatmul.f32.gmra.mxu0 %v53
  %v374 = vpop.f32.mrf.mxu0
  %v375 = vadd.f32 %v310, %v374
  %376 = vmatmul.f32.gmra.mxu0 %v61
  %v377 = vpop.f32.mrf.mxu0
  %v378 = vadd.f32 %v313, %v377
  %379 = vmatmul.f32.gmra.mxu0 %v69
  %v380 = vpop.f32.mrf.mxu0
  %v381 = vadd.f32 %v316, %v380
  %382 = vmatmul.f32.gmra.mxu0 %v77
  %v383 = vpop.f32.mrf.mxu0
  %v384 = vadd.f32 %v319, %v383
  %385 = vmatmul.f32.gmra.mxu0 %v85
  %v386 = vpop.f32.mrf.mxu0
  %v387 = vadd.f32 %v322, %v386
  %388 = vmatmul.f32.gmra.mxu0 %v93
  %v389 = vpop.f32.mrf.mxu0
  %v390 = vadd.f32 %v325, %v389
  %391 = vmatmul.f32.gmra.mxu0 %v101
  %v392 = vpop.f32.mrf.mxu0
  %v393 = vadd.f32 %v328, %v392
  %394 = vmatmul.f32.gmra.mxu0 %v109
  %v395 = vpop.f32.mrf.mxu0
  %v396 = vadd.f32 %v331, %v395
  %397 = vmatmul.f32.gmra.mxu0 %v117
  %v398 = vpop.f32.mrf.mxu0
  %v399 = vadd.f32 %v334, %v398
  %400 = vmatmul.f32.gmra.mxu0 %v125
  %v401 = vpop.f32.mrf.mxu0
  %v402 = vadd.f32 %v337, %v401
  %403 = vmatmul.f32.gmra.mxu0 %v133
  %v404 = vpop.f32.mrf.mxu0
  %v405 = vadd.f32 %v340, %v404
  %406 = vmatmul.f32.gmra.mxu0 %v141
  %v407 = vpop.f32.mrf.mxu0
  %v408 = vadd.f32 %v343, %v407
  %409 = vdwg.mxu0
  %410 = vmatpush.msra.mxu0 %v195
  %411 = vmatpush.msra.mxu0 %v194
  %412 = vmatpush.msra.mxu0 %v193
  %413 = vmatpush.msra.mxu0 %v192
  %414 = vmatpush.msra.mxu0 %v191
  %415 = vmatpush.msra.mxu0 %v190
  %416 = vmatpush.msra.mxu0 %v189
  %417 = vmatpush.msra.mxu0 %v188
  %418 = vmatpush.msra.mxu0 %v187
  %419 = vmatpush.msra.mxu0 %v186
  %420 = vmatpush.msra.mxu0 %v185
  %421 = vmatpush.msra.mxu0 %v184
  %422 = vmatpush.msra.mxu0 %v183
  %423 = vmatpush.msra.mxu0 %v182
  %424 = vmatpush.msra.mxu0 %v181
  %425 = vmatpush.msra.mxu0 %v180
  %426 = vmatmul.f32.gmra.mxu0 %v22
  %v427 = vpop.f32.mrf.mxu0
  %v428 = vadd.f32 %v363, %v427
  %429 = vmatmul.f32.gmra.mxu0 %v30
  %v430 = vpop.f32.mrf.mxu0
  %v431 = vadd.f32 %v366, %v430
  %432 = vmatmul.f32.gmra.mxu0 %v38
  %v433 = vpop.f32.mrf.mxu0
  %v434 = vadd.f32 %v369, %v433
  %435 = vmatmul.f32.gmra.mxu0 %v46
  %v436 = vpop.f32.mrf.mxu0
  %v437 = vadd.f32 %v372, %v436
  %438 = vmatmul.f32.gmra.mxu0 %v54
  %v439 = vpop.f32.mrf.mxu0
  %v440 = vadd.f32 %v375, %v439
  %441 = vmatmul.f32.gmra.mxu0 %v62
  %v442 = vpop.f32.mrf.mxu0
  %v443 = vadd.f32 %v378, %v442
  %444 = vmatmul.f32.gmra.mxu0 %v70
  %v445 = vpop.f32.mrf.mxu0
  %v446 = vadd.f32 %v381, %v445
  %447 = vmatmul.f32.gmra.mxu0 %v78
  %v448 = vpop.f32.mrf.mxu0
  %v449 = vadd.f32 %v384, %v448
  %450 = vmatmul.f32.gmra.mxu0 %v86
  %v451 = vpop.f32.mrf.mxu0
  %v452 = vadd.f32 %v387, %v451
  %453 = vmatmul.f32.gmra.mxu0 %v94
  %v454 = vpop.f32.mrf.mxu0
  %v455 = vadd.f32 %v390, %v454
  %456 = vmatmul.f32.gmra.mxu0 %v102
  %v457 = vpop.f32.mrf.mxu0
  %v458 = vadd.f32 %v393, %v457
  %459 = vmatmul.f32.gmra.mxu0 %v110
  %v460 = vpop.f32.mrf.mxu0
  %v461 = vadd.f32 %v396, %v460
  %462 = vmatmul.f32.gmra.mxu0 %v118
  %v463 = vpop.f32.mrf.mxu0
  %v464 = vadd.f32 %v399, %v463
  %465 = vmatmul.f32.gmra.mxu0 %v126
  %v466 = vpop.f32.mrf.mxu0
  %v467 = vadd.f32 %v402, %v466
  %468 = vmatmul.f32.gmra.mxu0 %v134
  %v469 = vpop.f32.mrf.mxu0
  %v470 = vadd.f32 %v405, %v469
  %471 = vmatmul.f32.gmra.mxu0 %v142
  %v472 = vpop.f32.mrf.mxu0
  %v473 = vadd.f32 %v408, %v472
  %474 = vdwg.mxu0
  %475 = vmatpush.msra.mxu0 %v211
  %476 = vmatpush.msra.mxu0 %v210
  %477 = vmatpush.msra.mxu0 %v209
  %478 = vmatpush.msra.mxu0 %v208
  %479 = vmatpush.msra.mxu0 %v207
  %480 = vmatpush.msra.mxu0 %v206
  %481 = vmatpush.msra.mxu0 %v205
  %482 = vmatpush.msra.mxu0 %v204
  %483 = vmatpush.msra.mxu0 %v203
  %484 = vmatpush.msra.mxu0 %v202
  %485 = vmatpush.msra.mxu0 %v201
  %486 = vmatpush.msra.mxu0 %v200
  %487 = vmatpush.msra.mxu0 %v199
  %488 = vmatpush.msra.mxu0 %v198
  %489 = vmatpush.msra.mxu0 %v197
  %490 = vmatpush.msra.mxu0 %v196
  %491 = vmatmul.f32.gmra.mxu0 %v23
  %v492 = vpop.f32.mrf.mxu0
  %v493 = vadd.f32 %v428, %v492
  %494 = vmatmul.f32.gmra.mxu0 %v31
  %v495 = vpop.f32.mrf.mxu0
  %v496 = vadd.f32 %v431, %v495
  %497 = vmatmul.f32.gmra.mxu0 %v39
  %v498 = vpop.f32.mrf.mxu0
  %v499 = vadd.f32 %v434, %v498
  %500 = vmatmul.f32.gmra.mxu0 %v47
  %v501 = vpop.f32.mrf.mxu0
  %v502 = vadd.f32 %v437, %v501
  %503 = vmatmul.f32.gmra.mxu0 %v55
  %v504 = vpop.f32.mrf.mxu0
  %v505 = vadd.f32 %v440, %v504
  %506 = vmatmul.f32.gmra.mxu0 %v63
  %v507 = vpop.f32.mrf.mxu0
  %v508 = vadd.f32 %v443, %v507
  %509 = vmatmul.f32.gmra.mxu0 %v71
  %v510 = vpop.f32.mrf.mxu0
  %v511 = vadd.f32 %v446, %v510
  %512 = vmatmul.f32.gmra.mxu0 %v79
  %v513 = vpop.f32.mrf.mxu0
  %v514 = vadd.f32 %v449, %v513
  %515 = vmatmul.f32.gmra.mxu0 %v87
  %v516 = vpop.f32.mrf.mxu0
  %v517 = vadd.f32 %v452, %v516
  %518 = vmatmul.f32.gmra.mxu0 %v95
  %v519 = vpop.f32.mrf.mxu0
  %v520 = vadd.f32 %v455, %v519
  %521 = vmatmul.f32.gmra.mxu0 %v103
  %v522 = vpop.f32.mrf.mxu0
  %v523 = vadd.f32 %v458, %v522
  %524 = vmatmul.f32.gmra.mxu0 %v111
  %v525 = vpop.f32.mrf.mxu0
  %v526 = vadd.f32 %v461, %v525
  %527 = vmatmul.f32.gmra.mxu0 %v119
  %v528 = vpop.f32.mrf.mxu0
  %v529 = vadd.f32 %v464, %v528
  %530 = vmatmul.f32.gmra.mxu0 %v127
  %v531 = vpop.f32.mrf.mxu0
  %v532 = vadd.f32 %v467, %v531
  %533 = vmatmul.f32.gmra.mxu0 %v135
  %v534 = vpop.f32.mrf.mxu0
  %v535 = vadd.f32 %v470, %v534
  %536 = vmatmul.f32.gmra.mxu0 %v143
  %v537 = vpop.f32.mrf.mxu0
  %v538 = vadd.f32 %v473, %v537
  %539 = vdwg.mxu0
  %540 = vmatpush.msra.mxu0 %v227
  %541 = vmatpush.msra.mxu0 %v226
  %542 = vmatpush.msra.mxu0 %v225
  %543 = vmatpush.msra.mxu0 %v224
  %544 = vmatpush.msra.mxu0 %v223
  %545 = vmatpush.msra.mxu0 %v222
  %546 = vmatpush.msra.mxu0 %v221
  %547 = vmatpush.msra.mxu0 %v220
  %548 = vmatpush.msra.mxu0 %v219
  %549 = vmatpush.msra.mxu0 %v218
  %550 = vmatpush.msra.mxu0 %v217
  %551 = vmatpush.msra.mxu0 %v216
  %552 = vmatpush.msra.mxu0 %v215
  %553 = vmatpush.msra.mxu0 %v214
  %554 = vmatpush.msra.mxu0 %v213
  %555 = vmatpush.msra.mxu0 %v212
  %556 = vmatmul.f32.gmra.mxu0 %v24
  %v557 = vpop.f32.mrf.mxu0
  %v558 = vadd.f32 %v493, %v557
  %559 = vmatmul.f32.gmra.mxu0 %v32
  %v560 = vpop.f32.mrf.mxu0
  %v561 = vadd.f32 %v496, %v560
  %562 = vmatmul.f32.gmra.mxu0 %v40
  %v563 = vpop.f32.mrf.mxu0
  %v564 = vadd.f32 %v499, %v563
  %565 = vmatmul.f32.gmra.mxu0 %v48
  %v566 = vpop.f32.mrf.mxu0
  %v567 = vadd.f32 %v502, %v566
  %568 = vmatmul.f32.gmra.mxu0 %v56
  %v569 = vpop.f32.mrf.mxu0
  %v570 = vadd.f32 %v505, %v569
  %571 = vmatmul.f32.gmra.mxu0 %v64
  %v572 = vpop.f32.mrf.mxu0
  %v573 = vadd.f32 %v508, %v572
  %574 = vmatmul.f32.gmra.mxu0 %v72
  %v575 = vpop.f32.mrf.mxu0
  %v576 = vadd.f32 %v511, %v575
  %577 = vmatmul.f32.gmra.mxu0 %v80
  %v578 = vpop.f32.mrf.mxu0
  %v579 = vadd.f32 %v514, %v578
  %580 = vmatmul.f32.gmra.mxu0 %v88
  %v581 = vpop.f32.mrf.mxu0
  %v582 = vadd.f32 %v517, %v581
  %583 = vmatmul.f32.gmra.mxu0 %v96
  %v584 = vpop.f32.mrf.mxu0
  %v585 = vadd.f32 %v520, %v584
  %586 = vmatmul.f32.gmra.mxu0 %v104
  %v587 = vpop.f32.mrf.mxu0
  %v588 = vadd.f32 %v523, %v587
  %589 = vmatmul.f32.gmra.mxu0 %v112
  %v590 = vpop.f32.mrf.mxu0
  %v591 = vadd.f32 %v526, %v590
  %592 = vmatmul.f32.gmra.mxu0 %v120
  %v593 = vpop.f32.mrf.mxu0
  %v594 = vadd.f32 %v529, %v593
  %595 = vmatmul.f32.gmra.mxu0 %v128
  %v596 = vpop.f32.mrf.mxu0
  %v597 = vadd.f32 %v532, %v596
  %598 = vmatmul.f32.gmra.mxu0 %v136
  %v599 = vpop.f32.mrf.mxu0
  %v600 = vadd.f32 %v535, %v599
  %601 = vmatmul.f32.gmra.mxu0 %v144
  %v602 = vpop.f32.mrf.mxu0
  %v603 = vadd.f32 %v538, %v602
  %604 = vdwg.mxu0
  %605 = vmatpush.msra.mxu0 %v243
  %606 = vmatpush.msra.mxu0 %v242
  %607 = vmatpush.msra.mxu0 %v241
  %608 = vmatpush.msra.mxu0 %v240
  %609 = vmatpush.msra.mxu0 %v239
  %610 = vmatpush.msra.mxu0 %v238
  %611 = vmatpush.msra.mxu0 %v237
  %612 = vmatpush.msra.mxu0 %v236
  %613 = vmatpush.msra.mxu0 %v235
  %614 = vmatpush.msra.mxu0 %v234
  %615 = vmatpush.msra.mxu0 %v233
  %616 = vmatpush.msra.mxu0 %v232
  %617 = vmatpush.msra.mxu0 %v231
  %618 = vmatpush.msra.mxu0 %v230
  %619 = vmatpush.msra.mxu0 %v229
  %620 = vmatpush.msra.mxu0 %v228
  %621 = vmatmul.f32.gmra.mxu0 %v25
  %v622 = vpop.f32.mrf.mxu0
  %v623 = vadd.f32 %v558, %v622
  %624 = vmatmul.f32.gmra.mxu0 %v33
  %v625 = vpop.f32.mrf.mxu0
  %v626 = vadd.f32 %v561, %v625
  %627 = vmatmul.f32.gmra.mxu0 %v41
  %v628 = vpop.f32.mrf.mxu0
  %v629 = vadd.f32 %v564, %v628
  %630 = vmatmul.f32.gmra.mxu0 %v49
  %v631 = vpop.f32.mrf.mxu0
  %v632 = vadd.f32 %v567, %v631
  %633 = vmatmul.f32.gmra.mxu0 %v57
  %v634 = vpop.f32.mrf.mxu0
  %v635 = vadd.f32 %v570, %v634
  %636 = vmatmul.f32.gmra.mxu0 %v65
  %v637 = vpop.f32.mrf.mxu0
  %v638 = vadd.f32 %v573, %v637
  %639 = vmatmul.f32.gmra.mxu0 %v73
  %v640 = vpop.f32.mrf.mxu0
  %v641 = vadd.f32 %v576, %v640
  %642 = vmatmul.f32.gmra.mxu0 %v81
  %v643 = vpop.f32.mrf.mxu0
  %v644 = vadd.f32 %v579, %v643
  %645 = vmatmul.f32.gmra.mxu0 %v89
  %v646 = vpop.f32.mrf.mxu0
  %v647 = vadd.f32 %v582, %v646
  %648 = vmatmul.f32.gmra.mxu0 %v97
  %v649 = vpop.f32.mrf.mxu0
  %v650 = vadd.f32 %v585, %v649
  %651 = vmatmul.f32.gmra.mxu0 %v105
  %v652 = vpop.f32.mrf.mxu0
  %v653 = vadd.f32 %v588, %v652
  %654 = vmatmul.f32.gmra.mxu0 %v113
  %v655 = vpop.f32.mrf.mxu0
  %v656 = vadd.f32 %v591, %v655
  %657 = vmatmul.f32.gmra.mxu0 %v121
  %v658 = vpop.f32.mrf.mxu0
  %v659 = vadd.f32 %v594, %v658
  %660 = vmatmul.f32.gmra.mxu0 %v129
  %v661 = vpop.f32.mrf.mxu0
  %v662 = vadd.f32 %v597, %v661
  %663 = vmatmul.f32.gmra.mxu0 %v137
  %v664 = vpop.f32.mrf.mxu0
  %v665 = vadd.f32 %v600, %v664
  %666 = vmatmul.f32.gmra.mxu0 %v145
  %v667 = vpop.f32.mrf.mxu0
  %v668 = vadd.f32 %v603, %v667
  %669 = vdwg.mxu0
  %670 = vmatpush.msra.mxu0 %v259
  %671 = vmatpush.msra.mxu0 %v258
  %672 = vmatpush.msra.mxu0 %v257
  %673 = vmatpush.msra.mxu0 %v256
  %674 = vmatpush.msra.mxu0 %v255
  %675 = vmatpush.msra.mxu0 %v254
  %676 = vmatpush.msra.mxu0 %v253
  %677 = vmatpush.msra.mxu0 %v252
  %678 = vmatpush.msra.mxu0 %v251
  %679 = vmatpush.msra.mxu0 %v250
  %680 = vmatpush.msra.mxu0 %v249
  %681 = vmatpush.msra.mxu0 %v248
  %682 = vmatpush.msra.mxu0 %v247
  %683 = vmatpush.msra.mxu0 %v246
  %684 = vmatpush.msra.mxu0 %v245
  %685 = vmatpush.msra.mxu0 %v244
  %686 = vmatmul.f32.gmra.mxu0 %v26
  %v687 = vpop.f32.mrf.mxu0
  %v688 = vadd.f32 %v623, %v687
  %689 = vmatmul.f32.gmra.mxu0 %v34
  %v690 = vpop.f32.mrf.mxu0
  %v691 = vadd.f32 %v626, %v690
  %692 = vmatmul.f32.gmra.mxu0 %v42
  %v693 = vpop.f32.mrf.mxu0
  %v694 = vadd.f32 %v629, %v693
  %695 = vmatmul.f32.gmra.mxu0 %v50
  %v696 = vpop.f32.mrf.mxu0
  %v697 = vadd.f32 %v632, %v696
  %698 = vmatmul.f32.gmra.mxu0 %v58
  %v699 = vpop.f32.mrf.mxu0
  %v700 = vadd.f32 %v635, %v699
  %701 = vmatmul.f32.gmra.mxu0 %v66
  %v702 = vpop.f32.mrf.mxu0
  %v703 = vadd.f32 %v638, %v702
  %704 = vmatmul.f32.gmra.mxu0 %v74
  %v705 = vpop.f32.mrf.mxu0
  %v706 = vadd.f32 %v641, %v705
  %707 = vmatmul.f32.gmra.mxu0 %v82
  %v708 = vpop.f32.mrf.mxu0
  %v709 = vadd.f32 %v644, %v708
  %710 = vmatmul.f32.gmra.mxu0 %v90
  %v711 = vpop.f32.mrf.mxu0
  %v712 = vadd.f32 %v647, %v711
  %713 = vmatmul.f32.gmra.mxu0 %v98
  %v714 = vpop.f32.mrf.mxu0
  %v715 = vadd.f32 %v650, %v714
  %716 = vmatmul.f32.gmra.mxu0 %v106
  %v717 = vpop.f32.mrf.mxu0
  %v718 = vadd.f32 %v653, %v717
  %719 = vmatmul.f32.gmra.mxu0 %v114
  %v720 = vpop.f32.mrf.mxu0
  %v721 = vadd.f32 %v656, %v720
  %722 = vmatmul.f32.gmra.mxu0 %v122
  %v723 = vpop.f32.mrf.mxu0
  %v724 = vadd.f32 %v659, %v723
  %725 = vmatmul.f32.gmra.mxu0 %v130
  %v726 = vpop.f32.mrf.mxu0
  %v727 = vadd.f32 %v662, %v726
  %728 = vmatmul.f32.gmra.mxu0 %v138
  %v729 = vpop.f32.mrf.mxu0
  %v730 = vadd.f32 %v665, %v729
  %731 = vmatmul.f32.gmra.mxu0 %v146
  %v732 = vpop.f32.mrf.mxu0
  %v733 = vadd.f32 %v668, %v732
  %734 = vdwg.mxu0
  %735 = vmatpush.msra.mxu0 %v275
  %736 = vmatpush.msra.mxu0 %v274
  %737 = vmatpush.msra.mxu0 %v273
  %738 = vmatpush.msra.mxu0 %v272
  %739 = vmatpush.msra.mxu0 %v271
  %740 = vmatpush.msra.mxu0 %v270
  %741 = vmatpush.msra.mxu0 %v269
  %742 = vmatpush.msra.mxu0 %v268
  %743 = vmatpush.msra.mxu0 %v267
  %744 = vmatpush.msra.mxu0 %v266
  %745 = vmatpush.msra.mxu0 %v265
  %746 = vmatpush.msra.mxu0 %v264
  %747 = vmatpush.msra.mxu0 %v263
  %748 = vmatpush.msra.mxu0 %v262
  %749 = vmatpush.msra.mxu0 %v261
  %750 = vmatpush.msra.mxu0 %v260
  %751 = vmatmul.f32.gmra.mxu0 %v27
  %v752 = vpop.f32.mrf.mxu0
  %v753 = vadd.f32 %v688, %v752
  %754 = vmatmul.f32.gmra.mxu0 %v35
  %v755 = vpop.f32.mrf.mxu0
  %v756 = vadd.f32 %v691, %v755
  %757 = vmatmul.f32.gmra.mxu0 %v43
  %v758 = vpop.f32.mrf.mxu0
  %v759 = vadd.f32 %v694, %v758
  %760 = vmatmul.f32.gmra.mxu0 %v51
  %v761 = vpop.f32.mrf.mxu0
  %v762 = vadd.f32 %v697, %v761
  %763 = vmatmul.f32.gmra.mxu0 %v59
  %v764 = vpop.f32.mrf.mxu0
  %v765 = vadd.f32 %v700, %v764
  %766 = vmatmul.f32.gmra.mxu0 %v67
  %v767 = vpop.f32.mrf.mxu0
  %v768 = vadd.f32 %v703, %v767
  %769 = vmatmul.f32.gmra.mxu0 %v75
  %v770 = vpop.f32.mrf.mxu0
  %v771 = vadd.f32 %v706, %v770
  %772 = vmatmul.f32.gmra.mxu0 %v83
  %v773 = vpop.f32.mrf.mxu0
  %v774 = vadd.f32 %v709, %v773
  %775 = vmatmul.f32.gmra.mxu0 %v91
  %v776 = vpop.f32.mrf.mxu0
  %v777 = vadd.f32 %v712, %v776
  %778 = vmatmul.f32.gmra.mxu0 %v99
  %v779 = vpop.f32.mrf.mxu0
  %v780 = vadd.f32 %v715, %v779
  %781 = vmatmul.f32.gmra.mxu0 %v107
  %v782 = vpop.f32.mrf.mxu0
  %v783 = vadd.f32 %v718, %v782
  %784 = vmatmul.f32.gmra.mxu0 %v115
  %v785 = vpop.f32.mrf.mxu0
  %v786 = vadd.f32 %v721, %v785
  %787 = vmatmul.f32.gmra.mxu0 %v123
  %v788 = vpop.f32.mrf.mxu0
  %v789 = vadd.f32 %v724, %v788
  %790 = vmatmul.f32.gmra.mxu0 %v131
  %v791 = vpop.f32.mrf.mxu0
  %v792 = vadd.f32 %v727, %v791
  %793 = vmatmul.f32.gmra.mxu0 %v139
  %v794 = vpop.f32.mrf.mxu0
  %v795 = vadd.f32 %v730, %v794
  %796 = vmatmul.f32.gmra.mxu0 %v147
  %v797 = vpop.f32.mrf.mxu0
  %v798 = vadd.f32 %v733, %v797
  %799 = vdwg.mxu0
  %v800 = vadd.f32 %v753, %v756
  %v801 = vadd.f32 %v800, %v759
  %v802 = vadd.f32 %v801, %v762
  %v803 = vadd.f32 %v802, %v765
  %v804 = vadd.f32 %v803, %v768
  %v805 = vadd.f32 %v804, %v771
  %v806 = vadd.f32 %v805, %v774
  %v807 = vadd.f32 %v806, %v777
  %v808 = vadd.f32 %v807, %v780
  %v809 = vadd.f32 %v808, %v783
  %v810 = vadd.f32 %v809, %v786
  %v811 = vadd.f32 %v810, %v789
  %v812 = vadd.f32 %v811, %v792
  %v813 = vadd.f32 %v812, %v795
  %v814 = vadd.f32 %v813, %v798
  %v815 = vrot.slane %v814, 4
  %v816 = vadd.f32 %v814, %v815
  %v817 = vrot.slane %v816, 2
  %v818 = vadd.f32 %v816, %v817
  %v819 = vrot.slane %v818, 1
  %v820 = vadd.f32 %v818, %v819
  %v821 = vrcp.pop 128.0
  %v822 = vmul.f32 128.0, %v821
  %v823 = vsub.f32 1.0, %v822
  %v824 = vmul.f32 %v821, %v823
  %v825 = vadd.f32 %v821, %v824
  %vm826 = vweird.f32 %v821
  %v827 = vsel %vm826, %v821, %v825
  %v828 = vmul.f32 %v820, %v827
  %v829 = vsub.f32 %v753, %v828
  %v830 = vsub.f32 %v756, %v828
  %v831 = vsub.f32 %v759, %v828
  %v832 = vsub.f32 %v762, %v828
  %v833 = vsub.f32 %v765, %v828
  %v834 = vsub.f32 %v768, %v828
  %v835 = vsub.f32 %v771, %v828
  %v836 = vsub.f32 %v774, %v828
  %v837 = vsub.f32 %v777, %v828
  %v838 = vsub.f32 %v780, %v828
  %v839 = vsub.f32 %v783, %v828
  %v840 = vsub.f32 %v786, %v828
  %v841 = vsub.f32 %v789, %v828
  %v842 = vsub.f32 %v792, %v828
  %v843 = vsub.f32 %v795, %v828
  %v844 = vsub.f32 %v798, %v828
  %v845 = vmul.f32 %v829, %v829
  %v846 = vmul.f32 %v830, %v830
  %v847 = vmul.f32 %v831, %v831
  %v848 = vmul.f32 %v832, %v832
  %v849 = vmul.f32 %v833, %v833
  %v850 = vmul.f32 %v834, %v834
  %v851 = vmul.f32 %v835, %v835
  %v852 = vmul.f32 %v836, %v836
  %v853 = vmul.f32 %v837, %v837
  %v854 = vmul.f32 %v838, %v838
  %v855 = vmul.f32 %v839, %v839
  %v856 = vmul.f32 %v840, %v840
  %v857 = vmul.f32 %v841, %v841
  %v858 = vmul.f32 %v842, %v842
  %v859 = vmul.f32 %v843, %v843
  %v860 = vmul.f32 %v844, %v844
  %v861 = vadd.f32 %v845, %v846
  %v862 = vadd.f32 %v861, %v847
  %v863 = vadd.f32 %v862, %v848
  %v864 = vadd.f32 %v863, %v849
  %v865 = vadd.f32 %v864, %v850
  %v866 = vadd.f32 %v865, %v851
  %v867 = vadd.f32 %v866, %v852
  %v868 = vadd.f32 %v867, %v853
  %v869 = vadd.f32 %v868, %v854
  %v870 = vadd.f32 %v869, %v855
  %v871 = vadd.f32 %v870, %v856
  %v872 = vadd.f32 %v871, %v857
  %v873 = vadd.f32 %v872, %v858
  %v874 = vadd.f32 %v873, %v859
  %v875 = vadd.f32 %v874, %v860
  %v876 = vrot.slane %v875, 4
  %v877 = vadd.f32 %v875, %v876
  %v878 = vrot.slane %v877, 2
  %v879 = vadd.f32 %v877, %v878
  %v880 = vrot.slane %v879, 1
  %v881 = vadd.f32 %v879, %v880
  %v882 = vmul.f32 %v881, %v827
  %v883 = vadd.f32 %v882, 1e-05
  %v884 = vrsqrt.pop %v883
  %v885 = vmul.f32 %v884, %v883
  %v886 = vmul.f32 %v885, %v884
  %v887 = vmul.f32 0.5, %v886
  %v888 = vsub.f32 1.5, %v887
  %v889 = vmul.f32 %v884, %v888
  %vm890 = vweird.f32 %v883
  %vm891 = vweird.f32 %v884
  %vm892 = vmor %vm890, %vm891
  %v893 = vsel %vm892, %v884, %v889
  %v894 = vmul.f32 %v829, %v893
  %v895 = vmul.f32 %v830, %v893
  %v896 = vmul.f32 %v831, %v893
  %v897 = vmul.f32 %v832, %v893
  %v898 = vmul.f32 %v833, %v893
  %v899 = vmul.f32 %v834, %v893
  %v900 = vmul.f32 %v835, %v893
  %v901 = vmul.f32 %v836, %v893
  %v902 = vmul.f32 %v837, %v893
  %v903 = vmul.f32 %v838, %v893
  %v904 = vmul.f32 %v839, %v893
  %v905 = vmul.f32 %v840, %v893
  %v906 = vmul.f32 %v841, %v893
  %v907 = vmul.f32 %v842, %v893
  %v908 = vmul.f32 %v843, %v893
  %v909 = vmul.f32 %v844, %v893
  %v910 = vld [vmem:[%s3] sm:$0x1]
  %v912 = vperm.slane %v910, 0
  %v914 = vmul.f32 %v894, %v912
  %v915 = vmul.f32 %v895, %v912
  %v916 = vmul.f32 %v896, %v912
  %v917 = vmul.f32 %v897, %v912
  %v918 = vmul.f32 %v898, %v912
  %v919 = vmul.f32 %v899, %v912
  %v920 = vmul.f32 %v900, %v912
  %v921 = vmul.f32 %v901, %v912
  %v922 = vmul.f32 %v902, %v912
  %v923 = vmul.f32 %v903, %v912
  %v924 = vmul.f32 %v904, %v912
  %v925 = vmul.f32 %v905, %v912
  %v926 = vmul.f32 %v906, %v912
  %v927 = vmul.f32 %v907, %v912
  %v928 = vmul.f32 %v908, %v912
  %v929 = vmul.f32 %v909, %v912
  %v930 = vld [vmem:[%s4] sm:$0x1]
  %v932 = vperm.slane %v930, 0
  %v934 = vadd.f32 %v914, %v932
  %v935 = vadd.f32 %v915, %v932
  %v936 = vadd.f32 %v916, %v932
  %v937 = vadd.f32 %v917, %v932
  %v938 = vadd.f32 %v918, %v932
  %v939 = vadd.f32 %v919, %v932
  %v940 = vadd.f32 %v920, %v932
  %v941 = vadd.f32 %v921, %v932
  %v942 = vadd.f32 %v922, %v932
  %v943 = vadd.f32 %v923, %v932
  %v944 = vadd.f32 %v924, %v932
  %v945 = vadd.f32 %v925, %v932
  %v946 = vadd.f32 %v926, %v932
  %v947 = vadd.f32 %v927, %v932
  %v948 = vadd.f32 %v928, %v932
  %v949 = vadd.f32 %v929, %v932
  %vm950 = vcmp.ge.f32.partialorder %v934, 0.0
  %vm951 = vcmp.ge.f32.partialorder %v935, 0.0
  %vm952 = vcmp.ge.f32.partialorder %v936, 0.0
  %vm953 = vcmp.ge.f32.partialorder %v937, 0.0
  %vm954 = vcmp.ge.f32.partialorder %v938, 0.0
  %vm955 = vcmp.ge.f32.partialorder %v939, 0.0
  %vm956 = vcmp.ge.f32.partialorder %v940, 0.0
  %vm957 = vcmp.ge.f32.partialorder %v941, 0.0
  %vm958 = vcmp.ge.f32.partialorder %v942, 0.0
  %vm959 = vcmp.ge.f32.partialorder %v943, 0.0
  %vm960 = vcmp.ge.f32.partialorder %v944, 0.0
  %vm961 = vcmp.ge.f32.partialorder %v945, 0.0
  %vm962 = vcmp.ge.f32.partialorder %v946, 0.0
  %vm963 = vcmp.ge.f32.partialorder %v947, 0.0
  %vm964 = vcmp.ge.f32.partialorder %v948, 0.0
  %vm965 = vcmp.ge.f32.partialorder %v949, 0.0
  %v966 = vmul.f32 %v934, 0.2
  %v967 = vmul.f32 %v935, 0.2
  %v968 = vmul.f32 %v936, 0.2
  %v969 = vmul.f32 %v937, 0.2
  %v970 = vmul.f32 %v938, 0.2
  %v971 = vmul.f32 %v939, 0.2
  %v972 = vmul.f32 %v940, 0.2
  %v973 = vmul.f32 %v941, 0.2
  %v974 = vmul.f32 %v942, 0.2
  %v975 = vmul.f32 %v943, 0.2
  %v976 = vmul.f32 %v944, 0.2
  %v977 = vmul.f32 %v945, 0.2
  %v978 = vmul.f32 %v946, 0.2
  %v979 = vmul.f32 %v947, 0.2
  %v980 = vmul.f32 %v948, 0.2
  %v981 = vmul.f32 %v949, 0.2
  %v982 = vsel %vm950, %v934, %v966
  %v983 = vsel %vm951, %v935, %v967
  %v984 = vsel %vm952, %v936, %v968
  %v985 = vsel %vm953, %v937, %v969
  %v986 = vsel %vm954, %v938, %v970
  %v987 = vsel %vm955, %v939, %v971
  %v988 = vsel %vm956, %v940, %v972
  %v989 = vsel %vm957, %v941, %v973
  %v990 = vsel %vm958, %v942, %v974
  %v991 = vsel %vm959, %v943, %v975
  %v992 = vsel %vm960, %v944, %v976
  %v993 = vsel %vm961, %v945, %v977
  %v994 = vsel %vm962, %v946, %v978
  %v995 = vsel %vm963, %v947, %v979
  %v996 = vsel %vm964, %v948, %v980
  %v997 = vsel %vm965, %v949, %v981
  %998 = vst [vmem:[%s5] sm:$0xff] %v982
  %999 = vst [vmem:[%s5 + $0x8] sm:$0xff] %v983
  %1000 = vst [vmem:[%s5 + $0x10] sm:$0xff] %v984
  %1001 = vst [vmem:[%s5 + $0x18] sm:$0xff] %v985
  %1002 = vst [vmem:[%s5 + $0x20] sm:$0xff] %v986
  %1003 = vst [vmem:[%s5 + $0x28] sm:$0xff] %v987
  %1004 = vst [vmem:[%s5 + $0x30] sm:$0xff] %v988
  %1005 = vst [vmem:[%s5 + $0x38] sm:$0xff] %v989
  %1006 = vst [vmem:[%s5 + $0x40] sm:$0xff] %v990
  %1007 = vst [vmem:[%s5 + $0x48] sm:$0xff] %v991
  %1008 = vst [vmem:[%s5 + $0x50] sm:$0xff] %v992
  %1009 = vst [vmem:[%s5 + $0x58] sm:$0xff] %v993
  %1010 = vst [vmem:[%s5 + $0x60] sm:$0xff] %v994
  %1011 = vst [vmem:[%s5 + $0x68] sm:$0xff] %v995
  %1012 = vst [vmem:[%s5 + $0x70] sm:$0xff] %v996
  %1013 = vst [vmem:[%s5 + $0x78] sm:$0xff] %v997
  // Predicated region
  $region22: #{d_forward.7} parent=0 // pred_check
    _
  $region23: #{d_forward.7} parent=0 // pred_check_branch
    %1015 = sbr.rel (0) target = $region25
  $region24: #{d_forward.7} parent=0 // pred_region
    _
  $region25: #{d_forward.7} parent=0 // pred_fallthru
    _
  // Predicated region
  $region26: #{d_forward.7} parent=0 // pred_check
    _
  $region27: #{d_forward.7} parent=0 // pred_check_branch
    %1017 = sbr.rel (0) target = $region29
  $region28: #{d_forward.7} parent=0 // pred_region
    _
  $region29: #{d_forward.7} parent=0 // pred_fallthru
    _

// kernel: d_forward.8
$region0: #{d_forward.8}
  #allocation0 [shape = 'u32[]', space=smem, size = 0x4, offset = 0x4, fixed_abs, tag = 'smem constant byte address 0x4 - core index']
  #allocation1 [shape = 'u32[72,128]{1,0:T(1,128)}', space=vmem, size = 0x9000, scoped, tag = 'internal scratch']
  %s0 = inlined_call_operand.vmem [shape: f32[50,2048], index: 0, kind: input, shape index: {}]
  %s1 = inlined_call_operand.vmem [shape: f32[2048,256], index: 1, kind: input, shape index: {}]
  %s2 = inlined_call_operand.vmem [shape: f32[1,256], index: 2, kind: input, shape index: {}]
  %s3 = inlined_call_operand.vmem [shape: f32[1,256], index: 3, kind: input, shape index: {}]
  %s4 = inlined_call_operand.vmem [shape: f32[1,256], index: 4, kind: input, shape index: {}]
  %s5 = inlined_call_operand.vmem [shape: f32[50,256], index: 5, kind: output, shape index: {}]
  %s6 = sld [smem:[#allocation0]]
  $region30: #{d_forward.8} parent=0
    _
  %s8 = ssub.s32 1, %s6
  %s9 = scalar_select 0, %s8, %s6
  // Predicated region
  $region2: #{d_forward.8} parent=0 // pred_check
    _
  $region3: #{d_forward.8} parent=0 // pred_check_branch
    %11 = sbr.rel (0) target = $region5
  $region4: #{d_forward.8} parent=0 // pred_region
    _
  $region5: #{d_forward.8} parent=0 // pred_fallthru
    _
  // Predicated region
  $region6: #{d_forward.8} parent=0 // pred_check
    _
  $region7: #{d_forward.8} parent=0 // pred_check_branch
    %13 = sbr.rel (0) target = $region9
  $region8: #{d_forward.8} parent=0 // pred_region
    _
  $region9: #{d_forward.8} parent=0 // pred_fallthru
    _
  // Predicated region
  $region10: #{d_forward.8} parent=0 // pred_check
    _
  $region11: #{d_forward.8} parent=0 // pred_check_branch
    %15 = sbr.rel (0) target = $region13
  $region12: #{d_forward.8} parent=0 // pred_region
    _
  $region13: #{d_forward.8} parent=0 // pred_fallthru
    _
  // Predicated region
  $region14: #{d_forward.8} parent=0 // pred_check
    _
  $region15: #{d_forward.8} parent=0 // pred_check_branch
    %17 = sbr.rel (0) target = $region17
  $region16: #{d_forward.8} parent=0 // pred_region
    _
  $region17: #{d_forward.8} parent=0 // pred_fallthru
    _
  // Predicated region
  $region18: #{d_forward.8} parent=0 // pred_check
    _
  $region19: #{d_forward.8} parent=0 // pred_check_branch
    %19 = sbr.rel (0) target = $region21
  $region20: #{d_forward.8} parent=0 // pred_region
    _
  $region21: #{d_forward.8} parent=0 // pred_fallthru
    _
  %v20 = vld [vmem:[%s0] sm:$0xff]
  %v21 = vld [vmem:[%s0 + $0x8] sm:$0xff]
  %v22 = vld [vmem:[%s0 + $0x10] sm:$0xff]
  %v23 = vld [vmem:[%s0 + $0x18] sm:$0xff]
  %v24 = vld [vmem:[%s0 + $0x20] sm:$0xff]
  %v25 = vld [vmem:[%s0 + $0x28] sm:$0xff]
  %v26 = vld [vmem:[%s0 + $0x30] sm:$0xff]
  %v27 = vld [vmem:[%s0 + $0x38] sm:$0xff]
  %v28 = vld [vmem:[%s0 + $0x40] sm:$0xff]
  %v29 = vld [vmem:[%s0 + $0x48] sm:$0xff]
  %v30 = vld [vmem:[%s0 + $0x50] sm:$0xff]
  %v31 = vld [vmem:[%s0 + $0x58] sm:$0xff]
  %v32 = vld [vmem:[%s0 + $0x60] sm:$0xff]
  %v33 = vld [vmem:[%s0 + $0x68] sm:$0xff]
  %v34 = vld [vmem:[%s0 + $0x70] sm:$0xff]
  %v35 = vld [vmem:[%s0 + $0x78] sm:$0xff]
  %v36 = vld [vmem:[%s0 + $0x80] sm:$0xff]
  %v37 = vld [vmem:[%s0 + $0x88] sm:$0xff]
  %v38 = vld [vmem:[%s0 + $0x90] sm:$0xff]
  %v39 = vld [vmem:[%s0 + $0x98] sm:$0xff]
  %v40 = vld [vmem:[%s0 + $0xa0] sm:$0xff]
  %v41 = vld [vmem:[%s0 + $0xa8] sm:$0xff]
  %v42 = vld [vmem:[%s0 + $0xb0] sm:$0xff]
  %v43 = vld [vmem:[%s0 + $0xb8] sm:$0xff]
  %v44 = vld [vmem:[%s0 + $0xc0] sm:$0xff]
  %v45 = vld [vmem:[%s0 + $0xc8] sm:$0xff]
  %v46 = vld [vmem:[%s0 + $0xd0] sm:$0xff]
  %v47 = vld [vmem:[%s0 + $0xd8] sm:$0xff]
  %v48 = vld [vmem:[%s0 + $0xe0] sm:$0xff]
  %v49 = vld [vmem:[%s0 + $0xe8] sm:$0xff]
  %v50 = vld [vmem:[%s0 + $0xf0] sm:$0xff]
  %v51 = vld [vmem:[%s0 + $0xf8] sm:$0xff]
  %v52 = vld [vmem:[%s0 + $0x100] sm:$0xff]
  %v53 = vld [vmem:[%s0 + $0x108] sm:$0xff]
  %v54 = vld [vmem:[%s0 + $0x110] sm:$0xff]
  %v55 = vld [vmem:[%s0 + $0x118] sm:$0xff]
  %v56 = vld [vmem:[%s0 + $0x120] sm:$0xff]
  %v57 = vld [vmem:[%s0 + $0x128] sm:$0xff]
  %v58 = vld [vmem:[%s0 + $0x130] sm:$0xff]
  %v59 = vld [vmem:[%s0 + $0x138] sm:$0xff]
  %v60 = vld [vmem:[%s0 + $0x140] sm:$0xff]
  %v61 = vld [vmem:[%s0 + $0x148] sm:$0xff]
  %v62 = vld [vmem:[%s0 + $0x150] sm:$0xff]
  %v63 = vld [vmem:[%s0 + $0x158] sm:$0xff]
  %v64 = vld [vmem:[%s0 + $0x160] sm:$0xff]
  %v65 = vld [vmem:[%s0 + $0x168] sm:$0xff]
  %v66 = vld [vmem:[%s0 + $0x170] sm:$0xff]
  %v67 = vld [vmem:[%s0 + $0x178] sm:$0xff]
  %v68 = vld [vmem:[%s0 + $0x180] sm:$0xff]
  %v69 = vld [vmem:[%s0 + $0x188] sm:$0xff]
  %v70 = vld [vmem:[%s0 + $0x190] sm:$0xff]
  %v71 = vld [vmem:[%s0 + $0x198] sm:$0xff]
  %v72 = vld [vmem:[%s0 + $0x1a0] sm:$0xff]
  %v73 = vld [vmem:[%s0 + $0x1a8] sm:$0xff]
  %v74 = vld [vmem:[%s0 + $0x1b0] sm:$0xff]
  %v75 = vld [vmem:[%s0 + $0x1b8] sm:$0xff]
  %v76 = vld [vmem:[%s0 + $0x1c0] sm:$0xff]
  %v77 = vld [vmem:[%s0 + $0x1c8] sm:$0xff]
  %v78 = vld [vmem:[%s0 + $0x1d0] sm:$0xff]
  %v79 = vld [vmem:[%s0 + $0x1d8] sm:$0xff]
  %v80 = vld [vmem:[%s0 + $0x1e0] sm:$0xff]
  %v81 = vld [vmem:[%s0 + $0x1e8] sm:$0xff]
  %v82 = vld [vmem:[%s0 + $0x1f0] sm:$0xff]
  %v83 = vld [vmem:[%s0 + $0x1f8] sm:$0xff]
  %v84 = vld [vmem:[%s0 + $0x200] sm:$0xff]
  %v85 = vld [vmem:[%s0 + $0x208] sm:$0xff]
  %v86 = vld [vmem:[%s0 + $0x210] sm:$0xff]
  %v87 = vld [vmem:[%s0 + $0x218] sm:$0xff]
  %v88 = vld [vmem:[%s0 + $0x220] sm:$0xff]
  %v89 = vld [vmem:[%s0 + $0x228] sm:$0xff]
  %v90 = vld [vmem:[%s0 + $0x230] sm:$0xff]
  %v91 = vld [vmem:[%s0 + $0x238] sm:$0xff]
  %v92 = vld [vmem:[%s0 + $0x240] sm:$0xff]
  %v93 = vld [vmem:[%s0 + $0x248] sm:$0xff]
  %v94 = vld [vmem:[%s0 + $0x250] sm:$0xff]
  %v95 = vld [vmem:[%s0 + $0x258] sm:$0xff]
  %v96 = vld [vmem:[%s0 + $0x260] sm:$0xff]
  %v97 = vld [vmem:[%s0 + $0x268] sm:$0xff]
  %v98 = vld [vmem:[%s0 + $0x270] sm:$0xff]
  %v99 = vld [vmem:[%s0 + $0x278] sm:$0xff]
  %v100 = vld [vmem:[%s0 + $0x280] sm:$0xff]
  %v101 = vld [vmem:[%s0 + $0x288] sm:$0xff]
  %v102 = vld [vmem:[%s0 + $0x290] sm:$0xff]
  %v103 = vld [vmem:[%s0 + $0x298] sm:$0xff]
  %v104 = vld [vmem:[%s0 + $0x2a0] sm:$0xff]
  %v105 = vld [vmem:[%s0 + $0x2a8] sm:$0xff]
  %v106 = vld [vmem:[%s0 + $0x2b0] sm:$0xff]
  %v107 = vld [vmem:[%s0 + $0x2b8] sm:$0xff]
  %v108 = vld [vmem:[%s0 + $0x2c0] sm:$0xff]
  %v109 = vld [vmem:[%s0 + $0x2c8] sm:$0xff]
  %v110 = vld [vmem:[%s0 + $0x2d0] sm:$0xff]
  %v111 = vld [vmem:[%s0 + $0x2d8] sm:$0xff]
  %v112 = vld [vmem:[%s0 + $0x2e0] sm:$0xff]
  %v113 = vld [vmem:[%s0 + $0x2e8] sm:$0xff]
  %v114 = vld [vmem:[%s0 + $0x2f0] sm:$0xff]
  %v115 = vld [vmem:[%s0 + $0x2f8] sm:$0xff]
  %v116 = vld [vmem:[%s0 + $0x300] sm:$0x3]
  %v117 = vld [vmem:[%s0 + $0x308] sm:$0x3]
  %v118 = vld [vmem:[%s0 + $0x310] sm:$0x3]
  %v119 = vld [vmem:[%s0 + $0x318] sm:$0x3]
  %v120 = vld [vmem:[%s0 + $0x320] sm:$0x3]
  %v121 = vld [vmem:[%s0 + $0x328] sm:$0x3]
  %v122 = vld [vmem:[%s0 + $0x330] sm:$0x3]
  %v123 = vld [vmem:[%s0 + $0x338] sm:$0x3]
  %v124 = vld [vmem:[%s0 + $0x340] sm:$0x3]
  %v125 = vld [vmem:[%s0 + $0x348] sm:$0x3]
  %v126 = vld [vmem:[%s0 + $0x350] sm:$0x3]
  %v127 = vld [vmem:[%s0 + $0x358] sm:$0x3]
  %v128 = vld [vmem:[%s0 + $0x360] sm:$0x3]
  %v129 = vld [vmem:[%s0 + $0x368] sm:$0x3]
  %v130 = vld [vmem:[%s0 + $0x370] sm:$0x3]
  %v131 = vld [vmem:[%s0 + $0x378] sm:$0x3]
  %v132 = vld [vmem:[%s1] sm:$0xff]
  %v133 = vld [vmem:[%s1 + $0x8] sm:$0xff]
  %v134 = vld [vmem:[%s1 + $0x10] sm:$0xff]
  %v135 = vld [vmem:[%s1 + $0x18] sm:$0xff]
  %v136 = vld [vmem:[%s1 + $0x20] sm:$0xff]
  %v137 = vld [vmem:[%s1 + $0x28] sm:$0xff]
  %v138 = vld [vmem:[%s1 + $0x30] sm:$0xff]
  %v139 = vld [vmem:[%s1 + $0x38] sm:$0xff]
  %v140 = vld [vmem:[%s1 + $0x40] sm:$0xff]
  %v141 = vld [vmem:[%s1 + $0x48] sm:$0xff]
  %v142 = vld [vmem:[%s1 + $0x50] sm:$0xff]
  %v143 = vld [vmem:[%s1 + $0x58] sm:$0xff]
  %v144 = vld [vmem:[%s1 + $0x60] sm:$0xff]
  %v145 = vld [vmem:[%s1 + $0x68] sm:$0xff]
  %v146 = vld [vmem:[%s1 + $0x70] sm:$0xff]
  %v147 = vld [vmem:[%s1 + $0x78] sm:$0xff]
  %v148 = vld [vmem:[%s1 + $0x80] sm:$0xff]
  %v149 = vld [vmem:[%s1 + $0x88] sm:$0xff]
  %v150 = vld [vmem:[%s1 + $0x90] sm:$0xff]
  %v151 = vld [vmem:[%s1 + $0x98] sm:$0xff]
  %v152 = vld [vmem:[%s1 + $0xa0] sm:$0xff]
  %v153 = vld [vmem:[%s1 + $0xa8] sm:$0xff]
  %v154 = vld [vmem:[%s1 + $0xb0] sm:$0xff]
  %v155 = vld [vmem:[%s1 + $0xb8] sm:$0xff]
  %v156 = vld [vmem:[%s1 + $0xc0] sm:$0xff]
  %v157 = vld [vmem:[%s1 + $0xc8] sm:$0xff]
  %v158 = vld [vmem:[%s1 + $0xd0] sm:$0xff]
  %v159 = vld [vmem:[%s1 + $0xd8] sm:$0xff]
  %v160 = vld [vmem:[%s1 + $0xe0] sm:$0xff]
  %v161 = vld [vmem:[%s1 + $0xe8] sm:$0xff]
  %v162 = vld [vmem:[%s1 + $0xf0] sm:$0xff]
  %v163 = vld [vmem:[%s1 + $0xf8] sm:$0xff]
  %v164 = vld [vmem:[%s1 + $0x100] sm:$0xff]
  %v165 = vld [vmem:[%s1 + $0x108] sm:$0xff]
  %v166 = vld [vmem:[%s1 + $0x110] sm:$0xff]
  %v167 = vld [vmem:[%s1 + $0x118] sm:$0xff]
  %v168 = vld [vmem:[%s1 + $0x120] sm:$0xff]
  %v169 = vld [vmem:[%s1 + $0x128] sm:$0xff]
  %v170 = vld [vmem:[%s1 + $0x130] sm:$0xff]
  %v171 = vld [vmem:[%s1 + $0x138] sm:$0xff]
  %v172 = vld [vmem:[%s1 + $0x140] sm:$0xff]
  %v173 = vld [vmem:[%s1 + $0x148] sm:$0xff]
  %v174 = vld [vmem:[%s1 + $0x150] sm:$0xff]
  %v175 = vld [vmem:[%s1 + $0x158] sm:$0xff]
  %v176 = vld [vmem:[%s1 + $0x160] sm:$0xff]
  %v177 = vld [vmem:[%s1 + $0x168] sm:$0xff]
  %v178 = vld [vmem:[%s1 + $0x170] sm:$0xff]
  %v179 = vld [vmem:[%s1 + $0x178] sm:$0xff]
  %v180 = vld [vmem:[%s1 + $0x180] sm:$0xff]
  %v181 = vld [vmem:[%s1 + $0x188] sm:$0xff]
  %v182 = vld [vmem:[%s1 + $0x190] sm:$0xff]
  %v183 = vld [vmem:[%s1 + $0x198] sm:$0xff]
  %v184 = vld [vmem:[%s1 + $0x1a0] sm:$0xff]
  %v185 = vld [vmem:[%s1 + $0x1a8] sm:$0xff]
  %v186 = vld [vmem:[%s1 + $0x1b0] sm:$0xff]
  %v187 = vld [vmem:[%s1 + $0x1b8] sm:$0xff]
  %v188 = vld [vmem:[%s1 + $0x1c0] sm:$0xff]
  %v189 = vld [vmem:[%s1 + $0x1c8] sm:$0xff]
  %v190 = vld [vmem:[%s1 + $0x1d0] sm:$0xff]
  %v191 = vld [vmem:[%s1 + $0x1d8] sm:$0xff]
  %v192 = vld [vmem:[%s1 + $0x1e0] sm:$0xff]
  %v193 = vld [vmem:[%s1 + $0x1e8] sm:$0xff]
  %v194 = vld [vmem:[%s1 + $0x1f0] sm:$0xff]
  %v195 = vld [vmem:[%s1 + $0x1f8] sm:$0xff]
  %v196 = vld [vmem:[%s1 + $0x200] sm:$0xff]
  %v197 = vld [vmem:[%s1 + $0x208] sm:$0xff]
  %v198 = vld [vmem:[%s1 + $0x210] sm:$0xff]
  %v199 = vld [vmem:[%s1 + $0x218] sm:$0xff]
  %v200 = vld [vmem:[%s1 + $0x220] sm:$0xff]
  %v201 = vld [vmem:[%s1 + $0x228] sm:$0xff]
  %v202 = vld [vmem:[%s1 + $0x230] sm:$0xff]
  %v203 = vld [vmem:[%s1 + $0x238] sm:$0xff]
  %v204 = vld [vmem:[%s1 + $0x240] sm:$0xff]
  %v205 = vld [vmem:[%s1 + $0x248] sm:$0xff]
  %v206 = vld [vmem:[%s1 + $0x250] sm:$0xff]
  %v207 = vld [vmem:[%s1 + $0x258] sm:$0xff]
  %v208 = vld [vmem:[%s1 + $0x260] sm:$0xff]
  %v209 = vld [vmem:[%s1 + $0x268] sm:$0xff]
  %v210 = vld [vmem:[%s1 + $0x270] sm:$0xff]
  %v211 = vld [vmem:[%s1 + $0x278] sm:$0xff]
  %v212 = vld [vmem:[%s1 + $0x280] sm:$0xff]
  %v213 = vld [vmem:[%s1 + $0x288] sm:$0xff]
  %v214 = vld [vmem:[%s1 + $0x290] sm:$0xff]
  %v215 = vld [vmem:[%s1 + $0x298] sm:$0xff]
  %v216 = vld [vmem:[%s1 + $0x2a0] sm:$0xff]
  %v217 = vld [vmem:[%s1 + $0x2a8] sm:$0xff]
  %v218 = vld [vmem:[%s1 + $0x2b0] sm:$0xff]
  %v219 = vld [vmem:[%s1 + $0x2b8] sm:$0xff]
  %v220 = vld [vmem:[%s1 + $0x2c0] sm:$0xff]
  %v221 = vld [vmem:[%s1 + $0x2c8] sm:$0xff]
  %v222 = vld [vmem:[%s1 + $0x2d0] sm:$0xff]
  %v223 = vld [vmem:[%s1 + $0x2d8] sm:$0xff]
  %v224 = vld [vmem:[%s1 + $0x2e0] sm:$0xff]
  %v225 = vld [vmem:[%s1 + $0x2e8] sm:$0xff]
  %v226 = vld [vmem:[%s1 + $0x2f0] sm:$0xff]
  %v227 = vld [vmem:[%s1 + $0x2f8] sm:$0xff]
  %v228 = vld [vmem:[%s1 + $0x300] sm:$0xff]
  %v229 = vld [vmem:[%s1 + $0x308] sm:$0xff]
  %v230 = vld [vmem:[%s1 + $0x310] sm:$0xff]
  %v231 = vld [vmem:[%s1 + $0x318] sm:$0xff]
  %v232 = vld [vmem:[%s1 + $0x320] sm:$0xff]
  %v233 = vld [vmem:[%s1 + $0x328] sm:$0xff]
  %v234 = vld [vmem:[%s1 + $0x330] sm:$0xff]
  %v235 = vld [vmem:[%s1 + $0x338] sm:$0xff]
  %v236 = vld [vmem:[%s1 + $0x340] sm:$0xff]
  %v237 = vld [vmem:[%s1 + $0x348] sm:$0xff]
  %v238 = vld [vmem:[%s1 + $0x350] sm:$0xff]
  %v239 = vld [vmem:[%s1 + $0x358] sm:$0xff]
  %v240 = vld [vmem:[%s1 + $0x360] sm:$0xff]
  %v241 = vld [vmem:[%s1 + $0x368] sm:$0xff]
  %v242 = vld [vmem:[%s1 + $0x370] sm:$0xff]
  %v243 = vld [vmem:[%s1 + $0x378] sm:$0xff]
  %v244 = vld [vmem:[%s1 + $0x380] sm:$0xff]
  %v245 = vld [vmem:[%s1 + $0x388] sm:$0xff]
  %v246 = vld [vmem:[%s1 + $0x390] sm:$0xff]
  %v247 = vld [vmem:[%s1 + $0x398] sm:$0xff]
  %v248 = vld [vmem:[%s1 + $0x3a0] sm:$0xff]
  %v249 = vld [vmem:[%s1 + $0x3a8] sm:$0xff]
  %v250 = vld [vmem:[%s1 + $0x3b0] sm:$0xff]
  %v251 = vld [vmem:[%s1 + $0x3b8] sm:$0xff]
  %v252 = vld [vmem:[%s1 + $0x3c0] sm:$0xff]
  %v253 = vld [vmem:[%s1 + $0x3c8] sm:$0xff]
  %v254 = vld [vmem:[%s1 + $0x3d0] sm:$0xff]
  %v255 = vld [vmem:[%s1 + $0x3d8] sm:$0xff]
  %v256 = vld [vmem:[%s1 + $0x3e0] sm:$0xff]
  %v257 = vld [vmem:[%s1 + $0x3e8] sm:$0xff]
  %v258 = vld [vmem:[%s1 + $0x3f0] sm:$0xff]
  %v259 = vld [vmem:[%s1 + $0x3f8] sm:$0xff]
  %v260 = vld [vmem:[%s1 + $0x400] sm:$0xff]
  %v261 = vld [vmem:[%s1 + $0x408] sm:$0xff]
  %v262 = vld [vmem:[%s1 + $0x410] sm:$0xff]
  %v263 = vld [vmem:[%s1 + $0x418] sm:$0xff]
  %v264 = vld [vmem:[%s1 + $0x420] sm:$0xff]
  %v265 = vld [vmem:[%s1 + $0x428] sm:$0xff]
  %v266 = vld [vmem:[%s1 + $0x430] sm:$0xff]
  %v267 = vld [vmem:[%s1 + $0x438] sm:$0xff]
  %v268 = vld [vmem:[%s1 + $0x440] sm:$0xff]
  %v269 = vld [vmem:[%s1 + $0x448] sm:$0xff]
  %v270 = vld [vmem:[%s1 + $0x450] sm:$0xff]
  %v271 = vld [vmem:[%s1 + $0x458] sm:$0xff]
  %v272 = vld [vmem:[%s1 + $0x460] sm:$0xff]
  %v273 = vld [vmem:[%s1 + $0x468] sm:$0xff]
  %v274 = vld [vmem:[%s1 + $0x470] sm:$0xff]
  %v275 = vld [vmem:[%s1 + $0x478] sm:$0xff]
  %v276 = vld [vmem:[%s1 + $0x480] sm:$0xff]
  %v277 = vld [vmem:[%s1 + $0x488] sm:$0xff]
  %v278 = vld [vmem:[%s1 + $0x490] sm:$0xff]
  %v279 = vld [vmem:[%s1 + $0x498] sm:$0xff]
  %v280 = vld [vmem:[%s1 + $0x4a0] sm:$0xff]
  %v281 = vld [vmem:[%s1 + $0x4a8] sm:$0xff]
  %v282 = vld [vmem:[%s1 + $0x4b0] sm:$0xff]
  %v283 = vld [vmem:[%s1 + $0x4b8] sm:$0xff]
  %v284 = vld [vmem:[%s1 + $0x4c0] sm:$0xff]
  %v285 = vld [vmem:[%s1 + $0x4c8] sm:$0xff]
  %v286 = vld [vmem:[%s1 + $0x4d0] sm:$0xff]
  %v287 = vld [vmem:[%s1 + $0x4d8] sm:$0xff]
  %v288 = vld [vmem:[%s1 + $0x4e0] sm:$0xff]
  %v289 = vld [vmem:[%s1 + $0x4e8] sm:$0xff]
  %v290 = vld [vmem:[%s1 + $0x4f0] sm:$0xff]
  %v291 = vld [vmem:[%s1 + $0x4f8] sm:$0xff]
  %v292 = vld [vmem:[%s1 + $0x500] sm:$0xff]
  %v293 = vld [vmem:[%s1 + $0x508] sm:$0xff]
  %v294 = vld [vmem:[%s1 + $0x510] sm:$0xff]
  %v295 = vld [vmem:[%s1 + $0x518] sm:$0xff]
  %v296 = vld [vmem:[%s1 + $0x520] sm:$0xff]
  %v297 = vld [vmem:[%s1 + $0x528] sm:$0xff]
  %v298 = vld [vmem:[%s1 + $0x530] sm:$0xff]
  %v299 = vld [vmem:[%s1 + $0x538] sm:$0xff]
  %v300 = vld [vmem:[%s1 + $0x540] sm:$0xff]
  %v301 = vld [vmem:[%s1 + $0x548] sm:$0xff]
  %v302 = vld [vmem:[%s1 + $0x550] sm:$0xff]
  %v303 = vld [vmem:[%s1 + $0x558] sm:$0xff]
  %v304 = vld [vmem:[%s1 + $0x560] sm:$0xff]
  %v305 = vld [vmem:[%s1 + $0x568] sm:$0xff]
  %v306 = vld [vmem:[%s1 + $0x570] sm:$0xff]
  %v307 = vld [vmem:[%s1 + $0x578] sm:$0xff]
  %v308 = vld [vmem:[%s1 + $0x580] sm:$0xff]
  %v309 = vld [vmem:[%s1 + $0x588] sm:$0xff]
  %v310 = vld [vmem:[%s1 + $0x590] sm:$0xff]
  %v311 = vld [vmem:[%s1 + $0x598] sm:$0xff]
  %v312 = vld [vmem:[%s1 + $0x5a0] sm:$0xff]
  %v313 = vld [vmem:[%s1 + $0x5a8] sm:$0xff]
  %v314 = vld [vmem:[%s1 + $0x5b0] sm:$0xff]
  %v315 = vld [vmem:[%s1 + $0x5b8] sm:$0xff]
  %v316 = vld [vmem:[%s1 + $0x5c0] sm:$0xff]
  %v317 = vld [vmem:[%s1 + $0x5c8] sm:$0xff]
  %v318 = vld [vmem:[%s1 + $0x5d0] sm:$0xff]
  %v319 = vld [vmem:[%s1 + $0x5d8] sm:$0xff]
  %v320 = vld [vmem:[%s1 + $0x5e0] sm:$0xff]
  %v321 = vld [vmem:[%s1 + $0x5e8] sm:$0xff]
  %v322 = vld [vmem:[%s1 + $0x5f0] sm:$0xff]
  %v323 = vld [vmem:[%s1 + $0x5f8] sm:$0xff]
  %v324 = vld [vmem:[%s1 + $0x600] sm:$0xff]
  %v325 = vld [vmem:[%s1 + $0x608] sm:$0xff]
  %v326 = vld [vmem:[%s1 + $0x610] sm:$0xff]
  %v327 = vld [vmem:[%s1 + $0x618] sm:$0xff]
  %v328 = vld [vmem:[%s1 + $0x620] sm:$0xff]
  %v329 = vld [vmem:[%s1 + $0x628] sm:$0xff]
  %v330 = vld [vmem:[%s1 + $0x630] sm:$0xff]
  %v331 = vld [vmem:[%s1 + $0x638] sm:$0xff]
  %v332 = vld [vmem:[%s1 + $0x640] sm:$0xff]
  %v333 = vld [vmem:[%s1 + $0x648] sm:$0xff]
  %v334 = vld [vmem:[%s1 + $0x650] sm:$0xff]
  %v335 = vld [vmem:[%s1 + $0x658] sm:$0xff]
  %v336 = vld [vmem:[%s1 + $0x660] sm:$0xff]
  %v337 = vld [vmem:[%s1 + $0x668] sm:$0xff]
  %v338 = vld [vmem:[%s1 + $0x670] sm:$0xff]
  %v339 = vld [vmem:[%s1 + $0x678] sm:$0xff]
  %v340 = vld [vmem:[%s1 + $0x680] sm:$0xff]
  %v341 = vld [vmem:[%s1 + $0x688] sm:$0xff]
  %v342 = vld [vmem:[%s1 + $0x690] sm:$0xff]
  %v343 = vld [vmem:[%s1 + $0x698] sm:$0xff]
  %v344 = vld [vmem:[%s1 + $0x6a0] sm:$0xff]
  %v345 = vld [vmem:[%s1 + $0x6a8] sm:$0xff]
  %v346 = vld [vmem:[%s1 + $0x6b0] sm:$0xff]
  %v347 = vld [vmem:[%s1 + $0x6b8] sm:$0xff]
  %v348 = vld [vmem:[%s1 + $0x6c0] sm:$0xff]
  %v349 = vld [vmem:[%s1 + $0x6c8] sm:$0xff]
  %v350 = vld [vmem:[%s1 + $0x6d0] sm:$0xff]
  %v351 = vld [vmem:[%s1 + $0x6d8] sm:$0xff]
  %v352 = vld [vmem:[%s1 + $0x6e0] sm:$0xff]
  %v353 = vld [vmem:[%s1 + $0x6e8] sm:$0xff]
  %v354 = vld [vmem:[%s1 + $0x6f0] sm:$0xff]
  %v355 = vld [vmem:[%s1 + $0x6f8] sm:$0xff]
  %v356 = vld [vmem:[%s1 + $0x700] sm:$0xff]
  %v357 = vld [vmem:[%s1 + $0x708] sm:$0xff]
  %v358 = vld [vmem:[%s1 + $0x710] sm:$0xff]
  %v359 = vld [vmem:[%s1 + $0x718] sm:$0xff]
  %v360 = vld [vmem:[%s1 + $0x720] sm:$0xff]
  %v361 = vld [vmem:[%s1 + $0x728] sm:$0xff]
  %v362 = vld [vmem:[%s1 + $0x730] sm:$0xff]
  %v363 = vld [vmem:[%s1 + $0x738] sm:$0xff]
  %v364 = vld [vmem:[%s1 + $0x740] sm:$0xff]
  %v365 = vld [vmem:[%s1 + $0x748] sm:$0xff]
  %v366 = vld [vmem:[%s1 + $0x750] sm:$0xff]
  %v367 = vld [vmem:[%s1 + $0x758] sm:$0xff]
  %v368 = vld [vmem:[%s1 + $0x760] sm:$0xff]
  %v369 = vld [vmem:[%s1 + $0x768] sm:$0xff]
  %v370 = vld [vmem:[%s1 + $0x770] sm:$0xff]
  %v371 = vld [vmem:[%s1 + $0x778] sm:$0xff]
  %v372 = vld [vmem:[%s1 + $0x780] sm:$0xff]
  %v373 = vld [vmem:[%s1 + $0x788] sm:$0xff]
  %v374 = vld [vmem:[%s1 + $0x790] sm:$0xff]
  %v375 = vld [vmem:[%s1 + $0x798] sm:$0xff]
  %v376 = vld [vmem:[%s1 + $0x7a0] sm:$0xff]
  %v377 = vld [vmem:[%s1 + $0x7a8] sm:$0xff]
  %v378 = vld [vmem:[%s1 + $0x7b0] sm:$0xff]
  %v379 = vld [vmem:[%s1 + $0x7b8] sm:$0xff]
  %v380 = vld [vmem:[%s1 + $0x7c0] sm:$0xff]
  %v381 = vld [vmem:[%s1 + $0x7c8] sm:$0xff]
  %v382 = vld [vmem:[%s1 + $0x7d0] sm:$0xff]
  %v383 = vld [vmem:[%s1 + $0x7d8] sm:$0xff]
  %v384 = vld [vmem:[%s1 + $0x7e0] sm:$0xff]
  %v385 = vld [vmem:[%s1 + $0x7e8] sm:$0xff]
  %v386 = vld [vmem:[%s1 + $0x7f0] sm:$0xff]
  %v387 = vld [vmem:[%s1 + $0x7f8] sm:$0xff]
  %v388 = vld [vmem:[%s1 + $0x800] sm:$0xff]
  %v389 = vld [vmem:[%s1 + $0x808] sm:$0xff]
  %v390 = vld [vmem:[%s1 + $0x810] sm:$0xff]
  %v391 = vld [vmem:[%s1 + $0x818] sm:$0xff]
  %v392 = vld [vmem:[%s1 + $0x820] sm:$0xff]
  %v393 = vld [vmem:[%s1 + $0x828] sm:$0xff]
  %v394 = vld [vmem:[%s1 + $0x830] sm:$0xff]
  %v395 = vld [vmem:[%s1 + $0x838] sm:$0xff]
  %v396 = vld [vmem:[%s1 + $0x840] sm:$0xff]
  %v397 = vld [vmem:[%s1 + $0x848] sm:$0xff]
  %v398 = vld [vmem:[%s1 + $0x850] sm:$0xff]
  %v399 = vld [vmem:[%s1 + $0x858] sm:$0xff]
  %v400 = vld [vmem:[%s1 + $0x860] sm:$0xff]
  %v401 = vld [vmem:[%s1 + $0x868] sm:$0xff]
  %v402 = vld [vmem:[%s1 + $0x870] sm:$0xff]
  %v403 = vld [vmem:[%s1 + $0x878] sm:$0xff]
  %v404 = vld [vmem:[%s1 + $0x880] sm:$0xff]
  %v405 = vld [vmem:[%s1 + $0x888] sm:$0xff]
  %v406 = vld [vmem:[%s1 + $0x890] sm:$0xff]
  %v407 = vld [vmem:[%s1 + $0x898] sm:$0xff]
  %v408 = vld [vmem:[%s1 + $0x8a0] sm:$0xff]
  %v409 = vld [vmem:[%s1 + $0x8a8] sm:$0xff]
  %v410 = vld [vmem:[%s1 + $0x8b0] sm:$0xff]
  %v411 = vld [vmem:[%s1 + $0x8b8] sm:$0xff]
  %v412 = vld [vmem:[%s1 + $0x8c0] sm:$0xff]
  %v413 = vld [vmem:[%s1 + $0x8c8] sm:$0xff]
  %v414 = vld [vmem:[%s1 + $0x8d0] sm:$0xff]
  %v415 = vld [vmem:[%s1 + $0x8d8] sm:$0xff]
  %v416 = vld [vmem:[%s1 + $0x8e0] sm:$0xff]
  %v417 = vld [vmem:[%s1 + $0x8e8] sm:$0xff]
  %v418 = vld [vmem:[%s1 + $0x8f0] sm:$0xff]
  %v419 = vld [vmem:[%s1 + $0x8f8] sm:$0xff]
  %v420 = vld [vmem:[%s1 + $0x900] sm:$0xff]
  %v421 = vld [vmem:[%s1 + $0x908] sm:$0xff]
  %v422 = vld [vmem:[%s1 + $0x910] sm:$0xff]
  %v423 = vld [vmem:[%s1 + $0x918] sm:$0xff]
  %v424 = vld [vmem:[%s1 + $0x920] sm:$0xff]
  %v425 = vld [vmem:[%s1 + $0x928] sm:$0xff]
  %v426 = vld [vmem:[%s1 + $0x930] sm:$0xff]
  %v427 = vld [vmem:[%s1 + $0x938] sm:$0xff]
  %v428 = vld [vmem:[%s1 + $0x940] sm:$0xff]
  %v429 = vld [vmem:[%s1 + $0x948] sm:$0xff]
  %v430 = vld [vmem:[%s1 + $0x950] sm:$0xff]
  %v431 = vld [vmem:[%s1 + $0x958] sm:$0xff]
  %v432 = vld [vmem:[%s1 + $0x960] sm:$0xff]
  %v433 = vld [vmem:[%s1 + $0x968] sm:$0xff]
  %v434 = vld [vmem:[%s1 + $0x970] sm:$0xff]
  %v435 = vld [vmem:[%s1 + $0x978] sm:$0xff]
  %v436 = vld [vmem:[%s1 + $0x980] sm:$0xff]
  %v437 = vld [vmem:[%s1 + $0x988] sm:$0xff]
  %v438 = vld [vmem:[%s1 + $0x990] sm:$0xff]
  %v439 = vld [vmem:[%s1 + $0x998] sm:$0xff]
  %v440 = vld [vmem:[%s1 + $0x9a0] sm:$0xff]
  %v441 = vld [vmem:[%s1 + $0x9a8] sm:$0xff]
  %v442 = vld [vmem:[%s1 + $0x9b0] sm:$0xff]
  %v443 = vld [vmem:[%s1 + $0x9b8] sm:$0xff]
  %v444 = vld [vmem:[%s1 + $0x9c0] sm:$0xff]
  %v445 = vld [vmem:[%s1 + $0x9c8] sm:$0xff]
  %v446 = vld [vmem:[%s1 + $0x9d0] sm:$0xff]
  %v447 = vld [vmem:[%s1 + $0x9d8] sm:$0xff]
  %v448 = vld [vmem:[%s1 + $0x9e0] sm:$0xff]
  %v449 = vld [vmem:[%s1 + $0x9e8] sm:$0xff]
  %v450 = vld [vmem:[%s1 + $0x9f0] sm:$0xff]
  %v451 = vld [vmem:[%s1 + $0x9f8] sm:$0xff]
  %v452 = vld [vmem:[%s1 + $0xa00] sm:$0xff]
  %v453 = vld [vmem:[%s1 + $0xa08] sm:$0xff]
  %v454 = vld [vmem:[%s1 + $0xa10] sm:$0xff]
  %v455 = vld [vmem:[%s1 + $0xa18] sm:$0xff]
  %v456 = vld [vmem:[%s1 + $0xa20] sm:$0xff]
  %v457 = vld [vmem:[%s1 + $0xa28] sm:$0xff]
  %v458 = vld [vmem:[%s1 + $0xa30] sm:$0xff]
  %v459 = vld [vmem:[%s1 + $0xa38] sm:$0xff]
  %v460 = vld [vmem:[%s1 + $0xa40] sm:$0xff]
  %v461 = vld [vmem:[%s1 + $0xa48] sm:$0xff]
  %v462 = vld [vmem:[%s1 + $0xa50] sm:$0xff]
  %v463 = vld [vmem:[%s1 + $0xa58] sm:$0xff]
  %v464 = vld [vmem:[%s1 + $0xa60] sm:$0xff]
  %v465 = vld [vmem:[%s1 + $0xa68] sm:$0xff]
  %v466 = vld [vmem:[%s1 + $0xa70] sm:$0xff]
  %v467 = vld [vmem:[%s1 + $0xa78] sm:$0xff]
  %v468 = vld [vmem:[%s1 + $0xa80] sm:$0xff]
  %v469 = vld [vmem:[%s1 + $0xa88] sm:$0xff]
  %v470 = vld [vmem:[%s1 + $0xa90] sm:$0xff]
  %v471 = vld [vmem:[%s1 + $0xa98] sm:$0xff]
  %v472 = vld [vmem:[%s1 + $0xaa0] sm:$0xff]
  %v473 = vld [vmem:[%s1 + $0xaa8] sm:$0xff]
  %v474 = vld [vmem:[%s1 + $0xab0] sm:$0xff]
  %v475 = vld [vmem:[%s1 + $0xab8] sm:$0xff]
  %v476 = vld [vmem:[%s1 + $0xac0] sm:$0xff]
  %v477 = vld [vmem:[%s1 + $0xac8] sm:$0xff]
  %v478 = vld [vmem:[%s1 + $0xad0] sm:$0xff]
  %v479 = vld [vmem:[%s1 + $0xad8] sm:$0xff]
  %v480 = vld [vmem:[%s1 + $0xae0] sm:$0xff]
  %v481 = vld [vmem:[%s1 + $0xae8] sm:$0xff]
  %v482 = vld [vmem:[%s1 + $0xaf0] sm:$0xff]
  %v483 = vld [vmem:[%s1 + $0xaf8] sm:$0xff]
  %v484 = vld [vmem:[%s1 + $0xb00] sm:$0xff]
  %v485 = vld [vmem:[%s1 + $0xb08] sm:$0xff]
  %v486 = vld [vmem:[%s1 + $0xb10] sm:$0xff]
  %v487 = vld [vmem:[%s1 + $0xb18] sm:$0xff]
  %v488 = vld [vmem:[%s1 + $0xb20] sm:$0xff]
  %v489 = vld [vmem:[%s1 + $0xb28] sm:$0xff]
  %v490 = vld [vmem:[%s1 + $0xb30] sm:$0xff]
  %v491 = vld [vmem:[%s1 + $0xb38] sm:$0xff]
  %v492 = vld [vmem:[%s1 + $0xb40] sm:$0xff]
  %v493 = vld [vmem:[%s1 + $0xb48] sm:$0xff]
  %v494 = vld [vmem:[%s1 + $0xb50] sm:$0xff]
  %v495 = vld [vmem:[%s1 + $0xb58] sm:$0xff]
  %v496 = vld [vmem:[%s1 + $0xb60] sm:$0xff]
  %v497 = vld [vmem:[%s1 + $0xb68] sm:$0xff]
  %v498 = vld [vmem:[%s1 + $0xb70] sm:$0xff]
  %v499 = vld [vmem:[%s1 + $0xb78] sm:$0xff]
  %v500 = vld [vmem:[%s1 + $0xb80] sm:$0xff]
  %v501 = vld [vmem:[%s1 + $0xb88] sm:$0xff]
  %v502 = vld [vmem:[%s1 + $0xb90] sm:$0xff]
  %v503 = vld [vmem:[%s1 + $0xb98] sm:$0xff]
  %v504 = vld [vmem:[%s1 + $0xba0] sm:$0xff]
  %v505 = vld [vmem:[%s1 + $0xba8] sm:$0xff]
  %v506 = vld [vmem:[%s1 + $0xbb0] sm:$0xff]
  %v507 = vld [vmem:[%s1 + $0xbb8] sm:$0xff]
  %v508 = vld [vmem:[%s1 + $0xbc0] sm:$0xff]
  %v509 = vld [vmem:[%s1 + $0xbc8] sm:$0xff]
  %v510 = vld [vmem:[%s1 + $0xbd0] sm:$0xff]
  %v511 = vld [vmem:[%s1 + $0xbd8] sm:$0xff]
  %v512 = vld [vmem:[%s1 + $0xbe0] sm:$0xff]
  %v513 = vld [vmem:[%s1 + $0xbe8] sm:$0xff]
  %v514 = vld [vmem:[%s1 + $0xbf0] sm:$0xff]
  %v515 = vld [vmem:[%s1 + $0xbf8] sm:$0xff]
  %v516 = vld [vmem:[%s1 + $0xc00] sm:$0xff]
  %v517 = vld [vmem:[%s1 + $0xc08] sm:$0xff]
  %v518 = vld [vmem:[%s1 + $0xc10] sm:$0xff]
  %v519 = vld [vmem:[%s1 + $0xc18] sm:$0xff]
  %v520 = vld [vmem:[%s1 + $0xc20] sm:$0xff]
  %v521 = vld [vmem:[%s1 + $0xc28] sm:$0xff]
  %v522 = vld [vmem:[%s1 + $0xc30] sm:$0xff]
  %v523 = vld [vmem:[%s1 + $0xc38] sm:$0xff]
  %v524 = vld [vmem:[%s1 + $0xc40] sm:$0xff]
  %v525 = vld [vmem:[%s1 + $0xc48] sm:$0xff]
  %v526 = vld [vmem:[%s1 + $0xc50] sm:$0xff]
  %v527 = vld [vmem:[%s1 + $0xc58] sm:$0xff]
  %v528 = vld [vmem:[%s1 + $0xc60] sm:$0xff]
  %v529 = vld [vmem:[%s1 + $0xc68] sm:$0xff]
  %v530 = vld [vmem:[%s1 + $0xc70] sm:$0xff]
  %v531 = vld [vmem:[%s1 + $0xc78] sm:$0xff]
  %v532 = vld [vmem:[%s1 + $0xc80] sm:$0xff]
  %v533 = vld [vmem:[%s1 + $0xc88] sm:$0xff]
  %v534 = vld [vmem:[%s1 + $0xc90] sm:$0xff]
  %v535 = vld [vmem:[%s1 + $0xc98] sm:$0xff]
  %v536 = vld [vmem:[%s1 + $0xca0] sm:$0xff]
  %v537 = vld [vmem:[%s1 + $0xca8] sm:$0xff]
  %v538 = vld [vmem:[%s1 + $0xcb0] sm:$0xff]
  %v539 = vld [vmem:[%s1 + $0xcb8] sm:$0xff]
  %v540 = vld [vmem:[%s1 + $0xcc0] sm:$0xff]
  %v541 = vld [vmem:[%s1 + $0xcc8] sm:$0xff]
  %v542 = vld [vmem:[%s1 + $0xcd0] sm:$0xff]
  %v543 = vld [vmem:[%s1 + $0xcd8] sm:$0xff]
  %v544 = vld [vmem:[%s1 + $0xce0] sm:$0xff]
  %v545 = vld [vmem:[%s1 + $0xce8] sm:$0xff]
  %v546 = vld [vmem:[%s1 + $0xcf0] sm:$0xff]
  %v547 = vld [vmem:[%s1 + $0xcf8] sm:$0xff]
  %v548 = vld [vmem:[%s1 + $0xd00] sm:$0xff]
  %v549 = vld [vmem:[%s1 + $0xd08] sm:$0xff]
  %v550 = vld [vmem:[%s1 + $0xd10] sm:$0xff]
  %v551 = vld [vmem:[%s1 + $0xd18] sm:$0xff]
  %v552 = vld [vmem:[%s1 + $0xd20] sm:$0xff]
  %v553 = vld [vmem:[%s1 + $0xd28] sm:$0xff]
  %v554 = vld [vmem:[%s1 + $0xd30] sm:$0xff]
  %v555 = vld [vmem:[%s1 + $0xd38] sm:$0xff]
  %v556 = vld [vmem:[%s1 + $0xd40] sm:$0xff]
  %v557 = vld [vmem:[%s1 + $0xd48] sm:$0xff]
  %v558 = vld [vmem:[%s1 + $0xd50] sm:$0xff]
  %v559 = vld [vmem:[%s1 + $0xd58] sm:$0xff]
  %v560 = vld [vmem:[%s1 + $0xd60] sm:$0xff]
  %v561 = vld [vmem:[%s1 + $0xd68] sm:$0xff]
  %v562 = vld [vmem:[%s1 + $0xd70] sm:$0xff]
  %v563 = vld [vmem:[%s1 + $0xd78] sm:$0xff]
  %v564 = vld [vmem:[%s1 + $0xd80] sm:$0xff]
  %v565 = vld [vmem:[%s1 + $0xd88] sm:$0xff]
  %v566 = vld [vmem:[%s1 + $0xd90] sm:$0xff]
  %v567 = vld [vmem:[%s1 + $0xd98] sm:$0xff]
  %v568 = vld [vmem:[%s1 + $0xda0] sm:$0xff]
  %v569 = vld [vmem:[%s1 + $0xda8] sm:$0xff]
  %v570 = vld [vmem:[%s1 + $0xdb0] sm:$0xff]
  %v571 = vld [vmem:[%s1 + $0xdb8] sm:$0xff]
  %v572 = vld [vmem:[%s1 + $0xdc0] sm:$0xff]
  %v573 = vld [vmem:[%s1 + $0xdc8] sm:$0xff]
  %v574 = vld [vmem:[%s1 + $0xdd0] sm:$0xff]
  %v575 = vld [vmem:[%s1 + $0xdd8] sm:$0xff]
  %v576 = vld [vmem:[%s1 + $0xde0] sm:$0xff]
  %v577 = vld [vmem:[%s1 + $0xde8] sm:$0xff]
  %v578 = vld [vmem:[%s1 + $0xdf0] sm:$0xff]
  %v579 = vld [vmem:[%s1 + $0xdf8] sm:$0xff]
  %v580 = vld [vmem:[%s1 + $0xe00] sm:$0xff]
  %v581 = vld [vmem:[%s1 + $0xe08] sm:$0xff]
  %v582 = vld [vmem:[%s1 + $0xe10] sm:$0xff]
  %v583 = vld [vmem:[%s1 + $0xe18] sm:$0xff]
  %v584 = vld [vmem:[%s1 + $0xe20] sm:$0xff]
  %v585 = vld [vmem:[%s1 + $0xe28] sm:$0xff]
  %v586 = vld [vmem:[%s1 + $0xe30] sm:$0xff]
  %v587 = vld [vmem:[%s1 + $0xe38] sm:$0xff]
  %v588 = vld [vmem:[%s1 + $0xe40] sm:$0xff]
  %v589 = vld [vmem:[%s1 + $0xe48] sm:$0xff]
  %v590 = vld [vmem:[%s1 + $0xe50] sm:$0xff]
  %v591 = vld [vmem:[%s1 + $0xe58] sm:$0xff]
  %v592 = vld [vmem:[%s1 + $0xe60] sm:$0xff]
  %v593 = vld [vmem:[%s1 + $0xe68] sm:$0xff]
  %v594 = vld [vmem:[%s1 + $0xe70] sm:$0xff]
  %v595 = vld [vmem:[%s1 + $0xe78] sm:$0xff]
  %v596 = vld [vmem:[%s1 + $0xe80] sm:$0xff]
  %v597 = vld [vmem:[%s1 + $0xe88] sm:$0xff]
  %v598 = vld [vmem:[%s1 + $0xe90] sm:$0xff]
  %v599 = vld [vmem:[%s1 + $0xe98] sm:$0xff]
  %v600 = vld [vmem:[%s1 + $0xea0] sm:$0xff]
  %v601 = vld [vmem:[%s1 + $0xea8] sm:$0xff]
  %v602 = vld [vmem:[%s1 + $0xeb0] sm:$0xff]
  %v603 = vld [vmem:[%s1 + $0xeb8] sm:$0xff]
  %v604 = vld [vmem:[%s1 + $0xec0] sm:$0xff]
  %v605 = vld [vmem:[%s1 + $0xec8] sm:$0xff]
  %v606 = vld [vmem:[%s1 + $0xed0] sm:$0xff]
  %v607 = vld [vmem:[%s1 + $0xed8] sm:$0xff]
  %v608 = vld [vmem:[%s1 + $0xee0] sm:$0xff]
  %v609 = vld [vmem:[%s1 + $0xee8] sm:$0xff]
  %v610 = vld [vmem:[%s1 + $0xef0] sm:$0xff]
  %v611 = vld [vmem:[%s1 + $0xef8] sm:$0xff]
  %v612 = vld [vmem:[%s1 + $0xf00] sm:$0xff]
  %v613 = vld [vmem:[%s1 + $0xf08] sm:$0xff]
  %v614 = vld [vmem:[%s1 + $0xf10] sm:$0xff]
  %v615 = vld [vmem:[%s1 + $0xf18] sm:$0xff]
  %v616 = vld [vmem:[%s1 + $0xf20] sm:$0xff]
  %v617 = vld [vmem:[%s1 + $0xf28] sm:$0xff]
  %v618 = vld [vmem:[%s1 + $0xf30] sm:$0xff]
  %v619 = vld [vmem:[%s1 + $0xf38] sm:$0xff]
  %v620 = vld [vmem:[%s1 + $0xf40] sm:$0xff]
  %v621 = vld [vmem:[%s1 + $0xf48] sm:$0xff]
  %v622 = vld [vmem:[%s1 + $0xf50] sm:$0xff]
  %v623 = vld [vmem:[%s1 + $0xf58] sm:$0xff]
  %v624 = vld [vmem:[%s1 + $0xf60] sm:$0xff]
  %v625 = vld [vmem:[%s1 + $0xf68] sm:$0xff]
  %v626 = vld [vmem:[%s1 + $0xf70] sm:$0xff]
  %v627 = vld [vmem:[%s1 + $0xf78] sm:$0xff]
  %v628 = vld [vmem:[%s1 + $0xf80] sm:$0xff]
  %v629 = vld [vmem:[%s1 + $0xf88] sm:$0xff]
  %v630 = vld [vmem:[%s1 + $0xf90] sm:$0xff]
  %v631 = vld [vmem:[%s1 + $0xf98] sm:$0xff]
  %v632 = vld [vmem:[%s1 + $0xfa0] sm:$0xff]
  %v633 = vld [vmem:[%s1 + $0xfa8] sm:$0xff]
  %v634 = vld [vmem:[%s1 + $0xfb0] sm:$0xff]
  %v635 = vld [vmem:[%s1 + $0xfb8] sm:$0xff]
  %v636 = vld [vmem:[%s1 + $0xfc0] sm:$0xff]
  %v637 = vld [vmem:[%s1 + $0xfc8] sm:$0xff]
  %v638 = vld [vmem:[%s1 + $0xfd0] sm:$0xff]
  %v639 = vld [vmem:[%s1 + $0xfd8] sm:$0xff]
  %v640 = vld [vmem:[%s1 + $0xfe0] sm:$0xff]
  %v641 = vld [vmem:[%s1 + $0xfe8] sm:$0xff]
  %v642 = vld [vmem:[%s1 + $0xff0] sm:$0xff]
  %v643 = vld [vmem:[%s1 + $0xff8] sm:$0xff]
  %v644 = vld [vmem:[%s2] sm:$0x3]
  %v646 = vperm.slane %v644, 0
  %v647 = vperm.slane %v644, 1
  %650 = vmatpush.msra.mxu0 %v162
  %651 = vmatpush.msra.mxu0 %v160
  %652 = vmatpush.msra.mxu0 %v158
  %653 = vmatpush.msra.mxu0 %v156
  %654 = vmatpush.msra.mxu0 %v154
  %655 = vmatpush.msra.mxu0 %v152
  %656 = vmatpush.msra.mxu0 %v150
  %657 = vmatpush.msra.mxu0 %v148
  %658 = vmatpush.msra.mxu0 %v146
  %659 = vmatpush.msra.mxu0 %v144
  %660 = vmatpush.msra.mxu0 %v142
  %661 = vmatpush.msra.mxu0 %v140
  %662 = vmatpush.msra.mxu0 %v138
  %663 = vmatpush.msra.mxu0 %v136
  %664 = vmatpush.msra.mxu0 %v134
  %665 = vmatpush.msra.mxu0 %v132
  %666 = vmatmul.f32.gmra.mxu0 %v20
  %v667 = vpop.f32.mrf.mxu0
  %v668 = vadd.f32 %v646, %v667
  %669 = vmatmul.f32.gmra.mxu0 %v36
  %v670 = vpop.f32.mrf.mxu0
  %v671 = vadd.f32 %v646, %v670
  %672 = vmatmul.f32.gmra.mxu0 %v52
  %v673 = vpop.f32.mrf.mxu0
  %v674 = vadd.f32 %v646, %v673
  %675 = vmatmul.f32.gmra.mxu0 %v68
  %v676 = vpop.f32.mrf.mxu0
  %v677 = vadd.f32 %v646, %v676
  %678 = vmatmul.f32.gmra.mxu0 %v84
  %v679 = vpop.f32.mrf.mxu0
  %v680 = vadd.f32 %v646, %v679
  %681 = vmatmul.f32.gmra.mxu0 %v100
  %v682 = vpop.f32.mrf.mxu0
  %v683 = vadd.f32 %v646, %v682
  %684 = vmatmul.f32.gmra.mxu0 %v116
  %v685 = vpop.f32.mrf.mxu0
  %v686 = vadd.f32 %v646, %v685
  %687 = vdwg.mxu0
  %688 = vmatpush.msra.mxu0 %v194
  %689 = vmatpush.msra.mxu0 %v192
  %690 = vmatpush.msra.mxu0 %v190
  %691 = vmatpush.msra.mxu0 %v188
  %692 = vmatpush.msra.mxu0 %v186
  %693 = vmatpush.msra.mxu0 %v184
  %694 = vmatpush.msra.mxu0 %v182
  %695 = vmatpush.msra.mxu0 %v180
  %696 = vmatpush.msra.mxu0 %v178
  %697 = vmatpush.msra.mxu0 %v176
  %698 = vmatpush.msra.mxu0 %v174
  %699 = vmatpush.msra.mxu0 %v172
  %700 = vmatpush.msra.mxu0 %v170
  %701 = vmatpush.msra.mxu0 %v168
  %702 = vmatpush.msra.mxu0 %v166
  %703 = vmatpush.msra.mxu0 %v164
  %704 = vmatmul.f32.gmra.mxu0 %v21
  %v705 = vpop.f32.mrf.mxu0
  %v706 = vadd.f32 %v668, %v705
  %707 = vmatmul.f32.gmra.mxu0 %v37
  %v708 = vpop.f32.mrf.mxu0
  %v709 = vadd.f32 %v671, %v708
  %710 = vmatmul.f32.gmra.mxu0 %v53
  %v711 = vpop.f32.mrf.mxu0
  %v712 = vadd.f32 %v674, %v711
  %713 = vmatmul.f32.gmra.mxu0 %v69
  %v714 = vpop.f32.mrf.mxu0
  %v715 = vadd.f32 %v677, %v714
  %716 = vmatmul.f32.gmra.mxu0 %v85
  %v717 = vpop.f32.mrf.mxu0
  %v718 = vadd.f32 %v680, %v717
  %719 = vmatmul.f32.gmra.mxu0 %v101
  %v720 = vpop.f32.mrf.mxu0
  %v721 = vadd.f32 %v683, %v720
  %722 = vmatmul.f32.gmra.mxu0 %v117
  %v723 = vpop.f32.mrf.mxu0
  %v724 = vadd.f32 %v686, %v723
  %725 = vdwg.mxu0
  %726 = vmatpush.msra.mxu0 %v226
  %727 = vmatpush.msra.mxu0 %v224
  %728 = vmatpush.msra.mxu0 %v222
  %729 = vmatpush.msra.mxu0 %v220
  %730 = vmatpush.msra.mxu0 %v218
  %731 = vmatpush.msra.mxu0 %v216
  %732 = vmatpush.msra.mxu0 %v214
  %733 = vmatpush.msra.mxu0 %v212
  %734 = vmatpush.msra.mxu0 %v210
  %735 = vmatpush.msra.mxu0 %v208
  %736 = vmatpush.msra.mxu0 %v206
  %737 = vmatpush.msra.mxu0 %v204
  %738 = vmatpush.msra.mxu0 %v202
  %739 = vmatpush.msra.mxu0 %v200
  %740 = vmatpush.msra.mxu0 %v198
  %741 = vmatpush.msra.mxu0 %v196
  %742 = vmatmul.f32.gmra.mxu0 %v22
  %v743 = vpop.f32.mrf.mxu0
  %v744 = vadd.f32 %v706, %v743
  %745 = vmatmul.f32.gmra.mxu0 %v38
  %v746 = vpop.f32.mrf.mxu0
  %v747 = vadd.f32 %v709, %v746
  %748 = vmatmul.f32.gmra.mxu0 %v54
  %v749 = vpop.f32.mrf.mxu0
  %v750 = vadd.f32 %v712, %v749
  %751 = vmatmul.f32.gmra.mxu0 %v70
  %v752 = vpop.f32.mrf.mxu0
  %v753 = vadd.f32 %v715, %v752
  %754 = vmatmul.f32.gmra.mxu0 %v86
  %v755 = vpop.f32.mrf.mxu0
  %v756 = vadd.f32 %v718, %v755
  %757 = vmatmul.f32.gmra.mxu0 %v102
  %v758 = vpop.f32.mrf.mxu0
  %v759 = vadd.f32 %v721, %v758
  %760 = vmatmul.f32.gmra.mxu0 %v118
  %v761 = vpop.f32.mrf.mxu0
  %v762 = vadd.f32 %v724, %v761
  %763 = vdwg.mxu0
  %764 = vmatpush.msra.mxu0 %v258
  %765 = vmatpush.msra.mxu0 %v256
  %766 = vmatpush.msra.mxu0 %v254
  %767 = vmatpush.msra.mxu0 %v252
  %768 = vmatpush.msra.mxu0 %v250
  %769 = vmatpush.msra.mxu0 %v248
  %770 = vmatpush.msra.mxu0 %v246
  %771 = vmatpush.msra.mxu0 %v244
  %772 = vmatpush.msra.mxu0 %v242
  %773 = vmatpush.msra.mxu0 %v240
  %774 = vmatpush.msra.mxu0 %v238
  %775 = vmatpush.msra.mxu0 %v236
  %776 = vmatpush.msra.mxu0 %v234
  %777 = vmatpush.msra.mxu0 %v232
  %778 = vmatpush.msra.mxu0 %v230
  %779 = vmatpush.msra.mxu0 %v228
  %780 = vmatmul.f32.gmra.mxu0 %v23
  %v781 = vpop.f32.mrf.mxu0
  %v782 = vadd.f32 %v744, %v781
  %783 = vmatmul.f32.gmra.mxu0 %v39
  %v784 = vpop.f32.mrf.mxu0
  %v785 = vadd.f32 %v747, %v784
  %786 = vmatmul.f32.gmra.mxu0 %v55
  %v787 = vpop.f32.mrf.mxu0
  %v788 = vadd.f32 %v750, %v787
  %789 = vmatmul.f32.gmra.mxu0 %v71
  %v790 = vpop.f32.mrf.mxu0
  %v791 = vadd.f32 %v753, %v790
  %792 = vmatmul.f32.gmra.mxu0 %v87
  %v793 = vpop.f32.mrf.mxu0
  %v794 = vadd.f32 %v756, %v793
  %795 = vmatmul.f32.gmra.mxu0 %v103
  %v796 = vpop.f32.mrf.mxu0
  %v797 = vadd.f32 %v759, %v796
  %798 = vmatmul.f32.gmra.mxu0 %v119
  %v799 = vpop.f32.mrf.mxu0
  %v800 = vadd.f32 %v762, %v799
  %801 = vdwg.mxu0
  %802 = vmatpush.msra.mxu0 %v290
  %803 = vmatpush.msra.mxu0 %v288
  %804 = vmatpush.msra.mxu0 %v286
  %805 = vmatpush.msra.mxu0 %v284
  %806 = vmatpush.msra.mxu0 %v282
  %807 = vmatpush.msra.mxu0 %v280
  %808 = vmatpush.msra.mxu0 %v278
  %809 = vmatpush.msra.mxu0 %v276
  %810 = vmatpush.msra.mxu0 %v274
  %811 = vmatpush.msra.mxu0 %v272
  %812 = vmatpush.msra.mxu0 %v270
  %813 = vmatpush.msra.mxu0 %v268
  %814 = vmatpush.msra.mxu0 %v266
  %815 = vmatpush.msra.mxu0 %v264
  %816 = vmatpush.msra.mxu0 %v262
  %817 = vmatpush.msra.mxu0 %v260
  %818 = vmatmul.f32.gmra.mxu0 %v24
  %v819 = vpop.f32.mrf.mxu0
  %v820 = vadd.f32 %v782, %v819
  %821 = vmatmul.f32.gmra.mxu0 %v40
  %v822 = vpop.f32.mrf.mxu0
  %v823 = vadd.f32 %v785, %v822
  %824 = vmatmul.f32.gmra.mxu0 %v56
  %v825 = vpop.f32.mrf.mxu0
  %v826 = vadd.f32 %v788, %v825
  %827 = vmatmul.f32.gmra.mxu0 %v72
  %v828 = vpop.f32.mrf.mxu0
  %v829 = vadd.f32 %v791, %v828
  %830 = vmatmul.f32.gmra.mxu0 %v88
  %v831 = vpop.f32.mrf.mxu0
  %v832 = vadd.f32 %v794, %v831
  %833 = vmatmul.f32.gmra.mxu0 %v104
  %v834 = vpop.f32.mrf.mxu0
  %v835 = vadd.f32 %v797, %v834
  %836 = vmatmul.f32.gmra.mxu0 %v120
  %v837 = vpop.f32.mrf.mxu0
  %v838 = vadd.f32 %v800, %v837
  %839 = vdwg.mxu0
  %840 = vmatpush.msra.mxu0 %v322
  %841 = vmatpush.msra.mxu0 %v320
  %842 = vmatpush.msra.mxu0 %v318
  %843 = vmatpush.msra.mxu0 %v316
  %844 = vmatpush.msra.mxu0 %v314
  %845 = vmatpush.msra.mxu0 %v312
  %846 = vmatpush.msra.mxu0 %v310
  %847 = vmatpush.msra.mxu0 %v308
  %848 = vmatpush.msra.mxu0 %v306
  %849 = vmatpush.msra.mxu0 %v304
  %850 = vmatpush.msra.mxu0 %v302
  %851 = vmatpush.msra.mxu0 %v300
  %852 = vmatpush.msra.mxu0 %v298
  %853 = vmatpush.msra.mxu0 %v296
  %854 = vmatpush.msra.mxu0 %v294
  %855 = vmatpush.msra.mxu0 %v292
  %856 = vmatmul.f32.gmra.mxu0 %v25
  %v857 = vpop.f32.mrf.mxu0
  %v858 = vadd.f32 %v820, %v857
  %859 = vmatmul.f32.gmra.mxu0 %v41
  %v860 = vpop.f32.mrf.mxu0
  %v861 = vadd.f32 %v823, %v860
  %862 = vmatmul.f32.gmra.mxu0 %v57
  %v863 = vpop.f32.mrf.mxu0
  %v864 = vadd.f32 %v826, %v863
  %865 = vmatmul.f32.gmra.mxu0 %v73
  %v866 = vpop.f32.mrf.mxu0
  %v867 = vadd.f32 %v829, %v866
  %868 = vmatmul.f32.gmra.mxu0 %v89
  %v869 = vpop.f32.mrf.mxu0
  %v870 = vadd.f32 %v832, %v869
  %871 = vmatmul.f32.gmra.mxu0 %v105
  %v872 = vpop.f32.mrf.mxu0
  %v873 = vadd.f32 %v835, %v872
  %874 = vmatmul.f32.gmra.mxu0 %v121
  %v875 = vpop.f32.mrf.mxu0
  %v876 = vadd.f32 %v838, %v875
  %877 = vdwg.mxu0
  %878 = vmatpush.msra.mxu0 %v354
  %879 = vmatpush.msra.mxu0 %v352
  %880 = vmatpush.msra.mxu0 %v350
  %881 = vmatpush.msra.mxu0 %v348
  %882 = vmatpush.msra.mxu0 %v346
  %883 = vmatpush.msra.mxu0 %v344
  %884 = vmatpush.msra.mxu0 %v342
  %885 = vmatpush.msra.mxu0 %v340
  %886 = vmatpush.msra.mxu0 %v338
  %887 = vmatpush.msra.mxu0 %v336
  %888 = vmatpush.msra.mxu0 %v334
  %889 = vmatpush.msra.mxu0 %v332
  %890 = vmatpush.msra.mxu0 %v330
  %891 = vmatpush.msra.mxu0 %v328
  %892 = vmatpush.msra.mxu0 %v326
  %893 = vmatpush.msra.mxu0 %v324
  %894 = vmatmul.f32.gmra.mxu0 %v26
  %v895 = vpop.f32.mrf.mxu0
  %v896 = vadd.f32 %v858, %v895
  %897 = vmatmul.f32.gmra.mxu0 %v42
  %v898 = vpop.f32.mrf.mxu0
  %v899 = vadd.f32 %v861, %v898
  %900 = vmatmul.f32.gmra.mxu0 %v58
  %v901 = vpop.f32.mrf.mxu0
  %v902 = vadd.f32 %v864, %v901
  %903 = vmatmul.f32.gmra.mxu0 %v74
  %v904 = vpop.f32.mrf.mxu0
  %v905 = vadd.f32 %v867, %v904
  %906 = vmatmul.f32.gmra.mxu0 %v90
  %v907 = vpop.f32.mrf.mxu0
  %v908 = vadd.f32 %v870, %v907
  %909 = vmatmul.f32.gmra.mxu0 %v106
  %v910 = vpop.f32.mrf.mxu0
  %v911 = vadd.f32 %v873, %v910
  %912 = vmatmul.f32.gmra.mxu0 %v122
  %v913 = vpop.f32.mrf.mxu0
  %v914 = vadd.f32 %v876, %v913
  %915 = vdwg.mxu0
  %916 = vmatpush.msra.mxu0 %v386
  %917 = vmatpush.msra.mxu0 %v384
  %918 = vmatpush.msra.mxu0 %v382
  %919 = vmatpush.msra.mxu0 %v380
  %920 = vmatpush.msra.mxu0 %v378
  %921 = vmatpush.msra.mxu0 %v376
  %922 = vmatpush.msra.mxu0 %v374
  %923 = vmatpush.msra.mxu0 %v372
  %924 = vmatpush.msra.mxu0 %v370
  %925 = vmatpush.msra.mxu0 %v368
  %926 = vmatpush.msra.mxu0 %v366
  %927 = vmatpush.msra.mxu0 %v364
  %928 = vmatpush.msra.mxu0 %v362
  %929 = vmatpush.msra.mxu0 %v360
  %930 = vmatpush.msra.mxu0 %v358
  %931 = vmatpush.msra.mxu0 %v356
  %932 = vmatmul.f32.gmra.mxu0 %v27
  %v933 = vpop.f32.mrf.mxu0
  %v934 = vadd.f32 %v896, %v933
  %935 = vmatmul.f32.gmra.mxu0 %v43
  %v936 = vpop.f32.mrf.mxu0
  %v937 = vadd.f32 %v899, %v936
  %938 = vmatmul.f32.gmra.mxu0 %v59
  %v939 = vpop.f32.mrf.mxu0
  %v940 = vadd.f32 %v902, %v939
  %941 = vmatmul.f32.gmra.mxu0 %v75
  %v942 = vpop.f32.mrf.mxu0
  %v943 = vadd.f32 %v905, %v942
  %944 = vmatmul.f32.gmra.mxu0 %v91
  %v945 = vpop.f32.mrf.mxu0
  %v946 = vadd.f32 %v908, %v945
  %947 = vmatmul.f32.gmra.mxu0 %v107
  %v948 = vpop.f32.mrf.mxu0
  %v949 = vadd.f32 %v911, %v948
  %950 = vmatmul.f32.gmra.mxu0 %v123
  %v951 = vpop.f32.mrf.mxu0
  %v952 = vadd.f32 %v914, %v951
  %953 = vdwg.mxu0
  %954 = vmatpush.msra.mxu0 %v418
  %955 = vmatpush.msra.mxu0 %v416
  %956 = vmatpush.msra.mxu0 %v414
  %957 = vmatpush.msra.mxu0 %v412
  %958 = vmatpush.msra.mxu0 %v410
  %959 = vmatpush.msra.mxu0 %v408
  %960 = vmatpush.msra.mxu0 %v406
  %961 = vmatpush.msra.mxu0 %v404
  %962 = vmatpush.msra.mxu0 %v402
  %963 = vmatpush.msra.mxu0 %v400
  %964 = vmatpush.msra.mxu0 %v398
  %965 = vmatpush.msra.mxu0 %v396
  %966 = vmatpush.msra.mxu0 %v394
  %967 = vmatpush.msra.mxu0 %v392
  %968 = vmatpush.msra.mxu0 %v390
  %969 = vmatpush.msra.mxu0 %v388
  %970 = vmatmul.f32.gmra.mxu0 %v28
  %v971 = vpop.f32.mrf.mxu0
  %v972 = vadd.f32 %v934, %v971
  %973 = vmatmul.f32.gmra.mxu0 %v44
  %v974 = vpop.f32.mrf.mxu0
  %v975 = vadd.f32 %v937, %v974
  %976 = vmatmul.f32.gmra.mxu0 %v60
  %v977 = vpop.f32.mrf.mxu0
  %v978 = vadd.f32 %v940, %v977
  %979 = vmatmul.f32.gmra.mxu0 %v76
  %v980 = vpop.f32.mrf.mxu0
  %v981 = vadd.f32 %v943, %v980
  %982 = vmatmul.f32.gmra.mxu0 %v92
  %v983 = vpop.f32.mrf.mxu0
  %v984 = vadd.f32 %v946, %v983
  %985 = vmatmul.f32.gmra.mxu0 %v108
  %v986 = vpop.f32.mrf.mxu0
  %v987 = vadd.f32 %v949, %v986
  %988 = vmatmul.f32.gmra.mxu0 %v124
  %v989 = vpop.f32.mrf.mxu0
  %v990 = vadd.f32 %v952, %v989
  %991 = vdwg.mxu0
  %992 = vmatpush.msra.mxu0 %v450
  %993 = vmatpush.msra.mxu0 %v448
  %994 = vmatpush.msra.mxu0 %v446
  %995 = vmatpush.msra.mxu0 %v444
  %996 = vmatpush.msra.mxu0 %v442
  %997 = vmatpush.msra.mxu0 %v440
  %998 = vmatpush.msra.mxu0 %v438
  %999 = vmatpush.msra.mxu0 %v436
  %1000 = vmatpush.msra.mxu0 %v434
  %1001 = vmatpush.msra.mxu0 %v432
  %1002 = vmatpush.msra.mxu0 %v430
  %1003 = vmatpush.msra.mxu0 %v428
  %1004 = vmatpush.msra.mxu0 %v426
  %1005 = vmatpush.msra.mxu0 %v424
  %1006 = vmatpush.msra.mxu0 %v422
  %1007 = vmatpush.msra.mxu0 %v420
  %1008 = vmatmul.f32.gmra.mxu0 %v29
  %v1009 = vpop.f32.mrf.mxu0
  %v1010 = vadd.f32 %v972, %v1009
  %1011 = vmatmul.f32.gmra.mxu0 %v45
  %v1012 = vpop.f32.mrf.mxu0
  %v1013 = vadd.f32 %v975, %v1012
  %1014 = vmatmul.f32.gmra.mxu0 %v61
  %v1015 = vpop.f32.mrf.mxu0
  %v1016 = vadd.f32 %v978, %v1015
  %1017 = vmatmul.f32.gmra.mxu0 %v77
  %v1018 = vpop.f32.mrf.mxu0
  %v1019 = vadd.f32 %v981, %v1018
  %1020 = vmatmul.f32.gmra.mxu0 %v93
  %v1021 = vpop.f32.mrf.mxu0
  %v1022 = vadd.f32 %v984, %v1021
  %1023 = vmatmul.f32.gmra.mxu0 %v109
  %v1024 = vpop.f32.mrf.mxu0
  %v1025 = vadd.f32 %v987, %v1024
  %1026 = vmatmul.f32.gmra.mxu0 %v125
  %v1027 = vpop.f32.mrf.mxu0
  %v1028 = vadd.f32 %v990, %v1027
  %1029 = vdwg.mxu0
  %1030 = vmatpush.msra.mxu0 %v482
  %1031 = vmatpush.msra.mxu0 %v480
  %1032 = vmatpush.msra.mxu0 %v478
  %1033 = vmatpush.msra.mxu0 %v476
  %1034 = vmatpush.msra.mxu0 %v474
  %1035 = vmatpush.msra.mxu0 %v472
  %1036 = vmatpush.msra.mxu0 %v470
  %1037 = vmatpush.msra.mxu0 %v468
  %1038 = vmatpush.msra.mxu0 %v466
  %1039 = vmatpush.msra.mxu0 %v464
  %1040 = vmatpush.msra.mxu0 %v462
  %1041 = vmatpush.msra.mxu0 %v460
  %1042 = vmatpush.msra.mxu0 %v458
  %1043 = vmatpush.msra.mxu0 %v456
  %1044 = vmatpush.msra.mxu0 %v454
  %1045 = vmatpush.msra.mxu0 %v452
  %1046 = vmatmul.f32.gmra.mxu0 %v30
  %v1047 = vpop.f32.mrf.mxu0
  %v1048 = vadd.f32 %v1010, %v1047
  %1049 = vmatmul.f32.gmra.mxu0 %v46
  %v1050 = vpop.f32.mrf.mxu0
  %v1051 = vadd.f32 %v1013, %v1050
  %1052 = vmatmul.f32.gmra.mxu0 %v62
  %v1053 = vpop.f32.mrf.mxu0
  %v1054 = vadd.f32 %v1016, %v1053
  %1055 = vmatmul.f32.gmra.mxu0 %v78
  %v1056 = vpop.f32.mrf.mxu0
  %v1057 = vadd.f32 %v1019, %v1056
  %1058 = vmatmul.f32.gmra.mxu0 %v94
  %v1059 = vpop.f32.mrf.mxu0
  %v1060 = vadd.f32 %v1022, %v1059
  %1061 = vmatmul.f32.gmra.mxu0 %v110
  %v1062 = vpop.f32.mrf.mxu0
  %v1063 = vadd.f32 %v1025, %v1062
  %1064 = vmatmul.f32.gmra.mxu0 %v126
  %v1065 = vpop.f32.mrf.mxu0
  %v1066 = vadd.f32 %v1028, %v1065
  %1067 = vdwg.mxu0
  %1068 = vmatpush.msra.mxu0 %v514
  %1069 = vmatpush.msra.mxu0 %v512
  %1070 = vmatpush.msra.mxu0 %v510
  %1071 = vmatpush.msra.mxu0 %v508
  %1072 = vmatpush.msra.mxu0 %v506
  %1073 = vmatpush.msra.mxu0 %v504
  %1074 = vmatpush.msra.mxu0 %v502
  %1075 = vmatpush.msra.mxu0 %v500
  %1076 = vmatpush.msra.mxu0 %v498
  %1077 = vmatpush.msra.mxu0 %v496
  %1078 = vmatpush.msra.mxu0 %v494
  %1079 = vmatpush.msra.mxu0 %v492
  %1080 = vmatpush.msra.mxu0 %v490
  %1081 = vmatpush.msra.mxu0 %v488
  %1082 = vmatpush.msra.mxu0 %v486
  %1083 = vmatpush.msra.mxu0 %v484
  %1084 = vmatmul.f32.gmra.mxu0 %v31
  %v1085 = vpop.f32.mrf.mxu0
  %v1086 = vadd.f32 %v1048, %v1085
  %1087 = vmatmul.f32.gmra.mxu0 %v47
  %v1088 = vpop.f32.mrf.mxu0
  %v1089 = vadd.f32 %v1051, %v1088
  %1090 = vmatmul.f32.gmra.mxu0 %v63
  %v1091 = vpop.f32.mrf.mxu0
  %v1092 = vadd.f32 %v1054, %v1091
  %1093 = vmatmul.f32.gmra.mxu0 %v79
  %v1094 = vpop.f32.mrf.mxu0
  %v1095 = vadd.f32 %v1057, %v1094
  %1096 = vmatmul.f32.gmra.mxu0 %v95
  %v1097 = vpop.f32.mrf.mxu0
  %v1098 = vadd.f32 %v1060, %v1097
  %1099 = vmatmul.f32.gmra.mxu0 %v111
  %v1100 = vpop.f32.mrf.mxu0
  %v1101 = vadd.f32 %v1063, %v1100
  %1102 = vmatmul.f32.gmra.mxu0 %v127
  %v1103 = vpop.f32.mrf.mxu0
  %v1104 = vadd.f32 %v1066, %v1103
  %1105 = vdwg.mxu0
  %1106 = vmatpush.msra.mxu0 %v546
  %1107 = vmatpush.msra.mxu0 %v544
  %1108 = vmatpush.msra.mxu0 %v542
  %1109 = vmatpush.msra.mxu0 %v540
  %1110 = vmatpush.msra.mxu0 %v538
  %1111 = vmatpush.msra.mxu0 %v536
  %1112 = vmatpush.msra.mxu0 %v534
  %1113 = vmatpush.msra.mxu0 %v532
  %1114 = vmatpush.msra.mxu0 %v530
  %1115 = vmatpush.msra.mxu0 %v528
  %1116 = vmatpush.msra.mxu0 %v526
  %1117 = vmatpush.msra.mxu0 %v524
  %1118 = vmatpush.msra.mxu0 %v522
  %1119 = vmatpush.msra.mxu0 %v520
  %1120 = vmatpush.msra.mxu0 %v518
  %1121 = vmatpush.msra.mxu0 %v516
  %1122 = vmatmul.f32.gmra.mxu0 %v32
  %v1123 = vpop.f32.mrf.mxu0
  %v1124 = vadd.f32 %v1086, %v1123
  %1125 = vmatmul.f32.gmra.mxu0 %v48
  %v1126 = vpop.f32.mrf.mxu0
  %v1127 = vadd.f32 %v1089, %v1126
  %1128 = vmatmul.f32.gmra.mxu0 %v64
  %v1129 = vpop.f32.mrf.mxu0
  %v1130 = vadd.f32 %v1092, %v1129
  %1131 = vmatmul.f32.gmra.mxu0 %v80
  %v1132 = vpop.f32.mrf.mxu0
  %v1133 = vadd.f32 %v1095, %v1132
  %1134 = vmatmul.f32.gmra.mxu0 %v96
  %v1135 = vpop.f32.mrf.mxu0
  %v1136 = vadd.f32 %v1098, %v1135
  %1137 = vmatmul.f32.gmra.mxu0 %v112
  %v1138 = vpop.f32.mrf.mxu0
  %v1139 = vadd.f32 %v1101, %v1138
  %1140 = vmatmul.f32.gmra.mxu0 %v128
  %v1141 = vpop.f32.mrf.mxu0
  %v1142 = vadd.f32 %v1104, %v1141
  %1143 = vdwg.mxu0
  %1144 = vmatpush.msra.mxu0 %v578
  %1145 = vmatpush.msra.mxu0 %v576
  %1146 = vmatpush.msra.mxu0 %v574
  %1147 = vmatpush.msra.mxu0 %v572
  %1148 = vmatpush.msra.mxu0 %v570
  %1149 = vmatpush.msra.mxu0 %v568
  %1150 = vmatpush.msra.mxu0 %v566
  %1151 = vmatpush.msra.mxu0 %v564
  %1152 = vmatpush.msra.mxu0 %v562
  %1153 = vmatpush.msra.mxu0 %v560
  %1154 = vmatpush.msra.mxu0 %v558
  %1155 = vmatpush.msra.mxu0 %v556
  %1156 = vmatpush.msra.mxu0 %v554
  %1157 = vmatpush.msra.mxu0 %v552
  %1158 = vmatpush.msra.mxu0 %v550
  %1159 = vmatpush.msra.mxu0 %v548
  %1160 = vmatmul.f32.gmra.mxu0 %v33
  %v1161 = vpop.f32.mrf.mxu0
  %v1162 = vadd.f32 %v1124, %v1161
  %1163 = vmatmul.f32.gmra.mxu0 %v49
  %v1164 = vpop.f32.mrf.mxu0
  %v1165 = vadd.f32 %v1127, %v1164
  %1166 = vmatmul.f32.gmra.mxu0 %v65
  %v1167 = vpop.f32.mrf.mxu0
  %v1168 = vadd.f32 %v1130, %v1167
  %1169 = vmatmul.f32.gmra.mxu0 %v81
  %v1170 = vpop.f32.mrf.mxu0
  %v1171 = vadd.f32 %v1133, %v1170
  %1172 = vmatmul.f32.gmra.mxu0 %v97
  %v1173 = vpop.f32.mrf.mxu0
  %v1174 = vadd.f32 %v1136, %v1173
  %1175 = vmatmul.f32.gmra.mxu0 %v113
  %v1176 = vpop.f32.mrf.mxu0
  %v1177 = vadd.f32 %v1139, %v1176
  %1178 = vmatmul.f32.gmra.mxu0 %v129
  %v1179 = vpop.f32.mrf.mxu0
  %v1180 = vadd.f32 %v1142, %v1179
  %1181 = vdwg.mxu0
  %1182 = vmatpush.msra.mxu0 %v610
  %1183 = vmatpush.msra.mxu0 %v608
  %1184 = vmatpush.msra.mxu0 %v606
  %1185 = vmatpush.msra.mxu0 %v604
  %1186 = vmatpush.msra.mxu0 %v602
  %1187 = vmatpush.msra.mxu0 %v600
  %1188 = vmatpush.msra.mxu0 %v598
  %1189 = vmatpush.msra.mxu0 %v596
  %1190 = vmatpush.msra.mxu0 %v594
  %1191 = vmatpush.msra.mxu0 %v592
  %1192 = vmatpush.msra.mxu0 %v590
  %1193 = vmatpush.msra.mxu0 %v588
  %1194 = vmatpush.msra.mxu0 %v586
  %1195 = vmatpush.msra.mxu0 %v584
  %1196 = vmatpush.msra.mxu0 %v582
  %1197 = vmatpush.msra.mxu0 %v580
  %1198 = vmatmul.f32.gmra.mxu0 %v34
  %v1199 = vpop.f32.mrf.mxu0
  %v1200 = vadd.f32 %v1162, %v1199
  %1201 = vmatmul.f32.gmra.mxu0 %v50
  %v1202 = vpop.f32.mrf.mxu0
  %v1203 = vadd.f32 %v1165, %v1202
  %1204 = vmatmul.f32.gmra.mxu0 %v66
  %v1205 = vpop.f32.mrf.mxu0
  %v1206 = vadd.f32 %v1168, %v1205
  %1207 = vmatmul.f32.gmra.mxu0 %v82
  %v1208 = vpop.f32.mrf.mxu0
  %v1209 = vadd.f32 %v1171, %v1208
  %1210 = vmatmul.f32.gmra.mxu0 %v98
  %v1211 = vpop.f32.mrf.mxu0
  %v1212 = vadd.f32 %v1174, %v1211
  %1213 = vmatmul.f32.gmra.mxu0 %v114
  %v1214 = vpop.f32.mrf.mxu0
  %v1215 = vadd.f32 %v1177, %v1214
  %1216 = vmatmul.f32.gmra.mxu0 %v130
  %v1217 = vpop.f32.mrf.mxu0
  %v1218 = vadd.f32 %v1180, %v1217
  %1219 = vdwg.mxu0
  %1220 = vmatpush.msra.mxu0 %v642
  %1221 = vmatpush.msra.mxu0 %v640
  %1222 = vmatpush.msra.mxu0 %v638
  %1223 = vmatpush.msra.mxu0 %v636
  %1224 = vmatpush.msra.mxu0 %v634
  %1225 = vmatpush.msra.mxu0 %v632
  %1226 = vmatpush.msra.mxu0 %v630
  %1227 = vmatpush.msra.mxu0 %v628
  %1228 = vmatpush.msra.mxu0 %v626
  %1229 = vmatpush.msra.mxu0 %v624
  %1230 = vmatpush.msra.mxu0 %v622
  %1231 = vmatpush.msra.mxu0 %v620
  %1232 = vmatpush.msra.mxu0 %v618
  %1233 = vmatpush.msra.mxu0 %v616
  %1234 = vmatpush.msra.mxu0 %v614
  %1235 = vmatpush.msra.mxu0 %v612
  %1236 = vmatmul.f32.gmra.mxu0 %v35
  %v1237 = vpop.f32.mrf.mxu0
  %v1238 = vadd.f32 %v1200, %v1237
  %1239 = vmatmul.f32.gmra.mxu0 %v51
  %v1240 = vpop.f32.mrf.mxu0
  %v1241 = vadd.f32 %v1203, %v1240
  %1242 = vmatmul.f32.gmra.mxu0 %v67
  %v1243 = vpop.f32.mrf.mxu0
  %v1244 = vadd.f32 %v1206, %v1243
  %1245 = vmatmul.f32.gmra.mxu0 %v83
  %v1246 = vpop.f32.mrf.mxu0
  %v1247 = vadd.f32 %v1209, %v1246
  %1248 = vmatmul.f32.gmra.mxu0 %v99
  %v1249 = vpop.f32.mrf.mxu0
  %v1250 = vadd.f32 %v1212, %v1249
  %1251 = vmatmul.f32.gmra.mxu0 %v115
  %v1252 = vpop.f32.mrf.mxu0
  %v1253 = vadd.f32 %v1215, %v1252
  %1254 = vmatmul.f32.gmra.mxu0 %v131
  %v1255 = vpop.f32.mrf.mxu0
  %v1256 = vadd.f32 %v1218, %v1255
  %1257 = vdwg.mxu0
  %1258 = vmatpush.msra.mxu0 %v163
  %1259 = vmatpush.msra.mxu0 %v161
  %1260 = vmatpush.msra.mxu0 %v159
  %1261 = vmatpush.msra.mxu0 %v157
  %1262 = vmatpush.msra.mxu0 %v155
  %1263 = vmatpush.msra.mxu0 %v153
  %1264 = vmatpush.msra.mxu0 %v151
  %1265 = vmatpush.msra.mxu0 %v149
  %1266 = vmatpush.msra.mxu0 %v147
  %1267 = vmatpush.msra.mxu0 %v145
  %1268 = vmatpush.msra.mxu0 %v143
  %1269 = vmatpush.msra.mxu0 %v141
  %1270 = vmatpush.msra.mxu0 %v139
  %1271 = vmatpush.msra.mxu0 %v137
  %1272 = vmatpush.msra.mxu0 %v135
  %1273 = vmatpush.msra.mxu0 %v133
  %1274 = vmatmul.f32.gmra.mxu0 %v20
  %v1275 = vpop.f32.mrf.mxu0
  %v1276 = vadd.f32 %v647, %v1275
  %1277 = vmatmul.f32.gmra.mxu0 %v36
  %v1278 = vpop.f32.mrf.mxu0
  %v1279 = vadd.f32 %v647, %v1278
  %1280 = vmatmul.f32.gmra.mxu0 %v52
  %v1281 = vpop.f32.mrf.mxu0
  %v1282 = vadd.f32 %v647, %v1281
  %1283 = vmatmul.f32.gmra.mxu0 %v68
  %v1284 = vpop.f32.mrf.mxu0
  %v1285 = vadd.f32 %v647, %v1284
  %1286 = vmatmul.f32.gmra.mxu0 %v84
  %v1287 = vpop.f32.mrf.mxu0
  %v1288 = vadd.f32 %v647, %v1287
  %1289 = vmatmul.f32.gmra.mxu0 %v100
  %v1290 = vpop.f32.mrf.mxu0
  %v1291 = vadd.f32 %v647, %v1290
  %1292 = vmatmul.f32.gmra.mxu0 %v116
  %v1293 = vpop.f32.mrf.mxu0
  %v1294 = vadd.f32 %v647, %v1293
  %1295 = vdwg.mxu0
  %1296 = vmatpush.msra.mxu0 %v195
  %1297 = vmatpush.msra.mxu0 %v193
  %1298 = vmatpush.msra.mxu0 %v191
  %1299 = vmatpush.msra.mxu0 %v189
  %1300 = vmatpush.msra.mxu0 %v187
  %1301 = vmatpush.msra.mxu0 %v185
  %1302 = vmatpush.msra.mxu0 %v183
  %1303 = vmatpush.msra.mxu0 %v181
  %1304 = vmatpush.msra.mxu0 %v179
  %1305 = vmatpush.msra.mxu0 %v177
  %1306 = vmatpush.msra.mxu0 %v175
  %1307 = vmatpush.msra.mxu0 %v173
  %1308 = vmatpush.msra.mxu0 %v171
  %1309 = vmatpush.msra.mxu0 %v169
  %1310 = vmatpush.msra.mxu0 %v167
  %1311 = vmatpush.msra.mxu0 %v165
  %1312 = vmatmul.f32.gmra.mxu0 %v21
  %v1313 = vpop.f32.mrf.mxu0
  %v1314 = vadd.f32 %v1276, %v1313
  %1315 = vmatmul.f32.gmra.mxu0 %v37
  %v1316 = vpop.f32.mrf.mxu0
  %v1317 = vadd.f32 %v1279, %v1316
  %1318 = vmatmul.f32.gmra.mxu0 %v53
  %v1319 = vpop.f32.mrf.mxu0
  %v1320 = vadd.f32 %v1282, %v1319
  %1321 = vmatmul.f32.gmra.mxu0 %v69
  %v1322 = vpop.f32.mrf.mxu0
  %v1323 = vadd.f32 %v1285, %v1322
  %1324 = vmatmul.f32.gmra.mxu0 %v85
  %v1325 = vpop.f32.mrf.mxu0
  %v1326 = vadd.f32 %v1288, %v1325
  %1327 = vmatmul.f32.gmra.mxu0 %v101
  %v1328 = vpop.f32.mrf.mxu0
  %v1329 = vadd.f32 %v1291, %v1328
  %1330 = vmatmul.f32.gmra.mxu0 %v117
  %v1331 = vpop.f32.mrf.mxu0
  %v1332 = vadd.f32 %v1294, %v1331
  %1333 = vdwg.mxu0
  %1334 = vmatpush.msra.mxu0 %v227
  %1335 = vmatpush.msra.mxu0 %v225
  %1336 = vmatpush.msra.mxu0 %v223
  %1337 = vmatpush.msra.mxu0 %v221
  %1338 = vmatpush.msra.mxu0 %v219
  %1339 = vmatpush.msra.mxu0 %v217
  %1340 = vmatpush.msra.mxu0 %v215
  %1341 = vmatpush.msra.mxu0 %v213
  %1342 = vmatpush.msra.mxu0 %v211
  %1343 = vmatpush.msra.mxu0 %v209
  %1344 = vmatpush.msra.mxu0 %v207
  %1345 = vmatpush.msra.mxu0 %v205
  %1346 = vmatpush.msra.mxu0 %v203
  %1347 = vmatpush.msra.mxu0 %v201
  %1348 = vmatpush.msra.mxu0 %v199
  %1349 = vmatpush.msra.mxu0 %v197
  %1350 = vmatmul.f32.gmra.mxu0 %v22
  %v1351 = vpop.f32.mrf.mxu0
  %v1352 = vadd.f32 %v1314, %v1351
  %1353 = vmatmul.f32.gmra.mxu0 %v38
  %v1354 = vpop.f32.mrf.mxu0
  %v1355 = vadd.f32 %v1317, %v1354
  %1356 = vmatmul.f32.gmra.mxu0 %v54
  %v1357 = vpop.f32.mrf.mxu0
  %v1358 = vadd.f32 %v1320, %v1357
  %1359 = vmatmul.f32.gmra.mxu0 %v70
  %v1360 = vpop.f32.mrf.mxu0
  %v1361 = vadd.f32 %v1323, %v1360
  %1362 = vmatmul.f32.gmra.mxu0 %v86
  %v1363 = vpop.f32.mrf.mxu0
  %v1364 = vadd.f32 %v1326, %v1363
  %1365 = vmatmul.f32.gmra.mxu0 %v102
  %v1366 = vpop.f32.mrf.mxu0
  %v1367 = vadd.f32 %v1329, %v1366
  %1368 = vmatmul.f32.gmra.mxu0 %v118
  %v1369 = vpop.f32.mrf.mxu0
  %v1370 = vadd.f32 %v1332, %v1369
  %1371 = vdwg.mxu0
  %1372 = vmatpush.msra.mxu0 %v259
  %1373 = vmatpush.msra.mxu0 %v257
  %1374 = vmatpush.msra.mxu0 %v255
  %1375 = vmatpush.msra.mxu0 %v253
  %1376 = vmatpush.msra.mxu0 %v251
  %1377 = vmatpush.msra.mxu0 %v249
  %1378 = vmatpush.msra.mxu0 %v247
  %1379 = vmatpush.msra.mxu0 %v245
  %1380 = vmatpush.msra.mxu0 %v243
  %1381 = vmatpush.msra.mxu0 %v241
  %1382 = vmatpush.msra.mxu0 %v239
  %1383 = vmatpush.msra.mxu0 %v237
  %1384 = vmatpush.msra.mxu0 %v235
  %1385 = vmatpush.msra.mxu0 %v233
  %1386 = vmatpush.msra.mxu0 %v231
  %1387 = vmatpush.msra.mxu0 %v229
  %1388 = vmatmul.f32.gmra.mxu0 %v23
  %v1389 = vpop.f32.mrf.mxu0
  %v1390 = vadd.f32 %v1352, %v1389
  %1391 = vmatmul.f32.gmra.mxu0 %v39
  %v1392 = vpop.f32.mrf.mxu0
  %v1393 = vadd.f32 %v1355, %v1392
  %1394 = vmatmul.f32.gmra.mxu0 %v55
  %v1395 = vpop.f32.mrf.mxu0
  %v1396 = vadd.f32 %v1358, %v1395
  %1397 = vmatmul.f32.gmra.mxu0 %v71
  %v1398 = vpop.f32.mrf.mxu0
  %v1399 = vadd.f32 %v1361, %v1398
  %1400 = vmatmul.f32.gmra.mxu0 %v87
  %v1401 = vpop.f32.mrf.mxu0
  %v1402 = vadd.f32 %v1364, %v1401
  %1403 = vmatmul.f32.gmra.mxu0 %v103
  %v1404 = vpop.f32.mrf.mxu0
  %v1405 = vadd.f32 %v1367, %v1404
  %1406 = vmatmul.f32.gmra.mxu0 %v119
  %v1407 = vpop.f32.mrf.mxu0
  %v1408 = vadd.f32 %v1370, %v1407
  %1409 = vdwg.mxu0
  %1410 = vmatpush.msra.mxu0 %v291
  %1411 = vmatpush.msra.mxu0 %v289
  %1412 = vmatpush.msra.mxu0 %v287
  %1413 = vmatpush.msra.mxu0 %v285
  %1414 = vmatpush.msra.mxu0 %v283
  %1415 = vmatpush.msra.mxu0 %v281
  %1416 = vmatpush.msra.mxu0 %v279
  %1417 = vmatpush.msra.mxu0 %v277
  %1418 = vmatpush.msra.mxu0 %v275
  %1419 = vmatpush.msra.mxu0 %v273
  %1420 = vmatpush.msra.mxu0 %v271
  %1421 = vmatpush.msra.mxu0 %v269
  %1422 = vmatpush.msra.mxu0 %v267
  %1423 = vmatpush.msra.mxu0 %v265
  %1424 = vmatpush.msra.mxu0 %v263
  %1425 = vmatpush.msra.mxu0 %v261
  %1426 = vmatmul.f32.gmra.mxu0 %v24
  %v1427 = vpop.f32.mrf.mxu0
  %v1428 = vadd.f32 %v1390, %v1427
  %1429 = vmatmul.f32.gmra.mxu0 %v40
  %v1430 = vpop.f32.mrf.mxu0
  %v1431 = vadd.f32 %v1393, %v1430
  %1432 = vmatmul.f32.gmra.mxu0 %v56
  %v1433 = vpop.f32.mrf.mxu0
  %v1434 = vadd.f32 %v1396, %v1433
  %1435 = vmatmul.f32.gmra.mxu0 %v72
  %v1436 = vpop.f32.mrf.mxu0
  %v1437 = vadd.f32 %v1399, %v1436
  %1438 = vmatmul.f32.gmra.mxu0 %v88
  %v1439 = vpop.f32.mrf.mxu0
  %v1440 = vadd.f32 %v1402, %v1439
  %1441 = vmatmul.f32.gmra.mxu0 %v104
  %v1442 = vpop.f32.mrf.mxu0
  %v1443 = vadd.f32 %v1405, %v1442
  %1444 = vmatmul.f32.gmra.mxu0 %v120
  %v1445 = vpop.f32.mrf.mxu0
  %v1446 = vadd.f32 %v1408, %v1445
  %1447 = vdwg.mxu0
  %1448 = vmatpush.msra.mxu0 %v323
  %1449 = vmatpush.msra.mxu0 %v321
  %1450 = vmatpush.msra.mxu0 %v319
  %1451 = vmatpush.msra.mxu0 %v317
  %1452 = vmatpush.msra.mxu0 %v315
  %1453 = vmatpush.msra.mxu0 %v313
  %1454 = vmatpush.msra.mxu0 %v311
  %1455 = vmatpush.msra.mxu0 %v309
  %1456 = vmatpush.msra.mxu0 %v307
  %1457 = vmatpush.msra.mxu0 %v305
  %1458 = vmatpush.msra.mxu0 %v303
  %1459 = vmatpush.msra.mxu0 %v301
  %1460 = vmatpush.msra.mxu0 %v299
  %1461 = vmatpush.msra.mxu0 %v297
  %1462 = vmatpush.msra.mxu0 %v295
  %1463 = vmatpush.msra.mxu0 %v293
  %1464 = vmatmul.f32.gmra.mxu0 %v25
  %v1465 = vpop.f32.mrf.mxu0
  %v1466 = vadd.f32 %v1428, %v1465
  %1467 = vmatmul.f32.gmra.mxu0 %v41
  %v1468 = vpop.f32.mrf.mxu0
  %v1469 = vadd.f32 %v1431, %v1468
  %1470 = vmatmul.f32.gmra.mxu0 %v57
  %v1471 = vpop.f32.mrf.mxu0
  %v1472 = vadd.f32 %v1434, %v1471
  %1473 = vmatmul.f32.gmra.mxu0 %v73
  %v1474 = vpop.f32.mrf.mxu0
  %v1475 = vadd.f32 %v1437, %v1474
  %1476 = vmatmul.f32.gmra.mxu0 %v89
  %v1477 = vpop.f32.mrf.mxu0
  %v1478 = vadd.f32 %v1440, %v1477
  %1479 = vmatmul.f32.gmra.mxu0 %v105
  %v1480 = vpop.f32.mrf.mxu0
  %v1481 = vadd.f32 %v1443, %v1480
  %1482 = vmatmul.f32.gmra.mxu0 %v121
  %v1483 = vpop.f32.mrf.mxu0
  %v1484 = vadd.f32 %v1446, %v1483
  %1485 = vdwg.mxu0
  %1486 = vmatpush.msra.mxu0 %v355
  %1487 = vmatpush.msra.mxu0 %v353
  %1488 = vmatpush.msra.mxu0 %v351
  %1489 = vmatpush.msra.mxu0 %v349
  %1490 = vmatpush.msra.mxu0 %v347
  %1491 = vmatpush.msra.mxu0 %v345
  %1492 = vmatpush.msra.mxu0 %v343
  %1493 = vmatpush.msra.mxu0 %v341
  %1494 = vmatpush.msra.mxu0 %v339
  %1495 = vmatpush.msra.mxu0 %v337
  %1496 = vmatpush.msra.mxu0 %v335
  %1497 = vmatpush.msra.mxu0 %v333
  %1498 = vmatpush.msra.mxu0 %v331
  %1499 = vmatpush.msra.mxu0 %v329
  %1500 = vmatpush.msra.mxu0 %v327
  %1501 = vmatpush.msra.mxu0 %v325
  %1502 = vmatmul.f32.gmra.mxu0 %v26
  %v1503 = vpop.f32.mrf.mxu0
  %v1504 = vadd.f32 %v1466, %v1503
  %1505 = vmatmul.f32.gmra.mxu0 %v42
  %v1506 = vpop.f32.mrf.mxu0
  %v1507 = vadd.f32 %v1469, %v1506
  %1508 = vmatmul.f32.gmra.mxu0 %v58
  %v1509 = vpop.f32.mrf.mxu0
  %v1510 = vadd.f32 %v1472, %v1509
  %1511 = vmatmul.f32.gmra.mxu0 %v74
  %v1512 = vpop.f32.mrf.mxu0
  %v1513 = vadd.f32 %v1475, %v1512
  %1514 = vmatmul.f32.gmra.mxu0 %v90
  %v1515 = vpop.f32.mrf.mxu0
  %v1516 = vadd.f32 %v1478, %v1515
  %1517 = vmatmul.f32.gmra.mxu0 %v106
  %v1518 = vpop.f32.mrf.mxu0
  %v1519 = vadd.f32 %v1481, %v1518
  %1520 = vmatmul.f32.gmra.mxu0 %v122
  %v1521 = vpop.f32.mrf.mxu0
  %v1522 = vadd.f32 %v1484, %v1521
  %1523 = vdwg.mxu0
  %1524 = vmatpush.msra.mxu0 %v387
  %1525 = vmatpush.msra.mxu0 %v385
  %1526 = vmatpush.msra.mxu0 %v383
  %1527 = vmatpush.msra.mxu0 %v381
  %1528 = vmatpush.msra.mxu0 %v379
  %1529 = vmatpush.msra.mxu0 %v377
  %1530 = vmatpush.msra.mxu0 %v375
  %1531 = vmatpush.msra.mxu0 %v373
  %1532 = vmatpush.msra.mxu0 %v371
  %1533 = vmatpush.msra.mxu0 %v369
  %1534 = vmatpush.msra.mxu0 %v367
  %1535 = vmatpush.msra.mxu0 %v365
  %1536 = vmatpush.msra.mxu0 %v363
  %1537 = vmatpush.msra.mxu0 %v361
  %1538 = vmatpush.msra.mxu0 %v359
  %1539 = vmatpush.msra.mxu0 %v357
  %1540 = vmatmul.f32.gmra.mxu0 %v27
  %v1541 = vpop.f32.mrf.mxu0
  %v1542 = vadd.f32 %v1504, %v1541
  %1543 = vmatmul.f32.gmra.mxu0 %v43
  %v1544 = vpop.f32.mrf.mxu0
  %v1545 = vadd.f32 %v1507, %v1544
  %1546 = vmatmul.f32.gmra.mxu0 %v59
  %v1547 = vpop.f32.mrf.mxu0
  %v1548 = vadd.f32 %v1510, %v1547
  %1549 = vmatmul.f32.gmra.mxu0 %v75
  %v1550 = vpop.f32.mrf.mxu0
  %v1551 = vadd.f32 %v1513, %v1550
  %1552 = vmatmul.f32.gmra.mxu0 %v91
  %v1553 = vpop.f32.mrf.mxu0
  %v1554 = vadd.f32 %v1516, %v1553
  %1555 = vmatmul.f32.gmra.mxu0 %v107
  %v1556 = vpop.f32.mrf.mxu0
  %v1557 = vadd.f32 %v1519, %v1556
  %1558 = vmatmul.f32.gmra.mxu0 %v123
  %v1559 = vpop.f32.mrf.mxu0
  %v1560 = vadd.f32 %v1522, %v1559
  %1561 = vdwg.mxu0
  %1562 = vmatpush.msra.mxu0 %v419
  %1563 = vmatpush.msra.mxu0 %v417
  %1564 = vmatpush.msra.mxu0 %v415
  %1565 = vmatpush.msra.mxu0 %v413
  %1566 = vmatpush.msra.mxu0 %v411
  %1567 = vmatpush.msra.mxu0 %v409
  %1568 = vmatpush.msra.mxu0 %v407
  %1569 = vmatpush.msra.mxu0 %v405
  %1570 = vmatpush.msra.mxu0 %v403
  %1571 = vmatpush.msra.mxu0 %v401
  %1572 = vmatpush.msra.mxu0 %v399
  %1573 = vmatpush.msra.mxu0 %v397
  %1574 = vmatpush.msra.mxu0 %v395
  %1575 = vmatpush.msra.mxu0 %v393
  %1576 = vmatpush.msra.mxu0 %v391
  %1577 = vmatpush.msra.mxu0 %v389
  %1578 = vmatmul.f32.gmra.mxu0 %v28
  %v1579 = vpop.f32.mrf.mxu0
  %v1580 = vadd.f32 %v1542, %v1579
  %1581 = vmatmul.f32.gmra.mxu0 %v44
  %v1582 = vpop.f32.mrf.mxu0
  %v1583 = vadd.f32 %v1545, %v1582
  %1584 = vmatmul.f32.gmra.mxu0 %v60
  %v1585 = vpop.f32.mrf.mxu0
  %v1586 = vadd.f32 %v1548, %v1585
  %1587 = vmatmul.f32.gmra.mxu0 %v76
  %v1588 = vpop.f32.mrf.mxu0
  %v1589 = vadd.f32 %v1551, %v1588
  %1590 = vmatmul.f32.gmra.mxu0 %v92
  %v1591 = vpop.f32.mrf.mxu0
  %v1592 = vadd.f32 %v1554, %v1591
  %1593 = vmatmul.f32.gmra.mxu0 %v108
  %v1594 = vpop.f32.mrf.mxu0
  %v1595 = vadd.f32 %v1557, %v1594
  %1596 = vmatmul.f32.gmra.mxu0 %v124
  %v1597 = vpop.f32.mrf.mxu0
  %v1598 = vadd.f32 %v1560, %v1597
  %1599 = vdwg.mxu0
  %1600 = vmatpush.msra.mxu0 %v451
  %1601 = vmatpush.msra.mxu0 %v449
  %1602 = vmatpush.msra.mxu0 %v447
  %1603 = vmatpush.msra.mxu0 %v445
  %1604 = vmatpush.msra.mxu0 %v443
  %1605 = vmatpush.msra.mxu0 %v441
  %1606 = vmatpush.msra.mxu0 %v439
  %1607 = vmatpush.msra.mxu0 %v437
  %1608 = vmatpush.msra.mxu0 %v435
  %1609 = vmatpush.msra.mxu0 %v433
  %1610 = vmatpush.msra.mxu0 %v431
  %1611 = vmatpush.msra.mxu0 %v429
  %1612 = vmatpush.msra.mxu0 %v427
  %1613 = vmatpush.msra.mxu0 %v425
  %1614 = vmatpush.msra.mxu0 %v423
  %1615 = vmatpush.msra.mxu0 %v421
  %1616 = vmatmul.f32.gmra.mxu0 %v29
  %v1617 = vpop.f32.mrf.mxu0
  %v1618 = vadd.f32 %v1580, %v1617
  %1619 = vmatmul.f32.gmra.mxu0 %v45
  %v1620 = vpop.f32.mrf.mxu0
  %v1621 = vadd.f32 %v1583, %v1620
  %1622 = vmatmul.f32.gmra.mxu0 %v61
  %v1623 = vpop.f32.mrf.mxu0
  %v1624 = vadd.f32 %v1586, %v1623
  %1625 = vmatmul.f32.gmra.mxu0 %v77
  %v1626 = vpop.f32.mrf.mxu0
  %v1627 = vadd.f32 %v1589, %v1626
  %1628 = vmatmul.f32.gmra.mxu0 %v93
  %v1629 = vpop.f32.mrf.mxu0
  %v1630 = vadd.f32 %v1592, %v1629
  %1631 = vmatmul.f32.gmra.mxu0 %v109
  %v1632 = vpop.f32.mrf.mxu0
  %v1633 = vadd.f32 %v1595, %v1632
  %1634 = vmatmul.f32.gmra.mxu0 %v125
  %v1635 = vpop.f32.mrf.mxu0
  %v1636 = vadd.f32 %v1598, %v1635
  %1637 = vdwg.mxu0
  %1638 = vmatpush.msra.mxu0 %v483
  %1639 = vmatpush.msra.mxu0 %v481
  %1640 = vmatpush.msra.mxu0 %v479
  %1641 = vmatpush.msra.mxu0 %v477
  %1642 = vmatpush.msra.mxu0 %v475
  %1643 = vmatpush.msra.mxu0 %v473
  %1644 = vmatpush.msra.mxu0 %v471
  %1645 = vmatpush.msra.mxu0 %v469
  %1646 = vmatpush.msra.mxu0 %v467
  %1647 = vmatpush.msra.mxu0 %v465
  %1648 = vmatpush.msra.mxu0 %v463
  %1649 = vmatpush.msra.mxu0 %v461
  %1650 = vmatpush.msra.mxu0 %v459
  %1651 = vmatpush.msra.mxu0 %v457
  %1652 = vmatpush.msra.mxu0 %v455
  %1653 = vmatpush.msra.mxu0 %v453
  %1654 = vmatmul.f32.gmra.mxu0 %v30
  %v1655 = vpop.f32.mrf.mxu0
  %v1656 = vadd.f32 %v1618, %v1655
  %1657 = vmatmul.f32.gmra.mxu0 %v46
  %v1658 = vpop.f32.mrf.mxu0
  %v1659 = vadd.f32 %v1621, %v1658
  %1660 = vmatmul.f32.gmra.mxu0 %v62
  %v1661 = vpop.f32.mrf.mxu0
  %v1662 = vadd.f32 %v1624, %v1661
  %1663 = vmatmul.f32.gmra.mxu0 %v78
  %v1664 = vpop.f32.mrf.mxu0
  %v1665 = vadd.f32 %v1627, %v1664
  %1666 = vmatmul.f32.gmra.mxu0 %v94
  %v1667 = vpop.f32.mrf.mxu0
  %v1668 = vadd.f32 %v1630, %v1667
  %1669 = vmatmul.f32.gmra.mxu0 %v110
  %v1670 = vpop.f32.mrf.mxu0
  %v1671 = vadd.f32 %v1633, %v1670
  %1672 = vmatmul.f32.gmra.mxu0 %v126
  %v1673 = vpop.f32.mrf.mxu0
  %v1674 = vadd.f32 %v1636, %v1673
  %1675 = vdwg.mxu0
  %1676 = vmatpush.msra.mxu0 %v515
  %1677 = vmatpush.msra.mxu0 %v513
  %1678 = vmatpush.msra.mxu0 %v511
  %1679 = vmatpush.msra.mxu0 %v509
  %1680 = vmatpush.msra.mxu0 %v507
  %1681 = vmatpush.msra.mxu0 %v505
  %1682 = vmatpush.msra.mxu0 %v503
  %1683 = vmatpush.msra.mxu0 %v501
  %1684 = vmatpush.msra.mxu0 %v499
  %1685 = vmatpush.msra.mxu0 %v497
  %1686 = vmatpush.msra.mxu0 %v495
  %1687 = vmatpush.msra.mxu0 %v493
  %1688 = vmatpush.msra.mxu0 %v491
  %1689 = vmatpush.msra.mxu0 %v489
  %1690 = vmatpush.msra.mxu0 %v487
  %1691 = vmatpush.msra.mxu0 %v485
  %1692 = vmatmul.f32.gmra.mxu0 %v31
  %v1693 = vpop.f32.mrf.mxu0
  %v1694 = vadd.f32 %v1656, %v1693
  %1695 = vmatmul.f32.gmra.mxu0 %v47
  %v1696 = vpop.f32.mrf.mxu0
  %v1697 = vadd.f32 %v1659, %v1696
  %1698 = vmatmul.f32.gmra.mxu0 %v63
  %v1699 = vpop.f32.mrf.mxu0
  %v1700 = vadd.f32 %v1662, %v1699
  %1701 = vmatmul.f32.gmra.mxu0 %v79
  %v1702 = vpop.f32.mrf.mxu0
  %v1703 = vadd.f32 %v1665, %v1702
  %1704 = vmatmul.f32.gmra.mxu0 %v95
  %v1705 = vpop.f32.mrf.mxu0
  %v1706 = vadd.f32 %v1668, %v1705
  %1707 = vmatmul.f32.gmra.mxu0 %v111
  %v1708 = vpop.f32.mrf.mxu0
  %v1709 = vadd.f32 %v1671, %v1708
  %1710 = vmatmul.f32.gmra.mxu0 %v127
  %v1711 = vpop.f32.mrf.mxu0
  %v1712 = vadd.f32 %v1674, %v1711
  %1713 = vdwg.mxu0
  %1714 = vmatpush.msra.mxu0 %v547
  %1715 = vmatpush.msra.mxu0 %v545
  %1716 = vmatpush.msra.mxu0 %v543
  %1717 = vmatpush.msra.mxu0 %v541
  %1718 = vmatpush.msra.mxu0 %v539
  %1719 = vmatpush.msra.mxu0 %v537
  %1720 = vmatpush.msra.mxu0 %v535
  %1721 = vmatpush.msra.mxu0 %v533
  %1722 = vmatpush.msra.mxu0 %v531
  %1723 = vmatpush.msra.mxu0 %v529
  %1724 = vmatpush.msra.mxu0 %v527
  %1725 = vmatpush.msra.mxu0 %v525
  %1726 = vmatpush.msra.mxu0 %v523
  %1727 = vmatpush.msra.mxu0 %v521
  %1728 = vmatpush.msra.mxu0 %v519
  %1729 = vmatpush.msra.mxu0 %v517
  %1730 = vmatmul.f32.gmra.mxu0 %v32
  %v1731 = vpop.f32.mrf.mxu0
  %v1732 = vadd.f32 %v1694, %v1731
  %1733 = vmatmul.f32.gmra.mxu0 %v48
  %v1734 = vpop.f32.mrf.mxu0
  %v1735 = vadd.f32 %v1697, %v1734
  %1736 = vmatmul.f32.gmra.mxu0 %v64
  %v1737 = vpop.f32.mrf.mxu0
  %v1738 = vadd.f32 %v1700, %v1737
  %1739 = vmatmul.f32.gmra.mxu0 %v80
  %v1740 = vpop.f32.mrf.mxu0
  %v1741 = vadd.f32 %v1703, %v1740
  %1742 = vmatmul.f32.gmra.mxu0 %v96
  %v1743 = vpop.f32.mrf.mxu0
  %v1744 = vadd.f32 %v1706, %v1743
  %1745 = vmatmul.f32.gmra.mxu0 %v112
  %v1746 = vpop.f32.mrf.mxu0
  %v1747 = vadd.f32 %v1709, %v1746
  %1748 = vmatmul.f32.gmra.mxu0 %v128
  %v1749 = vpop.f32.mrf.mxu0
  %v1750 = vadd.f32 %v1712, %v1749
  %1751 = vdwg.mxu0
  %1752 = vmatpush.msra.mxu0 %v579
  %1753 = vmatpush.msra.mxu0 %v577
  %1754 = vmatpush.msra.mxu0 %v575
  %1755 = vmatpush.msra.mxu0 %v573
  %1756 = vmatpush.msra.mxu0 %v571
  %1757 = vmatpush.msra.mxu0 %v569
  %1758 = vmatpush.msra.mxu0 %v567
  %1759 = vmatpush.msra.mxu0 %v565
  %1760 = vmatpush.msra.mxu0 %v563
  %1761 = vmatpush.msra.mxu0 %v561
  %1762 = vmatpush.msra.mxu0 %v559
  %1763 = vmatpush.msra.mxu0 %v557
  %1764 = vmatpush.msra.mxu0 %v555
  %1765 = vmatpush.msra.mxu0 %v553
  %1766 = vmatpush.msra.mxu0 %v551
  %1767 = vmatpush.msra.mxu0 %v549
  %1768 = vmatmul.f32.gmra.mxu0 %v33
  %v1769 = vpop.f32.mrf.mxu0
  %v1770 = vadd.f32 %v1732, %v1769
  %1771 = vmatmul.f32.gmra.mxu0 %v49
  %v1772 = vpop.f32.mrf.mxu0
  %v1773 = vadd.f32 %v1735, %v1772
  %1774 = vmatmul.f32.gmra.mxu0 %v65
  %v1775 = vpop.f32.mrf.mxu0
  %v1776 = vadd.f32 %v1738, %v1775
  %1777 = vmatmul.f32.gmra.mxu0 %v81
  %v1778 = vpop.f32.mrf.mxu0
  %v1779 = vadd.f32 %v1741, %v1778
  %1780 = vmatmul.f32.gmra.mxu0 %v97
  %v1781 = vpop.f32.mrf.mxu0
  %v1782 = vadd.f32 %v1744, %v1781
  %1783 = vmatmul.f32.gmra.mxu0 %v113
  %v1784 = vpop.f32.mrf.mxu0
  %v1785 = vadd.f32 %v1747, %v1784
  %1786 = vmatmul.f32.gmra.mxu0 %v129
  %v1787 = vpop.f32.mrf.mxu0
  %v1788 = vadd.f32 %v1750, %v1787
  %1789 = vdwg.mxu0
  %1790 = vmatpush.msra.mxu0 %v611
  %1791 = vmatpush.msra.mxu0 %v609
  %1792 = vmatpush.msra.mxu0 %v607
  %1793 = vmatpush.msra.mxu0 %v605
  %1794 = vmatpush.msra.mxu0 %v603
  %1795 = vmatpush.msra.mxu0 %v601
  %1796 = vmatpush.msra.mxu0 %v599
  %1797 = vmatpush.msra.mxu0 %v597
  %1798 = vmatpush.msra.mxu0 %v595
  %1799 = vmatpush.msra.mxu0 %v593
  %1800 = vmatpush.msra.mxu0 %v591
  %1801 = vmatpush.msra.mxu0 %v589
  %1802 = vmatpush.msra.mxu0 %v587
  %1803 = vmatpush.msra.mxu0 %v585
  %1804 = vmatpush.msra.mxu0 %v583
  %1805 = vmatpush.msra.mxu0 %v581
  %1806 = vmatmul.f32.gmra.mxu0 %v34
  %v1807 = vpop.f32.mrf.mxu0
  %v1808 = vadd.f32 %v1770, %v1807
  %1809 = vmatmul.f32.gmra.mxu0 %v50
  %v1810 = vpop.f32.mrf.mxu0
  %v1811 = vadd.f32 %v1773, %v1810
  %1812 = vmatmul.f32.gmra.mxu0 %v66
  %v1813 = vpop.f32.mrf.mxu0
  %v1814 = vadd.f32 %v1776, %v1813
  %1815 = vmatmul.f32.gmra.mxu0 %v82
  %v1816 = vpop.f32.mrf.mxu0
  %v1817 = vadd.f32 %v1779, %v1816
  %1818 = vmatmul.f32.gmra.mxu0 %v98
  %v1819 = vpop.f32.mrf.mxu0
  %v1820 = vadd.f32 %v1782, %v1819
  %1821 = vmatmul.f32.gmra.mxu0 %v114
  %v1822 = vpop.f32.mrf.mxu0
  %v1823 = vadd.f32 %v1785, %v1822
  %1824 = vmatmul.f32.gmra.mxu0 %v130
  %v1825 = vpop.f32.mrf.mxu0
  %v1826 = vadd.f32 %v1788, %v1825
  %1827 = vdwg.mxu0
  %1828 = vmatpush.msra.mxu0 %v643
  %1829 = vmatpush.msra.mxu0 %v641
  %1830 = vmatpush.msra.mxu0 %v639
  %1831 = vmatpush.msra.mxu0 %v637
  %1832 = vmatpush.msra.mxu0 %v635
  %1833 = vmatpush.msra.mxu0 %v633
  %1834 = vmatpush.msra.mxu0 %v631
  %1835 = vmatpush.msra.mxu0 %v629
  %1836 = vmatpush.msra.mxu0 %v627
  %1837 = vmatpush.msra.mxu0 %v625
  %1838 = vmatpush.msra.mxu0 %v623
  %1839 = vmatpush.msra.mxu0 %v621
  %1840 = vmatpush.msra.mxu0 %v619
  %1841 = vmatpush.msra.mxu0 %v617
  %1842 = vmatpush.msra.mxu0 %v615
  %1843 = vmatpush.msra.mxu0 %v613
  %1844 = vmatmul.f32.gmra.mxu0 %v35
  %v1845 = vpop.f32.mrf.mxu0
  %v1846 = vadd.f32 %v1808, %v1845
  %1847 = vmatmul.f32.gmra.mxu0 %v51
  %v1848 = vpop.f32.mrf.mxu0
  %v1849 = vadd.f32 %v1811, %v1848
  %1850 = vmatmul.f32.gmra.mxu0 %v67
  %v1851 = vpop.f32.mrf.mxu0
  %v1852 = vadd.f32 %v1814, %v1851
  %1853 = vmatmul.f32.gmra.mxu0 %v83
  %v1854 = vpop.f32.mrf.mxu0
  %v1855 = vadd.f32 %v1817, %v1854
  %1856 = vmatmul.f32.gmra.mxu0 %v99
  %v1857 = vpop.f32.mrf.mxu0
  %v1858 = vadd.f32 %v1820, %v1857
  %1859 = vmatmul.f32.gmra.mxu0 %v115
  %v1860 = vpop.f32.mrf.mxu0
  %v1861 = vadd.f32 %v1823, %v1860
  %1862 = vmatmul.f32.gmra.mxu0 %v131
  %v1863 = vpop.f32.mrf.mxu0
  %v1864 = vadd.f32 %v1826, %v1863
  %1865 = vdwg.mxu0
  %v1866 = vadd.f32 %v1238, %v1241
  %v1867 = vadd.f32 %v1866, %v1244
  %v1868 = vadd.f32 %v1867, %v1247
  %v1869 = vadd.f32 %v1868, %v1250
  %v1870 = vadd.f32 %v1869, %v1253
  %vm1871 = vcmask 1041408
  %v1872 = vsel %vm1871, %v1256, 0.0
  %v1873 = vadd.f32 %v1870, %v1872
  %v1874 = vrot.slane %v1873, 4
  %v1875 = vadd.f32 %v1873, %v1874
  %v1876 = vrot.slane %v1875, 2
  %v1877 = vadd.f32 %v1875, %v1876
  %v1878 = vrot.slane %v1877, 1
  %v1879 = vadd.f32 %v1877, %v1878
  %v1880 = vadd.f32 %v1846, %v1849
  %v1881 = vadd.f32 %v1880, %v1852
  %v1882 = vadd.f32 %v1881, %v1855
  %v1883 = vadd.f32 %v1882, %v1858
  %v1884 = vadd.f32 %v1883, %v1861
  %v1885 = vsel %vm1871, %v1864, 0.0
  %v1886 = vadd.f32 %v1884, %v1885
  %v1887 = vrot.slane %v1886, 4
  %v1888 = vadd.f32 %v1886, %v1887
  %v1889 = vrot.slane %v1888, 2
  %v1890 = vadd.f32 %v1888, %v1889
  %v1891 = vrot.slane %v1890, 1
  %v1892 = vadd.f32 %v1890, %v1891
  %v1893 = vrcp.pop 50.0
  %v1894 = vmul.f32 50.0, %v1893
  %v1895 = vsub.f32 1.0, %v1894
  %v1896 = vmul.f32 %v1893, %v1895
  %v1897 = vadd.f32 %v1893, %v1896
  %vm1898 = vweird.f32 %v1893
  %v1899 = vsel %vm1898, %v1893, %v1897
  %v1900 = vmul.f32 %v1879, %v1899
  %v1901 = vmul.f32 %v1892, %v1899
  %v1902 = vsub.f32 %v1238, %v1900
  %v1903 = vsub.f32 %v1846, %v1901
  %v1904 = vsub.f32 %v1241, %v1900
  %v1905 = vsub.f32 %v1849, %v1901
  %v1906 = vsub.f32 %v1244, %v1900
  %v1907 = vsub.f32 %v1852, %v1901
  %v1908 = vsub.f32 %v1247, %v1900
  %v1909 = vsub.f32 %v1855, %v1901
  %v1910 = vsub.f32 %v1250, %v1900
  %v1911 = vsub.f32 %v1858, %v1901
  %v1912 = vsub.f32 %v1253, %v1900
  %v1913 = vsub.f32 %v1861, %v1901
  %v1914 = vsub.f32 %v1256, %v1900
  %v1915 = vsub.f32 %v1864, %v1901
  %v1916 = vmul.f32 %v1902, %v1902
  %v1917 = vmul.f32 %v1903, %v1903
  %v1918 = vmul.f32 %v1904, %v1904
  %v1919 = vmul.f32 %v1905, %v1905
  %v1920 = vmul.f32 %v1906, %v1906
  %v1921 = vmul.f32 %v1907, %v1907
  %v1922 = vmul.f32 %v1908, %v1908
  %v1923 = vmul.f32 %v1909, %v1909
  %v1924 = vmul.f32 %v1910, %v1910
  %v1925 = vmul.f32 %v1911, %v1911
  %v1926 = vmul.f32 %v1912, %v1912
  %v1927 = vmul.f32 %v1913, %v1913
  %v1928 = vmul.f32 %v1914, %v1914
  %v1929 = vmul.f32 %v1915, %v1915
  %v1930 = vadd.f32 %v1916, %v1918
  %v1931 = vadd.f32 %v1930, %v1920
  %v1932 = vadd.f32 %v1931, %v1922
  %v1933 = vadd.f32 %v1932, %v1924
  %v1934 = vadd.f32 %v1933, %v1926
  %v1935 = vsel %vm1871, %v1928, 0.0
  %v1936 = vadd.f32 %v1934, %v1935
  %v1937 = vrot.slane %v1936, 4
  %v1938 = vadd.f32 %v1936, %v1937
  %v1939 = vrot.slane %v1938, 2
  %v1940 = vadd.f32 %v1938, %v1939
  %v1941 = vrot.slane %v1940, 1
  %v1942 = vadd.f32 %v1940, %v1941
  %v1943 = vadd.f32 %v1917, %v1919
  %v1944 = vadd.f32 %v1943, %v1921
  %v1945 = vadd.f32 %v1944, %v1923
  %v1946 = vadd.f32 %v1945, %v1925
  %v1947 = vadd.f32 %v1946, %v1927
  %v1948 = vsel %vm1871, %v1929, 0.0
  %v1949 = vadd.f32 %v1947, %v1948
  %v1950 = vrot.slane %v1949, 4
  %v1951 = vadd.f32 %v1949, %v1950
  %v1952 = vrot.slane %v1951, 2
  %v1953 = vadd.f32 %v1951, %v1952
  %v1954 = vrot.slane %v1953, 1
  %v1955 = vadd.f32 %v1953, %v1954
  %v1956 = vmul.f32 %v1942, %v1899
  %v1957 = vmul.f32 %v1955, %v1899
  %v1958 = vadd.f32 %v1956, 1e-05
  %v1959 = vadd.f32 %v1957, 1e-05
  %v1960 = vrsqrt.pop %v1958
  %v1961 = vmul.f32 %v1960, %v1958
  %v1962 = vmul.f32 %v1961, %v1960
  %v1963 = vmul.f32 0.5, %v1962
  %v1964 = vsub.f32 1.5, %v1963
  %v1965 = vmul.f32 %v1960, %v1964
  %vm1966 = vweird.f32 %v1958
  %vm1967 = vweird.f32 %v1960
  %vm1968 = vmor %vm1966, %vm1967
  %v1969 = vsel %vm1968, %v1960, %v1965
  %v1970 = vrsqrt.pop %v1959
  %v1971 = vmul.f32 %v1970, %v1959
  %v1972 = vmul.f32 %v1971, %v1970
  %v1973 = vmul.f32 0.5, %v1972
  %v1974 = vsub.f32 1.5, %v1973
  %v1975 = vmul.f32 %v1970, %v1974
  %vm1976 = vweird.f32 %v1959
  %vm1977 = vweird.f32 %v1970
  %vm1978 = vmor %vm1976, %vm1977
  %v1979 = vsel %vm1978, %v1970, %v1975
  %v1980 = vmul.f32 %v1902, %v1969
  %v1981 = vmul.f32 %v1903, %v1979
  %v1982 = vmul.f32 %v1904, %v1969
  %v1983 = vmul.f32 %v1905, %v1979
  %v1984 = vmul.f32 %v1906, %v1969
  %v1985 = vmul.f32 %v1907, %v1979
  %v1986 = vmul.f32 %v1908, %v1969
  %v1987 = vmul.f32 %v1909, %v1979
  %v1988 = vmul.f32 %v1910, %v1969
  %v1989 = vmul.f32 %v1911, %v1979
  %v1990 = vmul.f32 %v1912, %v1969
  %v1991 = vmul.f32 %v1913, %v1979
  %v1992 = vmul.f32 %v1914, %v1969
  %v1993 = vmul.f32 %v1915, %v1979
  %v1994 = vld [vmem:[%s3] sm:$0x3]
  %v1996 = vperm.slane %v1994, 0
  %v1997 = vperm.slane %v1994, 1
  %v2000 = vmul.f32 %v1980, %v1996
  %v2001 = vmul.f32 %v1981, %v1997
  %v2002 = vmul.f32 %v1982, %v1996
  %v2003 = vmul.f32 %v1983, %v1997
  %v2004 = vmul.f32 %v1984, %v1996
  %v2005 = vmul.f32 %v1985, %v1997
  %v2006 = vmul.f32 %v1986, %v1996
  %v2007 = vmul.f32 %v1987, %v1997
  %v2008 = vmul.f32 %v1988, %v1996
  %v2009 = vmul.f32 %v1989, %v1997
  %v2010 = vmul.f32 %v1990, %v1996
  %v2011 = vmul.f32 %v1991, %v1997
  %v2012 = vmul.f32 %v1992, %v1996
  %v2013 = vmul.f32 %v1993, %v1997
  %v2014 = vld [vmem:[%s4] sm:$0x3]
  %v2016 = vperm.slane %v2014, 0
  %v2017 = vperm.slane %v2014, 1
  %v2020 = vadd.f32 %v2000, %v2016
  %v2021 = vadd.f32 %v2001, %v2017
  %v2022 = vadd.f32 %v2002, %v2016
  %v2023 = vadd.f32 %v2003, %v2017
  %v2024 = vadd.f32 %v2004, %v2016
  %v2025 = vadd.f32 %v2005, %v2017
  %v2026 = vadd.f32 %v2006, %v2016
  %v2027 = vadd.f32 %v2007, %v2017
  %v2028 = vadd.f32 %v2008, %v2016
  %v2029 = vadd.f32 %v2009, %v2017
  %v2030 = vadd.f32 %v2010, %v2016
  %v2031 = vadd.f32 %v2011, %v2017
  %v2032 = vadd.f32 %v2012, %v2016
  %v2033 = vadd.f32 %v2013, %v2017
  %vm2034 = vcmp.ge.f32.partialorder %v2020, 0.0
  %vm2035 = vcmp.ge.f32.partialorder %v2021, 0.0
  %vm2036 = vcmp.ge.f32.partialorder %v2022, 0.0
  %vm2037 = vcmp.ge.f32.partialorder %v2023, 0.0
  %vm2038 = vcmp.ge.f32.partialorder %v2024, 0.0
  %vm2039 = vcmp.ge.f32.partialorder %v2025, 0.0
  %vm2040 = vcmp.ge.f32.partialorder %v2026, 0.0
  %vm2041 = vcmp.ge.f32.partialorder %v2027, 0.0
  %vm2042 = vcmp.ge.f32.partialorder %v2028, 0.0
  %vm2043 = vcmp.ge.f32.partialorder %v2029, 0.0
  %vm2044 = vcmp.ge.f32.partialorder %v2030, 0.0
  %vm2045 = vcmp.ge.f32.partialorder %v2031, 0.0
  %vm2046 = vcmp.ge.f32.partialorder %v2032, 0.0
  %vm2047 = vcmp.ge.f32.partialorder %v2033, 0.0
  %v2048 = vmul.f32 %v2020, 0.2
  %v2049 = vmul.f32 %v2021, 0.2
  %v2050 = vmul.f32 %v2022, 0.2
  %v2051 = vmul.f32 %v2023, 0.2
  %v2052 = vmul.f32 %v2024, 0.2
  %v2053 = vmul.f32 %v2025, 0.2
  %v2054 = vmul.f32 %v2026, 0.2
  %v2055 = vmul.f32 %v2027, 0.2
  %v2056 = vmul.f32 %v2028, 0.2
  %v2057 = vmul.f32 %v2029, 0.2
  %v2058 = vmul.f32 %v2030, 0.2
  %v2059 = vmul.f32 %v2031, 0.2
  %v2060 = vmul.f32 %v2032, 0.2
  %v2061 = vmul.f32 %v2033, 0.2
  %v2062 = vsel %vm2034, %v2020, %v2048
  %v2063 = vsel %vm2035, %v2021, %v2049
  %v2064 = vsel %vm2036, %v2022, %v2050
  %v2065 = vsel %vm2037, %v2023, %v2051
  %v2066 = vsel %vm2038, %v2024, %v2052
  %v2067 = vsel %vm2039, %v2025, %v2053
  %v2068 = vsel %vm2040, %v2026, %v2054
  %v2069 = vsel %vm2041, %v2027, %v2055
  %v2070 = vsel %vm2042, %v2028, %v2056
  %v2071 = vsel %vm2043, %v2029, %v2057
  %v2072 = vsel %vm2044, %v2030, %v2058
  %v2073 = vsel %vm2045, %v2031, %v2059
  %v2074 = vsel %vm2046, %v2032, %v2060
  %v2075 = vsel %vm2047, %v2033, %v2061
  %2076 = vst [vmem:[%s5] sm:$0xff] %v2062
  %2077 = vst [vmem:[%s5 + $0x8] sm:$0xff] %v2063
  %2078 = vst [vmem:[%s5 + $0x10] sm:$0xff] %v2064
  %2079 = vst [vmem:[%s5 + $0x18] sm:$0xff] %v2065
  %2080 = vst [vmem:[%s5 + $0x20] sm:$0xff] %v2066
  %2081 = vst [vmem:[%s5 + $0x28] sm:$0xff] %v2067
  %2082 = vst [vmem:[%s5 + $0x30] sm:$0xff] %v2068
  %2083 = vst [vmem:[%s5 + $0x38] sm:$0xff] %v2069
  %2084 = vst [vmem:[%s5 + $0x40] sm:$0xff] %v2070
  %2085 = vst [vmem:[%s5 + $0x48] sm:$0xff] %v2071
  %2086 = vst [vmem:[%s5 + $0x50] sm:$0xff] %v2072
  %2087 = vst [vmem:[%s5 + $0x58] sm:$0xff] %v2073
  %2088 = vst [vmem:[%s5 + $0x60] sm:$0x3] %v2074
  %2089 = vst [vmem:[%s5 + $0x68] sm:$0x3] %v2075
  // Predicated region
  $region22: #{d_forward.8} parent=0 // pred_check
    _
  $region23: #{d_forward.8} parent=0 // pred_check_branch
    %2091 = sbr.rel (0) target = $region25
  $region24: #{d_forward.8} parent=0 // pred_region
    _
  $region25: #{d_forward.8} parent=0 // pred_fallthru
    _
  // Predicated region
  $region26: #{d_forward.8} parent=0 // pred_check
    _
  $region27: #{d_forward.8} parent=0 // pred_check_branch
    %2093 = sbr.rel (0) target = $region29
  $region28: #{d_forward.8} parent=0 // pred_region
    _
  $region29: #{d_forward.8} parent=0 // pred_fallthru
    _

// kernel: d_forward.9
$region0: #{d_forward.9}
  #allocation0 [shape = 'u32[]', space=smem, size = 0x4, offset = 0x4, fixed_abs, tag = 'smem constant byte address 0x4 - core index']
  #allocation1 [shape = 'u32[72,128]{1,0:T(1,128)}', space=vmem, size = 0x9000, scoped, tag = 'internal scratch']
  #allocation2 [shape = 'f32[1,1]{1,0:T(1,128)S(1)}', space=vmem, size = 0x200, scoped, tag = 'scoped memory for d_forward.9']
  %s0 = inlined_call_operand.vmem [shape: f32[2,8], index: 0, kind: input, shape index: {}]
  %s1 = inlined_call_operand.vmem [shape: f32[8,4096], index: 1, kind: input, shape index: {}]
  %s2 = inlined_call_operand.vmem [shape: f32[4096,1], index: 2, kind: input, shape index: {}]
  %s3 = inlined_call_operand.<no memory space> [shape: f32[1,1], index: 3, kind: input, shape index: {}]
  %s4 = inlined_call_operand.vmem [shape: f32[2,1], index: 4, kind: output, shape index: {}]
  %s5 = sld [smem:[#allocation0]]
  $region26: #{d_forward.9} parent=0
    _
  %s7 = ssub.s32 1, %s5
  %s8 = scalar_select 0, %s7, %s5
  %v9 = vstv %s3
  %10 = vst [vmem:[#allocation2] sm:$0x1] %v9
  // Predicated region
  $region2: #{d_forward.9} parent=0 // pred_check
    _
  $region3: #{d_forward.9} parent=0 // pred_check_branch
    %12 = sbr.rel (0) target = $region5
  $region4: #{d_forward.9} parent=0 // pred_region
    _
  $region5: #{d_forward.9} parent=0 // pred_fallthru
    _
  // Predicated region
  $region6: #{d_forward.9} parent=0 // pred_check
    _
  $region7: #{d_forward.9} parent=0 // pred_check_branch
    %14 = sbr.rel (0) target = $region9
  $region8: #{d_forward.9} parent=0 // pred_region
    _
  $region9: #{d_forward.9} parent=0 // pred_fallthru
    _
  // Predicated region
  $region10: #{d_forward.9} parent=0 // pred_check
    _
  $region11: #{d_forward.9} parent=0 // pred_check_branch
    %16 = sbr.rel (0) target = $region13
  $region12: #{d_forward.9} parent=0 // pred_region
    _
  $region13: #{d_forward.9} parent=0 // pred_fallthru
    _
  // Predicated region
  $region14: #{d_forward.9} parent=0 // pred_check
    _
  $region15: #{d_forward.9} parent=0 // pred_check_branch
    %18 = sbr.rel (0) target = $region17
  $region16: #{d_forward.9} parent=0 // pred_region
    _
  $region17: #{d_forward.9} parent=0 // pred_fallthru
    _
  %v19 = vld [vmem:[%s0] sm:$0x3]
  %v20 = vld [vmem:[%s1] sm:$0xff]
  %v21 = vld [vmem:[%s1 + $0x8] sm:$0xff]
  %v22 = vld [vmem:[%s1 + $0x10] sm:$0xff]
  %v23 = vld [vmem:[%s1 + $0x18] sm:$0xff]
  %v24 = vld [vmem:[%s1 + $0x20] sm:$0xff]
  %v25 = vld [vmem:[%s1 + $0x28] sm:$0xff]
  %v26 = vld [vmem:[%s1 + $0x30] sm:$0xff]
  %v27 = vld [vmem:[%s1 + $0x38] sm:$0xff]
  %v28 = vld [vmem:[%s1 + $0x40] sm:$0xff]
  %v29 = vld [vmem:[%s1 + $0x48] sm:$0xff]
  %v30 = vld [vmem:[%s1 + $0x50] sm:$0xff]
  %v31 = vld [vmem:[%s1 + $0x58] sm:$0xff]
  %v32 = vld [vmem:[%s1 + $0x60] sm:$0xff]
  %v33 = vld [vmem:[%s1 + $0x68] sm:$0xff]
  %v34 = vld [vmem:[%s1 + $0x70] sm:$0xff]
  %v35 = vld [vmem:[%s1 + $0x78] sm:$0xff]
  %v36 = vld [vmem:[%s1 + $0x80] sm:$0xff]
  %v37 = vld [vmem:[%s1 + $0x88] sm:$0xff]
  %v38 = vld [vmem:[%s1 + $0x90] sm:$0xff]
  %v39 = vld [vmem:[%s1 + $0x98] sm:$0xff]
  %v40 = vld [vmem:[%s1 + $0xa0] sm:$0xff]
  %v41 = vld [vmem:[%s1 + $0xa8] sm:$0xff]
  %v42 = vld [vmem:[%s1 + $0xb0] sm:$0xff]
  %v43 = vld [vmem:[%s1 + $0xb8] sm:$0xff]
  %v44 = vld [vmem:[%s1 + $0xc0] sm:$0xff]
  %v45 = vld [vmem:[%s1 + $0xc8] sm:$0xff]
  %v46 = vld [vmem:[%s1 + $0xd0] sm:$0xff]
  %v47 = vld [vmem:[%s1 + $0xd8] sm:$0xff]
  %v48 = vld [vmem:[%s1 + $0xe0] sm:$0xff]
  %v49 = vld [vmem:[%s1 + $0xe8] sm:$0xff]
  %v50 = vld [vmem:[%s1 + $0xf0] sm:$0xff]
  %v51 = vld [vmem:[%s1 + $0xf8] sm:$0xff]
  %vm52 = vcmask 64512
  %v54 = vsel %vm52, %v19, 0
  %56 = vmatpush.msra.mxu0 0.0
  %57 = vmatpush.msra.mxu0 0.0
  %58 = vmatpush.msra.mxu0 0.0
  %59 = vmatpush.msra.mxu0 0.0
  %60 = vmatpush.msra.mxu0 0.0
  %61 = vmatpush.msra.mxu0 0.0
  %62 = vmatpush.msra.mxu0 0.0
  %63 = vmatpush.msra.mxu0 0.0
  %64 = vmatpush.msra.mxu0 0.0
  %65 = vmatpush.msra.mxu0 0.0
  %66 = vmatpush.msra.mxu0 0.0
  %67 = vmatpush.msra.mxu0 0.0
  %68 = vmatpush.msra.mxu0 0.0
  %69 = vmatpush.msra.mxu0 0.0
  %70 = vmatpush.msra.mxu0 0.0
  %71 = vmatpush.msra.mxu0 %v20
  %72 = vmatmul.f32.gmra.mxu0 %v54
  %v73 = vpop.f32.mrf.mxu0
  %v74 = vadd.f32 0.0, %v73
  %75 = vdwg.mxu0
  %76 = vmatpush.msra.mxu0 0.0
  %77 = vmatpush.msra.mxu0 0.0
  %78 = vmatpush.msra.mxu0 0.0
  %79 = vmatpush.msra.mxu0 0.0
  %80 = vmatpush.msra.mxu0 0.0
  %81 = vmatpush.msra.mxu0 0.0
  %82 = vmatpush.msra.mxu0 0.0
  %83 = vmatpush.msra.mxu0 0.0
  %84 = vmatpush.msra.mxu0 0.0
  %85 = vmatpush.msra.mxu0 0.0
  %86 = vmatpush.msra.mxu0 0.0
  %87 = vmatpush.msra.mxu0 0.0
  %88 = vmatpush.msra.mxu0 0.0
  %89 = vmatpush.msra.mxu0 0.0
  %90 = vmatpush.msra.mxu0 0.0
  %91 = vmatpush.msra.mxu0 %v21
  %92 = vmatmul.f32.gmra.mxu0 %v54
  %v93 = vpop.f32.mrf.mxu0
  %v94 = vadd.f32 0.0, %v93
  %95 = vdwg.mxu0
  %96 = vmatpush.msra.mxu0 0.0
  %97 = vmatpush.msra.mxu0 0.0
  %98 = vmatpush.msra.mxu0 0.0
  %99 = vmatpush.msra.mxu0 0.0
  %100 = vmatpush.msra.mxu0 0.0
  %101 = vmatpush.msra.mxu0 0.0
  %102 = vmatpush.msra.mxu0 0.0
  %103 = vmatpush.msra.mxu0 0.0
  %104 = vmatpush.msra.mxu0 0.0
  %105 = vmatpush.msra.mxu0 0.0
  %106 = vmatpush.msra.mxu0 0.0
  %107 = vmatpush.msra.mxu0 0.0
  %108 = vmatpush.msra.mxu0 0.0
  %109 = vmatpush.msra.mxu0 0.0
  %110 = vmatpush.msra.mxu0 0.0
  %111 = vmatpush.msra.mxu0 %v22
  %112 = vmatmul.f32.gmra.mxu0 %v54
  %v113 = vpop.f32.mrf.mxu0
  %v114 = vadd.f32 0.0, %v113
  %115 = vdwg.mxu0
  %116 = vmatpush.msra.mxu0 0.0
  %117 = vmatpush.msra.mxu0 0.0
  %118 = vmatpush.msra.mxu0 0.0
  %119 = vmatpush.msra.mxu0 0.0
  %120 = vmatpush.msra.mxu0 0.0
  %121 = vmatpush.msra.mxu0 0.0
  %122 = vmatpush.msra.mxu0 0.0
  %123 = vmatpush.msra.mxu0 0.0
  %124 = vmatpush.msra.mxu0 0.0
  %125 = vmatpush.msra.mxu0 0.0
  %126 = vmatpush.msra.mxu0 0.0
  %127 = vmatpush.msra.mxu0 0.0
  %128 = vmatpush.msra.mxu0 0.0
  %129 = vmatpush.msra.mxu0 0.0
  %130 = vmatpush.msra.mxu0 0.0
  %131 = vmatpush.msra.mxu0 %v23
  %132 = vmatmul.f32.gmra.mxu0 %v54
  %v133 = vpop.f32.mrf.mxu0
  %v134 = vadd.f32 0.0, %v133
  %135 = vdwg.mxu0
  %136 = vmatpush.msra.mxu0 0.0
  %137 = vmatpush.msra.mxu0 0.0
  %138 = vmatpush.msra.mxu0 0.0
  %139 = vmatpush.msra.mxu0 0.0
  %140 = vmatpush.msra.mxu0 0.0
  %141 = vmatpush.msra.mxu0 0.0
  %142 = vmatpush.msra.mxu0 0.0
  %143 = vmatpush.msra.mxu0 0.0
  %144 = vmatpush.msra.mxu0 0.0
  %145 = vmatpush.msra.mxu0 0.0
  %146 = vmatpush.msra.mxu0 0.0
  %147 = vmatpush.msra.mxu0 0.0
  %148 = vmatpush.msra.mxu0 0.0
  %149 = vmatpush.msra.mxu0 0.0
  %150 = vmatpush.msra.mxu0 0.0
  %151 = vmatpush.msra.mxu0 %v24
  %152 = vmatmul.f32.gmra.mxu0 %v54
  %v153 = vpop.f32.mrf.mxu0
  %v154 = vadd.f32 0.0, %v153
  %155 = vdwg.mxu0
  %156 = vmatpush.msra.mxu0 0.0
  %157 = vmatpush.msra.mxu0 0.0
  %158 = vmatpush.msra.mxu0 0.0
  %159 = vmatpush.msra.mxu0 0.0
  %160 = vmatpush.msra.mxu0 0.0
  %161 = vmatpush.msra.mxu0 0.0
  %162 = vmatpush.msra.mxu0 0.0
  %163 = vmatpush.msra.mxu0 0.0
  %164 = vmatpush.msra.mxu0 0.0
  %165 = vmatpush.msra.mxu0 0.0
  %166 = vmatpush.msra.mxu0 0.0
  %167 = vmatpush.msra.mxu0 0.0
  %168 = vmatpush.msra.mxu0 0.0
  %169 = vmatpush.msra.mxu0 0.0
  %170 = vmatpush.msra.mxu0 0.0
  %171 = vmatpush.msra.mxu0 %v25
  %172 = vmatmul.f32.gmra.mxu0 %v54
  %v173 = vpop.f32.mrf.mxu0
  %v174 = vadd.f32 0.0, %v173
  %175 = vdwg.mxu0
  %176 = vmatpush.msra.mxu0 0.0
  %177 = vmatpush.msra.mxu0 0.0
  %178 = vmatpush.msra.mxu0 0.0
  %179 = vmatpush.msra.mxu0 0.0
  %180 = vmatpush.msra.mxu0 0.0
  %181 = vmatpush.msra.mxu0 0.0
  %182 = vmatpush.msra.mxu0 0.0
  %183 = vmatpush.msra.mxu0 0.0
  %184 = vmatpush.msra.mxu0 0.0
  %185 = vmatpush.msra.mxu0 0.0
  %186 = vmatpush.msra.mxu0 0.0
  %187 = vmatpush.msra.mxu0 0.0
  %188 = vmatpush.msra.mxu0 0.0
  %189 = vmatpush.msra.mxu0 0.0
  %190 = vmatpush.msra.mxu0 0.0
  %191 = vmatpush.msra.mxu0 %v26
  %192 = vmatmul.f32.gmra.mxu0 %v54
  %v193 = vpop.f32.mrf.mxu0
  %v194 = vadd.f32 0.0, %v193
  %195 = vdwg.mxu0
  %196 = vmatpush.msra.mxu0 0.0
  %197 = vmatpush.msra.mxu0 0.0
  %198 = vmatpush.msra.mxu0 0.0
  %199 = vmatpush.msra.mxu0 0.0
  %200 = vmatpush.msra.mxu0 0.0
  %201 = vmatpush.msra.mxu0 0.0
  %202 = vmatpush.msra.mxu0 0.0
  %203 = vmatpush.msra.mxu0 0.0
  %204 = vmatpush.msra.mxu0 0.0
  %205 = vmatpush.msra.mxu0 0.0
  %206 = vmatpush.msra.mxu0 0.0
  %207 = vmatpush.msra.mxu0 0.0
  %208 = vmatpush.msra.mxu0 0.0
  %209 = vmatpush.msra.mxu0 0.0
  %210 = vmatpush.msra.mxu0 0.0
  %211 = vmatpush.msra.mxu0 %v27
  %212 = vmatmul.f32.gmra.mxu0 %v54
  %v213 = vpop.f32.mrf.mxu0
  %v214 = vadd.f32 0.0, %v213
  %215 = vdwg.mxu0
  %216 = vmatpush.msra.mxu0 0.0
  %217 = vmatpush.msra.mxu0 0.0
  %218 = vmatpush.msra.mxu0 0.0
  %219 = vmatpush.msra.mxu0 0.0
  %220 = vmatpush.msra.mxu0 0.0
  %221 = vmatpush.msra.mxu0 0.0
  %222 = vmatpush.msra.mxu0 0.0
  %223 = vmatpush.msra.mxu0 0.0
  %224 = vmatpush.msra.mxu0 0.0
  %225 = vmatpush.msra.mxu0 0.0
  %226 = vmatpush.msra.mxu0 0.0
  %227 = vmatpush.msra.mxu0 0.0
  %228 = vmatpush.msra.mxu0 0.0
  %229 = vmatpush.msra.mxu0 0.0
  %230 = vmatpush.msra.mxu0 0.0
  %231 = vmatpush.msra.mxu0 %v28
  %232 = vmatmul.f32.gmra.mxu0 %v54
  %v233 = vpop.f32.mrf.mxu0
  %v234 = vadd.f32 0.0, %v233
  %235 = vdwg.mxu0
  %236 = vmatpush.msra.mxu0 0.0
  %237 = vmatpush.msra.mxu0 0.0
  %238 = vmatpush.msra.mxu0 0.0
  %239 = vmatpush.msra.mxu0 0.0
  %240 = vmatpush.msra.mxu0 0.0
  %241 = vmatpush.msra.mxu0 0.0
  %242 = vmatpush.msra.mxu0 0.0
  %243 = vmatpush.msra.mxu0 0.0
  %244 = vmatpush.msra.mxu0 0.0
  %245 = vmatpush.msra.mxu0 0.0
  %246 = vmatpush.msra.mxu0 0.0
  %247 = vmatpush.msra.mxu0 0.0
  %248 = vmatpush.msra.mxu0 0.0
  %249 = vmatpush.msra.mxu0 0.0
  %250 = vmatpush.msra.mxu0 0.0
  %251 = vmatpush.msra.mxu0 %v29
  %252 = vmatmul.f32.gmra.mxu0 %v54
  %v253 = vpop.f32.mrf.mxu0
  %v254 = vadd.f32 0.0, %v253
  %255 = vdwg.mxu0
  %256 = vmatpush.msra.mxu0 0.0
  %257 = vmatpush.msra.mxu0 0.0
  %258 = vmatpush.msra.mxu0 0.0
  %259 = vmatpush.msra.mxu0 0.0
  %260 = vmatpush.msra.mxu0 0.0
  %261 = vmatpush.msra.mxu0 0.0
  %262 = vmatpush.msra.mxu0 0.0
  %263 = vmatpush.msra.mxu0 0.0
  %264 = vmatpush.msra.mxu0 0.0
  %265 = vmatpush.msra.mxu0 0.0
  %266 = vmatpush.msra.mxu0 0.0
  %267 = vmatpush.msra.mxu0 0.0
  %268 = vmatpush.msra.mxu0 0.0
  %269 = vmatpush.msra.mxu0 0.0
  %270 = vmatpush.msra.mxu0 0.0
  %271 = vmatpush.msra.mxu0 %v30
  %272 = vmatmul.f32.gmra.mxu0 %v54
  %v273 = vpop.f32.mrf.mxu0
  %v274 = vadd.f32 0.0, %v273
  %275 = vdwg.mxu0
  %276 = vmatpush.msra.mxu0 0.0
  %277 = vmatpush.msra.mxu0 0.0
  %278 = vmatpush.msra.mxu0 0.0
  %279 = vmatpush.msra.mxu0 0.0
  %280 = vmatpush.msra.mxu0 0.0
  %281 = vmatpush.msra.mxu0 0.0
  %282 = vmatpush.msra.mxu0 0.0
  %283 = vmatpush.msra.mxu0 0.0
  %284 = vmatpush.msra.mxu0 0.0
  %285 = vmatpush.msra.mxu0 0.0
  %286 = vmatpush.msra.mxu0 0.0
  %287 = vmatpush.msra.mxu0 0.0
  %288 = vmatpush.msra.mxu0 0.0
  %289 = vmatpush.msra.mxu0 0.0
  %290 = vmatpush.msra.mxu0 0.0
  %291 = vmatpush.msra.mxu0 %v31
  %292 = vmatmul.f32.gmra.mxu0 %v54
  %v293 = vpop.f32.mrf.mxu0
  %v294 = vadd.f32 0.0, %v293
  %295 = vdwg.mxu0
  %296 = vmatpush.msra.mxu0 0.0
  %297 = vmatpush.msra.mxu0 0.0
  %298 = vmatpush.msra.mxu0 0.0
  %299 = vmatpush.msra.mxu0 0.0
  %300 = vmatpush.msra.mxu0 0.0
  %301 = vmatpush.msra.mxu0 0.0
  %302 = vmatpush.msra.mxu0 0.0
  %303 = vmatpush.msra.mxu0 0.0
  %304 = vmatpush.msra.mxu0 0.0
  %305 = vmatpush.msra.mxu0 0.0
  %306 = vmatpush.msra.mxu0 0.0
  %307 = vmatpush.msra.mxu0 0.0
  %308 = vmatpush.msra.mxu0 0.0
  %309 = vmatpush.msra.mxu0 0.0
  %310 = vmatpush.msra.mxu0 0.0
  %311 = vmatpush.msra.mxu0 %v32
  %312 = vmatmul.f32.gmra.mxu0 %v54
  %v313 = vpop.f32.mrf.mxu0
  %v314 = vadd.f32 0.0, %v313
  %315 = vdwg.mxu0
  %316 = vmatpush.msra.mxu0 0.0
  %317 = vmatpush.msra.mxu0 0.0
  %318 = vmatpush.msra.mxu0 0.0
  %319 = vmatpush.msra.mxu0 0.0
  %320 = vmatpush.msra.mxu0 0.0
  %321 = vmatpush.msra.mxu0 0.0
  %322 = vmatpush.msra.mxu0 0.0
  %323 = vmatpush.msra.mxu0 0.0
  %324 = vmatpush.msra.mxu0 0.0
  %325 = vmatpush.msra.mxu0 0.0
  %326 = vmatpush.msra.mxu0 0.0
  %327 = vmatpush.msra.mxu0 0.0
  %328 = vmatpush.msra.mxu0 0.0
  %329 = vmatpush.msra.mxu0 0.0
  %330 = vmatpush.msra.mxu0 0.0
  %331 = vmatpush.msra.mxu0 %v33
  %332 = vmatmul.f32.gmra.mxu0 %v54
  %v333 = vpop.f32.mrf.mxu0
  %v334 = vadd.f32 0.0, %v333
  %335 = vdwg.mxu0
  %336 = vmatpush.msra.mxu0 0.0
  %337 = vmatpush.msra.mxu0 0.0
  %338 = vmatpush.msra.mxu0 0.0
  %339 = vmatpush.msra.mxu0 0.0
  %340 = vmatpush.msra.mxu0 0.0
  %341 = vmatpush.msra.mxu0 0.0
  %342 = vmatpush.msra.mxu0 0.0
  %343 = vmatpush.msra.mxu0 0.0
  %344 = vmatpush.msra.mxu0 0.0
  %345 = vmatpush.msra.mxu0 0.0
  %346 = vmatpush.msra.mxu0 0.0
  %347 = vmatpush.msra.mxu0 0.0
  %348 = vmatpush.msra.mxu0 0.0
  %349 = vmatpush.msra.mxu0 0.0
  %350 = vmatpush.msra.mxu0 0.0
  %351 = vmatpush.msra.mxu0 %v34
  %352 = vmatmul.f32.gmra.mxu0 %v54
  %v353 = vpop.f32.mrf.mxu0
  %v354 = vadd.f32 0.0, %v353
  %355 = vdwg.mxu0
  %356 = vmatpush.msra.mxu0 0.0
  %357 = vmatpush.msra.mxu0 0.0
  %358 = vmatpush.msra.mxu0 0.0
  %359 = vmatpush.msra.mxu0 0.0
  %360 = vmatpush.msra.mxu0 0.0
  %361 = vmatpush.msra.mxu0 0.0
  %362 = vmatpush.msra.mxu0 0.0
  %363 = vmatpush.msra.mxu0 0.0
  %364 = vmatpush.msra.mxu0 0.0
  %365 = vmatpush.msra.mxu0 0.0
  %366 = vmatpush.msra.mxu0 0.0
  %367 = vmatpush.msra.mxu0 0.0
  %368 = vmatpush.msra.mxu0 0.0
  %369 = vmatpush.msra.mxu0 0.0
  %370 = vmatpush.msra.mxu0 0.0
  %371 = vmatpush.msra.mxu0 %v35
  %372 = vmatmul.f32.gmra.mxu0 %v54
  %v373 = vpop.f32.mrf.mxu0
  %v374 = vadd.f32 0.0, %v373
  %375 = vdwg.mxu0
  %376 = vmatpush.msra.mxu0 0.0
  %377 = vmatpush.msra.mxu0 0.0
  %378 = vmatpush.msra.mxu0 0.0
  %379 = vmatpush.msra.mxu0 0.0
  %380 = vmatpush.msra.mxu0 0.0
  %381 = vmatpush.msra.mxu0 0.0
  %382 = vmatpush.msra.mxu0 0.0
  %383 = vmatpush.msra.mxu0 0.0
  %384 = vmatpush.msra.mxu0 0.0
  %385 = vmatpush.msra.mxu0 0.0
  %386 = vmatpush.msra.mxu0 0.0
  %387 = vmatpush.msra.mxu0 0.0
  %388 = vmatpush.msra.mxu0 0.0
  %389 = vmatpush.msra.mxu0 0.0
  %390 = vmatpush.msra.mxu0 0.0
  %391 = vmatpush.msra.mxu0 %v36
  %392 = vmatmul.f32.gmra.mxu0 %v54
  %v393 = vpop.f32.mrf.mxu0
  %v394 = vadd.f32 0.0, %v393
  %395 = vdwg.mxu0
  %396 = vmatpush.msra.mxu0 0.0
  %397 = vmatpush.msra.mxu0 0.0
  %398 = vmatpush.msra.mxu0 0.0
  %399 = vmatpush.msra.mxu0 0.0
  %400 = vmatpush.msra.mxu0 0.0
  %401 = vmatpush.msra.mxu0 0.0
  %402 = vmatpush.msra.mxu0 0.0
  %403 = vmatpush.msra.mxu0 0.0
  %404 = vmatpush.msra.mxu0 0.0
  %405 = vmatpush.msra.mxu0 0.0
  %406 = vmatpush.msra.mxu0 0.0
  %407 = vmatpush.msra.mxu0 0.0
  %408 = vmatpush.msra.mxu0 0.0
  %409 = vmatpush.msra.mxu0 0.0
  %410 = vmatpush.msra.mxu0 0.0
  %411 = vmatpush.msra.mxu0 %v37
  %412 = vmatmul.f32.gmra.mxu0 %v54
  %v413 = vpop.f32.mrf.mxu0
  %v414 = vadd.f32 0.0, %v413
  %415 = vdwg.mxu0
  %416 = vmatpush.msra.mxu0 0.0
  %417 = vmatpush.msra.mxu0 0.0
  %418 = vmatpush.msra.mxu0 0.0
  %419 = vmatpush.msra.mxu0 0.0
  %420 = vmatpush.msra.mxu0 0.0
  %421 = vmatpush.msra.mxu0 0.0
  %422 = vmatpush.msra.mxu0 0.0
  %423 = vmatpush.msra.mxu0 0.0
  %424 = vmatpush.msra.mxu0 0.0
  %425 = vmatpush.msra.mxu0 0.0
  %426 = vmatpush.msra.mxu0 0.0
  %427 = vmatpush.msra.mxu0 0.0
  %428 = vmatpush.msra.mxu0 0.0
  %429 = vmatpush.msra.mxu0 0.0
  %430 = vmatpush.msra.mxu0 0.0
  %431 = vmatpush.msra.mxu0 %v38
  %432 = vmatmul.f32.gmra.mxu0 %v54
  %v433 = vpop.f32.mrf.mxu0
  %v434 = vadd.f32 0.0, %v433
  %435 = vdwg.mxu0
  %436 = vmatpush.msra.mxu0 0.0
  %437 = vmatpush.msra.mxu0 0.0
  %438 = vmatpush.msra.mxu0 0.0
  %439 = vmatpush.msra.mxu0 0.0
  %440 = vmatpush.msra.mxu0 0.0
  %441 = vmatpush.msra.mxu0 0.0
  %442 = vmatpush.msra.mxu0 0.0
  %443 = vmatpush.msra.mxu0 0.0
  %444 = vmatpush.msra.mxu0 0.0
  %445 = vmatpush.msra.mxu0 0.0
  %446 = vmatpush.msra.mxu0 0.0
  %447 = vmatpush.msra.mxu0 0.0
  %448 = vmatpush.msra.mxu0 0.0
  %449 = vmatpush.msra.mxu0 0.0
  %450 = vmatpush.msra.mxu0 0.0
  %451 = vmatpush.msra.mxu0 %v39
  %452 = vmatmul.f32.gmra.mxu0 %v54
  %v453 = vpop.f32.mrf.mxu0
  %v454 = vadd.f32 0.0, %v453
  %455 = vdwg.mxu0
  %456 = vmatpush.msra.mxu0 0.0
  %457 = vmatpush.msra.mxu0 0.0
  %458 = vmatpush.msra.mxu0 0.0
  %459 = vmatpush.msra.mxu0 0.0
  %460 = vmatpush.msra.mxu0 0.0
  %461 = vmatpush.msra.mxu0 0.0
  %462 = vmatpush.msra.mxu0 0.0
  %463 = vmatpush.msra.mxu0 0.0
  %464 = vmatpush.msra.mxu0 0.0
  %465 = vmatpush.msra.mxu0 0.0
  %466 = vmatpush.msra.mxu0 0.0
  %467 = vmatpush.msra.mxu0 0.0
  %468 = vmatpush.msra.mxu0 0.0
  %469 = vmatpush.msra.mxu0 0.0
  %470 = vmatpush.msra.mxu0 0.0
  %471 = vmatpush.msra.mxu0 %v40
  %472 = vmatmul.f32.gmra.mxu0 %v54
  %v473 = vpop.f32.mrf.mxu0
  %v474 = vadd.f32 0.0, %v473
  %475 = vdwg.mxu0
  %476 = vmatpush.msra.mxu0 0.0
  %477 = vmatpush.msra.mxu0 0.0
  %478 = vmatpush.msra.mxu0 0.0
  %479 = vmatpush.msra.mxu0 0.0
  %480 = vmatpush.msra.mxu0 0.0
  %481 = vmatpush.msra.mxu0 0.0
  %482 = vmatpush.msra.mxu0 0.0
  %483 = vmatpush.msra.mxu0 0.0
  %484 = vmatpush.msra.mxu0 0.0
  %485 = vmatpush.msra.mxu0 0.0
  %486 = vmatpush.msra.mxu0 0.0
  %487 = vmatpush.msra.mxu0 0.0
  %488 = vmatpush.msra.mxu0 0.0
  %489 = vmatpush.msra.mxu0 0.0
  %490 = vmatpush.msra.mxu0 0.0
  %491 = vmatpush.msra.mxu0 %v41
  %492 = vmatmul.f32.gmra.mxu0 %v54
  %v493 = vpop.f32.mrf.mxu0
  %v494 = vadd.f32 0.0, %v493
  %495 = vdwg.mxu0
  %496 = vmatpush.msra.mxu0 0.0
  %497 = vmatpush.msra.mxu0 0.0
  %498 = vmatpush.msra.mxu0 0.0
  %499 = vmatpush.msra.mxu0 0.0
  %500 = vmatpush.msra.mxu0 0.0
  %501 = vmatpush.msra.mxu0 0.0
  %502 = vmatpush.msra.mxu0 0.0
  %503 = vmatpush.msra.mxu0 0.0
  %504 = vmatpush.msra.mxu0 0.0
  %505 = vmatpush.msra.mxu0 0.0
  %506 = vmatpush.msra.mxu0 0.0
  %507 = vmatpush.msra.mxu0 0.0
  %508 = vmatpush.msra.mxu0 0.0
  %509 = vmatpush.msra.mxu0 0.0
  %510 = vmatpush.msra.mxu0 0.0
  %511 = vmatpush.msra.mxu0 %v42
  %512 = vmatmul.f32.gmra.mxu0 %v54
  %v513 = vpop.f32.mrf.mxu0
  %v514 = vadd.f32 0.0, %v513
  %515 = vdwg.mxu0
  %516 = vmatpush.msra.mxu0 0.0
  %517 = vmatpush.msra.mxu0 0.0
  %518 = vmatpush.msra.mxu0 0.0
  %519 = vmatpush.msra.mxu0 0.0
  %520 = vmatpush.msra.mxu0 0.0
  %521 = vmatpush.msra.mxu0 0.0
  %522 = vmatpush.msra.mxu0 0.0
  %523 = vmatpush.msra.mxu0 0.0
  %524 = vmatpush.msra.mxu0 0.0
  %525 = vmatpush.msra.mxu0 0.0
  %526 = vmatpush.msra.mxu0 0.0
  %527 = vmatpush.msra.mxu0 0.0
  %528 = vmatpush.msra.mxu0 0.0
  %529 = vmatpush.msra.mxu0 0.0
  %530 = vmatpush.msra.mxu0 0.0
  %531 = vmatpush.msra.mxu0 %v43
  %532 = vmatmul.f32.gmra.mxu0 %v54
  %v533 = vpop.f32.mrf.mxu0
  %v534 = vadd.f32 0.0, %v533
  %535 = vdwg.mxu0
  %536 = vmatpush.msra.mxu0 0.0
  %537 = vmatpush.msra.mxu0 0.0
  %538 = vmatpush.msra.mxu0 0.0
  %539 = vmatpush.msra.mxu0 0.0
  %540 = vmatpush.msra.mxu0 0.0
  %541 = vmatpush.msra.mxu0 0.0
  %542 = vmatpush.msra.mxu0 0.0
  %543 = vmatpush.msra.mxu0 0.0
  %544 = vmatpush.msra.mxu0 0.0
  %545 = vmatpush.msra.mxu0 0.0
  %546 = vmatpush.msra.mxu0 0.0
  %547 = vmatpush.msra.mxu0 0.0
  %548 = vmatpush.msra.mxu0 0.0
  %549 = vmatpush.msra.mxu0 0.0
  %550 = vmatpush.msra.mxu0 0.0
  %551 = vmatpush.msra.mxu0 %v44
  %552 = vmatmul.f32.gmra.mxu0 %v54
  %v553 = vpop.f32.mrf.mxu0
  %v554 = vadd.f32 0.0, %v553
  %555 = vdwg.mxu0
  %556 = vmatpush.msra.mxu0 0.0
  %557 = vmatpush.msra.mxu0 0.0
  %558 = vmatpush.msra.mxu0 0.0
  %559 = vmatpush.msra.mxu0 0.0
  %560 = vmatpush.msra.mxu0 0.0
  %561 = vmatpush.msra.mxu0 0.0
  %562 = vmatpush.msra.mxu0 0.0
  %563 = vmatpush.msra.mxu0 0.0
  %564 = vmatpush.msra.mxu0 0.0
  %565 = vmatpush.msra.mxu0 0.0
  %566 = vmatpush.msra.mxu0 0.0
  %567 = vmatpush.msra.mxu0 0.0
  %568 = vmatpush.msra.mxu0 0.0
  %569 = vmatpush.msra.mxu0 0.0
  %570 = vmatpush.msra.mxu0 0.0
  %571 = vmatpush.msra.mxu0 %v45
  %572 = vmatmul.f32.gmra.mxu0 %v54
  %v573 = vpop.f32.mrf.mxu0
  %v574 = vadd.f32 0.0, %v573
  %575 = vdwg.mxu0
  %576 = vmatpush.msra.mxu0 0.0
  %577 = vmatpush.msra.mxu0 0.0
  %578 = vmatpush.msra.mxu0 0.0
  %579 = vmatpush.msra.mxu0 0.0
  %580 = vmatpush.msra.mxu0 0.0
  %581 = vmatpush.msra.mxu0 0.0
  %582 = vmatpush.msra.mxu0 0.0
  %583 = vmatpush.msra.mxu0 0.0
  %584 = vmatpush.msra.mxu0 0.0
  %585 = vmatpush.msra.mxu0 0.0
  %586 = vmatpush.msra.mxu0 0.0
  %587 = vmatpush.msra.mxu0 0.0
  %588 = vmatpush.msra.mxu0 0.0
  %589 = vmatpush.msra.mxu0 0.0
  %590 = vmatpush.msra.mxu0 0.0
  %591 = vmatpush.msra.mxu0 %v46
  %592 = vmatmul.f32.gmra.mxu0 %v54
  %v593 = vpop.f32.mrf.mxu0
  %v594 = vadd.f32 0.0, %v593
  %595 = vdwg.mxu0
  %596 = vmatpush.msra.mxu0 0.0
  %597 = vmatpush.msra.mxu0 0.0
  %598 = vmatpush.msra.mxu0 0.0
  %599 = vmatpush.msra.mxu0 0.0
  %600 = vmatpush.msra.mxu0 0.0
  %601 = vmatpush.msra.mxu0 0.0
  %602 = vmatpush.msra.mxu0 0.0
  %603 = vmatpush.msra.mxu0 0.0
  %604 = vmatpush.msra.mxu0 0.0
  %605 = vmatpush.msra.mxu0 0.0
  %606 = vmatpush.msra.mxu0 0.0
  %607 = vmatpush.msra.mxu0 0.0
  %608 = vmatpush.msra.mxu0 0.0
  %609 = vmatpush.msra.mxu0 0.0
  %610 = vmatpush.msra.mxu0 0.0
  %611 = vmatpush.msra.mxu0 %v47
  %612 = vmatmul.f32.gmra.mxu0 %v54
  %v613 = vpop.f32.mrf.mxu0
  %v614 = vadd.f32 0.0, %v613
  %615 = vdwg.mxu0
  %616 = vmatpush.msra.mxu0 0.0
  %617 = vmatpush.msra.mxu0 0.0
  %618 = vmatpush.msra.mxu0 0.0
  %619 = vmatpush.msra.mxu0 0.0
  %620 = vmatpush.msra.mxu0 0.0
  %621 = vmatpush.msra.mxu0 0.0
  %622 = vmatpush.msra.mxu0 0.0
  %623 = vmatpush.msra.mxu0 0.0
  %624 = vmatpush.msra.mxu0 0.0
  %625 = vmatpush.msra.mxu0 0.0
  %626 = vmatpush.msra.mxu0 0.0
  %627 = vmatpush.msra.mxu0 0.0
  %628 = vmatpush.msra.mxu0 0.0
  %629 = vmatpush.msra.mxu0 0.0
  %630 = vmatpush.msra.mxu0 0.0
  %631 = vmatpush.msra.mxu0 %v48
  %632 = vmatmul.f32.gmra.mxu0 %v54
  %v633 = vpop.f32.mrf.mxu0
  %v634 = vadd.f32 0.0, %v633
  %635 = vdwg.mxu0
  %636 = vmatpush.msra.mxu0 0.0
  %637 = vmatpush.msra.mxu0 0.0
  %638 = vmatpush.msra.mxu0 0.0
  %639 = vmatpush.msra.mxu0 0.0
  %640 = vmatpush.msra.mxu0 0.0
  %641 = vmatpush.msra.mxu0 0.0
  %642 = vmatpush.msra.mxu0 0.0
  %643 = vmatpush.msra.mxu0 0.0
  %644 = vmatpush.msra.mxu0 0.0
  %645 = vmatpush.msra.mxu0 0.0
  %646 = vmatpush.msra.mxu0 0.0
  %647 = vmatpush.msra.mxu0 0.0
  %648 = vmatpush.msra.mxu0 0.0
  %649 = vmatpush.msra.mxu0 0.0
  %650 = vmatpush.msra.mxu0 0.0
  %651 = vmatpush.msra.mxu0 %v49
  %652 = vmatmul.f32.gmra.mxu0 %v54
  %v653 = vpop.f32.mrf.mxu0
  %v654 = vadd.f32 0.0, %v653
  %655 = vdwg.mxu0
  %656 = vmatpush.msra.mxu0 0.0
  %657 = vmatpush.msra.mxu0 0.0
  %658 = vmatpush.msra.mxu0 0.0
  %659 = vmatpush.msra.mxu0 0.0
  %660 = vmatpush.msra.mxu0 0.0
  %661 = vmatpush.msra.mxu0 0.0
  %662 = vmatpush.msra.mxu0 0.0
  %663 = vmatpush.msra.mxu0 0.0
  %664 = vmatpush.msra.mxu0 0.0
  %665 = vmatpush.msra.mxu0 0.0
  %666 = vmatpush.msra.mxu0 0.0
  %667 = vmatpush.msra.mxu0 0.0
  %668 = vmatpush.msra.mxu0 0.0
  %669 = vmatpush.msra.mxu0 0.0
  %670 = vmatpush.msra.mxu0 0.0
  %671 = vmatpush.msra.mxu0 %v50
  %672 = vmatmul.f32.gmra.mxu0 %v54
  %v673 = vpop.f32.mrf.mxu0
  %v674 = vadd.f32 0.0, %v673
  %675 = vdwg.mxu0
  %676 = vmatpush.msra.mxu0 0.0
  %677 = vmatpush.msra.mxu0 0.0
  %678 = vmatpush.msra.mxu0 0.0
  %679 = vmatpush.msra.mxu0 0.0
  %680 = vmatpush.msra.mxu0 0.0
  %681 = vmatpush.msra.mxu0 0.0
  %682 = vmatpush.msra.mxu0 0.0
  %683 = vmatpush.msra.mxu0 0.0
  %684 = vmatpush.msra.mxu0 0.0
  %685 = vmatpush.msra.mxu0 0.0
  %686 = vmatpush.msra.mxu0 0.0
  %687 = vmatpush.msra.mxu0 0.0
  %688 = vmatpush.msra.mxu0 0.0
  %689 = vmatpush.msra.mxu0 0.0
  %690 = vmatpush.msra.mxu0 0.0
  %691 = vmatpush.msra.mxu0 %v51
  %692 = vmatmul.f32.gmra.mxu0 %v54
  %v693 = vpop.f32.mrf.mxu0
  %v694 = vadd.f32 0.0, %v693
  %695 = vdwg.mxu0
  %v696 = vld [vmem:[%s2] sm:$0xff]
  %v697 = vld [vmem:[%s2 + $0x8] sm:$0xff]
  %v698 = vld [vmem:[%s2 + $0x10] sm:$0xff]
  %v699 = vld [vmem:[%s2 + $0x18] sm:$0xff]
  %v700 = vld [vmem:[%s2 + $0x20] sm:$0xff]
  %v701 = vld [vmem:[%s2 + $0x28] sm:$0xff]
  %v702 = vld [vmem:[%s2 + $0x30] sm:$0xff]
  %v703 = vld [vmem:[%s2 + $0x38] sm:$0xff]
  %v704 = vld [vmem:[%s2 + $0x40] sm:$0xff]
  %v705 = vld [vmem:[%s2 + $0x48] sm:$0xff]
  %v706 = vld [vmem:[%s2 + $0x50] sm:$0xff]
  %v707 = vld [vmem:[%s2 + $0x58] sm:$0xff]
  %v708 = vld [vmem:[%s2 + $0x60] sm:$0xff]
  %v709 = vld [vmem:[%s2 + $0x68] sm:$0xff]
  %v710 = vld [vmem:[%s2 + $0x70] sm:$0xff]
  %v711 = vld [vmem:[%s2 + $0x78] sm:$0xff]
  %v712 = vld [vmem:[%s2 + $0x80] sm:$0xff]
  %v713 = vld [vmem:[%s2 + $0x88] sm:$0xff]
  %v714 = vld [vmem:[%s2 + $0x90] sm:$0xff]
  %v715 = vld [vmem:[%s2 + $0x98] sm:$0xff]
  %v716 = vld [vmem:[%s2 + $0xa0] sm:$0xff]
  %v717 = vld [vmem:[%s2 + $0xa8] sm:$0xff]
  %v718 = vld [vmem:[%s2 + $0xb0] sm:$0xff]
  %v719 = vld [vmem:[%s2 + $0xb8] sm:$0xff]
  %v720 = vld [vmem:[%s2 + $0xc0] sm:$0xff]
  %v721 = vld [vmem:[%s2 + $0xc8] sm:$0xff]
  %v722 = vld [vmem:[%s2 + $0xd0] sm:$0xff]
  %v723 = vld [vmem:[%s2 + $0xd8] sm:$0xff]
  %v724 = vld [vmem:[%s2 + $0xe0] sm:$0xff]
  %v725 = vld [vmem:[%s2 + $0xe8] sm:$0xff]
  %v726 = vld [vmem:[%s2 + $0xf0] sm:$0xff]
  %v727 = vld [vmem:[%s2 + $0xf8] sm:$0xff]
  %v728 = vld [vmem:[%s2 + $0x100] sm:$0xff]
  %v729 = vld [vmem:[%s2 + $0x108] sm:$0xff]
  %v730 = vld [vmem:[%s2 + $0x110] sm:$0xff]
  %v731 = vld [vmem:[%s2 + $0x118] sm:$0xff]
  %v732 = vld [vmem:[%s2 + $0x120] sm:$0xff]
  %v733 = vld [vmem:[%s2 + $0x128] sm:$0xff]
  %v734 = vld [vmem:[%s2 + $0x130] sm:$0xff]
  %v735 = vld [vmem:[%s2 + $0x138] sm:$0xff]
  %v736 = vld [vmem:[%s2 + $0x140] sm:$0xff]
  %v737 = vld [vmem:[%s2 + $0x148] sm:$0xff]
  %v738 = vld [vmem:[%s2 + $0x150] sm:$0xff]
  %v739 = vld [vmem:[%s2 + $0x158] sm:$0xff]
  %v740 = vld [vmem:[%s2 + $0x160] sm:$0xff]
  %v741 = vld [vmem:[%s2 + $0x168] sm:$0xff]
  %v742 = vld [vmem:[%s2 + $0x170] sm:$0xff]
  %v743 = vld [vmem:[%s2 + $0x178] sm:$0xff]
  %v744 = vld [vmem:[%s2 + $0x180] sm:$0xff]
  %v745 = vld [vmem:[%s2 + $0x188] sm:$0xff]
  %v746 = vld [vmem:[%s2 + $0x190] sm:$0xff]
  %v747 = vld [vmem:[%s2 + $0x198] sm:$0xff]
  %v748 = vld [vmem:[%s2 + $0x1a0] sm:$0xff]
  %v749 = vld [vmem:[%s2 + $0x1a8] sm:$0xff]
  %v750 = vld [vmem:[%s2 + $0x1b0] sm:$0xff]
  %v751 = vld [vmem:[%s2 + $0x1b8] sm:$0xff]
  %v752 = vld [vmem:[%s2 + $0x1c0] sm:$0xff]
  %v753 = vld [vmem:[%s2 + $0x1c8] sm:$0xff]
  %v754 = vld [vmem:[%s2 + $0x1d0] sm:$0xff]
  %v755 = vld [vmem:[%s2 + $0x1d8] sm:$0xff]
  %v756 = vld [vmem:[%s2 + $0x1e0] sm:$0xff]
  %v757 = vld [vmem:[%s2 + $0x1e8] sm:$0xff]
  %v758 = vld [vmem:[%s2 + $0x1f0] sm:$0xff]
  %v759 = vld [vmem:[%s2 + $0x1f8] sm:$0xff]
  %v760 = vld [vmem:[%s2 + $0x200] sm:$0xff]
  %v761 = vld [vmem:[%s2 + $0x208] sm:$0xff]
  %v762 = vld [vmem:[%s2 + $0x210] sm:$0xff]
  %v763 = vld [vmem:[%s2 + $0x218] sm:$0xff]
  %v764 = vld [vmem:[%s2 + $0x220] sm:$0xff]
  %v765 = vld [vmem:[%s2 + $0x228] sm:$0xff]
  %v766 = vld [vmem:[%s2 + $0x230] sm:$0xff]
  %v767 = vld [vmem:[%s2 + $0x238] sm:$0xff]
  %v768 = vld [vmem:[%s2 + $0x240] sm:$0xff]
  %v769 = vld [vmem:[%s2 + $0x248] sm:$0xff]
  %v770 = vld [vmem:[%s2 + $0x250] sm:$0xff]
  %v771 = vld [vmem:[%s2 + $0x258] sm:$0xff]
  %v772 = vld [vmem:[%s2 + $0x260] sm:$0xff]
  %v773 = vld [vmem:[%s2 + $0x268] sm:$0xff]
  %v774 = vld [vmem:[%s2 + $0x270] sm:$0xff]
  %v775 = vld [vmem:[%s2 + $0x278] sm:$0xff]
  %v776 = vld [vmem:[%s2 + $0x280] sm:$0xff]
  %v777 = vld [vmem:[%s2 + $0x288] sm:$0xff]
  %v778 = vld [vmem:[%s2 + $0x290] sm:$0xff]
  %v779 = vld [vmem:[%s2 + $0x298] sm:$0xff]
  %v780 = vld [vmem:[%s2 + $0x2a0] sm:$0xff]
  %v781 = vld [vmem:[%s2 + $0x2a8] sm:$0xff]
  %v782 = vld [vmem:[%s2 + $0x2b0] sm:$0xff]
  %v783 = vld [vmem:[%s2 + $0x2b8] sm:$0xff]
  %v784 = vld [vmem:[%s2 + $0x2c0] sm:$0xff]
  %v785 = vld [vmem:[%s2 + $0x2c8] sm:$0xff]
  %v786 = vld [vmem:[%s2 + $0x2d0] sm:$0xff]
  %v787 = vld [vmem:[%s2 + $0x2d8] sm:$0xff]
  %v788 = vld [vmem:[%s2 + $0x2e0] sm:$0xff]
  %v789 = vld [vmem:[%s2 + $0x2e8] sm:$0xff]
  %v790 = vld [vmem:[%s2 + $0x2f0] sm:$0xff]
  %v791 = vld [vmem:[%s2 + $0x2f8] sm:$0xff]
  %v792 = vld [vmem:[%s2 + $0x300] sm:$0xff]
  %v793 = vld [vmem:[%s2 + $0x308] sm:$0xff]
  %v794 = vld [vmem:[%s2 + $0x310] sm:$0xff]
  %v795 = vld [vmem:[%s2 + $0x318] sm:$0xff]
  %v796 = vld [vmem:[%s2 + $0x320] sm:$0xff]
  %v797 = vld [vmem:[%s2 + $0x328] sm:$0xff]
  %v798 = vld [vmem:[%s2 + $0x330] sm:$0xff]
  %v799 = vld [vmem:[%s2 + $0x338] sm:$0xff]
  %v800 = vld [vmem:[%s2 + $0x340] sm:$0xff]
  %v801 = vld [vmem:[%s2 + $0x348] sm:$0xff]
  %v802 = vld [vmem:[%s2 + $0x350] sm:$0xff]
  %v803 = vld [vmem:[%s2 + $0x358] sm:$0xff]
  %v804 = vld [vmem:[%s2 + $0x360] sm:$0xff]
  %v805 = vld [vmem:[%s2 + $0x368] sm:$0xff]
  %v806 = vld [vmem:[%s2 + $0x370] sm:$0xff]
  %v807 = vld [vmem:[%s2 + $0x378] sm:$0xff]
  %v808 = vld [vmem:[%s2 + $0x380] sm:$0xff]
  %v809 = vld [vmem:[%s2 + $0x388] sm:$0xff]
  %v810 = vld [vmem:[%s2 + $0x390] sm:$0xff]
  %v811 = vld [vmem:[%s2 + $0x398] sm:$0xff]
  %v812 = vld [vmem:[%s2 + $0x3a0] sm:$0xff]
  %v813 = vld [vmem:[%s2 + $0x3a8] sm:$0xff]
  %v814 = vld [vmem:[%s2 + $0x3b0] sm:$0xff]
  %v815 = vld [vmem:[%s2 + $0x3b8] sm:$0xff]
  %v816 = vld [vmem:[%s2 + $0x3c0] sm:$0xff]
  %v817 = vld [vmem:[%s2 + $0x3c8] sm:$0xff]
  %v818 = vld [vmem:[%s2 + $0x3d0] sm:$0xff]
  %v819 = vld [vmem:[%s2 + $0x3d8] sm:$0xff]
  %v820 = vld [vmem:[%s2 + $0x3e0] sm:$0xff]
  %v821 = vld [vmem:[%s2 + $0x3e8] sm:$0xff]
  %v822 = vld [vmem:[%s2 + $0x3f0] sm:$0xff]
  %v823 = vld [vmem:[%s2 + $0x3f8] sm:$0xff]
  %v824 = vld [vmem:[%s2 + $0x400] sm:$0xff]
  %v825 = vld [vmem:[%s2 + $0x408] sm:$0xff]
  %v826 = vld [vmem:[%s2 + $0x410] sm:$0xff]
  %v827 = vld [vmem:[%s2 + $0x418] sm:$0xff]
  %v828 = vld [vmem:[%s2 + $0x420] sm:$0xff]
  %v829 = vld [vmem:[%s2 + $0x428] sm:$0xff]
  %v830 = vld [vmem:[%s2 + $0x430] sm:$0xff]
  %v831 = vld [vmem:[%s2 + $0x438] sm:$0xff]
  %v832 = vld [vmem:[%s2 + $0x440] sm:$0xff]
  %v833 = vld [vmem:[%s2 + $0x448] sm:$0xff]
  %v834 = vld [vmem:[%s2 + $0x450] sm:$0xff]
  %v835 = vld [vmem:[%s2 + $0x458] sm:$0xff]
  %v836 = vld [vmem:[%s2 + $0x460] sm:$0xff]
  %v837 = vld [vmem:[%s2 + $0x468] sm:$0xff]
  %v838 = vld [vmem:[%s2 + $0x470] sm:$0xff]
  %v839 = vld [vmem:[%s2 + $0x478] sm:$0xff]
  %v840 = vld [vmem:[%s2 + $0x480] sm:$0xff]
  %v841 = vld [vmem:[%s2 + $0x488] sm:$0xff]
  %v842 = vld [vmem:[%s2 + $0x490] sm:$0xff]
  %v843 = vld [vmem:[%s2 + $0x498] sm:$0xff]
  %v844 = vld [vmem:[%s2 + $0x4a0] sm:$0xff]
  %v845 = vld [vmem:[%s2 + $0x4a8] sm:$0xff]
  %v846 = vld [vmem:[%s2 + $0x4b0] sm:$0xff]
  %v847 = vld [vmem:[%s2 + $0x4b8] sm:$0xff]
  %v848 = vld [vmem:[%s2 + $0x4c0] sm:$0xff]
  %v849 = vld [vmem:[%s2 + $0x4c8] sm:$0xff]
  %v850 = vld [vmem:[%s2 + $0x4d0] sm:$0xff]
  %v851 = vld [vmem:[%s2 + $0x4d8] sm:$0xff]
  %v852 = vld [vmem:[%s2 + $0x4e0] sm:$0xff]
  %v853 = vld [vmem:[%s2 + $0x4e8] sm:$0xff]
  %v854 = vld [vmem:[%s2 + $0x4f0] sm:$0xff]
  %v855 = vld [vmem:[%s2 + $0x4f8] sm:$0xff]
  %v856 = vld [vmem:[%s2 + $0x500] sm:$0xff]
  %v857 = vld [vmem:[%s2 + $0x508] sm:$0xff]
  %v858 = vld [vmem:[%s2 + $0x510] sm:$0xff]
  %v859 = vld [vmem:[%s2 + $0x518] sm:$0xff]
  %v860 = vld [vmem:[%s2 + $0x520] sm:$0xff]
  %v861 = vld [vmem:[%s2 + $0x528] sm:$0xff]
  %v862 = vld [vmem:[%s2 + $0x530] sm:$0xff]
  %v863 = vld [vmem:[%s2 + $0x538] sm:$0xff]
  %v864 = vld [vmem:[%s2 + $0x540] sm:$0xff]
  %v865 = vld [vmem:[%s2 + $0x548] sm:$0xff]
  %v866 = vld [vmem:[%s2 + $0x550] sm:$0xff]
  %v867 = vld [vmem:[%s2 + $0x558] sm:$0xff]
  %v868 = vld [vmem:[%s2 + $0x560] sm:$0xff]
  %v869 = vld [vmem:[%s2 + $0x568] sm:$0xff]
  %v870 = vld [vmem:[%s2 + $0x570] sm:$0xff]
  %v871 = vld [vmem:[%s2 + $0x578] sm:$0xff]
  %v872 = vld [vmem:[%s2 + $0x580] sm:$0xff]
  %v873 = vld [vmem:[%s2 + $0x588] sm:$0xff]
  %v874 = vld [vmem:[%s2 + $0x590] sm:$0xff]
  %v875 = vld [vmem:[%s2 + $0x598] sm:$0xff]
  %v876 = vld [vmem:[%s2 + $0x5a0] sm:$0xff]
  %v877 = vld [vmem:[%s2 + $0x5a8] sm:$0xff]
  %v878 = vld [vmem:[%s2 + $0x5b0] sm:$0xff]
  %v879 = vld [vmem:[%s2 + $0x5b8] sm:$0xff]
  %v880 = vld [vmem:[%s2 + $0x5c0] sm:$0xff]
  %v881 = vld [vmem:[%s2 + $0x5c8] sm:$0xff]
  %v882 = vld [vmem:[%s2 + $0x5d0] sm:$0xff]
  %v883 = vld [vmem:[%s2 + $0x5d8] sm:$0xff]
  %v884 = vld [vmem:[%s2 + $0x5e0] sm:$0xff]
  %v885 = vld [vmem:[%s2 + $0x5e8] sm:$0xff]
  %v886 = vld [vmem:[%s2 + $0x5f0] sm:$0xff]
  %v887 = vld [vmem:[%s2 + $0x5f8] sm:$0xff]
  %v888 = vld [vmem:[%s2 + $0x600] sm:$0xff]
  %v889 = vld [vmem:[%s2 + $0x608] sm:$0xff]
  %v890 = vld [vmem:[%s2 + $0x610] sm:$0xff]
  %v891 = vld [vmem:[%s2 + $0x618] sm:$0xff]
  %v892 = vld [vmem:[%s2 + $0x620] sm:$0xff]
  %v893 = vld [vmem:[%s2 + $0x628] sm:$0xff]
  %v894 = vld [vmem:[%s2 + $0x630] sm:$0xff]
  %v895 = vld [vmem:[%s2 + $0x638] sm:$0xff]
  %v896 = vld [vmem:[%s2 + $0x640] sm:$0xff]
  %v897 = vld [vmem:[%s2 + $0x648] sm:$0xff]
  %v898 = vld [vmem:[%s2 + $0x650] sm:$0xff]
  %v899 = vld [vmem:[%s2 + $0x658] sm:$0xff]
  %v900 = vld [vmem:[%s2 + $0x660] sm:$0xff]
  %v901 = vld [vmem:[%s2 + $0x668] sm:$0xff]
  %v902 = vld [vmem:[%s2 + $0x670] sm:$0xff]
  %v903 = vld [vmem:[%s2 + $0x678] sm:$0xff]
  %v904 = vld [vmem:[%s2 + $0x680] sm:$0xff]
  %v905 = vld [vmem:[%s2 + $0x688] sm:$0xff]
  %v906 = vld [vmem:[%s2 + $0x690] sm:$0xff]
  %v907 = vld [vmem:[%s2 + $0x698] sm:$0xff]
  %v908 = vld [vmem:[%s2 + $0x6a0] sm:$0xff]
  %v909 = vld [vmem:[%s2 + $0x6a8] sm:$0xff]
  %v910 = vld [vmem:[%s2 + $0x6b0] sm:$0xff]
  %v911 = vld [vmem:[%s2 + $0x6b8] sm:$0xff]
  %v912 = vld [vmem:[%s2 + $0x6c0] sm:$0xff]
  %v913 = vld [vmem:[%s2 + $0x6c8] sm:$0xff]
  %v914 = vld [vmem:[%s2 + $0x6d0] sm:$0xff]
  %v915 = vld [vmem:[%s2 + $0x6d8] sm:$0xff]
  %v916 = vld [vmem:[%s2 + $0x6e0] sm:$0xff]
  %v917 = vld [vmem:[%s2 + $0x6e8] sm:$0xff]
  %v918 = vld [vmem:[%s2 + $0x6f0] sm:$0xff]
  %v919 = vld [vmem:[%s2 + $0x6f8] sm:$0xff]
  %v920 = vld [vmem:[%s2 + $0x700] sm:$0xff]
  %v921 = vld [vmem:[%s2 + $0x708] sm:$0xff]
  %v922 = vld [vmem:[%s2 + $0x710] sm:$0xff]
  %v923 = vld [vmem:[%s2 + $0x718] sm:$0xff]
  %v924 = vld [vmem:[%s2 + $0x720] sm:$0xff]
  %v925 = vld [vmem:[%s2 + $0x728] sm:$0xff]
  %v926 = vld [vmem:[%s2 + $0x730] sm:$0xff]
  %v927 = vld [vmem:[%s2 + $0x738] sm:$0xff]
  %v928 = vld [vmem:[%s2 + $0x740] sm:$0xff]
  %v929 = vld [vmem:[%s2 + $0x748] sm:$0xff]
  %v930 = vld [vmem:[%s2 + $0x750] sm:$0xff]
  %v931 = vld [vmem:[%s2 + $0x758] sm:$0xff]
  %v932 = vld [vmem:[%s2 + $0x760] sm:$0xff]
  %v933 = vld [vmem:[%s2 + $0x768] sm:$0xff]
  %v934 = vld [vmem:[%s2 + $0x770] sm:$0xff]
  %v935 = vld [vmem:[%s2 + $0x778] sm:$0xff]
  %v936 = vld [vmem:[%s2 + $0x780] sm:$0xff]
  %v937 = vld [vmem:[%s2 + $0x788] sm:$0xff]
  %v938 = vld [vmem:[%s2 + $0x790] sm:$0xff]
  %v939 = vld [vmem:[%s2 + $0x798] sm:$0xff]
  %v940 = vld [vmem:[%s2 + $0x7a0] sm:$0xff]
  %v941 = vld [vmem:[%s2 + $0x7a8] sm:$0xff]
  %v942 = vld [vmem:[%s2 + $0x7b0] sm:$0xff]
  %v943 = vld [vmem:[%s2 + $0x7b8] sm:$0xff]
  %v944 = vld [vmem:[%s2 + $0x7c0] sm:$0xff]
  %v945 = vld [vmem:[%s2 + $0x7c8] sm:$0xff]
  %v946 = vld [vmem:[%s2 + $0x7d0] sm:$0xff]
  %v947 = vld [vmem:[%s2 + $0x7d8] sm:$0xff]
  %v948 = vld [vmem:[%s2 + $0x7e0] sm:$0xff]
  %v949 = vld [vmem:[%s2 + $0x7e8] sm:$0xff]
  %v950 = vld [vmem:[%s2 + $0x7f0] sm:$0xff]
  %v951 = vld [vmem:[%s2 + $0x7f8] sm:$0xff]
  %v952 = vld [vmem:[%s2 + $0x800] sm:$0xff]
  %v953 = vld [vmem:[%s2 + $0x808] sm:$0xff]
  %v954 = vld [vmem:[%s2 + $0x810] sm:$0xff]
  %v955 = vld [vmem:[%s2 + $0x818] sm:$0xff]
  %v956 = vld [vmem:[%s2 + $0x820] sm:$0xff]
  %v957 = vld [vmem:[%s2 + $0x828] sm:$0xff]
  %v958 = vld [vmem:[%s2 + $0x830] sm:$0xff]
  %v959 = vld [vmem:[%s2 + $0x838] sm:$0xff]
  %v960 = vld [vmem:[%s2 + $0x840] sm:$0xff]
  %v961 = vld [vmem:[%s2 + $0x848] sm:$0xff]
  %v962 = vld [vmem:[%s2 + $0x850] sm:$0xff]
  %v963 = vld [vmem:[%s2 + $0x858] sm:$0xff]
  %v964 = vld [vmem:[%s2 + $0x860] sm:$0xff]
  %v965 = vld [vmem:[%s2 + $0x868] sm:$0xff]
  %v966 = vld [vmem:[%s2 + $0x870] sm:$0xff]
  %v967 = vld [vmem:[%s2 + $0x878] sm:$0xff]
  %v968 = vld [vmem:[%s2 + $0x880] sm:$0xff]
  %v969 = vld [vmem:[%s2 + $0x888] sm:$0xff]
  %v970 = vld [vmem:[%s2 + $0x890] sm:$0xff]
  %v971 = vld [vmem:[%s2 + $0x898] sm:$0xff]
  %v972 = vld [vmem:[%s2 + $0x8a0] sm:$0xff]
  %v973 = vld [vmem:[%s2 + $0x8a8] sm:$0xff]
  %v974 = vld [vmem:[%s2 + $0x8b0] sm:$0xff]
  %v975 = vld [vmem:[%s2 + $0x8b8] sm:$0xff]
  %v976 = vld [vmem:[%s2 + $0x8c0] sm:$0xff]
  %v977 = vld [vmem:[%s2 + $0x8c8] sm:$0xff]
  %v978 = vld [vmem:[%s2 + $0x8d0] sm:$0xff]
  %v979 = vld [vmem:[%s2 + $0x8d8] sm:$0xff]
  %v980 = vld [vmem:[%s2 + $0x8e0] sm:$0xff]
  %v981 = vld [vmem:[%s2 + $0x8e8] sm:$0xff]
  %v982 = vld [vmem:[%s2 + $0x8f0] sm:$0xff]
  %v983 = vld [vmem:[%s2 + $0x8f8] sm:$0xff]
  %v984 = vld [vmem:[%s2 + $0x900] sm:$0xff]
  %v985 = vld [vmem:[%s2 + $0x908] sm:$0xff]
  %v986 = vld [vmem:[%s2 + $0x910] sm:$0xff]
  %v987 = vld [vmem:[%s2 + $0x918] sm:$0xff]
  %v988 = vld [vmem:[%s2 + $0x920] sm:$0xff]
  %v989 = vld [vmem:[%s2 + $0x928] sm:$0xff]
  %v990 = vld [vmem:[%s2 + $0x930] sm:$0xff]
  %v991 = vld [vmem:[%s2 + $0x938] sm:$0xff]
  %v992 = vld [vmem:[%s2 + $0x940] sm:$0xff]
  %v993 = vld [vmem:[%s2 + $0x948] sm:$0xff]
  %v994 = vld [vmem:[%s2 + $0x950] sm:$0xff]
  %v995 = vld [vmem:[%s2 + $0x958] sm:$0xff]
  %v996 = vld [vmem:[%s2 + $0x960] sm:$0xff]
  %v997 = vld [vmem:[%s2 + $0x968] sm:$0xff]
  %v998 = vld [vmem:[%s2 + $0x970] sm:$0xff]
  %v999 = vld [vmem:[%s2 + $0x978] sm:$0xff]
  %v1000 = vld [vmem:[%s2 + $0x980] sm:$0xff]
  %v1001 = vld [vmem:[%s2 + $0x988] sm:$0xff]
  %v1002 = vld [vmem:[%s2 + $0x990] sm:$0xff]
  %v1003 = vld [vmem:[%s2 + $0x998] sm:$0xff]
  %v1004 = vld [vmem:[%s2 + $0x9a0] sm:$0xff]
  %v1005 = vld [vmem:[%s2 + $0x9a8] sm:$0xff]
  %v1006 = vld [vmem:[%s2 + $0x9b0] sm:$0xff]
  %v1007 = vld [vmem:[%s2 + $0x9b8] sm:$0xff]
  %v1008 = vld [vmem:[%s2 + $0x9c0] sm:$0xff]
  %v1009 = vld [vmem:[%s2 + $0x9c8] sm:$0xff]
  %v1010 = vld [vmem:[%s2 + $0x9d0] sm:$0xff]
  %v1011 = vld [vmem:[%s2 + $0x9d8] sm:$0xff]
  %v1012 = vld [vmem:[%s2 + $0x9e0] sm:$0xff]
  %v1013 = vld [vmem:[%s2 + $0x9e8] sm:$0xff]
  %v1014 = vld [vmem:[%s2 + $0x9f0] sm:$0xff]
  %v1015 = vld [vmem:[%s2 + $0x9f8] sm:$0xff]
  %v1016 = vld [vmem:[%s2 + $0xa00] sm:$0xff]
  %v1017 = vld [vmem:[%s2 + $0xa08] sm:$0xff]
  %v1018 = vld [vmem:[%s2 + $0xa10] sm:$0xff]
  %v1019 = vld [vmem:[%s2 + $0xa18] sm:$0xff]
  %v1020 = vld [vmem:[%s2 + $0xa20] sm:$0xff]
  %v1021 = vld [vmem:[%s2 + $0xa28] sm:$0xff]
  %v1022 = vld [vmem:[%s2 + $0xa30] sm:$0xff]
  %v1023 = vld [vmem:[%s2 + $0xa38] sm:$0xff]
  %v1024 = vld [vmem:[%s2 + $0xa40] sm:$0xff]
  %v1025 = vld [vmem:[%s2 + $0xa48] sm:$0xff]
  %v1026 = vld [vmem:[%s2 + $0xa50] sm:$0xff]
  %v1027 = vld [vmem:[%s2 + $0xa58] sm:$0xff]
  %v1028 = vld [vmem:[%s2 + $0xa60] sm:$0xff]
  %v1029 = vld [vmem:[%s2 + $0xa68] sm:$0xff]
  %v1030 = vld [vmem:[%s2 + $0xa70] sm:$0xff]
  %v1031 = vld [vmem:[%s2 + $0xa78] sm:$0xff]
  %v1032 = vld [vmem:[%s2 + $0xa80] sm:$0xff]
  %v1033 = vld [vmem:[%s2 + $0xa88] sm:$0xff]
  %v1034 = vld [vmem:[%s2 + $0xa90] sm:$0xff]
  %v1035 = vld [vmem:[%s2 + $0xa98] sm:$0xff]
  %v1036 = vld [vmem:[%s2 + $0xaa0] sm:$0xff]
  %v1037 = vld [vmem:[%s2 + $0xaa8] sm:$0xff]
  %v1038 = vld [vmem:[%s2 + $0xab0] sm:$0xff]
  %v1039 = vld [vmem:[%s2 + $0xab8] sm:$0xff]
  %v1040 = vld [vmem:[%s2 + $0xac0] sm:$0xff]
  %v1041 = vld [vmem:[%s2 + $0xac8] sm:$0xff]
  %v1042 = vld [vmem:[%s2 + $0xad0] sm:$0xff]
  %v1043 = vld [vmem:[%s2 + $0xad8] sm:$0xff]
  %v1044 = vld [vmem:[%s2 + $0xae0] sm:$0xff]
  %v1045 = vld [vmem:[%s2 + $0xae8] sm:$0xff]
  %v1046 = vld [vmem:[%s2 + $0xaf0] sm:$0xff]
  %v1047 = vld [vmem:[%s2 + $0xaf8] sm:$0xff]
  %v1048 = vld [vmem:[%s2 + $0xb00] sm:$0xff]
  %v1049 = vld [vmem:[%s2 + $0xb08] sm:$0xff]
  %v1050 = vld [vmem:[%s2 + $0xb10] sm:$0xff]
  %v1051 = vld [vmem:[%s2 + $0xb18] sm:$0xff]
  %v1052 = vld [vmem:[%s2 + $0xb20] sm:$0xff]
  %v1053 = vld [vmem:[%s2 + $0xb28] sm:$0xff]
  %v1054 = vld [vmem:[%s2 + $0xb30] sm:$0xff]
  %v1055 = vld [vmem:[%s2 + $0xb38] sm:$0xff]
  %v1056 = vld [vmem:[%s2 + $0xb40] sm:$0xff]
  %v1057 = vld [vmem:[%s2 + $0xb48] sm:$0xff]
  %v1058 = vld [vmem:[%s2 + $0xb50] sm:$0xff]
  %v1059 = vld [vmem:[%s2 + $0xb58] sm:$0xff]
  %v1060 = vld [vmem:[%s2 + $0xb60] sm:$0xff]
  %v1061 = vld [vmem:[%s2 + $0xb68] sm:$0xff]
  %v1062 = vld [vmem:[%s2 + $0xb70] sm:$0xff]
  %v1063 = vld [vmem:[%s2 + $0xb78] sm:$0xff]
  %v1064 = vld [vmem:[%s2 + $0xb80] sm:$0xff]
  %v1065 = vld [vmem:[%s2 + $0xb88] sm:$0xff]
  %v1066 = vld [vmem:[%s2 + $0xb90] sm:$0xff]
  %v1067 = vld [vmem:[%s2 + $0xb98] sm:$0xff]
  %v1068 = vld [vmem:[%s2 + $0xba0] sm:$0xff]
  %v1069 = vld [vmem:[%s2 + $0xba8] sm:$0xff]
  %v1070 = vld [vmem:[%s2 + $0xbb0] sm:$0xff]
  %v1071 = vld [vmem:[%s2 + $0xbb8] sm:$0xff]
  %v1072 = vld [vmem:[%s2 + $0xbc0] sm:$0xff]
  %v1073 = vld [vmem:[%s2 + $0xbc8] sm:$0xff]
  %v1074 = vld [vmem:[%s2 + $0xbd0] sm:$0xff]
  %v1075 = vld [vmem:[%s2 + $0xbd8] sm:$0xff]
  %v1076 = vld [vmem:[%s2 + $0xbe0] sm:$0xff]
  %v1077 = vld [vmem:[%s2 + $0xbe8] sm:$0xff]
  %v1078 = vld [vmem:[%s2 + $0xbf0] sm:$0xff]
  %v1079 = vld [vmem:[%s2 + $0xbf8] sm:$0xff]
  %v1080 = vld [vmem:[%s2 + $0xc00] sm:$0xff]
  %v1081 = vld [vmem:[%s2 + $0xc08] sm:$0xff]
  %v1082 = vld [vmem:[%s2 + $0xc10] sm:$0xff]
  %v1083 = vld [vmem:[%s2 + $0xc18] sm:$0xff]
  %v1084 = vld [vmem:[%s2 + $0xc20] sm:$0xff]
  %v1085 = vld [vmem:[%s2 + $0xc28] sm:$0xff]
  %v1086 = vld [vmem:[%s2 + $0xc30] sm:$0xff]
  %v1087 = vld [vmem:[%s2 + $0xc38] sm:$0xff]
  %v1088 = vld [vmem:[%s2 + $0xc40] sm:$0xff]
  %v1089 = vld [vmem:[%s2 + $0xc48] sm:$0xff]
  %v1090 = vld [vmem:[%s2 + $0xc50] sm:$0xff]
  %v1091 = vld [vmem:[%s2 + $0xc58] sm:$0xff]
  %v1092 = vld [vmem:[%s2 + $0xc60] sm:$0xff]
  %v1093 = vld [vmem:[%s2 + $0xc68] sm:$0xff]
  %v1094 = vld [vmem:[%s2 + $0xc70] sm:$0xff]
  %v1095 = vld [vmem:[%s2 + $0xc78] sm:$0xff]
  %v1096 = vld [vmem:[%s2 + $0xc80] sm:$0xff]
  %v1097 = vld [vmem:[%s2 + $0xc88] sm:$0xff]
  %v1098 = vld [vmem:[%s2 + $0xc90] sm:$0xff]
  %v1099 = vld [vmem:[%s2 + $0xc98] sm:$0xff]
  %v1100 = vld [vmem:[%s2 + $0xca0] sm:$0xff]
  %v1101 = vld [vmem:[%s2 + $0xca8] sm:$0xff]
  %v1102 = vld [vmem:[%s2 + $0xcb0] sm:$0xff]
  %v1103 = vld [vmem:[%s2 + $0xcb8] sm:$0xff]
  %v1104 = vld [vmem:[%s2 + $0xcc0] sm:$0xff]
  %v1105 = vld [vmem:[%s2 + $0xcc8] sm:$0xff]
  %v1106 = vld [vmem:[%s2 + $0xcd0] sm:$0xff]
  %v1107 = vld [vmem:[%s2 + $0xcd8] sm:$0xff]
  %v1108 = vld [vmem:[%s2 + $0xce0] sm:$0xff]
  %v1109 = vld [vmem:[%s2 + $0xce8] sm:$0xff]
  %v1110 = vld [vmem:[%s2 + $0xcf0] sm:$0xff]
  %v1111 = vld [vmem:[%s2 + $0xcf8] sm:$0xff]
  %v1112 = vld [vmem:[%s2 + $0xd00] sm:$0xff]
  %v1113 = vld [vmem:[%s2 + $0xd08] sm:$0xff]
  %v1114 = vld [vmem:[%s2 + $0xd10] sm:$0xff]
  %v1115 = vld [vmem:[%s2 + $0xd18] sm:$0xff]
  %v1116 = vld [vmem:[%s2 + $0xd20] sm:$0xff]
  %v1117 = vld [vmem:[%s2 + $0xd28] sm:$0xff]
  %v1118 = vld [vmem:[%s2 + $0xd30] sm:$0xff]
  %v1119 = vld [vmem:[%s2 + $0xd38] sm:$0xff]
  %v1120 = vld [vmem:[%s2 + $0xd40] sm:$0xff]
  %v1121 = vld [vmem:[%s2 + $0xd48] sm:$0xff]
  %v1122 = vld [vmem:[%s2 + $0xd50] sm:$0xff]
  %v1123 = vld [vmem:[%s2 + $0xd58] sm:$0xff]
  %v1124 = vld [vmem:[%s2 + $0xd60] sm:$0xff]
  %v1125 = vld [vmem:[%s2 + $0xd68] sm:$0xff]
  %v1126 = vld [vmem:[%s2 + $0xd70] sm:$0xff]
  %v1127 = vld [vmem:[%s2 + $0xd78] sm:$0xff]
  %v1128 = vld [vmem:[%s2 + $0xd80] sm:$0xff]
  %v1129 = vld [vmem:[%s2 + $0xd88] sm:$0xff]
  %v1130 = vld [vmem:[%s2 + $0xd90] sm:$0xff]
  %v1131 = vld [vmem:[%s2 + $0xd98] sm:$0xff]
  %v1132 = vld [vmem:[%s2 + $0xda0] sm:$0xff]
  %v1133 = vld [vmem:[%s2 + $0xda8] sm:$0xff]
  %v1134 = vld [vmem:[%s2 + $0xdb0] sm:$0xff]
  %v1135 = vld [vmem:[%s2 + $0xdb8] sm:$0xff]
  %v1136 = vld [vmem:[%s2 + $0xdc0] sm:$0xff]
  %v1137 = vld [vmem:[%s2 + $0xdc8] sm:$0xff]
  %v1138 = vld [vmem:[%s2 + $0xdd0] sm:$0xff]
  %v1139 = vld [vmem:[%s2 + $0xdd8] sm:$0xff]
  %v1140 = vld [vmem:[%s2 + $0xde0] sm:$0xff]
  %v1141 = vld [vmem:[%s2 + $0xde8] sm:$0xff]
  %v1142 = vld [vmem:[%s2 + $0xdf0] sm:$0xff]
  %v1143 = vld [vmem:[%s2 + $0xdf8] sm:$0xff]
  %v1144 = vld [vmem:[%s2 + $0xe00] sm:$0xff]
  %v1145 = vld [vmem:[%s2 + $0xe08] sm:$0xff]
  %v1146 = vld [vmem:[%s2 + $0xe10] sm:$0xff]
  %v1147 = vld [vmem:[%s2 + $0xe18] sm:$0xff]
  %v1148 = vld [vmem:[%s2 + $0xe20] sm:$0xff]
  %v1149 = vld [vmem:[%s2 + $0xe28] sm:$0xff]
  %v1150 = vld [vmem:[%s2 + $0xe30] sm:$0xff]
  %v1151 = vld [vmem:[%s2 + $0xe38] sm:$0xff]
  %v1152 = vld [vmem:[%s2 + $0xe40] sm:$0xff]
  %v1153 = vld [vmem:[%s2 + $0xe48] sm:$0xff]
  %v1154 = vld [vmem:[%s2 + $0xe50] sm:$0xff]
  %v1155 = vld [vmem:[%s2 + $0xe58] sm:$0xff]
  %v1156 = vld [vmem:[%s2 + $0xe60] sm:$0xff]
  %v1157 = vld [vmem:[%s2 + $0xe68] sm:$0xff]
  %v1158 = vld [vmem:[%s2 + $0xe70] sm:$0xff]
  %v1159 = vld [vmem:[%s2 + $0xe78] sm:$0xff]
  %v1160 = vld [vmem:[%s2 + $0xe80] sm:$0xff]
  %v1161 = vld [vmem:[%s2 + $0xe88] sm:$0xff]
  %v1162 = vld [vmem:[%s2 + $0xe90] sm:$0xff]
  %v1163 = vld [vmem:[%s2 + $0xe98] sm:$0xff]
  %v1164 = vld [vmem:[%s2 + $0xea0] sm:$0xff]
  %v1165 = vld [vmem:[%s2 + $0xea8] sm:$0xff]
  %v1166 = vld [vmem:[%s2 + $0xeb0] sm:$0xff]
  %v1167 = vld [vmem:[%s2 + $0xeb8] sm:$0xff]
  %v1168 = vld [vmem:[%s2 + $0xec0] sm:$0xff]
  %v1169 = vld [vmem:[%s2 + $0xec8] sm:$0xff]
  %v1170 = vld [vmem:[%s2 + $0xed0] sm:$0xff]
  %v1171 = vld [vmem:[%s2 + $0xed8] sm:$0xff]
  %v1172 = vld [vmem:[%s2 + $0xee0] sm:$0xff]
  %v1173 = vld [vmem:[%s2 + $0xee8] sm:$0xff]
  %v1174 = vld [vmem:[%s2 + $0xef0] sm:$0xff]
  %v1175 = vld [vmem:[%s2 + $0xef8] sm:$0xff]
  %v1176 = vld [vmem:[%s2 + $0xf00] sm:$0xff]
  %v1177 = vld [vmem:[%s2 + $0xf08] sm:$0xff]
  %v1178 = vld [vmem:[%s2 + $0xf10] sm:$0xff]
  %v1179 = vld [vmem:[%s2 + $0xf18] sm:$0xff]
  %v1180 = vld [vmem:[%s2 + $0xf20] sm:$0xff]
  %v1181 = vld [vmem:[%s2 + $0xf28] sm:$0xff]
  %v1182 = vld [vmem:[%s2 + $0xf30] sm:$0xff]
  %v1183 = vld [vmem:[%s2 + $0xf38] sm:$0xff]
  %v1184 = vld [vmem:[%s2 + $0xf40] sm:$0xff]
  %v1185 = vld [vmem:[%s2 + $0xf48] sm:$0xff]
  %v1186 = vld [vmem:[%s2 + $0xf50] sm:$0xff]
  %v1187 = vld [vmem:[%s2 + $0xf58] sm:$0xff]
  %v1188 = vld [vmem:[%s2 + $0xf60] sm:$0xff]
  %v1189 = vld [vmem:[%s2 + $0xf68] sm:$0xff]
  %v1190 = vld [vmem:[%s2 + $0xf70] sm:$0xff]
  %v1191 = vld [vmem:[%s2 + $0xf78] sm:$0xff]
  %v1192 = vld [vmem:[%s2 + $0xf80] sm:$0xff]
  %v1193 = vld [vmem:[%s2 + $0xf88] sm:$0xff]
  %v1194 = vld [vmem:[%s2 + $0xf90] sm:$0xff]
  %v1195 = vld [vmem:[%s2 + $0xf98] sm:$0xff]
  %v1196 = vld [vmem:[%s2 + $0xfa0] sm:$0xff]
  %v1197 = vld [vmem:[%s2 + $0xfa8] sm:$0xff]
  %v1198 = vld [vmem:[%s2 + $0xfb0] sm:$0xff]
  %v1199 = vld [vmem:[%s2 + $0xfb8] sm:$0xff]
  %v1200 = vld [vmem:[%s2 + $0xfc0] sm:$0xff]
  %v1201 = vld [vmem:[%s2 + $0xfc8] sm:$0xff]
  %v1202 = vld [vmem:[%s2 + $0xfd0] sm:$0xff]
  %v1203 = vld [vmem:[%s2 + $0xfd8] sm:$0xff]
  %v1204 = vld [vmem:[%s2 + $0xfe0] sm:$0xff]
  %v1205 = vld [vmem:[%s2 + $0xfe8] sm:$0xff]
  %v1206 = vld [vmem:[%s2 + $0xff0] sm:$0xff]
  %v1207 = vld [vmem:[%s2 + $0xff8] sm:$0xff]
  %v1208 = vld [vmem:[#allocation2] sm:$0x1]
  %v1210 = vperm.slane %v1208, 0
  %1212 = vmatpush.msra.mxu0 %v711
  %1213 = vmatpush.msra.mxu0 %v710
  %1214 = vmatpush.msra.mxu0 %v709
  %1215 = vmatpush.msra.mxu0 %v708
  %1216 = vmatpush.msra.mxu0 %v707
  %1217 = vmatpush.msra.mxu0 %v706
  %1218 = vmatpush.msra.mxu0 %v705
  %1219 = vmatpush.msra.mxu0 %v704
  %1220 = vmatpush.msra.mxu0 %v703
  %1221 = vmatpush.msra.mxu0 %v702
  %1222 = vmatpush.msra.mxu0 %v701
  %1223 = vmatpush.msra.mxu0 %v700
  %1224 = vmatpush.msra.mxu0 %v699
  %1225 = vmatpush.msra.mxu0 %v698
  %1226 = vmatpush.msra.mxu0 %v697
  %1227 = vmatpush.msra.mxu0 %v696
  %1228 = vmatmul.f32.gmra.mxu0 %v74
  %v1229 = vpop.f32.mrf.mxu0
  %v1230 = vadd.f32 %v1210, %v1229
  %1231 = vdwg.mxu0
  %1232 = vmatpush.msra.mxu0 %v727
  %1233 = vmatpush.msra.mxu0 %v726
  %1234 = vmatpush.msra.mxu0 %v725
  %1235 = vmatpush.msra.mxu0 %v724
  %1236 = vmatpush.msra.mxu0 %v723
  %1237 = vmatpush.msra.mxu0 %v722
  %1238 = vmatpush.msra.mxu0 %v721
  %1239 = vmatpush.msra.mxu0 %v720
  %1240 = vmatpush.msra.mxu0 %v719
  %1241 = vmatpush.msra.mxu0 %v718
  %1242 = vmatpush.msra.mxu0 %v717
  %1243 = vmatpush.msra.mxu0 %v716
  %1244 = vmatpush.msra.mxu0 %v715
  %1245 = vmatpush.msra.mxu0 %v714
  %1246 = vmatpush.msra.mxu0 %v713
  %1247 = vmatpush.msra.mxu0 %v712
  %1248 = vmatmul.f32.gmra.mxu0 %v94
  %v1249 = vpop.f32.mrf.mxu0
  %v1250 = vadd.f32 %v1230, %v1249
  %1251 = vdwg.mxu0
  %1252 = vmatpush.msra.mxu0 %v743
  %1253 = vmatpush.msra.mxu0 %v742
  %1254 = vmatpush.msra.mxu0 %v741
  %1255 = vmatpush.msra.mxu0 %v740
  %1256 = vmatpush.msra.mxu0 %v739
  %1257 = vmatpush.msra.mxu0 %v738
  %1258 = vmatpush.msra.mxu0 %v737
  %1259 = vmatpush.msra.mxu0 %v736
  %1260 = vmatpush.msra.mxu0 %v735
  %1261 = vmatpush.msra.mxu0 %v734
  %1262 = vmatpush.msra.mxu0 %v733
  %1263 = vmatpush.msra.mxu0 %v732
  %1264 = vmatpush.msra.mxu0 %v731
  %1265 = vmatpush.msra.mxu0 %v730
  %1266 = vmatpush.msra.mxu0 %v729
  %1267 = vmatpush.msra.mxu0 %v728
  %1268 = vmatmul.f32.gmra.mxu0 %v114
  %v1269 = vpop.f32.mrf.mxu0
  %v1270 = vadd.f32 %v1250, %v1269
  %1271 = vdwg.mxu0
  %1272 = vmatpush.msra.mxu0 %v759
  %1273 = vmatpush.msra.mxu0 %v758
  %1274 = vmatpush.msra.mxu0 %v757
  %1275 = vmatpush.msra.mxu0 %v756
  %1276 = vmatpush.msra.mxu0 %v755
  %1277 = vmatpush.msra.mxu0 %v754
  %1278 = vmatpush.msra.mxu0 %v753
  %1279 = vmatpush.msra.mxu0 %v752
  %1280 = vmatpush.msra.mxu0 %v751
  %1281 = vmatpush.msra.mxu0 %v750
  %1282 = vmatpush.msra.mxu0 %v749
  %1283 = vmatpush.msra.mxu0 %v748
  %1284 = vmatpush.msra.mxu0 %v747
  %1285 = vmatpush.msra.mxu0 %v746
  %1286 = vmatpush.msra.mxu0 %v745
  %1287 = vmatpush.msra.mxu0 %v744
  %1288 = vmatmul.f32.gmra.mxu0 %v134
  %v1289 = vpop.f32.mrf.mxu0
  %v1290 = vadd.f32 %v1270, %v1289
  %1291 = vdwg.mxu0
  %1292 = vmatpush.msra.mxu0 %v775
  %1293 = vmatpush.msra.mxu0 %v774
  %1294 = vmatpush.msra.mxu0 %v773
  %1295 = vmatpush.msra.mxu0 %v772
  %1296 = vmatpush.msra.mxu0 %v771
  %1297 = vmatpush.msra.mxu0 %v770
  %1298 = vmatpush.msra.mxu0 %v769
  %1299 = vmatpush.msra.mxu0 %v768
  %1300 = vmatpush.msra.mxu0 %v767
  %1301 = vmatpush.msra.mxu0 %v766
  %1302 = vmatpush.msra.mxu0 %v765
  %1303 = vmatpush.msra.mxu0 %v764
  %1304 = vmatpush.msra.mxu0 %v763
  %1305 = vmatpush.msra.mxu0 %v762
  %1306 = vmatpush.msra.mxu0 %v761
  %1307 = vmatpush.msra.mxu0 %v760
  %1308 = vmatmul.f32.gmra.mxu0 %v154
  %v1309 = vpop.f32.mrf.mxu0
  %v1310 = vadd.f32 %v1290, %v1309
  %1311 = vdwg.mxu0
  %1312 = vmatpush.msra.mxu0 %v791
  %1313 = vmatpush.msra.mxu0 %v790
  %1314 = vmatpush.msra.mxu0 %v789
  %1315 = vmatpush.msra.mxu0 %v788
  %1316 = vmatpush.msra.mxu0 %v787
  %1317 = vmatpush.msra.mxu0 %v786
  %1318 = vmatpush.msra.mxu0 %v785
  %1319 = vmatpush.msra.mxu0 %v784
  %1320 = vmatpush.msra.mxu0 %v783
  %1321 = vmatpush.msra.mxu0 %v782
  %1322 = vmatpush.msra.mxu0 %v781
  %1323 = vmatpush.msra.mxu0 %v780
  %1324 = vmatpush.msra.mxu0 %v779
  %1325 = vmatpush.msra.mxu0 %v778
  %1326 = vmatpush.msra.mxu0 %v777
  %1327 = vmatpush.msra.mxu0 %v776
  %1328 = vmatmul.f32.gmra.mxu0 %v174
  %v1329 = vpop.f32.mrf.mxu0
  %v1330 = vadd.f32 %v1310, %v1329
  %1331 = vdwg.mxu0
  %1332 = vmatpush.msra.mxu0 %v807
  %1333 = vmatpush.msra.mxu0 %v806
  %1334 = vmatpush.msra.mxu0 %v805
  %1335 = vmatpush.msra.mxu0 %v804
  %1336 = vmatpush.msra.mxu0 %v803
  %1337 = vmatpush.msra.mxu0 %v802
  %1338 = vmatpush.msra.mxu0 %v801
  %1339 = vmatpush.msra.mxu0 %v800
  %1340 = vmatpush.msra.mxu0 %v799
  %1341 = vmatpush.msra.mxu0 %v798
  %1342 = vmatpush.msra.mxu0 %v797
  %1343 = vmatpush.msra.mxu0 %v796
  %1344 = vmatpush.msra.mxu0 %v795
  %1345 = vmatpush.msra.mxu0 %v794
  %1346 = vmatpush.msra.mxu0 %v793
  %1347 = vmatpush.msra.mxu0 %v792
  %1348 = vmatmul.f32.gmra.mxu0 %v194
  %v1349 = vpop.f32.mrf.mxu0
  %v1350 = vadd.f32 %v1330, %v1349
  %1351 = vdwg.mxu0
  %1352 = vmatpush.msra.mxu0 %v823
  %1353 = vmatpush.msra.mxu0 %v822
  %1354 = vmatpush.msra.mxu0 %v821
  %1355 = vmatpush.msra.mxu0 %v820
  %1356 = vmatpush.msra.mxu0 %v819
  %1357 = vmatpush.msra.mxu0 %v818
  %1358 = vmatpush.msra.mxu0 %v817
  %1359 = vmatpush.msra.mxu0 %v816
  %1360 = vmatpush.msra.mxu0 %v815
  %1361 = vmatpush.msra.mxu0 %v814
  %1362 = vmatpush.msra.mxu0 %v813
  %1363 = vmatpush.msra.mxu0 %v812
  %1364 = vmatpush.msra.mxu0 %v811
  %1365 = vmatpush.msra.mxu0 %v810
  %1366 = vmatpush.msra.mxu0 %v809
  %1367 = vmatpush.msra.mxu0 %v808
  %1368 = vmatmul.f32.gmra.mxu0 %v214
  %v1369 = vpop.f32.mrf.mxu0
  %v1370 = vadd.f32 %v1350, %v1369
  %1371 = vdwg.mxu0
  %1372 = vmatpush.msra.mxu0 %v839
  %1373 = vmatpush.msra.mxu0 %v838
  %1374 = vmatpush.msra.mxu0 %v837
  %1375 = vmatpush.msra.mxu0 %v836
  %1376 = vmatpush.msra.mxu0 %v835
  %1377 = vmatpush.msra.mxu0 %v834
  %1378 = vmatpush.msra.mxu0 %v833
  %1379 = vmatpush.msra.mxu0 %v832
  %1380 = vmatpush.msra.mxu0 %v831
  %1381 = vmatpush.msra.mxu0 %v830
  %1382 = vmatpush.msra.mxu0 %v829
  %1383 = vmatpush.msra.mxu0 %v828
  %1384 = vmatpush.msra.mxu0 %v827
  %1385 = vmatpush.msra.mxu0 %v826
  %1386 = vmatpush.msra.mxu0 %v825
  %1387 = vmatpush.msra.mxu0 %v824
  %1388 = vmatmul.f32.gmra.mxu0 %v234
  %v1389 = vpop.f32.mrf.mxu0
  %v1390 = vadd.f32 %v1370, %v1389
  %1391 = vdwg.mxu0
  %1392 = vmatpush.msra.mxu0 %v855
  %1393 = vmatpush.msra.mxu0 %v854
  %1394 = vmatpush.msra.mxu0 %v853
  %1395 = vmatpush.msra.mxu0 %v852
  %1396 = vmatpush.msra.mxu0 %v851
  %1397 = vmatpush.msra.mxu0 %v850
  %1398 = vmatpush.msra.mxu0 %v849
  %1399 = vmatpush.msra.mxu0 %v848
  %1400 = vmatpush.msra.mxu0 %v847
  %1401 = vmatpush.msra.mxu0 %v846
  %1402 = vmatpush.msra.mxu0 %v845
  %1403 = vmatpush.msra.mxu0 %v844
  %1404 = vmatpush.msra.mxu0 %v843
  %1405 = vmatpush.msra.mxu0 %v842
  %1406 = vmatpush.msra.mxu0 %v841
  %1407 = vmatpush.msra.mxu0 %v840
  %1408 = vmatmul.f32.gmra.mxu0 %v254
  %v1409 = vpop.f32.mrf.mxu0
  %v1410 = vadd.f32 %v1390, %v1409
  %1411 = vdwg.mxu0
  %1412 = vmatpush.msra.mxu0 %v871
  %1413 = vmatpush.msra.mxu0 %v870
  %1414 = vmatpush.msra.mxu0 %v869
  %1415 = vmatpush.msra.mxu0 %v868
  %1416 = vmatpush.msra.mxu0 %v867
  %1417 = vmatpush.msra.mxu0 %v866
  %1418 = vmatpush.msra.mxu0 %v865
  %1419 = vmatpush.msra.mxu0 %v864
  %1420 = vmatpush.msra.mxu0 %v863
  %1421 = vmatpush.msra.mxu0 %v862
  %1422 = vmatpush.msra.mxu0 %v861
  %1423 = vmatpush.msra.mxu0 %v860
  %1424 = vmatpush.msra.mxu0 %v859
  %1425 = vmatpush.msra.mxu0 %v858
  %1426 = vmatpush.msra.mxu0 %v857
  %1427 = vmatpush.msra.mxu0 %v856
  %1428 = vmatmul.f32.gmra.mxu0 %v274
  %v1429 = vpop.f32.mrf.mxu0
  %v1430 = vadd.f32 %v1410, %v1429
  %1431 = vdwg.mxu0
  %1432 = vmatpush.msra.mxu0 %v887
  %1433 = vmatpush.msra.mxu0 %v886
  %1434 = vmatpush.msra.mxu0 %v885
  %1435 = vmatpush.msra.mxu0 %v884
  %1436 = vmatpush.msra.mxu0 %v883
  %1437 = vmatpush.msra.mxu0 %v882
  %1438 = vmatpush.msra.mxu0 %v881
  %1439 = vmatpush.msra.mxu0 %v880
  %1440 = vmatpush.msra.mxu0 %v879
  %1441 = vmatpush.msra.mxu0 %v878
  %1442 = vmatpush.msra.mxu0 %v877
  %1443 = vmatpush.msra.mxu0 %v876
  %1444 = vmatpush.msra.mxu0 %v875
  %1445 = vmatpush.msra.mxu0 %v874
  %1446 = vmatpush.msra.mxu0 %v873
  %1447 = vmatpush.msra.mxu0 %v872
  %1448 = vmatmul.f32.gmra.mxu0 %v294
  %v1449 = vpop.f32.mrf.mxu0
  %v1450 = vadd.f32 %v1430, %v1449
  %1451 = vdwg.mxu0
  %1452 = vmatpush.msra.mxu0 %v903
  %1453 = vmatpush.msra.mxu0 %v902
  %1454 = vmatpush.msra.mxu0 %v901
  %1455 = vmatpush.msra.mxu0 %v900
  %1456 = vmatpush.msra.mxu0 %v899
  %1457 = vmatpush.msra.mxu0 %v898
  %1458 = vmatpush.msra.mxu0 %v897
  %1459 = vmatpush.msra.mxu0 %v896
  %1460 = vmatpush.msra.mxu0 %v895
  %1461 = vmatpush.msra.mxu0 %v894
  %1462 = vmatpush.msra.mxu0 %v893
  %1463 = vmatpush.msra.mxu0 %v892
  %1464 = vmatpush.msra.mxu0 %v891
  %1465 = vmatpush.msra.mxu0 %v890
  %1466 = vmatpush.msra.mxu0 %v889
  %1467 = vmatpush.msra.mxu0 %v888
  %1468 = vmatmul.f32.gmra.mxu0 %v314
  %v1469 = vpop.f32.mrf.mxu0
  %v1470 = vadd.f32 %v1450, %v1469
  %1471 = vdwg.mxu0
  %1472 = vmatpush.msra.mxu0 %v919
  %1473 = vmatpush.msra.mxu0 %v918
  %1474 = vmatpush.msra.mxu0 %v917
  %1475 = vmatpush.msra.mxu0 %v916
  %1476 = vmatpush.msra.mxu0 %v915
  %1477 = vmatpush.msra.mxu0 %v914
  %1478 = vmatpush.msra.mxu0 %v913
  %1479 = vmatpush.msra.mxu0 %v912
  %1480 = vmatpush.msra.mxu0 %v911
  %1481 = vmatpush.msra.mxu0 %v910
  %1482 = vmatpush.msra.mxu0 %v909
  %1483 = vmatpush.msra.mxu0 %v908
  %1484 = vmatpush.msra.mxu0 %v907
  %1485 = vmatpush.msra.mxu0 %v906
  %1486 = vmatpush.msra.mxu0 %v905
  %1487 = vmatpush.msra.mxu0 %v904
  %1488 = vmatmul.f32.gmra.mxu0 %v334
  %v1489 = vpop.f32.mrf.mxu0
  %v1490 = vadd.f32 %v1470, %v1489
  %1491 = vdwg.mxu0
  %1492 = vmatpush.msra.mxu0 %v935
  %1493 = vmatpush.msra.mxu0 %v934
  %1494 = vmatpush.msra.mxu0 %v933
  %1495 = vmatpush.msra.mxu0 %v932
  %1496 = vmatpush.msra.mxu0 %v931
  %1497 = vmatpush.msra.mxu0 %v930
  %1498 = vmatpush.msra.mxu0 %v929
  %1499 = vmatpush.msra.mxu0 %v928
  %1500 = vmatpush.msra.mxu0 %v927
  %1501 = vmatpush.msra.mxu0 %v926
  %1502 = vmatpush.msra.mxu0 %v925
  %1503 = vmatpush.msra.mxu0 %v924
  %1504 = vmatpush.msra.mxu0 %v923
  %1505 = vmatpush.msra.mxu0 %v922
  %1506 = vmatpush.msra.mxu0 %v921
  %1507 = vmatpush.msra.mxu0 %v920
  %1508 = vmatmul.f32.gmra.mxu0 %v354
  %v1509 = vpop.f32.mrf.mxu0
  %v1510 = vadd.f32 %v1490, %v1509
  %1511 = vdwg.mxu0
  %1512 = vmatpush.msra.mxu0 %v951
  %1513 = vmatpush.msra.mxu0 %v950
  %1514 = vmatpush.msra.mxu0 %v949
  %1515 = vmatpush.msra.mxu0 %v948
  %1516 = vmatpush.msra.mxu0 %v947
  %1517 = vmatpush.msra.mxu0 %v946
  %1518 = vmatpush.msra.mxu0 %v945
  %1519 = vmatpush.msra.mxu0 %v944
  %1520 = vmatpush.msra.mxu0 %v943
  %1521 = vmatpush.msra.mxu0 %v942
  %1522 = vmatpush.msra.mxu0 %v941
  %1523 = vmatpush.msra.mxu0 %v940
  %1524 = vmatpush.msra.mxu0 %v939
  %1525 = vmatpush.msra.mxu0 %v938
  %1526 = vmatpush.msra.mxu0 %v937
  %1527 = vmatpush.msra.mxu0 %v936
  %1528 = vmatmul.f32.gmra.mxu0 %v374
  %v1529 = vpop.f32.mrf.mxu0
  %v1530 = vadd.f32 %v1510, %v1529
  %1531 = vdwg.mxu0
  %1532 = vmatpush.msra.mxu0 %v967
  %1533 = vmatpush.msra.mxu0 %v966
  %1534 = vmatpush.msra.mxu0 %v965
  %1535 = vmatpush.msra.mxu0 %v964
  %1536 = vmatpush.msra.mxu0 %v963
  %1537 = vmatpush.msra.mxu0 %v962
  %1538 = vmatpush.msra.mxu0 %v961
  %1539 = vmatpush.msra.mxu0 %v960
  %1540 = vmatpush.msra.mxu0 %v959
  %1541 = vmatpush.msra.mxu0 %v958
  %1542 = vmatpush.msra.mxu0 %v957
  %1543 = vmatpush.msra.mxu0 %v956
  %1544 = vmatpush.msra.mxu0 %v955
  %1545 = vmatpush.msra.mxu0 %v954
  %1546 = vmatpush.msra.mxu0 %v953
  %1547 = vmatpush.msra.mxu0 %v952
  %1548 = vmatmul.f32.gmra.mxu0 %v394
  %v1549 = vpop.f32.mrf.mxu0
  %v1550 = vadd.f32 %v1530, %v1549
  %1551 = vdwg.mxu0
  %1552 = vmatpush.msra.mxu0 %v983
  %1553 = vmatpush.msra.mxu0 %v982
  %1554 = vmatpush.msra.mxu0 %v981
  %1555 = vmatpush.msra.mxu0 %v980
  %1556 = vmatpush.msra.mxu0 %v979
  %1557 = vmatpush.msra.mxu0 %v978
  %1558 = vmatpush.msra.mxu0 %v977
  %1559 = vmatpush.msra.mxu0 %v976
  %1560 = vmatpush.msra.mxu0 %v975
  %1561 = vmatpush.msra.mxu0 %v974
  %1562 = vmatpush.msra.mxu0 %v973
  %1563 = vmatpush.msra.mxu0 %v972
  %1564 = vmatpush.msra.mxu0 %v971
  %1565 = vmatpush.msra.mxu0 %v970
  %1566 = vmatpush.msra.mxu0 %v969
  %1567 = vmatpush.msra.mxu0 %v968
  %1568 = vmatmul.f32.gmra.mxu0 %v414
  %v1569 = vpop.f32.mrf.mxu0
  %v1570 = vadd.f32 %v1550, %v1569
  %1571 = vdwg.mxu0
  %1572 = vmatpush.msra.mxu0 %v999
  %1573 = vmatpush.msra.mxu0 %v998
  %1574 = vmatpush.msra.mxu0 %v997
  %1575 = vmatpush.msra.mxu0 %v996
  %1576 = vmatpush.msra.mxu0 %v995
  %1577 = vmatpush.msra.mxu0 %v994
  %1578 = vmatpush.msra.mxu0 %v993
  %1579 = vmatpush.msra.mxu0 %v992
  %1580 = vmatpush.msra.mxu0 %v991
  %1581 = vmatpush.msra.mxu0 %v990
  %1582 = vmatpush.msra.mxu0 %v989
  %1583 = vmatpush.msra.mxu0 %v988
  %1584 = vmatpush.msra.mxu0 %v987
  %1585 = vmatpush.msra.mxu0 %v986
  %1586 = vmatpush.msra.mxu0 %v985
  %1587 = vmatpush.msra.mxu0 %v984
  %1588 = vmatmul.f32.gmra.mxu0 %v434
  %v1589 = vpop.f32.mrf.mxu0
  %v1590 = vadd.f32 %v1570, %v1589
  %1591 = vdwg.mxu0
  %1592 = vmatpush.msra.mxu0 %v1015
  %1593 = vmatpush.msra.mxu0 %v1014
  %1594 = vmatpush.msra.mxu0 %v1013
  %1595 = vmatpush.msra.mxu0 %v1012
  %1596 = vmatpush.msra.mxu0 %v1011
  %1597 = vmatpush.msra.mxu0 %v1010
  %1598 = vmatpush.msra.mxu0 %v1009
  %1599 = vmatpush.msra.mxu0 %v1008
  %1600 = vmatpush.msra.mxu0 %v1007
  %1601 = vmatpush.msra.mxu0 %v1006
  %1602 = vmatpush.msra.mxu0 %v1005
  %1603 = vmatpush.msra.mxu0 %v1004
  %1604 = vmatpush.msra.mxu0 %v1003
  %1605 = vmatpush.msra.mxu0 %v1002
  %1606 = vmatpush.msra.mxu0 %v1001
  %1607 = vmatpush.msra.mxu0 %v1000
  %1608 = vmatmul.f32.gmra.mxu0 %v454
  %v1609 = vpop.f32.mrf.mxu0
  %v1610 = vadd.f32 %v1590, %v1609
  %1611 = vdwg.mxu0
  %1612 = vmatpush.msra.mxu0 %v1031
  %1613 = vmatpush.msra.mxu0 %v1030
  %1614 = vmatpush.msra.mxu0 %v1029
  %1615 = vmatpush.msra.mxu0 %v1028
  %1616 = vmatpush.msra.mxu0 %v1027
  %1617 = vmatpush.msra.mxu0 %v1026
  %1618 = vmatpush.msra.mxu0 %v1025
  %1619 = vmatpush.msra.mxu0 %v1024
  %1620 = vmatpush.msra.mxu0 %v1023
  %1621 = vmatpush.msra.mxu0 %v1022
  %1622 = vmatpush.msra.mxu0 %v1021
  %1623 = vmatpush.msra.mxu0 %v1020
  %1624 = vmatpush.msra.mxu0 %v1019
  %1625 = vmatpush.msra.mxu0 %v1018
  %1626 = vmatpush.msra.mxu0 %v1017
  %1627 = vmatpush.msra.mxu0 %v1016
  %1628 = vmatmul.f32.gmra.mxu0 %v474
  %v1629 = vpop.f32.mrf.mxu0
  %v1630 = vadd.f32 %v1610, %v1629
  %1631 = vdwg.mxu0
  %1632 = vmatpush.msra.mxu0 %v1047
  %1633 = vmatpush.msra.mxu0 %v1046
  %1634 = vmatpush.msra.mxu0 %v1045
  %1635 = vmatpush.msra.mxu0 %v1044
  %1636 = vmatpush.msra.mxu0 %v1043
  %1637 = vmatpush.msra.mxu0 %v1042
  %1638 = vmatpush.msra.mxu0 %v1041
  %1639 = vmatpush.msra.mxu0 %v1040
  %1640 = vmatpush.msra.mxu0 %v1039
  %1641 = vmatpush.msra.mxu0 %v1038
  %1642 = vmatpush.msra.mxu0 %v1037
  %1643 = vmatpush.msra.mxu0 %v1036
  %1644 = vmatpush.msra.mxu0 %v1035
  %1645 = vmatpush.msra.mxu0 %v1034
  %1646 = vmatpush.msra.mxu0 %v1033
  %1647 = vmatpush.msra.mxu0 %v1032
  %1648 = vmatmul.f32.gmra.mxu0 %v494
  %v1649 = vpop.f32.mrf.mxu0
  %v1650 = vadd.f32 %v1630, %v1649
  %1651 = vdwg.mxu0
  %1652 = vmatpush.msra.mxu0 %v1063
  %1653 = vmatpush.msra.mxu0 %v1062
  %1654 = vmatpush.msra.mxu0 %v1061
  %1655 = vmatpush.msra.mxu0 %v1060
  %1656 = vmatpush.msra.mxu0 %v1059
  %1657 = vmatpush.msra.mxu0 %v1058
  %1658 = vmatpush.msra.mxu0 %v1057
  %1659 = vmatpush.msra.mxu0 %v1056
  %1660 = vmatpush.msra.mxu0 %v1055
  %1661 = vmatpush.msra.mxu0 %v1054
  %1662 = vmatpush.msra.mxu0 %v1053
  %1663 = vmatpush.msra.mxu0 %v1052
  %1664 = vmatpush.msra.mxu0 %v1051
  %1665 = vmatpush.msra.mxu0 %v1050
  %1666 = vmatpush.msra.mxu0 %v1049
  %1667 = vmatpush.msra.mxu0 %v1048
  %1668 = vmatmul.f32.gmra.mxu0 %v514
  %v1669 = vpop.f32.mrf.mxu0
  %v1670 = vadd.f32 %v1650, %v1669
  %1671 = vdwg.mxu0
  %1672 = vmatpush.msra.mxu0 %v1079
  %1673 = vmatpush.msra.mxu0 %v1078
  %1674 = vmatpush.msra.mxu0 %v1077
  %1675 = vmatpush.msra.mxu0 %v1076
  %1676 = vmatpush.msra.mxu0 %v1075
  %1677 = vmatpush.msra.mxu0 %v1074
  %1678 = vmatpush.msra.mxu0 %v1073
  %1679 = vmatpush.msra.mxu0 %v1072
  %1680 = vmatpush.msra.mxu0 %v1071
  %1681 = vmatpush.msra.mxu0 %v1070
  %1682 = vmatpush.msra.mxu0 %v1069
  %1683 = vmatpush.msra.mxu0 %v1068
  %1684 = vmatpush.msra.mxu0 %v1067
  %1685 = vmatpush.msra.mxu0 %v1066
  %1686 = vmatpush.msra.mxu0 %v1065
  %1687 = vmatpush.msra.mxu0 %v1064
  %1688 = vmatmul.f32.gmra.mxu0 %v534
  %v1689 = vpop.f32.mrf.mxu0
  %v1690 = vadd.f32 %v1670, %v1689
  %1691 = vdwg.mxu0
  %1692 = vmatpush.msra.mxu0 %v1095
  %1693 = vmatpush.msra.mxu0 %v1094
  %1694 = vmatpush.msra.mxu0 %v1093
  %1695 = vmatpush.msra.mxu0 %v1092
  %1696 = vmatpush.msra.mxu0 %v1091
  %1697 = vmatpush.msra.mxu0 %v1090
  %1698 = vmatpush.msra.mxu0 %v1089
  %1699 = vmatpush.msra.mxu0 %v1088
  %1700 = vmatpush.msra.mxu0 %v1087
  %1701 = vmatpush.msra.mxu0 %v1086
  %1702 = vmatpush.msra.mxu0 %v1085
  %1703 = vmatpush.msra.mxu0 %v1084
  %1704 = vmatpush.msra.mxu0 %v1083
  %1705 = vmatpush.msra.mxu0 %v1082
  %1706 = vmatpush.msra.mxu0 %v1081
  %1707 = vmatpush.msra.mxu0 %v1080
  %1708 = vmatmul.f32.gmra.mxu0 %v554
  %v1709 = vpop.f32.mrf.mxu0
  %v1710 = vadd.f32 %v1690, %v1709
  %1711 = vdwg.mxu0
  %1712 = vmatpush.msra.mxu0 %v1111
  %1713 = vmatpush.msra.mxu0 %v1110
  %1714 = vmatpush.msra.mxu0 %v1109
  %1715 = vmatpush.msra.mxu0 %v1108
  %1716 = vmatpush.msra.mxu0 %v1107
  %1717 = vmatpush.msra.mxu0 %v1106
  %1718 = vmatpush.msra.mxu0 %v1105
  %1719 = vmatpush.msra.mxu0 %v1104
  %1720 = vmatpush.msra.mxu0 %v1103
  %1721 = vmatpush.msra.mxu0 %v1102
  %1722 = vmatpush.msra.mxu0 %v1101
  %1723 = vmatpush.msra.mxu0 %v1100
  %1724 = vmatpush.msra.mxu0 %v1099
  %1725 = vmatpush.msra.mxu0 %v1098
  %1726 = vmatpush.msra.mxu0 %v1097
  %1727 = vmatpush.msra.mxu0 %v1096
  %1728 = vmatmul.f32.gmra.mxu0 %v574
  %v1729 = vpop.f32.mrf.mxu0
  %v1730 = vadd.f32 %v1710, %v1729
  %1731 = vdwg.mxu0
  %1732 = vmatpush.msra.mxu0 %v1127
  %1733 = vmatpush.msra.mxu0 %v1126
  %1734 = vmatpush.msra.mxu0 %v1125
  %1735 = vmatpush.msra.mxu0 %v1124
  %1736 = vmatpush.msra.mxu0 %v1123
  %1737 = vmatpush.msra.mxu0 %v1122
  %1738 = vmatpush.msra.mxu0 %v1121
  %1739 = vmatpush.msra.mxu0 %v1120
  %1740 = vmatpush.msra.mxu0 %v1119
  %1741 = vmatpush.msra.mxu0 %v1118
  %1742 = vmatpush.msra.mxu0 %v1117
  %1743 = vmatpush.msra.mxu0 %v1116
  %1744 = vmatpush.msra.mxu0 %v1115
  %1745 = vmatpush.msra.mxu0 %v1114
  %1746 = vmatpush.msra.mxu0 %v1113
  %1747 = vmatpush.msra.mxu0 %v1112
  %1748 = vmatmul.f32.gmra.mxu0 %v594
  %v1749 = vpop.f32.mrf.mxu0
  %v1750 = vadd.f32 %v1730, %v1749
  %1751 = vdwg.mxu0
  %1752 = vmatpush.msra.mxu0 %v1143
  %1753 = vmatpush.msra.mxu0 %v1142
  %1754 = vmatpush.msra.mxu0 %v1141
  %1755 = vmatpush.msra.mxu0 %v1140
  %1756 = vmatpush.msra.mxu0 %v1139
  %1757 = vmatpush.msra.mxu0 %v1138
  %1758 = vmatpush.msra.mxu0 %v1137
  %1759 = vmatpush.msra.mxu0 %v1136
  %1760 = vmatpush.msra.mxu0 %v1135
  %1761 = vmatpush.msra.mxu0 %v1134
  %1762 = vmatpush.msra.mxu0 %v1133
  %1763 = vmatpush.msra.mxu0 %v1132
  %1764 = vmatpush.msra.mxu0 %v1131
  %1765 = vmatpush.msra.mxu0 %v1130
  %1766 = vmatpush.msra.mxu0 %v1129
  %1767 = vmatpush.msra.mxu0 %v1128
  %1768 = vmatmul.f32.gmra.mxu0 %v614
  %v1769 = vpop.f32.mrf.mxu0
  %v1770 = vadd.f32 %v1750, %v1769
  %1771 = vdwg.mxu0
  %1772 = vmatpush.msra.mxu0 %v1159
  %1773 = vmatpush.msra.mxu0 %v1158
  %1774 = vmatpush.msra.mxu0 %v1157
  %1775 = vmatpush.msra.mxu0 %v1156
  %1776 = vmatpush.msra.mxu0 %v1155
  %1777 = vmatpush.msra.mxu0 %v1154
  %1778 = vmatpush.msra.mxu0 %v1153
  %1779 = vmatpush.msra.mxu0 %v1152
  %1780 = vmatpush.msra.mxu0 %v1151
  %1781 = vmatpush.msra.mxu0 %v1150
  %1782 = vmatpush.msra.mxu0 %v1149
  %1783 = vmatpush.msra.mxu0 %v1148
  %1784 = vmatpush.msra.mxu0 %v1147
  %1785 = vmatpush.msra.mxu0 %v1146
  %1786 = vmatpush.msra.mxu0 %v1145
  %1787 = vmatpush.msra.mxu0 %v1144
  %1788 = vmatmul.f32.gmra.mxu0 %v634
  %v1789 = vpop.f32.mrf.mxu0
  %v1790 = vadd.f32 %v1770, %v1789
  %1791 = vdwg.mxu0
  %1792 = vmatpush.msra.mxu0 %v1175
  %1793 = vmatpush.msra.mxu0 %v1174
  %1794 = vmatpush.msra.mxu0 %v1173
  %1795 = vmatpush.msra.mxu0 %v1172
  %1796 = vmatpush.msra.mxu0 %v1171
  %1797 = vmatpush.msra.mxu0 %v1170
  %1798 = vmatpush.msra.mxu0 %v1169
  %1799 = vmatpush.msra.mxu0 %v1168
  %1800 = vmatpush.msra.mxu0 %v1167
  %1801 = vmatpush.msra.mxu0 %v1166
  %1802 = vmatpush.msra.mxu0 %v1165
  %1803 = vmatpush.msra.mxu0 %v1164
  %1804 = vmatpush.msra.mxu0 %v1163
  %1805 = vmatpush.msra.mxu0 %v1162
  %1806 = vmatpush.msra.mxu0 %v1161
  %1807 = vmatpush.msra.mxu0 %v1160
  %1808 = vmatmul.f32.gmra.mxu0 %v654
  %v1809 = vpop.f32.mrf.mxu0
  %v1810 = vadd.f32 %v1790, %v1809
  %1811 = vdwg.mxu0
  %1812 = vmatpush.msra.mxu0 %v1191
  %1813 = vmatpush.msra.mxu0 %v1190
  %1814 = vmatpush.msra.mxu0 %v1189
  %1815 = vmatpush.msra.mxu0 %v1188
  %1816 = vmatpush.msra.mxu0 %v1187
  %1817 = vmatpush.msra.mxu0 %v1186
  %1818 = vmatpush.msra.mxu0 %v1185
  %1819 = vmatpush.msra.mxu0 %v1184
  %1820 = vmatpush.msra.mxu0 %v1183
  %1821 = vmatpush.msra.mxu0 %v1182
  %1822 = vmatpush.msra.mxu0 %v1181
  %1823 = vmatpush.msra.mxu0 %v1180
  %1824 = vmatpush.msra.mxu0 %v1179
  %1825 = vmatpush.msra.mxu0 %v1178
  %1826 = vmatpush.msra.mxu0 %v1177
  %1827 = vmatpush.msra.mxu0 %v1176
  %1828 = vmatmul.f32.gmra.mxu0 %v674
  %v1829 = vpop.f32.mrf.mxu0
  %v1830 = vadd.f32 %v1810, %v1829
  %1831 = vdwg.mxu0
  %1832 = vmatpush.msra.mxu0 %v1207
  %1833 = vmatpush.msra.mxu0 %v1206
  %1834 = vmatpush.msra.mxu0 %v1205
  %1835 = vmatpush.msra.mxu0 %v1204
  %1836 = vmatpush.msra.mxu0 %v1203
  %1837 = vmatpush.msra.mxu0 %v1202
  %1838 = vmatpush.msra.mxu0 %v1201
  %1839 = vmatpush.msra.mxu0 %v1200
  %1840 = vmatpush.msra.mxu0 %v1199
  %1841 = vmatpush.msra.mxu0 %v1198
  %1842 = vmatpush.msra.mxu0 %v1197
  %1843 = vmatpush.msra.mxu0 %v1196
  %1844 = vmatpush.msra.mxu0 %v1195
  %1845 = vmatpush.msra.mxu0 %v1194
  %1846 = vmatpush.msra.mxu0 %v1193
  %1847 = vmatpush.msra.mxu0 %v1192
  %1848 = vmatmul.f32.gmra.mxu0 %v694
  %v1849 = vpop.f32.mrf.mxu0
  %v1850 = vadd.f32 %v1830, %v1849
  %1851 = vdwg.mxu0
  %vm1852 = vcmask 1024
  %1853 = vst.msk [vmem:[%s4] sm:$0x3] %vm1852, %v1850
  // Predicated region
  $region18: #{d_forward.9} parent=0 // pred_check
    _
  $region19: #{d_forward.9} parent=0 // pred_check_branch
    %1855 = sbr.rel (0) target = $region21
  $region20: #{d_forward.9} parent=0 // pred_region
    _
  $region21: #{d_forward.9} parent=0 // pred_fallthru
    _
  // Predicated region
  $region22: #{d_forward.9} parent=0 // pred_check
    _
  $region23: #{d_forward.9} parent=0 // pred_check_branch
    %1857 = sbr.rel (0) target = $region25
  $region24: #{d_forward.9} parent=0 // pred_region
    _
  $region25: #{d_forward.9} parent=0 // pred_fallthru
    _

</llo_original>
